<compile_context>
chip_gen: v7x
topology: tpu7x:2x2x1
jax: 0.10.0
libtpu: 0.0.40
codegen_flags: <defaults>
</compile_context>

<pallas_src>
import jax
import jax.numpy as jnp
from jax import lax
from jax.experimental import pallas as pl
from jax.experimental.pallas import tpu as pltpu


def _round_up(x, m):
    return (x + m - 1) // m * m


# ---------------------------------------------------------------------------
# Kernel 1: conv as a single GEMM (taps folded into K) + folded-BN + ReLU.
#   grid = (M_pad // TM,)   ("parallel" M tiles)
#   p_ref:     (TM, K)      bf16   K-folded im2col patches
#   w_ref:     (K, Cout)    bf16   K-folded weights
#   scale_ref: (1, Cout)    f32    folded BN scale
#   bias_ref:  (1, Cout)    f32    folded BN bias
#   o_ref:     (TM, Cout)          lane-dense output tile
# ---------------------------------------------------------------------------
def _conv_gemm_kernel(p_ref, w_ref, scale_ref, bias_ref, o_ref):
    y = jnp.dot(p_ref[...], w_ref[...], preferred_element_type=jnp.float32)
    y = y * scale_ref[...] + bias_ref[...]
    o_ref[...] = jnp.maximum(y, 0.0).astype(o_ref.dtype)


def _conv_gemm(patches, w_kfold, scale, bias, out_dtype):
    """One conv+BN+ReLU as a single-GEMM pallas_call. Returns (M, Cout)."""
    m, k = patches.shape
    cout = w_kfold.shape[-1]

    tm = min(512, _round_up(m, 8))
    m_pad = _round_up(m, tm)
    patches = patches.astype(jnp.bfloat16)
    if m_pad != m:
        patches = jnp.pad(patches, ((0, m_pad - m), (0, 0)))

    w_kfold = w_kfold.reshape(k, cout).astype(jnp.bfloat16)
    scale2 = scale.reshape(1, cout).astype(jnp.float32)
    bias2 = bias.reshape(1, cout).astype(jnp.float32)

    out = pl.pallas_call(
        _conv_gemm_kernel,
        out_shape=jax.ShapeDtypeStruct((m_pad, cout), out_dtype),
        grid=(m_pad // tm,),
        in_specs=[
            pl.BlockSpec((tm, k), lambda i: (i, 0)),
            pl.BlockSpec((k, cout), lambda i: (0, 0)),
            pl.BlockSpec((1, cout), lambda i: (0, 0)),
            pl.BlockSpec((1, cout), lambda i: (0, 0)),
        ],
        out_specs=pl.BlockSpec((tm, cout), lambda i: (i, 0)),
        compiler_params=pltpu.CompilerParams(
            dimension_semantics=("parallel",)),
    )(patches, w_kfold, scale2, bias2)
    return out[:m]


# ---------------------------------------------------------------------------
# Kernel 2: fused Reduction_A tail.  Computes branch0 conv, branch1 final
# conv and the 3x3/s2 max-pool and writes them at their lane offsets of one
# (TM, 1024) output slab (no HBM concat).
# ---------------------------------------------------------------------------
def _reduction_a_tail_kernel(p0_ref, w0_ref, s0_ref, b0_ref,
                             p1_ref, w1_ref, s1_ref, b1_ref,
                             pool_ref, o_ref):
    c0 = w0_ref.shape[1]          # 384
    c1 = w1_ref.shape[1]          # 256

    y0 = jnp.dot(p0_ref[...], w0_ref[...], preferred_element_type=jnp.float32)
    y0 = jnp.maximum(y0 * s0_ref[...] + b0_ref[...], 0.0)
    o_ref[:, 0:c0] = y0.astype(o_ref.dtype)

    y1 = jnp.dot(p1_ref[...], w1_ref[...], preferred_element_type=jnp.float32)
    y1 = jnp.maximum(y1 * s1_ref[...] + b1_ref[...], 0.0)
    o_ref[:, c0:c0 + c1] = y1.astype(o_ref.dtype)

    mx = pool_ref[0]
    for t in range(1, pool_ref.shape[0]):
        mx = jnp.maximum(mx, pool_ref[t])
    o_ref[:, c0 + c1:] = mx.astype(o_ref.dtype)


def _reduction_a_tail(p0, w0, s0, b0, p1, w1, s1, b1, pool_taps, out_dtype):
    m, k0 = p0.shape
    _, k1 = p1.shape
    c0 = w0.shape[-1]
    c1 = w1.shape[-1]
    n_taps, _, cp = pool_taps.shape
    c_out = c0 + c1 + cp          # 384 + 256 + 384 = 1024 (lane-aligned splits)

    tm = min(256, _round_up(m, 8))
    m_pad = _round_up(m, tm)

    p0 = p0.astype(jnp.bfloat16)
    p1 = p1.astype(jnp.bfloat16)
    if m_pad != m:
        p0 = jnp.pad(p0, ((0, m_pad - m), (0, 0)))
        p1 = jnp.pad(p1, ((0, m_pad - m), (0, 0)))
        pool_taps = jnp.pad(pool_taps, ((0, 0), (0, m_pad - m), (0, 0)))

    w0 = w0.reshape(k0, c0).astype(jnp.bfloat16)
    w1 = w1.reshape(k1, c1).astype(jnp.bfloat16)
    s0 = s0.reshape(1, c0).astype(jnp.float32)
    b0 = b0.reshape(1, c0).astype(jnp.float32)
    s1 = s1.reshape(1, c1).astype(jnp.float32)
    b1 = b1.reshape(1, c1).astype(jnp.float32)

    out = pl.pallas_call(
        _reduction_a_tail_kernel,
        out_shape=jax.ShapeDtypeStruct((m_pad, c_out), out_dtype),
        grid=(m_pad // tm,),
        in_specs=[
            pl.BlockSpec((tm, k0), lambda i: (i, 0)),
            pl.BlockSpec((k0, c0), lambda i: (0, 0)),
            pl.BlockSpec((1, c0), lambda i: (0, 0)),
            pl.BlockSpec((1, c0), lambda i: (0, 0)),
            pl.BlockSpec((tm, k1), lambda i: (i, 0)),
            pl.BlockSpec((k1, c1), lambda i: (0, 0)),
            pl.BlockSpec((1, c1), lambda i: (0, 0)),
            pl.BlockSpec((1, c1), lambda i: (0, 0)),
            pl.BlockSpec((n_taps, tm, cp), lambda i: (0, i, 0)),
        ],
        out_specs=pl.BlockSpec((tm, c_out), lambda i: (i, 0)),
        compiler_params=pltpu.CompilerParams(
            dimension_semantics=("parallel",)),
    )(p0, w0, s0, b0, p1, w1, s1, b1, pool_taps)
    return out[:m]


# ---------------------------------------------------------------------------
# Wrapper-side layout plumbing (pure data movement, no compute):
#   * K-folded im2col: (N,H,W,C) -> (N*Ho*Wo, kh*kw*C), K order (ih, iw, c)
#     matching w.reshape(kh*kw*C, Cout).
#   * Stacked pool taps: (kh*kw, N*Ho*Wo, C).
# ---------------------------------------------------------------------------
def _im2col(x_nhwc, kh, kw, stride, padding):
    if padding:
        x_nhwc = jnp.pad(
            x_nhwc, ((0, 0), (padding, padding), (padding, padding), (0, 0)))
    n, hp, wp, c = x_nhwc.shape
    ho = (hp - kh) // stride + 1
    wo = (wp - kw) // stride + 1
    cols = []
    for ih in range(kh):
        for iw in range(kw):
            win = lax.slice(
                x_nhwc,
                (0, ih, iw, 0),
                (n, ih + (ho - 1) * stride + 1,
                 iw + (wo - 1) * stride + 1, c),
                (1, stride, stride, 1))
            cols.append(win)
    patches = jnp.concatenate(cols, axis=-1)          # (N, Ho, Wo, kh*kw*C)
    return patches.reshape(n * ho * wo, kh * kw * c), ho, wo


def _pool_taps(x_nhwc, k, stride):
    n, h, w, c = x_nhwc.shape
    ho = (h - k) // stride + 1
    wo = (w - k) // stride + 1
    taps = []
    for ih in range(k):
        for iw in range(k):
            win = lax.slice(
                x_nhwc,
                (0, ih, iw, 0),
                (n, ih + (ho - 1) * stride + 1,
                 iw + (wo - 1) * stride + 1, c),
                (1, stride, stride, 1))
            taps.append(win.reshape(n * ho * wo, c))
    return jnp.stack(taps, axis=0), ho, wo             # (k*k, M, C)


# ---------------------------------------------------------------------------
# Parameter init (deterministic, synthetic) + BN folding (eval mode)
# ---------------------------------------------------------------------------
def init_basic_conv2d(key, cin, cout, k):
    k1, k2, k3, k4, k5 = jax.random.split(key, 5)
    w = 0.05 * jax.random.normal(k1, (k, k, cin, cout), jnp.float32)   # HWIO
    gamma = 1.0 + 0.1 * jax.random.normal(k2, (cout,), jnp.float32)
    beta = 0.1 * jax.random.normal(k3, (cout,), jnp.float32)
    mean = 0.1 * jax.random.normal(k4, (cout,), jnp.float32)
    var = 1.0 + 0.1 * jax.random.uniform(k5, (cout,), jnp.float32)
    eps = 1e-3
    scale = gamma / jnp.sqrt(var + eps)
    bias = beta - mean * scale
    return {"w": w, "scale": scale, "bias": bias}


def init_reduction_a_params(key):
    k0, k1, k2, k3 = jax.random.split(key, 4)
    return {
        "b0":   init_basic_conv2d(k0, 384, 384, 3),   # 3x3 s2
        "b1_0": init_basic_conv2d(k1, 384, 192, 1),   # 1x1 s1
        "b1_1": init_basic_conv2d(k2, 192, 224, 3),   # 3x3 s1 p1
        "b1_2": init_basic_conv2d(k3, 224, 256, 3),   # 3x3 s2
    }


# ---------------------------------------------------------------------------
# Reduction_A forward (NCHW in / NCHW out, like the PyTorch module)
# ---------------------------------------------------------------------------
def reduction_a_forward(x_nchw, params):
    x = jnp.transpose(x_nchw, (0, 2, 3, 1))            # NHWC for the kernels
    n, h, w, cin = x.shape

    # branch1: 1x1 (384->192) -> 3x3/s1/p1 (192->224), bf16 intermediates
    p = params["b1_0"]
    x_flat = x.reshape(n * h * w, cin)
    h1 = _conv_gemm(x_flat, p["w"], p["scale"], p["bias"], jnp.bfloat16)
    h1 = h1.reshape(n, h, w, -1)                       # (N, H, W, 192) bf16

    p = params["b1_1"]
    h1p, ho1, wo1 = _im2col(h1, 3, 3, 1, 1)            # (N*H*W, 9*192) bf16
    h1 = _conv_gemm(h1p, p["w"], p["scale"], p["bias"], jnp.bfloat16)
    h1 = h1.reshape(n, ho1, wo1, -1)                   # (N, H, W, 224) bf16

    # fused tail: branch0 3x3/s2, branch1 3x3/s2, 3x3/s2 max-pool, lane-concat
    p0 = params["b0"]
    p12 = params["b1_2"]
    xb0, ho2, wo2 = _im2col(x.astype(jnp.bfloat16), 3, 3, 2, 0)   # (M2, 9*384)
    h12, _, _ = _im2col(h1, 3, 3, 2, 0)                           # (M2, 9*224)
    pool, _, _ = _pool_taps(x, 3, 2)                              # (9, M2, 384) f32

    out_flat = _reduction_a_tail(
        xb0, p0["w"], p0["scale"], p0["bias"],
        h12, p12["w"], p12["scale"], p12["bias"],
        pool, jnp.float32)                                        # (M2, 1024)

    out = out_flat.reshape(n, ho2, wo2, -1)
    return jnp.transpose(out, (0, 3, 1, 2))            # back to NCHW


# ---------------------------------------------------------------------------
# Pure-JAX reference (same bf16 operand quantization, f32 accumulation)
# ---------------------------------------------------------------------------
def reduction_a_reference(x_nchw, params):
    x = jnp.transpose(x_nchw, (0, 2, 3, 1))

    def cbr(h, p, stride, pad):
        y = lax.conv_general_dilated(
            h.astype(jnp.bfloat16), p["w"].astype(jnp.bfloat16),
            (stride, stride), [(pad, pad), (pad, pad)],
            dimension_numbers=("NHWC", "HWIO", "NHWC"),
            preferred_element_type=jnp.float32)
        return jnp.maximum(y * p["scale"] + p["bias"], 0.0)

    b0 = cbr(x, params["b0"], 2, 0)
    b1 = cbr(x, params["b1_0"], 1, 0)
    b1 = cbr(b1, params["b1_1"], 1, 1)
    b1 = cbr(b1, params["b1_2"], 2, 0)
    b2 = lax.reduce_window(x, -jnp.inf, lax.max,
                           (1, 3, 3, 1), (1, 2, 2, 1), "VALID")
    out = jnp.concatenate([b0, b1, b2], axis=-1)
    return jnp.transpose(out, (0, 3, 1, 2))


if __name__ == "__main__":
    key = jax.random.PRNGKey(0)
    kx, kp = jax.random.split(key)

    N, C, H, W = 2, 384, 9, 9          # channels fixed by the module; small spatial
    x = jax.random.normal(kx, (N, C, H, W), jnp.float32)
    params = init_reduction_a_params(kp)

    out = jax.jit(reduction_a_forward)(x, params)
    out = jax.block_until_ready(out)

    assert out.shape == (N, 1024, 4, 4), out.shape

    ref = reduction_a_reference(x, params)
    max_err = float(jnp.max(jnp.abs(out - ref)))
    assert max_err < 5e-3, f"max abs err {max_err}"

    print("KERNEL_OK")
</pallas_src>

<mosaic_0001>
module attributes {stable_mosaic.version = 11 : i64} {
  func.func @_conv_gemm_kernel(%arg0: i32, %arg1: memref<168x384xbf16, #tpu.memory_space<vmem>>, %arg2: memref<384x192xbf16, #tpu.memory_space<vmem>>, %arg3: memref<1x192xf32, #tpu.memory_space<vmem>>, %arg4: memref<1x192xf32, #tpu.memory_space<vmem>>, %arg5: memref<168x192xbf16, #tpu.memory_space<vmem>>) attributes {dimension_semantics = [#tpu.dimension_semantics<parallel>], iteration_bounds = array<i64: 1>, scalar_prefetch = 0 : i64, scratch_operands = 0 : i64, tpu.core_type = #tpu.core_type<tc>, window_params = [{transform_indices = @transform_0, window_bounds = array<i64: 168, 384>}, {pipeline_mode = #tpu.pipeline_mode<synchronous>, transform_indices = @transform_1, window_bounds = array<i64: 384, 192>}, {pipeline_mode = #tpu.pipeline_mode<synchronous>, transform_indices = @transform_2, window_bounds = array<i64: 1, 192>}, {pipeline_mode = #tpu.pipeline_mode<synchronous>, transform_indices = @transform_3, window_bounds = array<i64: 1, 192>}, {transform_indices = @transform_4, window_bounds = array<i64: 168, 192>}]} {
    %c0 = arith.constant 0 : index
    %c0_0 = arith.constant 0 : index
    %0 = vector.load %arg1[%c0, %c0_0] : memref<168x384xbf16, #tpu.memory_space<vmem>>, vector<168x384xbf16>
    %c0_1 = arith.constant 0 : index
    %c0_2 = arith.constant 0 : index
    %1 = vector.load %arg2[%c0_1, %c0_2] : memref<384x192xbf16, #tpu.memory_space<vmem>>, vector<384x192xbf16>
    %cst = arith.constant dense<0.000000e+00> : vector<168x192xf32>
    %2 = tpu.matmul %0, %1, %cst {dimension_numbers = #tpu.dot_dimension_numbers<[1], [0], [0], [1], [0, 0, 1, 1], [], []>} : vector<168x384xbf16>, vector<384x192xbf16>, vector<168x192xf32> -> vector<168x192xf32>
    %c0_3 = arith.constant 0 : index
    %c0_4 = arith.constant 0 : index
    %3 = vector.load %arg3[%c0_3, %c0_4] : memref<1x192xf32, #tpu.memory_space<vmem>>, vector<1x192xf32>
    %4 = vector.broadcast %3 : vector<1x192xf32> to vector<168x192xf32>
    %5 = arith.mulf %2, %4 : vector<168x192xf32>
    %c0_5 = arith.constant 0 : index
    %c0_6 = arith.constant 0 : index
    %6 = vector.load %arg4[%c0_5, %c0_6] : memref<1x192xf32, #tpu.memory_space<vmem>>, vector<1x192xf32>
    %7 = vector.broadcast %6 : vector<1x192xf32> to vector<168x192xf32>
    %8 = arith.addf %5, %7 : vector<168x192xf32>
    %cst_7 = arith.constant 0.000000e+00 : f32
    %9 = vector.broadcast %cst_7 : f32 to vector<168x192xf32>
    %10 = arith.maximumf %8, %9 : vector<168x192xf32>
    %11 = arith.truncf %10 : vector<168x192xf32> to vector<168x192xbf16>
    %c0_8 = arith.constant 0 : index
    %c0_9 = arith.constant 0 : index
    %12 = vector.load %arg5[%c0_8, %c0_9] : memref<168x192xbf16, #tpu.memory_space<vmem>>, vector<168x192xbf16>
    tpu.vector_store %arg5[%c0_8, %c0_9], %11 {strides = array<i32>} : memref<168x192xbf16, #tpu.memory_space<vmem>>, vector<168x192xbf16>,
    return
  }
  func.func @transform_0(%arg0: i32) -> (i32, i32) {
    %c0_i32 = arith.constant 0 : i32
    %c0_i32_0 = arith.constant 0 : i32
    return %arg0, %c0_i32 : i32, i32
  }
  func.func @transform_1(%arg0: i32) -> (i32, i32) {
    %c0_i32 = arith.constant 0 : i32
    %c0_i32_0 = arith.constant 0 : i32
    %c0_i32_1 = arith.constant 0 : i32
    return %c0_i32, %c0_i32_0 : i32, i32
  }
  func.func @transform_2(%arg0: i32) -> (i32, i32) {
    %c0_i32 = arith.constant 0 : i32
    %c0_i32_0 = arith.constant 0 : i32
    %c0_i32_1 = arith.constant 0 : i32
    return %c0_i32, %c0_i32_0 : i32, i32
  }
  func.func @transform_3(%arg0: i32) -> (i32, i32) {
    %c0_i32 = arith.constant 0 : i32
    %c0_i32_0 = arith.constant 0 : i32
    %c0_i32_1 = arith.constant 0 : i32
    return %c0_i32, %c0_i32_0 : i32, i32
  }
  func.func @transform_4(%arg0: i32) -> (i32, i32) {
    %c0_i32 = arith.constant 0 : i32
    %c0_i32_0 = arith.constant 0 : i32
    return %arg0, %c0_i32 : i32, i32
  }
}

module attributes {stable_mosaic.version = 11 : i64} {
  func.func @_conv_gemm_kernel(%arg0: i32, %arg1: memref<168x1728xbf16, #tpu.memory_space<vmem>>, %arg2: memref<1728x224xbf16, #tpu.memory_space<vmem>>, %arg3: memref<1x224xf32, #tpu.memory_space<vmem>>, %arg4: memref<1x224xf32, #tpu.memory_space<vmem>>, %arg5: memref<168x224xbf16, #tpu.memory_space<vmem>>) attributes {dimension_semantics = [#tpu.dimension_semantics<parallel>], iteration_bounds = array<i64: 1>, scalar_prefetch = 0 : i64, scratch_operands = 0 : i64, tpu.core_type = #tpu.core_type<tc>, window_params = [{transform_indices = @transform_0, window_bounds = array<i64: 168, 1728>}, {pipeline_mode = #tpu.pipeline_mode<synchronous>, transform_indices = @transform_1, window_bounds = array<i64: 1728, 224>}, {pipeline_mode = #tpu.pipeline_mode<synchronous>, transform_indices = @transform_2, window_bounds = array<i64: 1, 224>}, {pipeline_mode = #tpu.pipeline_mode<synchronous>, transform_indices = @transform_3, window_bounds = array<i64: 1, 224>}, {transform_indices = @transform_4, window_bounds = array<i64: 168, 224>}]} {
    %c0 = arith.constant 0 : index
    %c0_0 = arith.constant 0 : index
    %0 = vector.load %arg1[%c0, %c0_0] : memref<168x1728xbf16, #tpu.memory_space<vmem>>, vector<168x1728xbf16>
    %c0_1 = arith.constant 0 : index
    %c0_2 = arith.constant 0 : index
    %1 = vector.load %arg2[%c0_1, %c0_2] : memref<1728x224xbf16, #tpu.memory_space<vmem>>, vector<1728x224xbf16>
    %cst = arith.constant dense<0.000000e+00> : vector<168x224xf32>
    %2 = tpu.matmul %0, %1, %cst {dimension_numbers = #tpu.dot_dimension_numbers<[1], [0], [0], [1], [0, 0, 1, 1], [], []>} : vector<168x1728xbf16>, vector<1728x224xbf16>, vector<168x224xf32> -> vector<168x224xf32>
    %c0_3 = arith.constant 0 : index
    %c0_4 = arith.constant 0 : index
    %3 = vector.load %arg3[%c0_3, %c0_4] : memref<1x224xf32, #tpu.memory_space<vmem>>, vector<1x224xf32>
    %4 = vector.broadcast %3 : vector<1x224xf32> to vector<168x224xf32>
    %5 = arith.mulf %2, %4 : vector<168x224xf32>
    %c0_5 = arith.constant 0 : index
    %c0_6 = arith.constant 0 : index
    %6 = vector.load %arg4[%c0_5, %c0_6] : memref<1x224xf32, #tpu.memory_space<vmem>>, vector<1x224xf32>
    %7 = vector.broadcast %6 : vector<1x224xf32> to vector<168x224xf32>
    %8 = arith.addf %5, %7 : vector<168x224xf32>
    %cst_7 = arith.constant 0.000000e+00 : f32
    %9 = vector.broadcast %cst_7 : f32 to vector<168x224xf32>
    %10 = arith.maximumf %8, %9 : vector<168x224xf32>
    %11 = arith.truncf %10 : vector<168x224xf32> to vector<168x224xbf16>
    %c0_8 = arith.constant 0 : index
    %c0_9 = arith.constant 0 : index
    %12 = vector.load %arg5[%c0_8, %c0_9] : memref<168x224xbf16, #tpu.memory_space<vmem>>, vector<168x224xbf16>
    tpu.vector_store %arg5[%c0_8, %c0_9], %11 {strides = array<i32>} : memref<168x224xbf16, #tpu.memory_space<vmem>>, vector<168x224xbf16>,
    return
  }
  func.func @transform_0(%arg0: i32) -> (i32, i32) {
    %c0_i32 = arith.constant 0 : i32
    %c0_i32_0 = arith.constant 0 : i32
    return %arg0, %c0_i32 : i32, i32
  }
  func.func @transform_1(%arg0: i32) -> (i32, i32) {
    %c0_i32 = arith.constant 0 : i32
    %c0_i32_0 = arith.constant 0 : i32
    %c0_i32_1 = arith.constant 0 : i32
    return %c0_i32, %c0_i32_0 : i32, i32
  }
  func.func @transform_2(%arg0: i32) -> (i32, i32) {
    %c0_i32 = arith.constant 0 : i32
    %c0_i32_0 = arith.constant 0 : i32
    %c0_i32_1 = arith.constant 0 : i32
    return %c0_i32, %c0_i32_0 : i32, i32
  }
  func.func @transform_3(%arg0: i32) -> (i32, i32) {
    %c0_i32 = arith.constant 0 : i32
    %c0_i32_0 = arith.constant 0 : i32
    %c0_i32_1 = arith.constant 0 : i32
    return %c0_i32, %c0_i32_0 : i32, i32
  }
  func.func @transform_4(%arg0: i32) -> (i32, i32) {
    %c0_i32 = arith.constant 0 : i32
    %c0_i32_0 = arith.constant 0 : i32
    return %arg0, %c0_i32 : i32, i32
  }
}

module attributes {stable_mosaic.version = 11 : i64} {
  func.func @_reduction_a_tail_kernel(%arg0: i32, %arg1: memref<32x3456xbf16, #tpu.memory_space<vmem>>, %arg2: memref<3456x384xbf16, #tpu.memory_space<vmem>>, %arg3: memref<1x384xf32, #tpu.memory_space<vmem>>, %arg4: memref<1x384xf32, #tpu.memory_space<vmem>>, %arg5: memref<32x2016xbf16, #tpu.memory_space<vmem>>, %arg6: memref<2016x256xbf16, #tpu.memory_space<vmem>>, %arg7: memref<1x256xf32, #tpu.memory_space<vmem>>, %arg8: memref<1x256xf32, #tpu.memory_space<vmem>>, %arg9: memref<9x32x384xf32, #tpu.memory_space<vmem>>, %arg10: memref<32x1024xf32, #tpu.memory_space<vmem>>) attributes {dimension_semantics = [#tpu.dimension_semantics<parallel>], iteration_bounds = array<i64: 1>, scalar_prefetch = 0 : i64, scratch_operands = 0 : i64, tpu.core_type = #tpu.core_type<tc>, window_params = [{transform_indices = @transform_0, window_bounds = array<i64: 32, 3456>}, {pipeline_mode = #tpu.pipeline_mode<synchronous>, transform_indices = @transform_1, window_bounds = array<i64: 3456, 384>}, {pipeline_mode = #tpu.pipeline_mode<synchronous>, transform_indices = @transform_2, window_bounds = array<i64: 1, 384>}, {pipeline_mode = #tpu.pipeline_mode<synchronous>, transform_indices = @transform_3, window_bounds = array<i64: 1, 384>}, {transform_indices = @transform_4, window_bounds = array<i64: 32, 2016>}, {pipeline_mode = #tpu.pipeline_mode<synchronous>, transform_indices = @transform_5, window_bounds = array<i64: 2016, 256>}, {pipeline_mode = #tpu.pipeline_mode<synchronous>, transform_indices = @transform_6, window_bounds = array<i64: 1, 256>}, {pipeline_mode = #tpu.pipeline_mode<synchronous>, transform_indices = @transform_7, window_bounds = array<i64: 1, 256>}, {transform_indices = @transform_8, window_bounds = array<i64: 9, 32, 384>}, {transform_indices = @transform_9, window_bounds = array<i64: 32, 1024>}]} {
    %c0 = arith.constant 0 : index
    %c0_0 = arith.constant 0 : index
    %0 = vector.load %arg1[%c0, %c0_0] : memref<32x3456xbf16, #tpu.memory_space<vmem>>, vector<32x3456xbf16>
    %c0_1 = arith.constant 0 : index
    %c0_2 = arith.constant 0 : index
    %1 = vector.load %arg2[%c0_1, %c0_2] : memref<3456x384xbf16, #tpu.memory_space<vmem>>, vector<3456x384xbf16>
    %cst = arith.constant dense<0.000000e+00> : vector<32x384xf32>
    %2 = tpu.matmul %0, %1, %cst {dimension_numbers = #tpu.dot_dimension_numbers<[1], [0], [0], [1], [0, 0, 1, 1], [], []>} : vector<32x3456xbf16>, vector<3456x384xbf16>, vector<32x384xf32> -> vector<32x384xf32>
    %c0_3 = arith.constant 0 : index
    %c0_4 = arith.constant 0 : index
    %3 = vector.load %arg3[%c0_3, %c0_4] : memref<1x384xf32, #tpu.memory_space<vmem>>, vector<1x384xf32>
    %4 = vector.broadcast %3 : vector<1x384xf32> to vector<32x384xf32>
    %5 = arith.mulf %2, %4 : vector<32x384xf32>
    %c0_5 = arith.constant 0 : index
    %c0_6 = arith.constant 0 : index
    %6 = vector.load %arg4[%c0_5, %c0_6] : memref<1x384xf32, #tpu.memory_space<vmem>>, vector<1x384xf32>
    %7 = vector.broadcast %6 : vector<1x384xf32> to vector<32x384xf32>
    %8 = arith.addf %5, %7 : vector<32x384xf32>
    %cst_7 = arith.constant 0.000000e+00 : f32
    %9 = vector.broadcast %cst_7 : f32 to vector<32x384xf32>
    %10 = arith.maximumf %8, %9 : vector<32x384xf32>
    %c0_8 = arith.constant 0 : index
    %c0_9 = arith.constant 0 : index
    %11 = vector.load %arg10[%c0_8, %c0_9] : memref<32x1024xf32, #tpu.memory_space<vmem>>, vector<32x384xf32>
    tpu.vector_store %arg10[%c0_8, %c0_9], %10 {strides = array<i32>} : memref<32x1024xf32, #tpu.memory_space<vmem>>, vector<32x384xf32>,
    %c0_10 = arith.constant 0 : index
    %c0_11 = arith.constant 0 : index
    %12 = vector.load %arg5[%c0_10, %c0_11] : memref<32x2016xbf16, #tpu.memory_space<vmem>>, vector<32x2016xbf16>
    %c0_12 = arith.constant 0 : index
    %c0_13 = arith.constant 0 : index
    %13 = vector.load %arg6[%c0_12, %c0_13] : memref<2016x256xbf16, #tpu.memory_space<vmem>>, vector<2016x256xbf16>
    %cst_14 = arith.constant dense<0.000000e+00> : vector<32x256xf32>
    %14 = tpu.matmul %12, %13, %cst_14 {dimension_numbers = #tpu.dot_dimension_numbers<[1], [0], [0], [1], [0, 0, 1, 1], [], []>} : vector<32x2016xbf16>, vector<2016x256xbf16>, vector<32x256xf32> -> vector<32x256xf32>
    %c0_15 = arith.constant 0 : index
    %c0_16 = arith.constant 0 : index
    %15 = vector.load %arg7[%c0_15, %c0_16] : memref<1x256xf32, #tpu.memory_space<vmem>>, vector<1x256xf32>
    %16 = vector.broadcast %15 : vector<1x256xf32> to vector<32x256xf32>
    %17 = arith.mulf %14, %16 : vector<32x256xf32>
    %c0_17 = arith.constant 0 : index
    %c0_18 = arith.constant 0 : index
    %18 = vector.load %arg8[%c0_17, %c0_18] : memref<1x256xf32, #tpu.memory_space<vmem>>, vector<1x256xf32>
    %19 = vector.broadcast %18 : vector<1x256xf32> to vector<32x256xf32>
    %20 = arith.addf %17, %19 : vector<32x256xf32>
    %cst_19 = arith.constant 0.000000e+00 : f32
    %21 = vector.broadcast %cst_19 : f32 to vector<32x256xf32>
    %22 = arith.maximumf %20, %21 : vector<32x256xf32>
    %c0_20 = arith.constant 0 : index
    %c384 = arith.constant 384 : index
    %23 = vector.load %arg10[%c0_20, %c384] : memref<32x1024xf32, #tpu.memory_space<vmem>>, vector<32x256xf32>
    tpu.vector_store %arg10[%c0_20, %c384], %22 {strides = array<i32>} : memref<32x1024xf32, #tpu.memory_space<vmem>>, vector<32x256xf32>,
    %c0_21 = arith.constant 0 : index
    %c0_22 = arith.constant 0 : index
    %c0_23 = arith.constant 0 : index
    %24 = vector.load %arg9[%c0_21, %c0_22, %c0_23] : memref<9x32x384xf32, #tpu.memory_space<vmem>>, vector<1x32x384xf32>
    %25 = vector.shape_cast %24 : vector<1x32x384xf32> to vector<32x384xf32>
    %c1 = arith.constant 1 : index
    %c0_24 = arith.constant 0 : index
    %c0_25 = arith.constant 0 : index
    %26 = vector.load %arg9[%c1, %c0_24, %c0_25] : memref<9x32x384xf32, #tpu.memory_space<vmem>>, vector<1x32x384xf32>
    %27 = vector.shape_cast %26 : vector<1x32x384xf32> to vector<32x384xf32>
    %28 = arith.maximumf %25, %27 : vector<32x384xf32>
    %c2 = arith.constant 2 : index
    %c0_26 = arith.constant 0 : index
    %c0_27 = arith.constant 0 : index
    %29 = vector.load %arg9[%c2, %c0_26, %c0_27] : memref<9x32x384xf32, #tpu.memory_space<vmem>>, vector<1x32x384xf32>
    %30 = vector.shape_cast %29 : vector<1x32x384xf32> to vector<32x384xf32>
    %31 = arith.maximumf %28, %30 : vector<32x384xf32>
    %c3 = arith.constant 3 : index
    %c0_28 = arith.constant 0 : index
    %c0_29 = arith.constant 0 : index
    %32 = vector.load %arg9[%c3, %c0_28, %c0_29] : memref<9x32x384xf32, #tpu.memory_space<vmem>>, vector<1x32x384xf32>
    %33 = vector.shape_cast %32 : vector<1x32x384xf32> to vector<32x384xf32>
    %34 = arith.maximumf %31, %33 : vector<32x384xf32>
    %c4 = arith.constant 4 : index
    %c0_30 = arith.constant 0 : index
    %c0_31 = arith.constant 0 : index
    %35 = vector.load %arg9[%c4, %c0_30, %c0_31] : memref<9x32x384xf32, #tpu.memory_space<vmem>>, vector<1x32x384xf32>
    %36 = vector.shape_cast %35 : vector<1x32x384xf32> to vector<32x384xf32>
    %37 = arith.maximumf %34, %36 : vector<32x384xf32>
    %c5 = arith.constant 5 : index
    %c0_32 = arith.constant 0 : index
    %c0_33 = arith.constant 0 : index
    %38 = vector.load %arg9[%c5, %c0_32, %c0_33] : memref<9x32x384xf32, #tpu.memory_space<vmem>>, vector<1x32x384xf32>
    %39 = vector.shape_cast %38 : vector<1x32x384xf32> to vector<32x384xf32>
    %40 = arith.maximumf %37, %39 : vector<32x384xf32>
    %c6 = arith.constant 6 : index
    %c0_34 = arith.constant 0 : index
    %c0_35 = arith.constant 0 : index
    %41 = vector.load %arg9[%c6, %c0_34, %c0_35] : memref<9x32x384xf32, #tpu.memory_space<vmem>>, vector<1x32x384xf32>
    %42 = vector.shape_cast %41 : vector<1x32x384xf32> to vector<32x384xf32>
    %43 = arith.maximumf %40, %42 : vector<32x384xf32>
    %c7 = arith.constant 7 : index
    %c0_36 = arith.constant 0 : index
    %c0_37 = arith.constant 0 : index
    %44 = vector.load %arg9[%c7, %c0_36, %c0_37] : memref<9x32x384xf32, #tpu.memory_space<vmem>>, vector<1x32x384xf32>
    %45 = vector.shape_cast %44 : vector<1x32x384xf32> to vector<32x384xf32>
    %46 = arith.maximumf %43, %45 : vector<32x384xf32>
    %c8 = arith.constant 8 : index
    %c0_38 = arith.constant 0 : index
    %c0_39 = arith.constant 0 : index
    %47 = vector.load %arg9[%c8, %c0_38, %c0_39] : memref<9x32x384xf32, #tpu.memory_space<vmem>>, vector<1x32x384xf32>
    %48 = vector.shape_cast %47 : vector<1x32x384xf32> to vector<32x384xf32>
    %49 = arith.maximumf %46, %48 : vector<32x384xf32>
    %c0_40 = arith.constant 0 : index
    %c640 = arith.constant 640 : index
    %50 = vector.load %arg10[%c0_40, %c640] : memref<32x1024xf32, #tpu.memory_space<vmem>>, vector<32x384xf32>
    tpu.vector_store %arg10[%c0_40, %c640], %49 {strides = array<i32>} : memref<32x1024xf32, #tpu.memory_space<vmem>>, vector<32x384xf32>,
    return
  }
  func.func @transform_0(%arg0: i32) -> (i32, i32) {
    %c0_i32 = arith.constant 0 : i32
    %c0_i32_0 = arith.constant 0 : i32
    return %arg0, %c0_i32 : i32, i32
  }
  func.func @transform_1(%arg0: i32) -> (i32, i32) {
    %c0_i32 = arith.constant 0 : i32
    %c0_i32_0 = arith.constant 0 : i32
    %c0_i32_1 = arith.constant 0 : i32
    return %c0_i32, %c0_i32_0 : i32, i32
  }
  func.func @transform_2(%arg0: i32) -> (i32, i32) {
    %c0_i32 = arith.constant 0 : i32
    %c0_i32_0 = arith.constant 0 : i32
    %c0_i32_1 = arith.constant 0 : i32
    return %c0_i32, %c0_i32_0 : i32, i32
  }
  func.func @transform_3(%arg0: i32) -> (i32, i32) {
    %c0_i32 = arith.constant 0 : i32
    %c0_i32_0 = arith.constant 0 : i32
    %c0_i32_1 = arith.constant 0 : i32
    return %c0_i32, %c0_i32_0 : i32, i32
  }
  func.func @transform_4(%arg0: i32) -> (i32, i32) {
    %c0_i32 = arith.constant 0 : i32
    %c0_i32_0 = arith.constant 0 : i32
    return %arg0, %c0_i32 : i32, i32
  }
  func.func @transform_5(%arg0: i32) -> (i32, i32) {
    %c0_i32 = arith.constant 0 : i32
    %c0_i32_0 = arith.constant 0 : i32
    %c0_i32_1 = arith.constant 0 : i32
    return %c0_i32, %c0_i32_0 : i32, i32
  }
  func.func @transform_6(%arg0: i32) -> (i32, i32) {
    %c0_i32 = arith.constant 0 : i32
    %c0_i32_0 = arith.constant 0 : i32
    %c0_i32_1 = arith.constant 0 : i32
    return %c0_i32, %c0_i32_0 : i32, i32
  }
  func.func @transform_7(%arg0: i32) -> (i32, i32) {
    %c0_i32 = arith.constant 0 : i32
    %c0_i32_0 = arith.constant 0 : i32
    %c0_i32_1 = arith.constant 0 : i32
    return %c0_i32, %c0_i32_0 : i32, i32
  }
  func.func @transform_8(%arg0: i32) -> (i32, i32, i32) {
    %c0_i32 = arith.constant 0 : i32
    %c0_i32_0 = arith.constant 0 : i32
    %c0_i32_1 = arith.constant 0 : i32
    return %c0_i32, %arg0, %c0_i32_0 : i32, i32, i32
  }
  func.func @transform_9(%arg0: i32) -> (i32, i32) {
    %c0_i32 = arith.constant 0 : i32
    %c0_i32_0 = arith.constant 0 : i32
    return %arg0, %c0_i32 : i32, i32
  }
}

</mosaic_0001>

<llo_original>
// kernel: reduction_a_forward.3
$region0: #{reduction_a_forward.3}
  #allocation0 [shape = 'u32[]', space=smem, size = 0x4, offset = 0x4, fixed_abs, tag = 'smem constant byte address 0x4 - core index']
  #allocation1 [shape = 'u32[144,128]{1,0:T(1,128)}', space=vmem, size = 0x12000, scoped, tag = 'internal scratch']
  %s0 = inlined_call_operand.vmem [shape: bf16[168,384], index: 0, kind: input, shape index: {}]
  %s1 = inlined_call_operand.vmem [shape: bf16[384,192], index: 1, kind: input, shape index: {}]
  %s2 = inlined_call_operand.hbm [shape: f32[1,192], index: 2, kind: input, shape index: {}]
  %s3 = inlined_call_operand.hbm [shape: f32[1,192], index: 3, kind: input, shape index: {}]
  %s4 = inlined_call_operand.vmem [shape: bf16[168,192], index: 4, kind: output, shape index: {}]
  %s5 = sld [smem:[#allocation0]]
  $region34: #{reduction_a_forward.3} parent=0
    _
  %s7 = ssub.s32 1, %s5
  %s8 = scalar_select 0, %s7, %s5
  $region1: #{reduction_a_forward.3} parent=0
    #allocation2 [shape = 'u8[1024]{0}', space=vmem, size = 0x400, scoped, tag = 'input window, operand 2, single buffered']
    #allocation3 [shape = 's32[1]{0}', space=sflag, size = 0x4, scoped, tag = 'scoped memory for reduction_a_forward.3']
    #allocation4 [shape = 'u8[1024]{0}', space=vmem, size = 0x400, scoped, tag = 'input window, operand 3, single buffered']
    #allocation5 [shape = 's32[1]{0}', space=sflag, size = 0x4, scoped, tag = 'scoped memory for reduction_a_forward.3']
    %9 = vsyncpa [#allocation3], 0
    %10 = vsyncpa [#allocation5], 0
    // Predicated region
    $region2: #{reduction_a_forward.3} parent=1 // pred_check
      _
    $region3: #{reduction_a_forward.3} parent=1 // pred_check_branch
      %12 = sbr.rel (0) target = $region5
    $region4: #{reduction_a_forward.3} parent=1 // pred_region
      _
    $region5: #{reduction_a_forward.3} parent=1 // pred_fallthru
      _
    // Predicated region
    $region6: #{reduction_a_forward.3} parent=1 // pred_check
      _
    $region7: #{reduction_a_forward.3} parent=1 // pred_check_branch
      %14 = sbr.rel (0) target = $region9
    $region8: #{reduction_a_forward.3} parent=1 // pred_region
      _
    $region9: #{reduction_a_forward.3} parent=1 // pred_fallthru
      _
    // Predicated region
    $region10: #{reduction_a_forward.3} parent=1 // pred_check
      _
    $region11: #{reduction_a_forward.3} parent=1 // pred_check_branch
      %16 = sbr.rel (0) target = $region13
    $region12: #{reduction_a_forward.3} parent=1 // pred_region
      %s18 = ssub.s32 32, 32
      %19 = vsyncadd [#allocation3], %s18
      %s21 = sshll.u32 [#allocation2], 4
      %s22 = int_to_ptr.vmem [resolvable:$true] %s21
      %24 = dma.hbm_to_vmem [thread:$0]  %s2, 32, %s22, [#allocation3]
    $region13: #{reduction_a_forward.3} parent=1 // pred_fallthru
      _
    // Predicated region
    $region14: #{reduction_a_forward.3} parent=1 // pred_check
      _
    $region15: #{reduction_a_forward.3} parent=1 // pred_check_branch
      %26 = sbr.rel (0) target = $region17
    $region16: #{reduction_a_forward.3} parent=1 // pred_region
      %s28 = ssub.s32 32, 32
      %29 = vsyncadd [#allocation5], %s28
      %s31 = sshll.u32 [#allocation4], 4
      %s32 = int_to_ptr.vmem [resolvable:$true] %s31
      %34 = dma.hbm_to_vmem [thread:$0]  %s3, 32, %s32, [#allocation5]
    $region17: #{reduction_a_forward.3} parent=1 // pred_fallthru
      _
    // Predicated region
    $region18: #{reduction_a_forward.3} parent=1 // pred_check
      _
    $region19: #{reduction_a_forward.3} parent=1 // pred_check_branch
      %36 = sbr.rel (0) target = $region21
    $region20: #{reduction_a_forward.3} parent=1 // pred_region
      %37 = dma.done [#allocation3], 32
    $region21: #{reduction_a_forward.3} parent=1 // pred_fallthru
      _
    // Predicated region
    $region22: #{reduction_a_forward.3} parent=1 // pred_check
      _
    $region23: #{reduction_a_forward.3} parent=1 // pred_check_branch
      %39 = sbr.rel (0) target = $region25
    $region24: #{reduction_a_forward.3} parent=1 // pred_region
      %40 = dma.done [#allocation5], 32
    $region25: #{reduction_a_forward.3} parent=1 // pred_fallthru
      _
    %v42 = vld [vmem:[%s0] sm:$0xff]
    %v43 = vld [vmem:[%s0 + $0x8] sm:$0xf]
    %v44 = vld [vmem:[%s0 + $0xc] sm:$0xff]
    %v45 = vld [vmem:[%s0 + $0x14] sm:$0xf]
    %v46 = vld [vmem:[%s0 + $0x18] sm:$0xff]
    %v47 = vld [vmem:[%s0 + $0x20] sm:$0xf]
    %v48 = vld [vmem:[%s0 + $0x24] sm:$0xff]
    %v49 = vld [vmem:[%s0 + $0x2c] sm:$0xf]
    %v50 = vld [vmem:[%s0 + $0x30] sm:$0xff]
    %v51 = vld [vmem:[%s0 + $0x38] sm:$0xf]
    %v52 = vld [vmem:[%s0 + $0x3c] sm:$0xff]
    %v53 = vld [vmem:[%s0 + $0x44] sm:$0xf]
    %v54 = vld [vmem:[%s0 + $0x48] sm:$0xff]
    %v55 = vld [vmem:[%s0 + $0x50] sm:$0xf]
    %v56 = vld [vmem:[%s0 + $0x54] sm:$0xff]
    %v57 = vld [vmem:[%s0 + $0x5c] sm:$0xf]
    %v58 = vld [vmem:[%s0 + $0x60] sm:$0xff]
    %v59 = vld [vmem:[%s0 + $0x68] sm:$0xf]
    %v60 = vld [vmem:[%s0 + $0x6c] sm:$0xff]
    %v61 = vld [vmem:[%s0 + $0x74] sm:$0xf]
    %v62 = vld [vmem:[%s0 + $0x78] sm:$0xff]
    %v63 = vld [vmem:[%s0 + $0x80] sm:$0xf]
    %v64 = vld [vmem:[%s0 + $0x84] sm:$0xff]
    %v65 = vld [vmem:[%s0 + $0x8c] sm:$0xf]
    %v66 = vld [vmem:[%s0 + $0x90] sm:$0xff]
    %v67 = vld [vmem:[%s0 + $0x98] sm:$0xf]
    %v68 = vld [vmem:[%s0 + $0x9c] sm:$0xff]
    %v69 = vld [vmem:[%s0 + $0xa4] sm:$0xf]
    %v70 = vld [vmem:[%s0 + $0xa8] sm:$0xff]
    %v71 = vld [vmem:[%s0 + $0xb0] sm:$0xf]
    %v72 = vld [vmem:[%s0 + $0xb4] sm:$0xff]
    %v73 = vld [vmem:[%s0 + $0xbc] sm:$0xf]
    %v74 = vld [vmem:[%s0 + $0xc0] sm:$0xff]
    %v75 = vld [vmem:[%s0 + $0xc8] sm:$0xf]
    %v76 = vld [vmem:[%s0 + $0xcc] sm:$0xff]
    %v77 = vld [vmem:[%s0 + $0xd4] sm:$0xf]
    %v78 = vld [vmem:[%s0 + $0xd8] sm:$0xff]
    %v79 = vld [vmem:[%s0 + $0xe0] sm:$0xf]
    %v80 = vld [vmem:[%s0 + $0xe4] sm:$0xff]
    %v81 = vld [vmem:[%s0 + $0xec] sm:$0xf]
    %v82 = vld [vmem:[%s0 + $0xf0] sm:$0xff]
    %v83 = vld [vmem:[%s0 + $0xf8] sm:$0xf]
    %v84 = vld [vmem:[%s1] sm:$0xff]
    %v85 = vld [vmem:[%s1 + $0x8] sm:$0xff]
    %v86 = vld [vmem:[%s1 + $0x10] sm:$0xff]
    %v87 = vld [vmem:[%s1 + $0x18] sm:$0xff]
    %v88 = vld [vmem:[%s1 + $0x20] sm:$0xff]
    %v89 = vld [vmem:[%s1 + $0x28] sm:$0xff]
    %v90 = vld [vmem:[%s1 + $0x30] sm:$0xff]
    %v91 = vld [vmem:[%s1 + $0x38] sm:$0xff]
    %v92 = vld [vmem:[%s1 + $0x40] sm:$0xff]
    %v93 = vld [vmem:[%s1 + $0x48] sm:$0xff]
    %v94 = vld [vmem:[%s1 + $0x50] sm:$0xff]
    %v95 = vld [vmem:[%s1 + $0x58] sm:$0xff]
    %v96 = vld [vmem:[%s1 + $0x60] sm:$0xff]
    %v97 = vld [vmem:[%s1 + $0x68] sm:$0xff]
    %v98 = vld [vmem:[%s1 + $0x70] sm:$0xff]
    %v99 = vld [vmem:[%s1 + $0x78] sm:$0xff]
    %v100 = vld [vmem:[%s1 + $0x80] sm:$0xff]
    %v101 = vld [vmem:[%s1 + $0x88] sm:$0xff]
    %v102 = vld [vmem:[%s1 + $0x90] sm:$0xff]
    %v103 = vld [vmem:[%s1 + $0x98] sm:$0xff]
    %v104 = vld [vmem:[%s1 + $0xa0] sm:$0xff]
    %v105 = vld [vmem:[%s1 + $0xa8] sm:$0xff]
    %v106 = vld [vmem:[%s1 + $0xb0] sm:$0xff]
    %v107 = vld [vmem:[%s1 + $0xb8] sm:$0xff]
    %v108 = vld [vmem:[%s1 + $0xc0] sm:$0xff]
    %v109 = vld [vmem:[%s1 + $0xc8] sm:$0xff]
    %v110 = vld [vmem:[%s1 + $0xd0] sm:$0xff]
    %v111 = vld [vmem:[%s1 + $0xd8] sm:$0xff]
    %v112 = vld [vmem:[%s1 + $0xe0] sm:$0xff]
    %v113 = vld [vmem:[%s1 + $0xe8] sm:$0xff]
    %v114 = vld [vmem:[%s1 + $0xf0] sm:$0xff]
    %v115 = vld [vmem:[%s1 + $0xf8] sm:$0xff]
    %v116 = vld [vmem:[%s1 + $0x100] sm:$0xff]
    %v117 = vld [vmem:[%s1 + $0x108] sm:$0xff]
    %v118 = vld [vmem:[%s1 + $0x110] sm:$0xff]
    %v119 = vld [vmem:[%s1 + $0x118] sm:$0xff]
    %v120 = vld [vmem:[%s1 + $0x120] sm:$0xff]
    %v121 = vld [vmem:[%s1 + $0x128] sm:$0xff]
    %v122 = vld [vmem:[%s1 + $0x130] sm:$0xff]
    %v123 = vld [vmem:[%s1 + $0x138] sm:$0xff]
    %v124 = vld [vmem:[%s1 + $0x140] sm:$0xff]
    %v125 = vld [vmem:[%s1 + $0x148] sm:$0xff]
    %v126 = vld [vmem:[%s1 + $0x150] sm:$0xff]
    %v127 = vld [vmem:[%s1 + $0x158] sm:$0xff]
    %v128 = vld [vmem:[%s1 + $0x160] sm:$0xff]
    %v129 = vld [vmem:[%s1 + $0x168] sm:$0xff]
    %v130 = vld [vmem:[%s1 + $0x170] sm:$0xff]
    %v131 = vld [vmem:[%s1 + $0x178] sm:$0xff]
    %v174 = vunpack.c.l.b16 %v42
    %v175 = vunpack.c.h.b16 %v42
    %v176 = vunpack.c.l.b16 %v43
    %v177 = vunpack.c.l.b16 %v44
    %v178 = vunpack.c.h.b16 %v44
    %v179 = vunpack.c.l.b16 %v45
    %v180 = vunpack.c.l.b16 %v46
    %v181 = vunpack.c.h.b16 %v46
    %v182 = vunpack.c.l.b16 %v47
    %v183 = vunpack.c.l.b16 %v48
    %v184 = vunpack.c.h.b16 %v48
    %v185 = vunpack.c.l.b16 %v49
    %v186 = vunpack.c.l.b16 %v50
    %v187 = vunpack.c.h.b16 %v50
    %v188 = vunpack.c.l.b16 %v51
    %v189 = vunpack.c.l.b16 %v52
    %v190 = vunpack.c.h.b16 %v52
    %v191 = vunpack.c.l.b16 %v53
    %v192 = vunpack.c.l.b16 %v54
    %v193 = vunpack.c.h.b16 %v54
    %v194 = vunpack.c.l.b16 %v55
    %v195 = vunpack.c.l.b16 %v56
    %v196 = vunpack.c.h.b16 %v56
    %v197 = vunpack.c.l.b16 %v57
    %v198 = vunpack.c.l.b16 %v58
    %v199 = vunpack.c.h.b16 %v58
    %v200 = vunpack.c.l.b16 %v59
    %v201 = vunpack.c.l.b16 %v60
    %v202 = vunpack.c.h.b16 %v60
    %v203 = vunpack.c.l.b16 %v61
    %v204 = vunpack.c.l.b16 %v62
    %v205 = vunpack.c.h.b16 %v62
    %v206 = vunpack.c.l.b16 %v63
    %v207 = vunpack.c.l.b16 %v64
    %v208 = vunpack.c.h.b16 %v64
    %v209 = vunpack.c.l.b16 %v65
    %v210 = vunpack.c.l.b16 %v66
    %v211 = vunpack.c.h.b16 %v66
    %v212 = vunpack.c.l.b16 %v67
    %v213 = vunpack.c.l.b16 %v68
    %v214 = vunpack.c.h.b16 %v68
    %v215 = vunpack.c.l.b16 %v69
    %v216 = vunpack.c.l.b16 %v70
    %v217 = vunpack.c.h.b16 %v70
    %v218 = vunpack.c.l.b16 %v71
    %v219 = vunpack.c.l.b16 %v72
    %v220 = vunpack.c.h.b16 %v72
    %v221 = vunpack.c.l.b16 %v73
    %v222 = vunpack.c.l.b16 %v74
    %v223 = vunpack.c.h.b16 %v74
    %v224 = vunpack.c.l.b16 %v75
    %v225 = vunpack.c.l.b16 %v76
    %v226 = vunpack.c.h.b16 %v76
    %v227 = vunpack.c.l.b16 %v77
    %v228 = vunpack.c.l.b16 %v78
    %v229 = vunpack.c.h.b16 %v78
    %v230 = vunpack.c.l.b16 %v79
    %v231 = vunpack.c.l.b16 %v80
    %v232 = vunpack.c.h.b16 %v80
    %v233 = vunpack.c.l.b16 %v81
    %v234 = vunpack.c.l.b16 %v82
    %v235 = vunpack.c.h.b16 %v82
    %v236 = vunpack.c.l.b16 %v83
    %v237 = vpack.c.b16 %v177, %v174
    %v238 = vpack.c.b16 %v178, %v175
    %v239 = vpack.c.b16 %v179, %v176
    %v240 = vpack.c.b16 %v183, %v180
    %v241 = vpack.c.b16 %v184, %v181
    %v242 = vpack.c.b16 %v185, %v182
    %v243 = vpack.c.b16 %v189, %v186
    %v244 = vpack.c.b16 %v190, %v187
    %v245 = vpack.c.b16 %v191, %v188
    %v246 = vpack.c.b16 %v195, %v192
    %v247 = vpack.c.b16 %v196, %v193
    %v248 = vpack.c.b16 %v197, %v194
    %v249 = vpack.c.b16 %v201, %v198
    %v250 = vpack.c.b16 %v202, %v199
    %v251 = vpack.c.b16 %v203, %v200
    %v252 = vpack.c.b16 %v207, %v204
    %v253 = vpack.c.b16 %v208, %v205
    %v254 = vpack.c.b16 %v209, %v206
    %v255 = vpack.c.b16 %v213, %v210
    %v256 = vpack.c.b16 %v214, %v211
    %v257 = vpack.c.b16 %v215, %v212
    %v258 = vpack.c.b16 %v219, %v216
    %v259 = vpack.c.b16 %v220, %v217
    %v260 = vpack.c.b16 %v221, %v218
    %v261 = vpack.c.b16 %v225, %v222
    %v262 = vpack.c.b16 %v226, %v223
    %v263 = vpack.c.b16 %v227, %v224
    %v264 = vpack.c.b16 %v231, %v228
    %v265 = vpack.c.b16 %v232, %v229
    %v266 = vpack.c.b16 %v233, %v230
    %v267 = vpack.c.b16 %v234, %v234
    %v268 = vpack.c.b16 %v235, %v235
    %v269 = vpack.c.b16 %v236, %v236
    %v351 = vunpack.c.l.b16 %v84
    %v352 = vunpack.c.h.b16 %v84
    %v353 = vunpack.c.l.b16 %v85
    %v354 = vunpack.c.h.b16 %v85
    %v355 = vunpack.c.l.b16 %v86
    %v356 = vunpack.c.h.b16 %v86
    %v357 = vunpack.c.l.b16 %v87
    %v358 = vunpack.c.h.b16 %v87
    %v359 = vunpack.c.l.b16 %v88
    %v360 = vunpack.c.h.b16 %v88
    %v361 = vunpack.c.l.b16 %v89
    %v362 = vunpack.c.h.b16 %v89
    %v363 = vunpack.c.l.b16 %v90
    %v364 = vunpack.c.h.b16 %v90
    %v365 = vunpack.c.l.b16 %v91
    %v366 = vunpack.c.h.b16 %v91
    %v367 = vunpack.c.l.b16 %v92
    %v368 = vunpack.c.h.b16 %v92
    %v369 = vunpack.c.l.b16 %v93
    %v370 = vunpack.c.h.b16 %v93
    %v371 = vunpack.c.l.b16 %v94
    %v372 = vunpack.c.h.b16 %v94
    %v373 = vunpack.c.l.b16 %v95
    %v374 = vunpack.c.h.b16 %v95
    %v375 = vunpack.c.l.b16 %v96
    %v376 = vunpack.c.h.b16 %v96
    %v377 = vunpack.c.l.b16 %v97
    %v378 = vunpack.c.h.b16 %v97
    %v379 = vunpack.c.l.b16 %v98
    %v380 = vunpack.c.h.b16 %v98
    %v381 = vunpack.c.l.b16 %v99
    %v382 = vunpack.c.h.b16 %v99
    %v383 = vunpack.c.l.b16 %v100
    %v384 = vunpack.c.h.b16 %v100
    %v385 = vunpack.c.l.b16 %v101
    %v386 = vunpack.c.h.b16 %v101
    %v387 = vunpack.c.l.b16 %v102
    %v388 = vunpack.c.h.b16 %v102
    %v389 = vunpack.c.l.b16 %v103
    %v390 = vunpack.c.h.b16 %v103
    %v391 = vunpack.c.l.b16 %v104
    %v392 = vunpack.c.h.b16 %v104
    %v393 = vunpack.c.l.b16 %v105
    %v394 = vunpack.c.h.b16 %v105
    %v395 = vunpack.c.l.b16 %v106
    %v396 = vunpack.c.h.b16 %v106
    %v397 = vunpack.c.l.b16 %v107
    %v398 = vunpack.c.h.b16 %v107
    %v399 = vunpack.c.l.b16 %v108
    %v400 = vunpack.c.h.b16 %v108
    %v401 = vunpack.c.l.b16 %v109
    %v402 = vunpack.c.h.b16 %v109
    %v403 = vunpack.c.l.b16 %v110
    %v404 = vunpack.c.h.b16 %v110
    %v405 = vunpack.c.l.b16 %v111
    %v406 = vunpack.c.h.b16 %v111
    %v407 = vunpack.c.l.b16 %v112
    %v408 = vunpack.c.h.b16 %v112
    %v409 = vunpack.c.l.b16 %v113
    %v410 = vunpack.c.h.b16 %v113
    %v411 = vunpack.c.l.b16 %v114
    %v412 = vunpack.c.h.b16 %v114
    %v413 = vunpack.c.l.b16 %v115
    %v414 = vunpack.c.h.b16 %v115
    %v415 = vunpack.c.l.b16 %v116
    %v416 = vunpack.c.h.b16 %v116
    %v417 = vunpack.c.l.b16 %v117
    %v418 = vunpack.c.h.b16 %v117
    %v419 = vunpack.c.l.b16 %v118
    %v420 = vunpack.c.h.b16 %v118
    %v421 = vunpack.c.l.b16 %v119
    %v422 = vunpack.c.h.b16 %v119
    %v423 = vunpack.c.l.b16 %v120
    %v424 = vunpack.c.h.b16 %v120
    %v425 = vunpack.c.l.b16 %v121
    %v426 = vunpack.c.h.b16 %v121
    %v427 = vunpack.c.l.b16 %v122
    %v428 = vunpack.c.h.b16 %v122
    %v429 = vunpack.c.l.b16 %v123
    %v430 = vunpack.c.h.b16 %v123
    %v431 = vunpack.c.l.b16 %v124
    %v432 = vunpack.c.h.b16 %v124
    %v433 = vunpack.c.l.b16 %v125
    %v434 = vunpack.c.h.b16 %v125
    %v435 = vunpack.c.l.b16 %v126
    %v436 = vunpack.c.h.b16 %v126
    %v437 = vunpack.c.l.b16 %v127
    %v438 = vunpack.c.h.b16 %v127
    %v439 = vunpack.c.l.b16 %v128
    %v440 = vunpack.c.h.b16 %v128
    %v441 = vunpack.c.l.b16 %v129
    %v442 = vunpack.c.h.b16 %v129
    %v443 = vunpack.c.l.b16 %v130
    %v444 = vunpack.c.h.b16 %v130
    %v445 = vunpack.c.l.b16 %v131
    %v446 = vunpack.c.h.b16 %v131
    %v447 = vpack.c.b16 %v353, %v351
    %v448 = vpack.c.b16 %v354, %v352
    %v449 = vpack.c.b16 %v357, %v355
    %v450 = vpack.c.b16 %v358, %v356
    %v451 = vpack.c.b16 %v361, %v359
    %v452 = vpack.c.b16 %v362, %v360
    %v453 = vpack.c.b16 %v365, %v363
    %v454 = vpack.c.b16 %v366, %v364
    %v455 = vpack.c.b16 %v369, %v367
    %v456 = vpack.c.b16 %v370, %v368
    %v457 = vpack.c.b16 %v373, %v371
    %v458 = vpack.c.b16 %v374, %v372
    %v459 = vpack.c.b16 %v377, %v375
    %v460 = vpack.c.b16 %v378, %v376
    %v461 = vpack.c.b16 %v381, %v379
    %v462 = vpack.c.b16 %v382, %v380
    %v463 = vpack.c.b16 %v385, %v383
    %v464 = vpack.c.b16 %v386, %v384
    %v465 = vpack.c.b16 %v389, %v387
    %v466 = vpack.c.b16 %v390, %v388
    %v467 = vpack.c.b16 %v393, %v391
    %v468 = vpack.c.b16 %v394, %v392
    %v469 = vpack.c.b16 %v397, %v395
    %v470 = vpack.c.b16 %v398, %v396
    %v471 = vpack.c.b16 %v401, %v399
    %v472 = vpack.c.b16 %v402, %v400
    %v473 = vpack.c.b16 %v405, %v403
    %v474 = vpack.c.b16 %v406, %v404
    %v475 = vpack.c.b16 %v409, %v407
    %v476 = vpack.c.b16 %v410, %v408
    %v477 = vpack.c.b16 %v413, %v411
    %v478 = vpack.c.b16 %v414, %v412
    %v479 = vpack.c.b16 %v417, %v415
    %v480 = vpack.c.b16 %v418, %v416
    %v481 = vpack.c.b16 %v421, %v419
    %v482 = vpack.c.b16 %v422, %v420
    %v483 = vpack.c.b16 %v425, %v423
    %v484 = vpack.c.b16 %v426, %v424
    %v485 = vpack.c.b16 %v429, %v427
    %v486 = vpack.c.b16 %v430, %v428
    %v487 = vpack.c.b16 %v433, %v431
    %v488 = vpack.c.b16 %v434, %v432
    %v489 = vpack.c.b16 %v437, %v435
    %v490 = vpack.c.b16 %v438, %v436
    %v491 = vpack.c.b16 %v441, %v439
    %v492 = vpack.c.b16 %v442, %v440
    %v493 = vpack.c.b16 %v445, %v443
    %v494 = vpack.c.b16 %v446, %v444
    %543 = vmatprep.subr.bf16.mxu0 %v448
    %544 = vmatpush1.bf16.msra.mxu0 %v447
    %545 = vmatprep.subr.bf16.mxu0 %v450
    %546 = vmatpush1.bf16.msra.mxu0 %v449
    %547 = vmatprep.subr.bf16.mxu0 %v452
    %548 = vmatpush1.bf16.msra.mxu0 %v451
    %549 = vmatprep.subr.bf16.mxu0 %v454
    %550 = vmatpush1.bf16.msra.mxu0 %v453
    %551 = vmatprep.subr.bf16.mxu0 %v456
    %552 = vmatpush1.bf16.msra.mxu0 %v455
    %553 = vmatprep.subr.bf16.mxu0 %v458
    %554 = vmatpush1.bf16.msra.mxu0 %v457
    %555 = vmatprep.subr.bf16.mxu0 %v460
    %556 = vmatpush1.bf16.msra.mxu0 %v459
    %557 = vmatprep.subr.bf16.mxu0 %v462
    %558 = vmatpush1.bf16.msra.mxu0 %v461
    %559 = vmatprep.subr.bf16.mxu0 %v464
    %560 = vmatpush1.bf16.msra.mxu0 %v463
    %561 = vmatprep.subr.bf16.mxu0 %v466
    %562 = vmatpush1.bf16.msra.mxu0 %v465
    %563 = vmatprep.subr.bf16.mxu0 %v468
    %564 = vmatpush1.bf16.msra.mxu0 %v467
    %565 = vmatprep.subr.bf16.mxu0 %v470
    %566 = vmatpush1.bf16.msra.mxu0 %v469
    %567 = vmatprep.subr.bf16.mxu0 %v472
    %568 = vmatpush1.bf16.msra.mxu0 %v471
    %569 = vmatprep.subr.bf16.mxu0 %v474
    %570 = vmatpush1.bf16.msra.mxu0 %v473
    %571 = vmatprep.subr.bf16.mxu0 %v476
    %572 = vmatpush1.bf16.msra.mxu0 %v475
    %573 = vmatprep.subr.bf16.mxu0 %v478
    %574 = vmatpush1.bf16.msra.mxu0 %v477
    %575 = vmatprep.mubr.bf16.mxu0 %v238
    %576 = vmatmul.mubr.bf16.gmra.mrb[0].mxu0 %v237
    %v577 = vpop.f32.mrb[0].mxu0
    %v578 = vadd.f32 0.0, %v577
    %v579 = vpop.f32.mrb[0].mxu0
    %v580 = vadd.f32 0.0, %v579
    %v581 = vpop.f32.mrb[0].mxu0
    %v582 = vadd.f32 0.0, %v581
    %v583 = vpop.f32.mrb[0].mxu0
    %v584 = vadd.f32 0.0, %v583
    %585 = vmatprep.mubr.bf16.mxu0 %v241
    %586 = vmatmul.mubr.bf16.gmra.mrb[0].mxu0 %v240
    %v587 = vpop.f32.mrb[0].mxu0
    %v588 = vadd.f32 0.0, %v587
    %v589 = vpop.f32.mrb[0].mxu0
    %v590 = vadd.f32 0.0, %v589
    %v591 = vpop.f32.mrb[0].mxu0
    %v592 = vadd.f32 0.0, %v591
    %v593 = vpop.f32.mrb[0].mxu0
    %v594 = vadd.f32 0.0, %v593
    %595 = vmatprep.mubr.bf16.mxu0 %v244
    %596 = vmatmul.mubr.bf16.gmra.mrb[0].mxu0 %v243
    %v597 = vpop.f32.mrb[0].mxu0
    %v598 = vadd.f32 0.0, %v597
    %v599 = vpop.f32.mrb[0].mxu0
    %v600 = vadd.f32 0.0, %v599
    %v601 = vpop.f32.mrb[0].mxu0
    %v602 = vadd.f32 0.0, %v601
    %v603 = vpop.f32.mrb[0].mxu0
    %v604 = vadd.f32 0.0, %v603
    %605 = vmatprep.mubr.bf16.mxu0 %v247
    %606 = vmatmul.mubr.bf16.gmra.mrb[0].mxu0 %v246
    %v607 = vpop.f32.mrb[0].mxu0
    %v608 = vadd.f32 0.0, %v607
    %v609 = vpop.f32.mrb[0].mxu0
    %v610 = vadd.f32 0.0, %v609
    %v611 = vpop.f32.mrb[0].mxu0
    %v612 = vadd.f32 0.0, %v611
    %v613 = vpop.f32.mrb[0].mxu0
    %v614 = vadd.f32 0.0, %v613
    %615 = vmatprep.mubr.bf16.mxu0 %v250
    %616 = vmatmul.mubr.bf16.gmra.mrb[0].mxu0 %v249
    %v617 = vpop.f32.mrb[0].mxu0
    %v618 = vadd.f32 0.0, %v617
    %v619 = vpop.f32.mrb[0].mxu0
    %v620 = vadd.f32 0.0, %v619
    %v621 = vpop.f32.mrb[0].mxu0
    %v622 = vadd.f32 0.0, %v621
    %v623 = vpop.f32.mrb[0].mxu0
    %v624 = vadd.f32 0.0, %v623
    %625 = vmatprep.mubr.bf16.mxu0 %v253
    %626 = vmatmul.mubr.bf16.gmra.mrb[0].mxu0 %v252
    %v627 = vpop.f32.mrb[0].mxu0
    %v628 = vadd.f32 0.0, %v627
    %v629 = vpop.f32.mrb[0].mxu0
    %v630 = vadd.f32 0.0, %v629
    %v631 = vpop.f32.mrb[0].mxu0
    %v632 = vadd.f32 0.0, %v631
    %v633 = vpop.f32.mrb[0].mxu0
    %v634 = vadd.f32 0.0, %v633
    %635 = vmatprep.mubr.bf16.mxu0 %v256
    %636 = vmatmul.mubr.bf16.gmra.mrb[0].mxu0 %v255
    %v637 = vpop.f32.mrb[0].mxu0
    %v638 = vadd.f32 0.0, %v637
    %v639 = vpop.f32.mrb[0].mxu0
    %v640 = vadd.f32 0.0, %v639
    %v641 = vpop.f32.mrb[0].mxu0
    %v642 = vadd.f32 0.0, %v641
    %v643 = vpop.f32.mrb[0].mxu0
    %v644 = vadd.f32 0.0, %v643
    %645 = vmatprep.mubr.bf16.mxu0 %v259
    %646 = vmatmul.mubr.bf16.gmra.mrb[0].mxu0 %v258
    %v647 = vpop.f32.mrb[0].mxu0
    %v648 = vadd.f32 0.0, %v647
    %v649 = vpop.f32.mrb[0].mxu0
    %v650 = vadd.f32 0.0, %v649
    %v651 = vpop.f32.mrb[0].mxu0
    %v652 = vadd.f32 0.0, %v651
    %v653 = vpop.f32.mrb[0].mxu0
    %v654 = vadd.f32 0.0, %v653
    %655 = vmatprep.mubr.bf16.mxu0 %v262
    %656 = vmatmul.mubr.bf16.gmra.mrb[0].mxu0 %v261
    %v657 = vpop.f32.mrb[0].mxu0
    %v658 = vadd.f32 0.0, %v657
    %v659 = vpop.f32.mrb[0].mxu0
    %v660 = vadd.f32 0.0, %v659
    %v661 = vpop.f32.mrb[0].mxu0
    %v662 = vadd.f32 0.0, %v661
    %v663 = vpop.f32.mrb[0].mxu0
    %v664 = vadd.f32 0.0, %v663
    %665 = vmatprep.mubr.bf16.mxu0 %v265
    %666 = vmatmul.mubr.bf16.gmra.mrb[0].mxu0 %v264
    %v667 = vpop.f32.mrb[0].mxu0
    %v668 = vadd.f32 0.0, %v667
    %v669 = vpop.f32.mrb[0].mxu0
    %v670 = vadd.f32 0.0, %v669
    %v671 = vpop.f32.mrb[0].mxu0
    %v672 = vadd.f32 0.0, %v671
    %v673 = vpop.f32.mrb[0].mxu0
    %v674 = vadd.f32 0.0, %v673
    %675 = vmatprep.mubr.bf16.mxu0 %v268
    %676 = vmatmul.mubr.bf16.gmra.mrb[0].mxu0 %v267
    %v677 = vpop.f32.mrb[0].mxu0
    %v678 = vadd.f32 0.0, %v677
    %v679 = vpop.f32.mrb[0].mxu0
    %v680 = vadd.f32 0.0, %v679
    %v681 = vpop.f32.mrb[0].mxu0
    %v682 = vpop.f32.mrb[0].mxu0
    %683 = vdwg.mxu0
    %684 = vmatprep.subr.bf16.mxu0 %v480
    %685 = vmatpush1.bf16.msra.mxu0 %v479
    %686 = vmatprep.subr.bf16.mxu0 %v482
    %687 = vmatpush1.bf16.msra.mxu0 %v481
    %688 = vmatprep.subr.bf16.mxu0 %v484
    %689 = vmatpush1.bf16.msra.mxu0 %v483
    %690 = vmatprep.subr.bf16.mxu0 %v486
    %691 = vmatpush1.bf16.msra.mxu0 %v485
    %692 = vmatprep.subr.bf16.mxu0 %v488
    %693 = vmatpush1.bf16.msra.mxu0 %v487
    %694 = vmatprep.subr.bf16.mxu0 %v490
    %695 = vmatpush1.bf16.msra.mxu0 %v489
    %696 = vmatprep.subr.bf16.mxu0 %v492
    %697 = vmatpush1.bf16.msra.mxu0 %v491
    %698 = vmatprep.subr.bf16.mxu0 %v494
    %699 = vmatpush1.bf16.msra.mxu0 %v493
    %700 = vmatprep.subr.bf16.mxu0 0
    %701 = vmatpush1.bf16.msra.mxu0 0
    %702 = vmatprep.subr.bf16.mxu0 0
    %703 = vmatpush1.bf16.msra.mxu0 0
    %704 = vmatprep.subr.bf16.mxu0 0
    %705 = vmatpush1.bf16.msra.mxu0 0
    %706 = vmatprep.subr.bf16.mxu0 0
    %707 = vmatpush1.bf16.msra.mxu0 0
    %708 = vmatprep.subr.bf16.mxu0 0
    %709 = vmatpush1.bf16.msra.mxu0 0
    %710 = vmatprep.subr.bf16.mxu0 0
    %711 = vmatpush1.bf16.msra.mxu0 0
    %712 = vmatprep.subr.bf16.mxu0 0
    %713 = vmatpush1.bf16.msra.mxu0 0
    %714 = vmatprep.subr.bf16.mxu0 0
    %715 = vmatpush1.bf16.msra.mxu0 0
    %716 = vmatprep.mubr.bf16.mxu0 0
    %717 = vmatmul.mubr.bf16.gmra.mrb[0].mxu0 %v239
    %v718 = vpop.f32.mrb[0].mxu0
    %v719 = vadd.f32 %v578, %v718
    %v720 = vpop.f32.mrb[0].mxu0
    %v721 = vadd.f32 %v580, %v720
    %v722 = vpop.f32.mrb[0].mxu0
    %v723 = vadd.f32 %v582, %v722
    %v724 = vpop.f32.mrb[0].mxu0
    %v725 = vadd.f32 %v584, %v724
    %726 = vmatprep.mubr.bf16.mxu0 0
    %727 = vmatmul.mubr.bf16.gmra.mrb[0].mxu0 %v242
    %v728 = vpop.f32.mrb[0].mxu0
    %v729 = vadd.f32 %v588, %v728
    %v730 = vpop.f32.mrb[0].mxu0
    %v731 = vadd.f32 %v590, %v730
    %v732 = vpop.f32.mrb[0].mxu0
    %v733 = vadd.f32 %v592, %v732
    %v734 = vpop.f32.mrb[0].mxu0
    %v735 = vadd.f32 %v594, %v734
    %736 = vmatprep.mubr.bf16.mxu0 0
    %737 = vmatmul.mubr.bf16.gmra.mrb[0].mxu0 %v245
    %v738 = vpop.f32.mrb[0].mxu0
    %v739 = vadd.f32 %v598, %v738
    %v740 = vpop.f32.mrb[0].mxu0
    %v741 = vadd.f32 %v600, %v740
    %v742 = vpop.f32.mrb[0].mxu0
    %v743 = vadd.f32 %v602, %v742
    %v744 = vpop.f32.mrb[0].mxu0
    %v745 = vadd.f32 %v604, %v744
    %746 = vmatprep.mubr.bf16.mxu0 0
    %747 = vmatmul.mubr.bf16.gmra.mrb[0].mxu0 %v248
    %v748 = vpop.f32.mrb[0].mxu0
    %v749 = vadd.f32 %v608, %v748
    %v750 = vpop.f32.mrb[0].mxu0
    %v751 = vadd.f32 %v610, %v750
    %v752 = vpop.f32.mrb[0].mxu0
    %v753 = vadd.f32 %v612, %v752
    %v754 = vpop.f32.mrb[0].mxu0
    %v755 = vadd.f32 %v614, %v754
    %756 = vmatprep.mubr.bf16.mxu0 0
    %757 = vmatmul.mubr.bf16.gmra.mrb[0].mxu0 %v251
    %v758 = vpop.f32.mrb[0].mxu0
    %v759 = vadd.f32 %v618, %v758
    %v760 = vpop.f32.mrb[0].mxu0
    %v761 = vadd.f32 %v620, %v760
    %v762 = vpop.f32.mrb[0].mxu0
    %v763 = vadd.f32 %v622, %v762
    %v764 = vpop.f32.mrb[0].mxu0
    %v765 = vadd.f32 %v624, %v764
    %766 = vmatprep.mubr.bf16.mxu0 0
    %767 = vmatmul.mubr.bf16.gmra.mrb[0].mxu0 %v254
    %v768 = vpop.f32.mrb[0].mxu0
    %v769 = vadd.f32 %v628, %v768
    %v770 = vpop.f32.mrb[0].mxu0
    %v771 = vadd.f32 %v630, %v770
    %v772 = vpop.f32.mrb[0].mxu0
    %v773 = vadd.f32 %v632, %v772
    %v774 = vpop.f32.mrb[0].mxu0
    %v775 = vadd.f32 %v634, %v774
    %776 = vmatprep.mubr.bf16.mxu0 0
    %777 = vmatmul.mubr.bf16.gmra.mrb[0].mxu0 %v257
    %v778 = vpop.f32.mrb[0].mxu0
    %v779 = vadd.f32 %v638, %v778
    %v780 = vpop.f32.mrb[0].mxu0
    %v781 = vadd.f32 %v640, %v780
    %v782 = vpop.f32.mrb[0].mxu0
    %v783 = vadd.f32 %v642, %v782
    %v784 = vpop.f32.mrb[0].mxu0
    %v785 = vadd.f32 %v644, %v784
    %786 = vmatprep.mubr.bf16.mxu0 0
    %787 = vmatmul.mubr.bf16.gmra.mrb[0].mxu0 %v260
    %v788 = vpop.f32.mrb[0].mxu0
    %v789 = vadd.f32 %v648, %v788
    %v790 = vpop.f32.mrb[0].mxu0
    %v791 = vadd.f32 %v650, %v790
    %v792 = vpop.f32.mrb[0].mxu0
    %v793 = vadd.f32 %v652, %v792
    %v794 = vpop.f32.mrb[0].mxu0
    %v795 = vadd.f32 %v654, %v794
    %796 = vmatprep.mubr.bf16.mxu0 0
    %797 = vmatmul.mubr.bf16.gmra.mrb[0].mxu0 %v263
    %v798 = vpop.f32.mrb[0].mxu0
    %v799 = vadd.f32 %v658, %v798
    %v800 = vpop.f32.mrb[0].mxu0
    %v801 = vadd.f32 %v660, %v800
    %v802 = vpop.f32.mrb[0].mxu0
    %v803 = vadd.f32 %v662, %v802
    %v804 = vpop.f32.mrb[0].mxu0
    %v805 = vadd.f32 %v664, %v804
    %806 = vmatprep.mubr.bf16.mxu0 0
    %807 = vmatmul.mubr.bf16.gmra.mrb[0].mxu0 %v266
    %v808 = vpop.f32.mrb[0].mxu0
    %v809 = vadd.f32 %v668, %v808
    %v810 = vpop.f32.mrb[0].mxu0
    %v811 = vadd.f32 %v670, %v810
    %v812 = vpop.f32.mrb[0].mxu0
    %v813 = vadd.f32 %v672, %v812
    %v814 = vpop.f32.mrb[0].mxu0
    %v815 = vadd.f32 %v674, %v814
    %816 = vmatprep.mubr.bf16.mxu0 0
    %817 = vmatmul.mubr.bf16.gmra.mrb[0].mxu0 %v269
    %v818 = vpop.f32.mrb[0].mxu0
    %v819 = vadd.f32 %v678, %v818
    %v820 = vpop.f32.mrb[0].mxu0
    %v821 = vadd.f32 %v680, %v820
    %v822 = vpop.f32.mrb[0].mxu0
    %v823 = vpop.f32.mrb[0].mxu0
    %824 = vdwg.mxu0
    %v825 = vld [vmem:[#allocation2] sm:$0x3]
    %v827 = vlaneseq
    %v828 = vshrl.u32 %v827, 7
    %v829 = vsub.s32 0, %v828
    %v830 = vrot.slane %v825, %v829
    %v831 = vlaneseq
    %v832 = vshrl.u32 %v831, 7
    %v833 = vsub.s32 1, %v832
    %v834 = vrot.slane %v825, %v833
    %v837 = vmul.f32 %v719, %v830
    %v838 = vmul.f32 %v721, %v834
    %v839 = vmul.f32 %v723, %v830
    %v840 = vmul.f32 %v725, %v834
    %v841 = vmul.f32 %v729, %v830
    %v842 = vmul.f32 %v731, %v834
    %v843 = vmul.f32 %v733, %v830
    %v844 = vmul.f32 %v735, %v834
    %v845 = vmul.f32 %v739, %v830
    %v846 = vmul.f32 %v741, %v834
    %v847 = vmul.f32 %v743, %v830
    %v848 = vmul.f32 %v745, %v834
    %v849 = vmul.f32 %v749, %v830
    %v850 = vmul.f32 %v751, %v834
    %v851 = vmul.f32 %v753, %v830
    %v852 = vmul.f32 %v755, %v834
    %v853 = vmul.f32 %v759, %v830
    %v854 = vmul.f32 %v761, %v834
    %v855 = vmul.f32 %v763, %v830
    %v856 = vmul.f32 %v765, %v834
    %v857 = vmul.f32 %v769, %v830
    %v858 = vmul.f32 %v771, %v834
    %v859 = vmul.f32 %v773, %v830
    %v860 = vmul.f32 %v775, %v834
    %v861 = vmul.f32 %v779, %v830
    %v862 = vmul.f32 %v781, %v834
    %v863 = vmul.f32 %v783, %v830
    %v864 = vmul.f32 %v785, %v834
    %v865 = vmul.f32 %v789, %v830
    %v866 = vmul.f32 %v791, %v834
    %v867 = vmul.f32 %v793, %v830
    %v868 = vmul.f32 %v795, %v834
    %v869 = vmul.f32 %v799, %v830
    %v870 = vmul.f32 %v801, %v834
    %v871 = vmul.f32 %v803, %v830
    %v872 = vmul.f32 %v805, %v834
    %v873 = vmul.f32 %v809, %v830
    %v874 = vmul.f32 %v811, %v834
    %v875 = vmul.f32 %v813, %v830
    %v876 = vmul.f32 %v815, %v834
    %v877 = vmul.f32 %v819, %v830
    %v878 = vmul.f32 %v821, %v834
    %v879 = vld [vmem:[#allocation4] sm:$0x3]
    %v881 = vlaneseq
    %v882 = vshrl.u32 %v881, 7
    %v883 = vsub.s32 0, %v882
    %v884 = vrot.slane %v879, %v883
    %v885 = vlaneseq
    %v886 = vshrl.u32 %v885, 7
    %v887 = vsub.s32 1, %v886
    %v888 = vrot.slane %v879, %v887
    %v891 = vadd.f32 %v837, %v884
    %v892 = vadd.f32 %v838, %v888
    %v893 = vadd.f32 %v839, %v884
    %v894 = vadd.f32 %v840, %v888
    %v895 = vadd.f32 %v841, %v884
    %v896 = vadd.f32 %v842, %v888
    %v897 = vadd.f32 %v843, %v884
    %v898 = vadd.f32 %v844, %v888
    %v899 = vadd.f32 %v845, %v884
    %v900 = vadd.f32 %v846, %v888
    %v901 = vadd.f32 %v847, %v884
    %v902 = vadd.f32 %v848, %v888
    %v903 = vadd.f32 %v849, %v884
    %v904 = vadd.f32 %v850, %v888
    %v905 = vadd.f32 %v851, %v884
    %v906 = vadd.f32 %v852, %v888
    %v907 = vadd.f32 %v853, %v884
    %v908 = vadd.f32 %v854, %v888
    %v909 = vadd.f32 %v855, %v884
    %v910 = vadd.f32 %v856, %v888
    %v911 = vadd.f32 %v857, %v884
    %v912 = vadd.f32 %v858, %v888
    %v913 = vadd.f32 %v859, %v884
    %v914 = vadd.f32 %v860, %v888
    %v915 = vadd.f32 %v861, %v884
    %v916 = vadd.f32 %v862, %v888
    %v917 = vadd.f32 %v863, %v884
    %v918 = vadd.f32 %v864, %v888
    %v919 = vadd.f32 %v865, %v884
    %v920 = vadd.f32 %v866, %v888
    %v921 = vadd.f32 %v867, %v884
    %v922 = vadd.f32 %v868, %v888
    %v923 = vadd.f32 %v869, %v884
    %v924 = vadd.f32 %v870, %v888
    %v925 = vadd.f32 %v871, %v884
    %v926 = vadd.f32 %v872, %v888
    %v927 = vadd.f32 %v873, %v884
    %v928 = vadd.f32 %v874, %v888
    %v929 = vadd.f32 %v875, %v884
    %v930 = vadd.f32 %v876, %v888
    %v931 = vadd.f32 %v877, %v884
    %v932 = vadd.f32 %v878, %v888
    %v933 = vmax.f32 %v891, 0.0
    %v934 = vmax.f32 %v892, 0.0
    %v935 = vmax.f32 %v893, 0.0
    %v936 = vmax.f32 %v894, 0.0
    %v937 = vmax.f32 %v895, 0.0
    %v938 = vmax.f32 %v896, 0.0
    %v939 = vmax.f32 %v897, 0.0
    %v940 = vmax.f32 %v898, 0.0
    %v941 = vmax.f32 %v899, 0.0
    %v942 = vmax.f32 %v900, 0.0
    %v943 = vmax.f32 %v901, 0.0
    %v944 = vmax.f32 %v902, 0.0
    %v945 = vmax.f32 %v903, 0.0
    %v946 = vmax.f32 %v904, 0.0
    %v947 = vmax.f32 %v905, 0.0
    %v948 = vmax.f32 %v906, 0.0
    %v949 = vmax.f32 %v907, 0.0
    %v950 = vmax.f32 %v908, 0.0
    %v951 = vmax.f32 %v909, 0.0
    %v952 = vmax.f32 %v910, 0.0
    %v953 = vmax.f32 %v911, 0.0
    %v954 = vmax.f32 %v912, 0.0
    %v955 = vmax.f32 %v913, 0.0
    %v956 = vmax.f32 %v914, 0.0
    %v957 = vmax.f32 %v915, 0.0
    %v958 = vmax.f32 %v916, 0.0
    %v959 = vmax.f32 %v917, 0.0
    %v960 = vmax.f32 %v918, 0.0
    %v961 = vmax.f32 %v919, 0.0
    %v962 = vmax.f32 %v920, 0.0
    %v963 = vmax.f32 %v921, 0.0
    %v964 = vmax.f32 %v922, 0.0
    %v965 = vmax.f32 %v923, 0.0
    %v966 = vmax.f32 %v924, 0.0
    %v967 = vmax.f32 %v925, 0.0
    %v968 = vmax.f32 %v926, 0.0
    %v969 = vmax.f32 %v927, 0.0
    %v970 = vmax.f32 %v928, 0.0
    %v971 = vmax.f32 %v929, 0.0
    %v972 = vmax.f32 %v930, 0.0
    %v973 = vmax.f32 %v931, 0.0
    %v974 = vmax.f32 %v932, 0.0
    %v975 = vpack.c.bf16 %v935, %v933
    %v976 = vpack.c.bf16 %v936, %v934
    %v977 = vpack.c.bf16 %v939, %v937
    %v978 = vpack.c.bf16 %v940, %v938
    %v979 = vpack.c.bf16 %v943, %v941
    %v980 = vpack.c.bf16 %v944, %v942
    %v981 = vpack.c.bf16 %v947, %v945
    %v982 = vpack.c.bf16 %v948, %v946
    %v983 = vpack.c.bf16 %v951, %v949
    %v984 = vpack.c.bf16 %v952, %v950
    %v985 = vpack.c.bf16 %v955, %v953
    %v986 = vpack.c.bf16 %v956, %v954
    %v987 = vpack.c.bf16 %v959, %v957
    %v988 = vpack.c.bf16 %v960, %v958
    %v989 = vpack.c.bf16 %v963, %v961
    %v990 = vpack.c.bf16 %v964, %v962
    %v991 = vpack.c.bf16 %v967, %v965
    %v992 = vpack.c.bf16 %v968, %v966
    %v993 = vpack.c.bf16 %v971, %v969
    %v994 = vpack.c.bf16 %v972, %v970
    %v995 = vpack.c.bf16 %v973, %v973
    %v996 = vpack.c.bf16 %v974, %v974
    %v1019 = vunpack.c.l.b16 %v975
    %v1020 = vunpack.c.l.b16 %v976
    %v1021 = vunpack.c.h.b16 %v975
    %v1022 = vunpack.c.h.b16 %v976
    %v1023 = vunpack.c.l.b16 %v977
    %v1024 = vunpack.c.l.b16 %v978
    %v1025 = vunpack.c.h.b16 %v977
    %v1026 = vunpack.c.h.b16 %v978
    %v1027 = vunpack.c.l.b16 %v979
    %v1028 = vunpack.c.l.b16 %v980
    %v1029 = vunpack.c.h.b16 %v979
    %v1030 = vunpack.c.h.b16 %v980
    %v1031 = vunpack.c.l.b16 %v981
    %v1032 = vunpack.c.l.b16 %v982
    %v1033 = vunpack.c.h.b16 %v981
    %v1034 = vunpack.c.h.b16 %v982
    %v1035 = vunpack.c.l.b16 %v983
    %v1036 = vunpack.c.l.b16 %v984
    %v1037 = vunpack.c.h.b16 %v983
    %v1038 = vunpack.c.h.b16 %v984
    %v1039 = vunpack.c.l.b16 %v985
    %v1040 = vunpack.c.l.b16 %v986
    %v1041 = vunpack.c.h.b16 %v985
    %v1042 = vunpack.c.h.b16 %v986
    %v1043 = vunpack.c.l.b16 %v987
    %v1044 = vunpack.c.l.b16 %v988
    %v1045 = vunpack.c.h.b16 %v987
    %v1046 = vunpack.c.h.b16 %v988
    %v1047 = vunpack.c.l.b16 %v989
    %v1048 = vunpack.c.l.b16 %v990
    %v1049 = vunpack.c.h.b16 %v989
    %v1050 = vunpack.c.h.b16 %v990
    %v1051 = vunpack.c.l.b16 %v991
    %v1052 = vunpack.c.l.b16 %v992
    %v1053 = vunpack.c.h.b16 %v991
    %v1054 = vunpack.c.h.b16 %v992
    %v1055 = vunpack.c.l.b16 %v993
    %v1056 = vunpack.c.l.b16 %v994
    %v1057 = vunpack.c.h.b16 %v993
    %v1058 = vunpack.c.h.b16 %v994
    %v1059 = vunpack.c.l.b16 %v995
    %v1060 = vunpack.c.l.b16 %v996
    %v1061 = vpack.c.b16 %v1020, %v1019
    %v1062 = vpack.c.b16 %v1022, %v1021
    %v1063 = vpack.c.b16 %v1024, %v1023
    %v1064 = vpack.c.b16 %v1026, %v1025
    %v1065 = vpack.c.b16 %v1028, %v1027
    %v1066 = vpack.c.b16 %v1030, %v1029
    %v1067 = vpack.c.b16 %v1032, %v1031
    %v1068 = vpack.c.b16 %v1034, %v1033
    %v1069 = vpack.c.b16 %v1036, %v1035
    %v1070 = vpack.c.b16 %v1038, %v1037
    %v1071 = vpack.c.b16 %v1040, %v1039
    %v1072 = vpack.c.b16 %v1042, %v1041
    %v1073 = vpack.c.b16 %v1044, %v1043
    %v1074 = vpack.c.b16 %v1046, %v1045
    %v1075 = vpack.c.b16 %v1048, %v1047
    %v1076 = vpack.c.b16 %v1050, %v1049
    %v1077 = vpack.c.b16 %v1052, %v1051
    %v1078 = vpack.c.b16 %v1054, %v1053
    %v1079 = vpack.c.b16 %v1056, %v1055
    %v1080 = vpack.c.b16 %v1058, %v1057
    %v1081 = vpack.c.b16 %v1060, %v1059
    %vm1103 = vcmask 1043456
    %vm1104 = vcmask 523268
    %vm1105 = vmor %vm1104, %vm1103
    %1106 = vst.msk [vmem:[%s4] sm:$0xff] %vm1105, %v1061
    %1107 = vst.msk [vmem:[%s4 + $0x8] sm:$0xff] %vm1105, %v1062
    %1108 = vst.msk [vmem:[%s4 + $0x10] sm:$0xff] %vm1105, %v1063
    %1109 = vst.msk [vmem:[%s4 + $0x18] sm:$0xff] %vm1105, %v1064
    %1110 = vst.msk [vmem:[%s4 + $0x20] sm:$0xff] %vm1105, %v1065
    %1111 = vst.msk [vmem:[%s4 + $0x28] sm:$0xff] %vm1105, %v1066
    %1112 = vst.msk [vmem:[%s4 + $0x30] sm:$0xff] %vm1105, %v1067
    %1113 = vst.msk [vmem:[%s4 + $0x38] sm:$0xff] %vm1105, %v1068
    %1114 = vst.msk [vmem:[%s4 + $0x40] sm:$0xff] %vm1105, %v1069
    %1115 = vst.msk [vmem:[%s4 + $0x48] sm:$0xff] %vm1105, %v1070
    %1116 = vst.msk [vmem:[%s4 + $0x50] sm:$0xff] %vm1105, %v1071
    %1117 = vst.msk [vmem:[%s4 + $0x58] sm:$0xff] %vm1105, %v1072
    %1118 = vst.msk [vmem:[%s4 + $0x60] sm:$0xff] %vm1105, %v1073
    %1119 = vst.msk [vmem:[%s4 + $0x68] sm:$0xff] %vm1105, %v1074
    %1120 = vst.msk [vmem:[%s4 + $0x70] sm:$0xff] %vm1105, %v1075
    %1121 = vst.msk [vmem:[%s4 + $0x78] sm:$0xff] %vm1105, %v1076
    %1122 = vst.msk [vmem:[%s4 + $0x80] sm:$0xff] %vm1105, %v1077
    %1123 = vst.msk [vmem:[%s4 + $0x88] sm:$0xff] %vm1105, %v1078
    %1124 = vst.msk [vmem:[%s4 + $0x90] sm:$0xff] %vm1105, %v1079
    %1125 = vst.msk [vmem:[%s4 + $0x98] sm:$0xff] %vm1105, %v1080
    %1126 = vst.msk [vmem:[%s4 + $0xa0] sm:$0xff] %vm1105, %v1081
    // Predicated region
    $region26: #{reduction_a_forward.3} parent=1 // pred_check
      _
    $region27: #{reduction_a_forward.3} parent=1 // pred_check_branch
      %1128 = sbr.rel (0) target = $region29
    $region28: #{reduction_a_forward.3} parent=1 // pred_region
      _
    $region29: #{reduction_a_forward.3} parent=1 // pred_fallthru
      _
    // Predicated region
    $region30: #{reduction_a_forward.3} parent=1 // pred_check
      _
    $region31: #{reduction_a_forward.3} parent=1 // pred_check_branch
      %1130 = sbr.rel (0) target = $region33
    $region32: #{reduction_a_forward.3} parent=1 // pred_region
      _
    $region33: #{reduction_a_forward.3} parent=1 // pred_fallthru
      _
    %1131 = vsyncpa [#allocation3], 1
    %1132 = vsyncpa [#allocation5], 1

// kernel: reduction_a_forward.4
$region0: #{reduction_a_forward.4}
  #allocation0 [shape = 'u32[]', space=smem, size = 0x4, offset = 0x4, fixed_abs, tag = 'smem constant byte address 0x4 - core index']
  #allocation1 [shape = 'u32[144,128]{1,0:T(1,128)}', space=vmem, size = 0x12000, scoped, tag = 'internal scratch']
  %s0 = inlined_call_operand.vmem [shape: bf16[168,1728], index: 0, kind: input, shape index: {}]
  %s1 = inlined_call_operand.vmem [shape: bf16[1728,224], index: 1, kind: input, shape index: {}]
  %s2 = inlined_call_operand.vmem [shape: f32[1,224], index: 2, kind: input, shape index: {}]
  %s3 = inlined_call_operand.vmem [shape: f32[1,224], index: 3, kind: input, shape index: {}]
  %s4 = inlined_call_operand.vmem [shape: bf16[168,224], index: 4, kind: output, shape index: {}]
  %s5 = sld [smem:[#allocation0]]
  $region26: #{reduction_a_forward.4} parent=0
    _
  %s7 = ssub.s32 1, %s5
  %s8 = scalar_select 0, %s7, %s5
  // Predicated region
  $region2: #{reduction_a_forward.4} parent=0 // pred_check
    _
  $region3: #{reduction_a_forward.4} parent=0 // pred_check_branch
    %10 = sbr.rel (0) target = $region5
  $region4: #{reduction_a_forward.4} parent=0 // pred_region
    _
  $region5: #{reduction_a_forward.4} parent=0 // pred_fallthru
    _
  // Predicated region
  $region6: #{reduction_a_forward.4} parent=0 // pred_check
    _
  $region7: #{reduction_a_forward.4} parent=0 // pred_check_branch
    %12 = sbr.rel (0) target = $region9
  $region8: #{reduction_a_forward.4} parent=0 // pred_region
    _
  $region9: #{reduction_a_forward.4} parent=0 // pred_fallthru
    _
  // Predicated region
  $region10: #{reduction_a_forward.4} parent=0 // pred_check
    _
  $region11: #{reduction_a_forward.4} parent=0 // pred_check_branch
    %14 = sbr.rel (0) target = $region13
  $region12: #{reduction_a_forward.4} parent=0 // pred_region
    _
  $region13: #{reduction_a_forward.4} parent=0 // pred_fallthru
    _
  // Predicated region
  $region14: #{reduction_a_forward.4} parent=0 // pred_check
    _
  $region15: #{reduction_a_forward.4} parent=0 // pred_check_branch
    %16 = sbr.rel (0) target = $region17
  $region16: #{reduction_a_forward.4} parent=0 // pred_region
    _
  $region17: #{reduction_a_forward.4} parent=0 // pred_fallthru
    _
  %v18 = vld [vmem:[%s0] sm:$0xff]
  %v19 = vld [vmem:[%s0 + $0x8] sm:$0xff]
  %v20 = vld [vmem:[%s0 + $0x10] sm:$0xff]
  %v21 = vld [vmem:[%s0 + $0x18] sm:$0xff]
  %v22 = vld [vmem:[%s0 + $0x20] sm:$0xff]
  %v23 = vld [vmem:[%s0 + $0x28] sm:$0xff]
  %v24 = vld [vmem:[%s0 + $0x30] sm:$0xff]
  %v25 = vld [vmem:[%s0 + $0x38] sm:$0xff]
  %v26 = vld [vmem:[%s0 + $0x40] sm:$0xff]
  %v27 = vld [vmem:[%s0 + $0x48] sm:$0xff]
  %v28 = vld [vmem:[%s0 + $0x50] sm:$0xff]
  %v29 = vld [vmem:[%s0 + $0x58] sm:$0xff]
  %v30 = vld [vmem:[%s0 + $0x60] sm:$0xff]
  %v31 = vld [vmem:[%s0 + $0x68] sm:$0xff]
  %v32 = vld [vmem:[%s0 + $0x70] sm:$0xff]
  %v33 = vld [vmem:[%s0 + $0x78] sm:$0xff]
  %v34 = vld [vmem:[%s0 + $0x80] sm:$0xff]
  %v35 = vld [vmem:[%s0 + $0x88] sm:$0xff]
  %v36 = vld [vmem:[%s0 + $0x90] sm:$0xff]
  %v37 = vld [vmem:[%s0 + $0x98] sm:$0xff]
  %v38 = vld [vmem:[%s0 + $0xa0] sm:$0xff]
  %v39 = vld [vmem:[%s0 + $0xa8] sm:$0xff]
  %v40 = vld [vmem:[%s0 + $0xb0] sm:$0xff]
  %v41 = vld [vmem:[%s0 + $0xb8] sm:$0xff]
  %v42 = vld [vmem:[%s0 + $0xc0] sm:$0xff]
  %v43 = vld [vmem:[%s0 + $0xc8] sm:$0xff]
  %v44 = vld [vmem:[%s0 + $0xd0] sm:$0xff]
  %v45 = vld [vmem:[%s0 + $0xd8] sm:$0xff]
  %v46 = vld [vmem:[%s0 + $0xe0] sm:$0xff]
  %v47 = vld [vmem:[%s0 + $0xe8] sm:$0xff]
  %v48 = vld [vmem:[%s0 + $0xf0] sm:$0xff]
  %v49 = vld [vmem:[%s0 + $0xf8] sm:$0xff]
  %v50 = vld [vmem:[%s0 + $0x100] sm:$0xff]
  %v51 = vld [vmem:[%s0 + $0x108] sm:$0xff]
  %v52 = vld [vmem:[%s0 + $0x110] sm:$0xff]
  %v53 = vld [vmem:[%s0 + $0x118] sm:$0xff]
  %v54 = vld [vmem:[%s0 + $0x120] sm:$0xff]
  %v55 = vld [vmem:[%s0 + $0x128] sm:$0xff]
  %v56 = vld [vmem:[%s0 + $0x130] sm:$0xff]
  %v57 = vld [vmem:[%s0 + $0x138] sm:$0xff]
  %v58 = vld [vmem:[%s0 + $0x140] sm:$0xff]
  %v59 = vld [vmem:[%s0 + $0x148] sm:$0xff]
  %v60 = vld [vmem:[%s0 + $0x150] sm:$0xff]
  %v61 = vld [vmem:[%s0 + $0x158] sm:$0xff]
  %v62 = vld [vmem:[%s0 + $0x160] sm:$0xff]
  %v63 = vld [vmem:[%s0 + $0x168] sm:$0xff]
  %v64 = vld [vmem:[%s0 + $0x170] sm:$0xff]
  %v65 = vld [vmem:[%s0 + $0x178] sm:$0xff]
  %v66 = vld [vmem:[%s0 + $0x180] sm:$0xff]
  %v67 = vld [vmem:[%s0 + $0x188] sm:$0xff]
  %v68 = vld [vmem:[%s0 + $0x190] sm:$0xff]
  %v69 = vld [vmem:[%s0 + $0x198] sm:$0xff]
  %v70 = vld [vmem:[%s0 + $0x1a0] sm:$0xff]
  %v71 = vld [vmem:[%s0 + $0x1a8] sm:$0xff]
  %v72 = vld [vmem:[%s0 + $0x1b0] sm:$0xff]
  %v73 = vld [vmem:[%s0 + $0x1b8] sm:$0xff]
  %v74 = vld [vmem:[%s0 + $0x1c0] sm:$0xff]
  %v75 = vld [vmem:[%s0 + $0x1c8] sm:$0xff]
  %v76 = vld [vmem:[%s0 + $0x1d0] sm:$0xff]
  %v77 = vld [vmem:[%s0 + $0x1d8] sm:$0xff]
  %v78 = vld [vmem:[%s0 + $0x1e0] sm:$0xff]
  %v79 = vld [vmem:[%s0 + $0x1e8] sm:$0xff]
  %v80 = vld [vmem:[%s0 + $0x1f0] sm:$0xff]
  %v81 = vld [vmem:[%s0 + $0x1f8] sm:$0xff]
  %v82 = vld [vmem:[%s0 + $0x200] sm:$0xff]
  %v83 = vld [vmem:[%s0 + $0x208] sm:$0xff]
  %v84 = vld [vmem:[%s0 + $0x210] sm:$0xff]
  %v85 = vld [vmem:[%s0 + $0x218] sm:$0xff]
  %v86 = vld [vmem:[%s0 + $0x220] sm:$0xff]
  %v87 = vld [vmem:[%s0 + $0x228] sm:$0xff]
  %v88 = vld [vmem:[%s0 + $0x230] sm:$0xff]
  %v89 = vld [vmem:[%s0 + $0x238] sm:$0xff]
  %v90 = vld [vmem:[%s0 + $0x240] sm:$0xff]
  %v91 = vld [vmem:[%s0 + $0x248] sm:$0xff]
  %v92 = vld [vmem:[%s0 + $0x250] sm:$0xff]
  %v93 = vld [vmem:[%s0 + $0x258] sm:$0xff]
  %v94 = vld [vmem:[%s0 + $0x260] sm:$0xff]
  %v95 = vld [vmem:[%s0 + $0x268] sm:$0xff]
  %v96 = vld [vmem:[%s0 + $0x270] sm:$0xff]
  %v97 = vld [vmem:[%s0 + $0x278] sm:$0xff]
  %v98 = vld [vmem:[%s0 + $0x280] sm:$0xff]
  %v99 = vld [vmem:[%s0 + $0x288] sm:$0xff]
  %v100 = vld [vmem:[%s0 + $0x290] sm:$0xff]
  %v101 = vld [vmem:[%s0 + $0x298] sm:$0xff]
  %v102 = vld [vmem:[%s0 + $0x2a0] sm:$0xff]
  %v103 = vld [vmem:[%s0 + $0x2a8] sm:$0xff]
  %v104 = vld [vmem:[%s0 + $0x2b0] sm:$0xff]
  %v105 = vld [vmem:[%s0 + $0x2b8] sm:$0xff]
  %v106 = vld [vmem:[%s0 + $0x2c0] sm:$0xff]
  %v107 = vld [vmem:[%s0 + $0x2c8] sm:$0xff]
  %v108 = vld [vmem:[%s0 + $0x2d0] sm:$0xff]
  %v109 = vld [vmem:[%s0 + $0x2d8] sm:$0xff]
  %v110 = vld [vmem:[%s0 + $0x2e0] sm:$0xff]
  %v111 = vld [vmem:[%s0 + $0x2e8] sm:$0xff]
  %v112 = vld [vmem:[%s0 + $0x2f0] sm:$0xff]
  %v113 = vld [vmem:[%s0 + $0x2f8] sm:$0xff]
  %v114 = vld [vmem:[%s0 + $0x300] sm:$0xff]
  %v115 = vld [vmem:[%s0 + $0x308] sm:$0xff]
  %v116 = vld [vmem:[%s0 + $0x310] sm:$0xff]
  %v117 = vld [vmem:[%s0 + $0x318] sm:$0xff]
  %v118 = vld [vmem:[%s0 + $0x320] sm:$0xff]
  %v119 = vld [vmem:[%s0 + $0x328] sm:$0xff]
  %v120 = vld [vmem:[%s0 + $0x330] sm:$0xff]
  %v121 = vld [vmem:[%s0 + $0x338] sm:$0xff]
  %v122 = vld [vmem:[%s0 + $0x340] sm:$0xff]
  %v123 = vld [vmem:[%s0 + $0x348] sm:$0xff]
  %v124 = vld [vmem:[%s0 + $0x350] sm:$0xff]
  %v125 = vld [vmem:[%s0 + $0x358] sm:$0xff]
  %v126 = vld [vmem:[%s0 + $0x360] sm:$0xff]
  %v127 = vld [vmem:[%s0 + $0x368] sm:$0xff]
  %v128 = vld [vmem:[%s0 + $0x370] sm:$0xff]
  %v129 = vld [vmem:[%s0 + $0x378] sm:$0xff]
  %v130 = vld [vmem:[%s0 + $0x380] sm:$0xff]
  %v131 = vld [vmem:[%s0 + $0x388] sm:$0xff]
  %v132 = vld [vmem:[%s0 + $0x390] sm:$0xff]
  %v133 = vld [vmem:[%s0 + $0x398] sm:$0xff]
  %v134 = vld [vmem:[%s0 + $0x3a0] sm:$0xff]
  %v135 = vld [vmem:[%s0 + $0x3a8] sm:$0xff]
  %v136 = vld [vmem:[%s0 + $0x3b0] sm:$0xff]
  %v137 = vld [vmem:[%s0 + $0x3b8] sm:$0xff]
  %v138 = vld [vmem:[%s0 + $0x3c0] sm:$0xff]
  %v139 = vld [vmem:[%s0 + $0x3c8] sm:$0xff]
  %v140 = vld [vmem:[%s0 + $0x3d0] sm:$0xff]
  %v141 = vld [vmem:[%s0 + $0x3d8] sm:$0xff]
  %v142 = vld [vmem:[%s0 + $0x3e0] sm:$0xff]
  %v143 = vld [vmem:[%s0 + $0x3e8] sm:$0xff]
  %v144 = vld [vmem:[%s0 + $0x3f0] sm:$0xff]
  %v145 = vld [vmem:[%s0 + $0x3f8] sm:$0xff]
  %v146 = vld [vmem:[%s0 + $0x400] sm:$0xff]
  %v147 = vld [vmem:[%s0 + $0x408] sm:$0xff]
  %v148 = vld [vmem:[%s0 + $0x410] sm:$0xff]
  %v149 = vld [vmem:[%s0 + $0x418] sm:$0xff]
  %v150 = vld [vmem:[%s0 + $0x420] sm:$0xff]
  %v151 = vld [vmem:[%s0 + $0x428] sm:$0xff]
  %v152 = vld [vmem:[%s0 + $0x430] sm:$0xff]
  %v153 = vld [vmem:[%s0 + $0x438] sm:$0xff]
  %v154 = vld [vmem:[%s0 + $0x440] sm:$0xff]
  %v155 = vld [vmem:[%s0 + $0x448] sm:$0xff]
  %v156 = vld [vmem:[%s0 + $0x450] sm:$0xff]
  %v157 = vld [vmem:[%s0 + $0x458] sm:$0xff]
  %v158 = vld [vmem:[%s0 + $0x460] sm:$0xff]
  %v159 = vld [vmem:[%s0 + $0x468] sm:$0xff]
  %v160 = vld [vmem:[%s0 + $0x470] sm:$0xff]
  %v161 = vld [vmem:[%s0 + $0x478] sm:$0xff]
  %v162 = vld [vmem:[%s0 + $0x480] sm:$0xff]
  %v163 = vld [vmem:[%s0 + $0x488] sm:$0xff]
  %v164 = vld [vmem:[%s0 + $0x490] sm:$0xff]
  %v165 = vld [vmem:[%s1] sm:$0xff]
  %v166 = vld [vmem:[%s1 + $0x8] sm:$0xff]
  %v167 = vld [vmem:[%s1 + $0x10] sm:$0xff]
  %v168 = vld [vmem:[%s1 + $0x18] sm:$0xff]
  %v169 = vld [vmem:[%s1 + $0x20] sm:$0xff]
  %v170 = vld [vmem:[%s1 + $0x28] sm:$0xff]
  %v171 = vld [vmem:[%s1 + $0x30] sm:$0xff]
  %v172 = vld [vmem:[%s1 + $0x38] sm:$0xff]
  %v173 = vld [vmem:[%s1 + $0x40] sm:$0xff]
  %v174 = vld [vmem:[%s1 + $0x48] sm:$0xff]
  %v175 = vld [vmem:[%s1 + $0x50] sm:$0xff]
  %v176 = vld [vmem:[%s1 + $0x58] sm:$0xff]
  %v177 = vld [vmem:[%s1 + $0x60] sm:$0xff]
  %v178 = vld [vmem:[%s1 + $0x68] sm:$0xff]
  %v179 = vld [vmem:[%s1 + $0x70] sm:$0xff]
  %v180 = vld [vmem:[%s1 + $0x78] sm:$0xff]
  %v181 = vld [vmem:[%s1 + $0x80] sm:$0xff]
  %v182 = vld [vmem:[%s1 + $0x88] sm:$0xff]
  %v183 = vld [vmem:[%s1 + $0x90] sm:$0xff]
  %v184 = vld [vmem:[%s1 + $0x98] sm:$0xff]
  %v185 = vld [vmem:[%s1 + $0xa0] sm:$0xff]
  %v186 = vld [vmem:[%s1 + $0xa8] sm:$0xff]
  %v187 = vld [vmem:[%s1 + $0xb0] sm:$0xff]
  %v188 = vld [vmem:[%s1 + $0xb8] sm:$0xff]
  %v189 = vld [vmem:[%s1 + $0xc0] sm:$0xff]
  %v190 = vld [vmem:[%s1 + $0xc8] sm:$0xff]
  %v191 = vld [vmem:[%s1 + $0xd0] sm:$0xff]
  %v192 = vld [vmem:[%s1 + $0xd8] sm:$0xff]
  %v193 = vld [vmem:[%s1 + $0xe0] sm:$0xff]
  %v194 = vld [vmem:[%s1 + $0xe8] sm:$0xff]
  %v195 = vld [vmem:[%s1 + $0xf0] sm:$0xff]
  %v196 = vld [vmem:[%s1 + $0xf8] sm:$0xff]
  %v197 = vld [vmem:[%s1 + $0x100] sm:$0xff]
  %v198 = vld [vmem:[%s1 + $0x108] sm:$0xff]
  %v199 = vld [vmem:[%s1 + $0x110] sm:$0xff]
  %v200 = vld [vmem:[%s1 + $0x118] sm:$0xff]
  %v201 = vld [vmem:[%s1 + $0x120] sm:$0xff]
  %v202 = vld [vmem:[%s1 + $0x128] sm:$0xff]
  %v203 = vld [vmem:[%s1 + $0x130] sm:$0xff]
  %v204 = vld [vmem:[%s1 + $0x138] sm:$0xff]
  %v205 = vld [vmem:[%s1 + $0x140] sm:$0xff]
  %v206 = vld [vmem:[%s1 + $0x148] sm:$0xff]
  %v207 = vld [vmem:[%s1 + $0x150] sm:$0xff]
  %v208 = vld [vmem:[%s1 + $0x158] sm:$0xff]
  %v209 = vld [vmem:[%s1 + $0x160] sm:$0xff]
  %v210 = vld [vmem:[%s1 + $0x168] sm:$0xff]
  %v211 = vld [vmem:[%s1 + $0x170] sm:$0xff]
  %v212 = vld [vmem:[%s1 + $0x178] sm:$0xff]
  %v213 = vld [vmem:[%s1 + $0x180] sm:$0xff]
  %v214 = vld [vmem:[%s1 + $0x188] sm:$0xff]
  %v215 = vld [vmem:[%s1 + $0x190] sm:$0xff]
  %v216 = vld [vmem:[%s1 + $0x198] sm:$0xff]
  %v217 = vld [vmem:[%s1 + $0x1a0] sm:$0xff]
  %v218 = vld [vmem:[%s1 + $0x1a8] sm:$0xff]
  %v219 = vld [vmem:[%s1 + $0x1b0] sm:$0xff]
  %v220 = vld [vmem:[%s1 + $0x1b8] sm:$0xff]
  %v221 = vld [vmem:[%s1 + $0x1c0] sm:$0xff]
  %v222 = vld [vmem:[%s1 + $0x1c8] sm:$0xff]
  %v223 = vld [vmem:[%s1 + $0x1d0] sm:$0xff]
  %v224 = vld [vmem:[%s1 + $0x1d8] sm:$0xff]
  %v225 = vld [vmem:[%s1 + $0x1e0] sm:$0xff]
  %v226 = vld [vmem:[%s1 + $0x1e8] sm:$0xff]
  %v227 = vld [vmem:[%s1 + $0x1f0] sm:$0xff]
  %v228 = vld [vmem:[%s1 + $0x1f8] sm:$0xff]
  %v229 = vld [vmem:[%s1 + $0x200] sm:$0xff]
  %v230 = vld [vmem:[%s1 + $0x208] sm:$0xff]
  %v231 = vld [vmem:[%s1 + $0x210] sm:$0xff]
  %v232 = vld [vmem:[%s1 + $0x218] sm:$0xff]
  %v233 = vld [vmem:[%s1 + $0x220] sm:$0xff]
  %v234 = vld [vmem:[%s1 + $0x228] sm:$0xff]
  %v235 = vld [vmem:[%s1 + $0x230] sm:$0xff]
  %v236 = vld [vmem:[%s1 + $0x238] sm:$0xff]
  %v237 = vld [vmem:[%s1 + $0x240] sm:$0xff]
  %v238 = vld [vmem:[%s1 + $0x248] sm:$0xff]
  %v239 = vld [vmem:[%s1 + $0x250] sm:$0xff]
  %v240 = vld [vmem:[%s1 + $0x258] sm:$0xff]
  %v241 = vld [vmem:[%s1 + $0x260] sm:$0xff]
  %v242 = vld [vmem:[%s1 + $0x268] sm:$0xff]
  %v243 = vld [vmem:[%s1 + $0x270] sm:$0xff]
  %v244 = vld [vmem:[%s1 + $0x278] sm:$0xff]
  %v245 = vld [vmem:[%s1 + $0x280] sm:$0xff]
  %v246 = vld [vmem:[%s1 + $0x288] sm:$0xff]
  %v247 = vld [vmem:[%s1 + $0x290] sm:$0xff]
  %v248 = vld [vmem:[%s1 + $0x298] sm:$0xff]
  %v249 = vld [vmem:[%s1 + $0x2a0] sm:$0xff]
  %v250 = vld [vmem:[%s1 + $0x2a8] sm:$0xff]
  %v251 = vld [vmem:[%s1 + $0x2b0] sm:$0xff]
  %v252 = vld [vmem:[%s1 + $0x2b8] sm:$0xff]
  %v253 = vld [vmem:[%s1 + $0x2c0] sm:$0xff]
  %v254 = vld [vmem:[%s1 + $0x2c8] sm:$0xff]
  %v255 = vld [vmem:[%s1 + $0x2d0] sm:$0xff]
  %v256 = vld [vmem:[%s1 + $0x2d8] sm:$0xff]
  %v257 = vld [vmem:[%s1 + $0x2e0] sm:$0xff]
  %v258 = vld [vmem:[%s1 + $0x2e8] sm:$0xff]
  %v259 = vld [vmem:[%s1 + $0x2f0] sm:$0xff]
  %v260 = vld [vmem:[%s1 + $0x2f8] sm:$0xff]
  %v261 = vld [vmem:[%s1 + $0x300] sm:$0xff]
  %v262 = vld [vmem:[%s1 + $0x308] sm:$0xff]
  %v263 = vld [vmem:[%s1 + $0x310] sm:$0xff]
  %v264 = vld [vmem:[%s1 + $0x318] sm:$0xff]
  %v265 = vld [vmem:[%s1 + $0x320] sm:$0xff]
  %v266 = vld [vmem:[%s1 + $0x328] sm:$0xff]
  %v267 = vld [vmem:[%s1 + $0x330] sm:$0xff]
  %v268 = vld [vmem:[%s1 + $0x338] sm:$0xff]
  %v269 = vld [vmem:[%s1 + $0x340] sm:$0xff]
  %v270 = vld [vmem:[%s1 + $0x348] sm:$0xff]
  %v271 = vld [vmem:[%s1 + $0x350] sm:$0xff]
  %v272 = vld [vmem:[%s1 + $0x358] sm:$0xff]
  %v273 = vld [vmem:[%s1 + $0x360] sm:$0xff]
  %v274 = vld [vmem:[%s1 + $0x368] sm:$0xff]
  %v275 = vld [vmem:[%s1 + $0x370] sm:$0xff]
  %v276 = vld [vmem:[%s1 + $0x378] sm:$0xff]
  %v277 = vld [vmem:[%s1 + $0x380] sm:$0xff]
  %v278 = vld [vmem:[%s1 + $0x388] sm:$0xff]
  %v279 = vld [vmem:[%s1 + $0x390] sm:$0xff]
  %v280 = vld [vmem:[%s1 + $0x398] sm:$0xff]
  %v281 = vld [vmem:[%s1 + $0x3a0] sm:$0xff]
  %v282 = vld [vmem:[%s1 + $0x3a8] sm:$0xff]
  %v283 = vld [vmem:[%s1 + $0x3b0] sm:$0xff]
  %v284 = vld [vmem:[%s1 + $0x3b8] sm:$0xff]
  %v285 = vld [vmem:[%s1 + $0x3c0] sm:$0xff]
  %v286 = vld [vmem:[%s1 + $0x3c8] sm:$0xff]
  %v287 = vld [vmem:[%s1 + $0x3d0] sm:$0xff]
  %v288 = vld [vmem:[%s1 + $0x3d8] sm:$0xff]
  %v289 = vld [vmem:[%s1 + $0x3e0] sm:$0xff]
  %v290 = vld [vmem:[%s1 + $0x3e8] sm:$0xff]
  %v291 = vld [vmem:[%s1 + $0x3f0] sm:$0xff]
  %v292 = vld [vmem:[%s1 + $0x3f8] sm:$0xff]
  %v293 = vld [vmem:[%s1 + $0x400] sm:$0xff]
  %v294 = vld [vmem:[%s1 + $0x408] sm:$0xff]
  %v295 = vld [vmem:[%s1 + $0x410] sm:$0xff]
  %v296 = vld [vmem:[%s1 + $0x418] sm:$0xff]
  %v297 = vld [vmem:[%s1 + $0x420] sm:$0xff]
  %v298 = vld [vmem:[%s1 + $0x428] sm:$0xff]
  %v299 = vld [vmem:[%s1 + $0x430] sm:$0xff]
  %v300 = vld [vmem:[%s1 + $0x438] sm:$0xff]
  %v301 = vld [vmem:[%s1 + $0x440] sm:$0xff]
  %v302 = vld [vmem:[%s1 + $0x448] sm:$0xff]
  %v303 = vld [vmem:[%s1 + $0x450] sm:$0xff]
  %v304 = vld [vmem:[%s1 + $0x458] sm:$0xff]
  %v305 = vld [vmem:[%s1 + $0x460] sm:$0xff]
  %v306 = vld [vmem:[%s1 + $0x468] sm:$0xff]
  %v307 = vld [vmem:[%s1 + $0x470] sm:$0xff]
  %v308 = vld [vmem:[%s1 + $0x478] sm:$0xff]
  %v309 = vld [vmem:[%s1 + $0x480] sm:$0xff]
  %v310 = vld [vmem:[%s1 + $0x488] sm:$0xff]
  %v311 = vld [vmem:[%s1 + $0x490] sm:$0xff]
  %v312 = vld [vmem:[%s1 + $0x498] sm:$0xff]
  %v313 = vld [vmem:[%s1 + $0x4a0] sm:$0xff]
  %v314 = vld [vmem:[%s1 + $0x4a8] sm:$0xff]
  %v315 = vld [vmem:[%s1 + $0x4b0] sm:$0xff]
  %v316 = vld [vmem:[%s1 + $0x4b8] sm:$0xff]
  %v317 = vld [vmem:[%s1 + $0x4c0] sm:$0xff]
  %v318 = vld [vmem:[%s1 + $0x4c8] sm:$0xff]
  %v319 = vld [vmem:[%s1 + $0x4d0] sm:$0xff]
  %v320 = vld [vmem:[%s1 + $0x4d8] sm:$0xff]
  %v321 = vld [vmem:[%s1 + $0x4e0] sm:$0xff]
  %v322 = vld [vmem:[%s1 + $0x4e8] sm:$0xff]
  %v323 = vld [vmem:[%s1 + $0x4f0] sm:$0xff]
  %v324 = vld [vmem:[%s1 + $0x4f8] sm:$0xff]
  %v325 = vld [vmem:[%s1 + $0x500] sm:$0xff]
  %v326 = vld [vmem:[%s1 + $0x508] sm:$0xff]
  %v327 = vld [vmem:[%s1 + $0x510] sm:$0xff]
  %v328 = vld [vmem:[%s1 + $0x518] sm:$0xff]
  %v329 = vld [vmem:[%s1 + $0x520] sm:$0xff]
  %v330 = vld [vmem:[%s1 + $0x528] sm:$0xff]
  %v331 = vld [vmem:[%s1 + $0x530] sm:$0xff]
  %v332 = vld [vmem:[%s1 + $0x538] sm:$0xff]
  %v333 = vld [vmem:[%s1 + $0x540] sm:$0xff]
  %v334 = vld [vmem:[%s1 + $0x548] sm:$0xff]
  %v335 = vld [vmem:[%s1 + $0x550] sm:$0xff]
  %v336 = vld [vmem:[%s1 + $0x558] sm:$0xff]
  %v337 = vld [vmem:[%s1 + $0x560] sm:$0xff]
  %v338 = vld [vmem:[%s1 + $0x568] sm:$0xff]
  %v339 = vld [vmem:[%s1 + $0x570] sm:$0xff]
  %v340 = vld [vmem:[%s1 + $0x578] sm:$0xff]
  %v341 = vld [vmem:[%s1 + $0x580] sm:$0xff]
  %v342 = vld [vmem:[%s1 + $0x588] sm:$0xff]
  %v343 = vld [vmem:[%s1 + $0x590] sm:$0xff]
  %v344 = vld [vmem:[%s1 + $0x598] sm:$0xff]
  %v345 = vld [vmem:[%s1 + $0x5a0] sm:$0xff]
  %v346 = vld [vmem:[%s1 + $0x5a8] sm:$0xff]
  %v347 = vld [vmem:[%s1 + $0x5b0] sm:$0xff]
  %v348 = vld [vmem:[%s1 + $0x5b8] sm:$0xff]
  %v349 = vld [vmem:[%s1 + $0x5c0] sm:$0xff]
  %v350 = vld [vmem:[%s1 + $0x5c8] sm:$0xff]
  %v351 = vld [vmem:[%s1 + $0x5d0] sm:$0xff]
  %v352 = vld [vmem:[%s1 + $0x5d8] sm:$0xff]
  %v353 = vld [vmem:[%s1 + $0x5e0] sm:$0xff]
  %v354 = vld [vmem:[%s1 + $0x5e8] sm:$0xff]
  %v355 = vld [vmem:[%s1 + $0x5f0] sm:$0xff]
  %v356 = vld [vmem:[%s1 + $0x5f8] sm:$0xff]
  %v357 = vld [vmem:[%s1 + $0x600] sm:$0xff]
  %v358 = vld [vmem:[%s1 + $0x608] sm:$0xff]
  %v359 = vld [vmem:[%s1 + $0x610] sm:$0xff]
  %v360 = vld [vmem:[%s1 + $0x618] sm:$0xff]
  %v361 = vld [vmem:[%s1 + $0x620] sm:$0xff]
  %v362 = vld [vmem:[%s1 + $0x628] sm:$0xff]
  %v363 = vld [vmem:[%s1 + $0x630] sm:$0xff]
  %v364 = vld [vmem:[%s1 + $0x638] sm:$0xff]
  %v365 = vld [vmem:[%s1 + $0x640] sm:$0xff]
  %v366 = vld [vmem:[%s1 + $0x648] sm:$0xff]
  %v367 = vld [vmem:[%s1 + $0x650] sm:$0xff]
  %v368 = vld [vmem:[%s1 + $0x658] sm:$0xff]
  %v369 = vld [vmem:[%s1 + $0x660] sm:$0xff]
  %v370 = vld [vmem:[%s1 + $0x668] sm:$0xff]
  %v371 = vld [vmem:[%s1 + $0x670] sm:$0xff]
  %v372 = vld [vmem:[%s1 + $0x678] sm:$0xff]
  %v373 = vld [vmem:[%s1 + $0x680] sm:$0xff]
  %v374 = vld [vmem:[%s1 + $0x688] sm:$0xff]
  %v375 = vld [vmem:[%s1 + $0x690] sm:$0xff]
  %v376 = vld [vmem:[%s1 + $0x698] sm:$0xff]
  %v377 = vld [vmem:[%s1 + $0x6a0] sm:$0xff]
  %v378 = vld [vmem:[%s1 + $0x6a8] sm:$0xff]
  %v379 = vld [vmem:[%s1 + $0x6b0] sm:$0xff]
  %v380 = vld [vmem:[%s1 + $0x6b8] sm:$0xff]
  %v528 = vunpack.c.l.b16 %v18
  %v529 = vunpack.c.h.b16 %v18
  %v530 = vunpack.c.l.b16 %v19
  %v531 = vunpack.c.h.b16 %v19
  %v532 = vunpack.c.l.b16 %v20
  %v533 = vunpack.c.h.b16 %v20
  %v534 = vunpack.c.l.b16 %v21
  %v535 = vunpack.c.h.b16 %v21
  %v536 = vunpack.c.l.b16 %v22
  %v537 = vunpack.c.h.b16 %v22
  %v538 = vunpack.c.l.b16 %v23
  %v539 = vunpack.c.h.b16 %v23
  %v540 = vunpack.c.l.b16 %v24
  %v541 = vunpack.c.h.b16 %v24
  %v542 = vunpack.c.l.b16 %v25
  %v543 = vunpack.c.h.b16 %v25
  %v544 = vunpack.c.l.b16 %v26
  %v545 = vunpack.c.h.b16 %v26
  %v546 = vunpack.c.l.b16 %v27
  %v547 = vunpack.c.h.b16 %v27
  %v548 = vunpack.c.l.b16 %v28
  %v549 = vunpack.c.h.b16 %v28
  %v550 = vunpack.c.l.b16 %v29
  %v551 = vunpack.c.h.b16 %v29
  %v552 = vunpack.c.l.b16 %v30
  %v553 = vunpack.c.h.b16 %v30
  %v554 = vunpack.c.l.b16 %v31
  %v555 = vunpack.c.h.b16 %v31
  %v556 = vunpack.c.l.b16 %v32
  %v557 = vunpack.c.h.b16 %v32
  %v558 = vunpack.c.l.b16 %v33
  %v559 = vunpack.c.h.b16 %v33
  %v560 = vunpack.c.l.b16 %v34
  %v561 = vunpack.c.h.b16 %v34
  %v562 = vunpack.c.l.b16 %v35
  %v563 = vunpack.c.h.b16 %v35
  %v564 = vunpack.c.l.b16 %v36
  %v565 = vunpack.c.h.b16 %v36
  %v566 = vunpack.c.l.b16 %v37
  %v567 = vunpack.c.h.b16 %v37
  %v568 = vunpack.c.l.b16 %v38
  %v569 = vunpack.c.h.b16 %v38
  %v570 = vunpack.c.l.b16 %v39
  %v571 = vunpack.c.h.b16 %v39
  %v572 = vunpack.c.l.b16 %v40
  %v573 = vunpack.c.h.b16 %v40
  %v574 = vunpack.c.l.b16 %v41
  %v575 = vunpack.c.h.b16 %v41
  %v576 = vunpack.c.l.b16 %v42
  %v577 = vunpack.c.h.b16 %v42
  %v578 = vunpack.c.l.b16 %v43
  %v579 = vunpack.c.h.b16 %v43
  %v580 = vunpack.c.l.b16 %v44
  %v581 = vunpack.c.h.b16 %v44
  %v582 = vunpack.c.l.b16 %v45
  %v583 = vunpack.c.h.b16 %v45
  %v584 = vunpack.c.l.b16 %v46
  %v585 = vunpack.c.h.b16 %v46
  %v586 = vunpack.c.l.b16 %v47
  %v587 = vunpack.c.h.b16 %v47
  %v588 = vunpack.c.l.b16 %v48
  %v589 = vunpack.c.h.b16 %v48
  %v590 = vunpack.c.l.b16 %v49
  %v591 = vunpack.c.h.b16 %v49
  %v592 = vunpack.c.l.b16 %v50
  %v593 = vunpack.c.h.b16 %v50
  %v594 = vunpack.c.l.b16 %v51
  %v595 = vunpack.c.h.b16 %v51
  %v596 = vunpack.c.l.b16 %v52
  %v597 = vunpack.c.h.b16 %v52
  %v598 = vunpack.c.l.b16 %v53
  %v599 = vunpack.c.h.b16 %v53
  %v600 = vunpack.c.l.b16 %v54
  %v601 = vunpack.c.h.b16 %v54
  %v602 = vunpack.c.l.b16 %v55
  %v603 = vunpack.c.h.b16 %v55
  %v604 = vunpack.c.l.b16 %v56
  %v605 = vunpack.c.h.b16 %v56
  %v606 = vunpack.c.l.b16 %v57
  %v607 = vunpack.c.h.b16 %v57
  %v608 = vunpack.c.l.b16 %v58
  %v609 = vunpack.c.h.b16 %v58
  %v610 = vunpack.c.l.b16 %v59
  %v611 = vunpack.c.h.b16 %v59
  %v612 = vunpack.c.l.b16 %v60
  %v613 = vunpack.c.h.b16 %v60
  %v614 = vunpack.c.l.b16 %v61
  %v615 = vunpack.c.h.b16 %v61
  %v616 = vunpack.c.l.b16 %v62
  %v617 = vunpack.c.h.b16 %v62
  %v618 = vunpack.c.l.b16 %v63
  %v619 = vunpack.c.h.b16 %v63
  %v620 = vunpack.c.l.b16 %v64
  %v621 = vunpack.c.h.b16 %v64
  %v622 = vunpack.c.l.b16 %v65
  %v623 = vunpack.c.h.b16 %v65
  %v624 = vunpack.c.l.b16 %v66
  %v625 = vunpack.c.h.b16 %v66
  %v626 = vunpack.c.l.b16 %v67
  %v627 = vunpack.c.h.b16 %v67
  %v628 = vunpack.c.l.b16 %v68
  %v629 = vunpack.c.h.b16 %v68
  %v630 = vunpack.c.l.b16 %v69
  %v631 = vunpack.c.h.b16 %v69
  %v632 = vunpack.c.l.b16 %v70
  %v633 = vunpack.c.h.b16 %v70
  %v634 = vunpack.c.l.b16 %v71
  %v635 = vunpack.c.h.b16 %v71
  %v636 = vunpack.c.l.b16 %v72
  %v637 = vunpack.c.h.b16 %v72
  %v638 = vunpack.c.l.b16 %v73
  %v639 = vunpack.c.h.b16 %v73
  %v640 = vunpack.c.l.b16 %v74
  %v641 = vunpack.c.h.b16 %v74
  %v642 = vunpack.c.l.b16 %v75
  %v643 = vunpack.c.h.b16 %v75
  %v644 = vunpack.c.l.b16 %v76
  %v645 = vunpack.c.h.b16 %v76
  %v646 = vunpack.c.l.b16 %v77
  %v647 = vunpack.c.h.b16 %v77
  %v648 = vunpack.c.l.b16 %v78
  %v649 = vunpack.c.h.b16 %v78
  %v650 = vunpack.c.l.b16 %v79
  %v651 = vunpack.c.h.b16 %v79
  %v652 = vunpack.c.l.b16 %v80
  %v653 = vunpack.c.h.b16 %v80
  %v654 = vunpack.c.l.b16 %v81
  %v655 = vunpack.c.h.b16 %v81
  %v656 = vunpack.c.l.b16 %v82
  %v657 = vunpack.c.h.b16 %v82
  %v658 = vunpack.c.l.b16 %v83
  %v659 = vunpack.c.h.b16 %v83
  %v660 = vunpack.c.l.b16 %v84
  %v661 = vunpack.c.h.b16 %v84
  %v662 = vunpack.c.l.b16 %v85
  %v663 = vunpack.c.h.b16 %v85
  %v664 = vunpack.c.l.b16 %v86
  %v665 = vunpack.c.h.b16 %v86
  %v666 = vunpack.c.l.b16 %v87
  %v667 = vunpack.c.h.b16 %v87
  %v668 = vunpack.c.l.b16 %v88
  %v669 = vunpack.c.h.b16 %v88
  %v670 = vunpack.c.l.b16 %v89
  %v671 = vunpack.c.h.b16 %v89
  %v672 = vunpack.c.l.b16 %v90
  %v673 = vunpack.c.h.b16 %v90
  %v674 = vunpack.c.l.b16 %v91
  %v675 = vunpack.c.h.b16 %v91
  %v676 = vunpack.c.l.b16 %v92
  %v677 = vunpack.c.h.b16 %v92
  %v678 = vunpack.c.l.b16 %v93
  %v679 = vunpack.c.h.b16 %v93
  %v680 = vunpack.c.l.b16 %v94
  %v681 = vunpack.c.h.b16 %v94
  %v682 = vunpack.c.l.b16 %v95
  %v683 = vunpack.c.h.b16 %v95
  %v684 = vunpack.c.l.b16 %v96
  %v685 = vunpack.c.h.b16 %v96
  %v686 = vunpack.c.l.b16 %v97
  %v687 = vunpack.c.h.b16 %v97
  %v688 = vunpack.c.l.b16 %v98
  %v689 = vunpack.c.h.b16 %v98
  %v690 = vunpack.c.l.b16 %v99
  %v691 = vunpack.c.h.b16 %v99
  %v692 = vunpack.c.l.b16 %v100
  %v693 = vunpack.c.h.b16 %v100
  %v694 = vunpack.c.l.b16 %v101
  %v695 = vunpack.c.h.b16 %v101
  %v696 = vunpack.c.l.b16 %v102
  %v697 = vunpack.c.h.b16 %v102
  %v698 = vunpack.c.l.b16 %v103
  %v699 = vunpack.c.h.b16 %v103
  %v700 = vunpack.c.l.b16 %v104
  %v701 = vunpack.c.h.b16 %v104
  %v702 = vunpack.c.l.b16 %v105
  %v703 = vunpack.c.h.b16 %v105
  %v704 = vunpack.c.l.b16 %v106
  %v705 = vunpack.c.h.b16 %v106
  %v706 = vunpack.c.l.b16 %v107
  %v707 = vunpack.c.h.b16 %v107
  %v708 = vunpack.c.l.b16 %v108
  %v709 = vunpack.c.h.b16 %v108
  %v710 = vunpack.c.l.b16 %v109
  %v711 = vunpack.c.h.b16 %v109
  %v712 = vunpack.c.l.b16 %v110
  %v713 = vunpack.c.h.b16 %v110
  %v714 = vunpack.c.l.b16 %v111
  %v715 = vunpack.c.h.b16 %v111
  %v716 = vunpack.c.l.b16 %v112
  %v717 = vunpack.c.h.b16 %v112
  %v718 = vunpack.c.l.b16 %v113
  %v719 = vunpack.c.h.b16 %v113
  %v720 = vunpack.c.l.b16 %v114
  %v721 = vunpack.c.h.b16 %v114
  %v722 = vunpack.c.l.b16 %v115
  %v723 = vunpack.c.h.b16 %v115
  %v724 = vunpack.c.l.b16 %v116
  %v725 = vunpack.c.h.b16 %v116
  %v726 = vunpack.c.l.b16 %v117
  %v727 = vunpack.c.h.b16 %v117
  %v728 = vunpack.c.l.b16 %v118
  %v729 = vunpack.c.h.b16 %v118
  %v730 = vunpack.c.l.b16 %v119
  %v731 = vunpack.c.h.b16 %v119
  %v732 = vunpack.c.l.b16 %v120
  %v733 = vunpack.c.h.b16 %v120
  %v734 = vunpack.c.l.b16 %v121
  %v735 = vunpack.c.h.b16 %v121
  %v736 = vunpack.c.l.b16 %v122
  %v737 = vunpack.c.h.b16 %v122
  %v738 = vunpack.c.l.b16 %v123
  %v739 = vunpack.c.h.b16 %v123
  %v740 = vunpack.c.l.b16 %v124
  %v741 = vunpack.c.h.b16 %v124
  %v742 = vunpack.c.l.b16 %v125
  %v743 = vunpack.c.h.b16 %v125
  %v744 = vunpack.c.l.b16 %v126
  %v745 = vunpack.c.h.b16 %v126
  %v746 = vunpack.c.l.b16 %v127
  %v747 = vunpack.c.h.b16 %v127
  %v748 = vunpack.c.l.b16 %v128
  %v749 = vunpack.c.h.b16 %v128
  %v750 = vunpack.c.l.b16 %v129
  %v751 = vunpack.c.h.b16 %v129
  %v752 = vunpack.c.l.b16 %v130
  %v753 = vunpack.c.h.b16 %v130
  %v754 = vunpack.c.l.b16 %v131
  %v755 = vunpack.c.h.b16 %v131
  %v756 = vunpack.c.l.b16 %v132
  %v757 = vunpack.c.h.b16 %v132
  %v758 = vunpack.c.l.b16 %v133
  %v759 = vunpack.c.h.b16 %v133
  %v760 = vunpack.c.l.b16 %v134
  %v761 = vunpack.c.h.b16 %v134
  %v762 = vunpack.c.l.b16 %v135
  %v763 = vunpack.c.h.b16 %v135
  %v764 = vunpack.c.l.b16 %v136
  %v765 = vunpack.c.h.b16 %v136
  %v766 = vunpack.c.l.b16 %v137
  %v767 = vunpack.c.h.b16 %v137
  %v768 = vunpack.c.l.b16 %v138
  %v769 = vunpack.c.h.b16 %v138
  %v770 = vunpack.c.l.b16 %v139
  %v771 = vunpack.c.h.b16 %v139
  %v772 = vunpack.c.l.b16 %v140
  %v773 = vunpack.c.h.b16 %v140
  %v774 = vunpack.c.l.b16 %v141
  %v775 = vunpack.c.h.b16 %v141
  %v776 = vunpack.c.l.b16 %v142
  %v777 = vunpack.c.h.b16 %v142
  %v778 = vunpack.c.l.b16 %v143
  %v779 = vunpack.c.h.b16 %v143
  %v780 = vunpack.c.l.b16 %v144
  %v781 = vunpack.c.h.b16 %v144
  %v782 = vunpack.c.l.b16 %v145
  %v783 = vunpack.c.h.b16 %v145
  %v784 = vunpack.c.l.b16 %v146
  %v785 = vunpack.c.h.b16 %v146
  %v786 = vunpack.c.l.b16 %v147
  %v787 = vunpack.c.h.b16 %v147
  %v788 = vunpack.c.l.b16 %v148
  %v789 = vunpack.c.h.b16 %v148
  %v790 = vunpack.c.l.b16 %v149
  %v791 = vunpack.c.h.b16 %v149
  %v792 = vunpack.c.l.b16 %v150
  %v793 = vunpack.c.h.b16 %v150
  %v794 = vunpack.c.l.b16 %v151
  %v795 = vunpack.c.h.b16 %v151
  %v796 = vunpack.c.l.b16 %v152
  %v797 = vunpack.c.h.b16 %v152
  %v798 = vunpack.c.l.b16 %v153
  %v799 = vunpack.c.h.b16 %v153
  %v800 = vunpack.c.l.b16 %v154
  %v801 = vunpack.c.h.b16 %v154
  %v802 = vunpack.c.l.b16 %v155
  %v803 = vunpack.c.h.b16 %v155
  %v804 = vunpack.c.l.b16 %v156
  %v805 = vunpack.c.h.b16 %v156
  %v806 = vunpack.c.l.b16 %v157
  %v807 = vunpack.c.h.b16 %v157
  %v808 = vunpack.c.l.b16 %v158
  %v809 = vunpack.c.h.b16 %v158
  %v810 = vunpack.c.l.b16 %v159
  %v811 = vunpack.c.h.b16 %v159
  %v812 = vunpack.c.l.b16 %v160
  %v813 = vunpack.c.h.b16 %v160
  %v814 = vunpack.c.l.b16 %v161
  %v815 = vunpack.c.h.b16 %v161
  %v816 = vunpack.c.l.b16 %v162
  %v817 = vunpack.c.h.b16 %v162
  %v818 = vunpack.c.l.b16 %v163
  %v819 = vunpack.c.h.b16 %v163
  %v820 = vunpack.c.l.b16 %v164
  %v821 = vunpack.c.h.b16 %v164
  %v822 = vpack.c.b16 %v542, %v528
  %v823 = vpack.c.b16 %v543, %v529
  %v824 = vpack.c.b16 %v544, %v530
  %v825 = vpack.c.b16 %v545, %v531
  %v826 = vpack.c.b16 %v546, %v532
  %v827 = vpack.c.b16 %v547, %v533
  %v828 = vpack.c.b16 %v548, %v534
  %v829 = vpack.c.b16 %v549, %v535
  %v830 = vpack.c.b16 %v550, %v536
  %v831 = vpack.c.b16 %v551, %v537
  %v832 = vpack.c.b16 %v552, %v538
  %v833 = vpack.c.b16 %v553, %v539
  %v834 = vpack.c.b16 %v554, %v540
  %v835 = vpack.c.b16 %v555, %v541
  %v836 = vpack.c.b16 %v570, %v556
  %v837 = vpack.c.b16 %v571, %v557
  %v838 = vpack.c.b16 %v572, %v558
  %v839 = vpack.c.b16 %v573, %v559
  %v840 = vpack.c.b16 %v574, %v560
  %v841 = vpack.c.b16 %v575, %v561
  %v842 = vpack.c.b16 %v576, %v562
  %v843 = vpack.c.b16 %v577, %v563
  %v844 = vpack.c.b16 %v578, %v564
  %v845 = vpack.c.b16 %v579, %v565
  %v846 = vpack.c.b16 %v580, %v566
  %v847 = vpack.c.b16 %v581, %v567
  %v848 = vpack.c.b16 %v582, %v568
  %v849 = vpack.c.b16 %v583, %v569
  %v850 = vpack.c.b16 %v598, %v584
  %v851 = vpack.c.b16 %v599, %v585
  %v852 = vpack.c.b16 %v600, %v586
  %v853 = vpack.c.b16 %v601, %v587
  %v854 = vpack.c.b16 %v602, %v588
  %v855 = vpack.c.b16 %v603, %v589
  %v856 = vpack.c.b16 %v604, %v590
  %v857 = vpack.c.b16 %v605, %v591
  %v858 = vpack.c.b16 %v606, %v592
  %v859 = vpack.c.b16 %v607, %v593
  %v860 = vpack.c.b16 %v608, %v594
  %v861 = vpack.c.b16 %v609, %v595
  %v862 = vpack.c.b16 %v610, %v596
  %v863 = vpack.c.b16 %v611, %v597
  %v864 = vpack.c.b16 %v626, %v612
  %v865 = vpack.c.b16 %v627, %v613
  %v866 = vpack.c.b16 %v628, %v614
  %v867 = vpack.c.b16 %v629, %v615
  %v868 = vpack.c.b16 %v630, %v616
  %v869 = vpack.c.b16 %v631, %v617
  %v870 = vpack.c.b16 %v632, %v618
  %v871 = vpack.c.b16 %v633, %v619
  %v872 = vpack.c.b16 %v634, %v620
  %v873 = vpack.c.b16 %v635, %v621
  %v874 = vpack.c.b16 %v636, %v622
  %v875 = vpack.c.b16 %v637, %v623
  %v876 = vpack.c.b16 %v638, %v624
  %v877 = vpack.c.b16 %v639, %v625
  %v878 = vpack.c.b16 %v654, %v640
  %v879 = vpack.c.b16 %v655, %v641
  %v880 = vpack.c.b16 %v656, %v642
  %v881 = vpack.c.b16 %v657, %v643
  %v882 = vpack.c.b16 %v658, %v644
  %v883 = vpack.c.b16 %v659, %v645
  %v884 = vpack.c.b16 %v660, %v646
  %v885 = vpack.c.b16 %v661, %v647
  %v886 = vpack.c.b16 %v662, %v648
  %v887 = vpack.c.b16 %v663, %v649
  %v888 = vpack.c.b16 %v664, %v650
  %v889 = vpack.c.b16 %v665, %v651
  %v890 = vpack.c.b16 %v666, %v652
  %v891 = vpack.c.b16 %v667, %v653
  %v892 = vpack.c.b16 %v682, %v668
  %v893 = vpack.c.b16 %v683, %v669
  %v894 = vpack.c.b16 %v684, %v670
  %v895 = vpack.c.b16 %v685, %v671
  %v896 = vpack.c.b16 %v686, %v672
  %v897 = vpack.c.b16 %v687, %v673
  %v898 = vpack.c.b16 %v688, %v674
  %v899 = vpack.c.b16 %v689, %v675
  %v900 = vpack.c.b16 %v690, %v676
  %v901 = vpack.c.b16 %v691, %v677
  %v902 = vpack.c.b16 %v692, %v678
  %v903 = vpack.c.b16 %v693, %v679
  %v904 = vpack.c.b16 %v694, %v680
  %v905 = vpack.c.b16 %v695, %v681
  %v906 = vpack.c.b16 %v710, %v696
  %v907 = vpack.c.b16 %v711, %v697
  %v908 = vpack.c.b16 %v712, %v698
  %v909 = vpack.c.b16 %v713, %v699
  %v910 = vpack.c.b16 %v714, %v700
  %v911 = vpack.c.b16 %v715, %v701
  %v912 = vpack.c.b16 %v716, %v702
  %v913 = vpack.c.b16 %v717, %v703
  %v914 = vpack.c.b16 %v718, %v704
  %v915 = vpack.c.b16 %v719, %v705
  %v916 = vpack.c.b16 %v720, %v706
  %v917 = vpack.c.b16 %v721, %v707
  %v918 = vpack.c.b16 %v722, %v708
  %v919 = vpack.c.b16 %v723, %v709
  %v920 = vpack.c.b16 %v738, %v724
  %v921 = vpack.c.b16 %v739, %v725
  %v922 = vpack.c.b16 %v740, %v726
  %v923 = vpack.c.b16 %v741, %v727
  %v924 = vpack.c.b16 %v742, %v728
  %v925 = vpack.c.b16 %v743, %v729
  %v926 = vpack.c.b16 %v744, %v730
  %v927 = vpack.c.b16 %v745, %v731
  %v928 = vpack.c.b16 %v746, %v732
  %v929 = vpack.c.b16 %v747, %v733
  %v930 = vpack.c.b16 %v748, %v734
  %v931 = vpack.c.b16 %v749, %v735
  %v932 = vpack.c.b16 %v750, %v736
  %v933 = vpack.c.b16 %v751, %v737
  %v934 = vpack.c.b16 %v766, %v752
  %v935 = vpack.c.b16 %v767, %v753
  %v936 = vpack.c.b16 %v768, %v754
  %v937 = vpack.c.b16 %v769, %v755
  %v938 = vpack.c.b16 %v770, %v756
  %v939 = vpack.c.b16 %v771, %v757
  %v940 = vpack.c.b16 %v772, %v758
  %v941 = vpack.c.b16 %v773, %v759
  %v942 = vpack.c.b16 %v774, %v760
  %v943 = vpack.c.b16 %v775, %v761
  %v944 = vpack.c.b16 %v776, %v762
  %v945 = vpack.c.b16 %v777, %v763
  %v946 = vpack.c.b16 %v778, %v764
  %v947 = vpack.c.b16 %v779, %v765
  %v948 = vpack.c.b16 %v794, %v780
  %v949 = vpack.c.b16 %v795, %v781
  %v950 = vpack.c.b16 %v796, %v782
  %v951 = vpack.c.b16 %v797, %v783
  %v952 = vpack.c.b16 %v798, %v784
  %v953 = vpack.c.b16 %v799, %v785
  %v954 = vpack.c.b16 %v800, %v786
  %v955 = vpack.c.b16 %v801, %v787
  %v956 = vpack.c.b16 %v802, %v788
  %v957 = vpack.c.b16 %v803, %v789
  %v958 = vpack.c.b16 %v804, %v790
  %v959 = vpack.c.b16 %v805, %v791
  %v960 = vpack.c.b16 %v806, %v792
  %v961 = vpack.c.b16 %v807, %v793
  %v962 = vpack.c.b16 %v808, %v808
  %v963 = vpack.c.b16 %v809, %v809
  %v964 = vpack.c.b16 %v810, %v810
  %v965 = vpack.c.b16 %v811, %v811
  %v966 = vpack.c.b16 %v812, %v812
  %v967 = vpack.c.b16 %v813, %v813
  %v968 = vpack.c.b16 %v814, %v814
  %v969 = vpack.c.b16 %v815, %v815
  %v970 = vpack.c.b16 %v816, %v816
  %v971 = vpack.c.b16 %v817, %v817
  %v972 = vpack.c.b16 %v818, %v818
  %v973 = vpack.c.b16 %v819, %v819
  %v974 = vpack.c.b16 %v820, %v820
  %v975 = vpack.c.b16 %v821, %v821
  %v1335 = vunpack.c.l.b16 %v165
  %v1336 = vunpack.c.h.b16 %v165
  %v1337 = vunpack.c.l.b16 %v166
  %v1338 = vunpack.c.h.b16 %v166
  %v1339 = vunpack.c.l.b16 %v167
  %v1340 = vunpack.c.h.b16 %v167
  %v1341 = vunpack.c.l.b16 %v168
  %v1342 = vunpack.c.h.b16 %v168
  %v1343 = vunpack.c.l.b16 %v169
  %v1344 = vunpack.c.h.b16 %v169
  %v1345 = vunpack.c.l.b16 %v170
  %v1346 = vunpack.c.h.b16 %v170
  %v1347 = vunpack.c.l.b16 %v171
  %v1348 = vunpack.c.h.b16 %v171
  %v1349 = vunpack.c.l.b16 %v172
  %v1350 = vunpack.c.h.b16 %v172
  %v1351 = vunpack.c.l.b16 %v173
  %v1352 = vunpack.c.h.b16 %v173
  %v1353 = vunpack.c.l.b16 %v174
  %v1354 = vunpack.c.h.b16 %v174
  %v1355 = vunpack.c.l.b16 %v175
  %v1356 = vunpack.c.h.b16 %v175
  %v1357 = vunpack.c.l.b16 %v176
  %v1358 = vunpack.c.h.b16 %v176
  %v1359 = vunpack.c.l.b16 %v177
  %v1360 = vunpack.c.h.b16 %v177
  %v1361 = vunpack.c.l.b16 %v178
  %v1362 = vunpack.c.h.b16 %v178
  %v1363 = vunpack.c.l.b16 %v179
  %v1364 = vunpack.c.h.b16 %v179
  %v1365 = vunpack.c.l.b16 %v180
  %v1366 = vunpack.c.h.b16 %v180
  %v1367 = vunpack.c.l.b16 %v181
  %v1368 = vunpack.c.h.b16 %v181
  %v1369 = vunpack.c.l.b16 %v182
  %v1370 = vunpack.c.h.b16 %v182
  %v1371 = vunpack.c.l.b16 %v183
  %v1372 = vunpack.c.h.b16 %v183
  %v1373 = vunpack.c.l.b16 %v184
  %v1374 = vunpack.c.h.b16 %v184
  %v1375 = vunpack.c.l.b16 %v185
  %v1376 = vunpack.c.h.b16 %v185
  %v1377 = vunpack.c.l.b16 %v186
  %v1378 = vunpack.c.h.b16 %v186
  %v1379 = vunpack.c.l.b16 %v187
  %v1380 = vunpack.c.h.b16 %v187
  %v1381 = vunpack.c.l.b16 %v188
  %v1382 = vunpack.c.h.b16 %v188
  %v1383 = vunpack.c.l.b16 %v189
  %v1384 = vunpack.c.h.b16 %v189
  %v1385 = vunpack.c.l.b16 %v190
  %v1386 = vunpack.c.h.b16 %v190
  %v1387 = vunpack.c.l.b16 %v191
  %v1388 = vunpack.c.h.b16 %v191
  %v1389 = vunpack.c.l.b16 %v192
  %v1390 = vunpack.c.h.b16 %v192
  %v1391 = vunpack.c.l.b16 %v193
  %v1392 = vunpack.c.h.b16 %v193
  %v1393 = vunpack.c.l.b16 %v194
  %v1394 = vunpack.c.h.b16 %v194
  %v1395 = vunpack.c.l.b16 %v195
  %v1396 = vunpack.c.h.b16 %v195
  %v1397 = vunpack.c.l.b16 %v196
  %v1398 = vunpack.c.h.b16 %v196
  %v1399 = vunpack.c.l.b16 %v197
  %v1400 = vunpack.c.h.b16 %v197
  %v1401 = vunpack.c.l.b16 %v198
  %v1402 = vunpack.c.h.b16 %v198
  %v1403 = vunpack.c.l.b16 %v199
  %v1404 = vunpack.c.h.b16 %v199
  %v1405 = vunpack.c.l.b16 %v200
  %v1406 = vunpack.c.h.b16 %v200
  %v1407 = vunpack.c.l.b16 %v201
  %v1408 = vunpack.c.h.b16 %v201
  %v1409 = vunpack.c.l.b16 %v202
  %v1410 = vunpack.c.h.b16 %v202
  %v1411 = vunpack.c.l.b16 %v203
  %v1412 = vunpack.c.h.b16 %v203
  %v1413 = vunpack.c.l.b16 %v204
  %v1414 = vunpack.c.h.b16 %v204
  %v1415 = vunpack.c.l.b16 %v205
  %v1416 = vunpack.c.h.b16 %v205
  %v1417 = vunpack.c.l.b16 %v206
  %v1418 = vunpack.c.h.b16 %v206
  %v1419 = vunpack.c.l.b16 %v207
  %v1420 = vunpack.c.h.b16 %v207
  %v1421 = vunpack.c.l.b16 %v208
  %v1422 = vunpack.c.h.b16 %v208
  %v1423 = vunpack.c.l.b16 %v209
  %v1424 = vunpack.c.h.b16 %v209
  %v1425 = vunpack.c.l.b16 %v210
  %v1426 = vunpack.c.h.b16 %v210
  %v1427 = vunpack.c.l.b16 %v211
  %v1428 = vunpack.c.h.b16 %v211
  %v1429 = vunpack.c.l.b16 %v212
  %v1430 = vunpack.c.h.b16 %v212
  %v1431 = vunpack.c.l.b16 %v213
  %v1432 = vunpack.c.h.b16 %v213
  %v1433 = vunpack.c.l.b16 %v214
  %v1434 = vunpack.c.h.b16 %v214
  %v1435 = vunpack.c.l.b16 %v215
  %v1436 = vunpack.c.h.b16 %v215
  %v1437 = vunpack.c.l.b16 %v216
  %v1438 = vunpack.c.h.b16 %v216
  %v1439 = vunpack.c.l.b16 %v217
  %v1440 = vunpack.c.h.b16 %v217
  %v1441 = vunpack.c.l.b16 %v218
  %v1442 = vunpack.c.h.b16 %v218
  %v1443 = vunpack.c.l.b16 %v219
  %v1444 = vunpack.c.h.b16 %v219
  %v1445 = vunpack.c.l.b16 %v220
  %v1446 = vunpack.c.h.b16 %v220
  %v1447 = vunpack.c.l.b16 %v221
  %v1448 = vunpack.c.h.b16 %v221
  %v1449 = vunpack.c.l.b16 %v222
  %v1450 = vunpack.c.h.b16 %v222
  %v1451 = vunpack.c.l.b16 %v223
  %v1452 = vunpack.c.h.b16 %v223
  %v1453 = vunpack.c.l.b16 %v224
  %v1454 = vunpack.c.h.b16 %v224
  %v1455 = vunpack.c.l.b16 %v225
  %v1456 = vunpack.c.h.b16 %v225
  %v1457 = vunpack.c.l.b16 %v226
  %v1458 = vunpack.c.h.b16 %v226
  %v1459 = vunpack.c.l.b16 %v227
  %v1460 = vunpack.c.h.b16 %v227
  %v1461 = vunpack.c.l.b16 %v228
  %v1462 = vunpack.c.h.b16 %v228
  %v1463 = vunpack.c.l.b16 %v229
  %v1464 = vunpack.c.h.b16 %v229
  %v1465 = vunpack.c.l.b16 %v230
  %v1466 = vunpack.c.h.b16 %v230
  %v1467 = vunpack.c.l.b16 %v231
  %v1468 = vunpack.c.h.b16 %v231
  %v1469 = vunpack.c.l.b16 %v232
  %v1470 = vunpack.c.h.b16 %v232
  %v1471 = vunpack.c.l.b16 %v233
  %v1472 = vunpack.c.h.b16 %v233
  %v1473 = vunpack.c.l.b16 %v234
  %v1474 = vunpack.c.h.b16 %v234
  %v1475 = vunpack.c.l.b16 %v235
  %v1476 = vunpack.c.h.b16 %v235
  %v1477 = vunpack.c.l.b16 %v236
  %v1478 = vunpack.c.h.b16 %v236
  %v1479 = vunpack.c.l.b16 %v237
  %v1480 = vunpack.c.h.b16 %v237
  %v1481 = vunpack.c.l.b16 %v238
  %v1482 = vunpack.c.h.b16 %v238
  %v1483 = vunpack.c.l.b16 %v239
  %v1484 = vunpack.c.h.b16 %v239
  %v1485 = vunpack.c.l.b16 %v240
  %v1486 = vunpack.c.h.b16 %v240
  %v1487 = vunpack.c.l.b16 %v241
  %v1488 = vunpack.c.h.b16 %v241
  %v1489 = vunpack.c.l.b16 %v242
  %v1490 = vunpack.c.h.b16 %v242
  %v1491 = vunpack.c.l.b16 %v243
  %v1492 = vunpack.c.h.b16 %v243
  %v1493 = vunpack.c.l.b16 %v244
  %v1494 = vunpack.c.h.b16 %v244
  %v1495 = vunpack.c.l.b16 %v245
  %v1496 = vunpack.c.h.b16 %v245
  %v1497 = vunpack.c.l.b16 %v246
  %v1498 = vunpack.c.h.b16 %v246
  %v1499 = vunpack.c.l.b16 %v247
  %v1500 = vunpack.c.h.b16 %v247
  %v1501 = vunpack.c.l.b16 %v248
  %v1502 = vunpack.c.h.b16 %v248
  %v1503 = vunpack.c.l.b16 %v249
  %v1504 = vunpack.c.h.b16 %v249
  %v1505 = vunpack.c.l.b16 %v250
  %v1506 = vunpack.c.h.b16 %v250
  %v1507 = vunpack.c.l.b16 %v251
  %v1508 = vunpack.c.h.b16 %v251
  %v1509 = vunpack.c.l.b16 %v252
  %v1510 = vunpack.c.h.b16 %v252
  %v1511 = vunpack.c.l.b16 %v253
  %v1512 = vunpack.c.h.b16 %v253
  %v1513 = vunpack.c.l.b16 %v254
  %v1514 = vunpack.c.h.b16 %v254
  %v1515 = vunpack.c.l.b16 %v255
  %v1516 = vunpack.c.h.b16 %v255
  %v1517 = vunpack.c.l.b16 %v256
  %v1518 = vunpack.c.h.b16 %v256
  %v1519 = vunpack.c.l.b16 %v257
  %v1520 = vunpack.c.h.b16 %v257
  %v1521 = vunpack.c.l.b16 %v258
  %v1522 = vunpack.c.h.b16 %v258
  %v1523 = vunpack.c.l.b16 %v259
  %v1524 = vunpack.c.h.b16 %v259
  %v1525 = vunpack.c.l.b16 %v260
  %v1526 = vunpack.c.h.b16 %v260
  %v1527 = vunpack.c.l.b16 %v261
  %v1528 = vunpack.c.h.b16 %v261
  %v1529 = vunpack.c.l.b16 %v262
  %v1530 = vunpack.c.h.b16 %v262
  %v1531 = vunpack.c.l.b16 %v263
  %v1532 = vunpack.c.h.b16 %v263
  %v1533 = vunpack.c.l.b16 %v264
  %v1534 = vunpack.c.h.b16 %v264
  %v1535 = vunpack.c.l.b16 %v265
  %v1536 = vunpack.c.h.b16 %v265
  %v1537 = vunpack.c.l.b16 %v266
  %v1538 = vunpack.c.h.b16 %v266
  %v1539 = vunpack.c.l.b16 %v267
  %v1540 = vunpack.c.h.b16 %v267
  %v1541 = vunpack.c.l.b16 %v268
  %v1542 = vunpack.c.h.b16 %v268
  %v1543 = vunpack.c.l.b16 %v269
  %v1544 = vunpack.c.h.b16 %v269
  %v1545 = vunpack.c.l.b16 %v270
  %v1546 = vunpack.c.h.b16 %v270
  %v1547 = vunpack.c.l.b16 %v271
  %v1548 = vunpack.c.h.b16 %v271
  %v1549 = vunpack.c.l.b16 %v272
  %v1550 = vunpack.c.h.b16 %v272
  %v1551 = vunpack.c.l.b16 %v273
  %v1552 = vunpack.c.h.b16 %v273
  %v1553 = vunpack.c.l.b16 %v274
  %v1554 = vunpack.c.h.b16 %v274
  %v1555 = vunpack.c.l.b16 %v275
  %v1556 = vunpack.c.h.b16 %v275
  %v1557 = vunpack.c.l.b16 %v276
  %v1558 = vunpack.c.h.b16 %v276
  %v1559 = vunpack.c.l.b16 %v277
  %v1560 = vunpack.c.h.b16 %v277
  %v1561 = vunpack.c.l.b16 %v278
  %v1562 = vunpack.c.h.b16 %v278
  %v1563 = vunpack.c.l.b16 %v279
  %v1564 = vunpack.c.h.b16 %v279
  %v1565 = vunpack.c.l.b16 %v280
  %v1566 = vunpack.c.h.b16 %v280
  %v1567 = vunpack.c.l.b16 %v281
  %v1568 = vunpack.c.h.b16 %v281
  %v1569 = vunpack.c.l.b16 %v282
  %v1570 = vunpack.c.h.b16 %v282
  %v1571 = vunpack.c.l.b16 %v283
  %v1572 = vunpack.c.h.b16 %v283
  %v1573 = vunpack.c.l.b16 %v284
  %v1574 = vunpack.c.h.b16 %v284
  %v1575 = vunpack.c.l.b16 %v285
  %v1576 = vunpack.c.h.b16 %v285
  %v1577 = vunpack.c.l.b16 %v286
  %v1578 = vunpack.c.h.b16 %v286
  %v1579 = vunpack.c.l.b16 %v287
  %v1580 = vunpack.c.h.b16 %v287
  %v1581 = vunpack.c.l.b16 %v288
  %v1582 = vunpack.c.h.b16 %v288
  %v1583 = vunpack.c.l.b16 %v289
  %v1584 = vunpack.c.h.b16 %v289
  %v1585 = vunpack.c.l.b16 %v290
  %v1586 = vunpack.c.h.b16 %v290
  %v1587 = vunpack.c.l.b16 %v291
  %v1588 = vunpack.c.h.b16 %v291
  %v1589 = vunpack.c.l.b16 %v292
  %v1590 = vunpack.c.h.b16 %v292
  %v1591 = vunpack.c.l.b16 %v293
  %v1592 = vunpack.c.h.b16 %v293
  %v1593 = vunpack.c.l.b16 %v294
  %v1594 = vunpack.c.h.b16 %v294
  %v1595 = vunpack.c.l.b16 %v295
  %v1596 = vunpack.c.h.b16 %v295
  %v1597 = vunpack.c.l.b16 %v296
  %v1598 = vunpack.c.h.b16 %v296
  %v1599 = vunpack.c.l.b16 %v297
  %v1600 = vunpack.c.h.b16 %v297
  %v1601 = vunpack.c.l.b16 %v298
  %v1602 = vunpack.c.h.b16 %v298
  %v1603 = vunpack.c.l.b16 %v299
  %v1604 = vunpack.c.h.b16 %v299
  %v1605 = vunpack.c.l.b16 %v300
  %v1606 = vunpack.c.h.b16 %v300
  %v1607 = vunpack.c.l.b16 %v301
  %v1608 = vunpack.c.h.b16 %v301
  %v1609 = vunpack.c.l.b16 %v302
  %v1610 = vunpack.c.h.b16 %v302
  %v1611 = vunpack.c.l.b16 %v303
  %v1612 = vunpack.c.h.b16 %v303
  %v1613 = vunpack.c.l.b16 %v304
  %v1614 = vunpack.c.h.b16 %v304
  %v1615 = vunpack.c.l.b16 %v305
  %v1616 = vunpack.c.h.b16 %v305
  %v1617 = vunpack.c.l.b16 %v306
  %v1618 = vunpack.c.h.b16 %v306
  %v1619 = vunpack.c.l.b16 %v307
  %v1620 = vunpack.c.h.b16 %v307
  %v1621 = vunpack.c.l.b16 %v308
  %v1622 = vunpack.c.h.b16 %v308
  %v1623 = vunpack.c.l.b16 %v309
  %v1624 = vunpack.c.h.b16 %v309
  %v1625 = vunpack.c.l.b16 %v310
  %v1626 = vunpack.c.h.b16 %v310
  %v1627 = vunpack.c.l.b16 %v311
  %v1628 = vunpack.c.h.b16 %v311
  %v1629 = vunpack.c.l.b16 %v312
  %v1630 = vunpack.c.h.b16 %v312
  %v1631 = vunpack.c.l.b16 %v313
  %v1632 = vunpack.c.h.b16 %v313
  %v1633 = vunpack.c.l.b16 %v314
  %v1634 = vunpack.c.h.b16 %v314
  %v1635 = vunpack.c.l.b16 %v315
  %v1636 = vunpack.c.h.b16 %v315
  %v1637 = vunpack.c.l.b16 %v316
  %v1638 = vunpack.c.h.b16 %v316
  %v1639 = vunpack.c.l.b16 %v317
  %v1640 = vunpack.c.h.b16 %v317
  %v1641 = vunpack.c.l.b16 %v318
  %v1642 = vunpack.c.h.b16 %v318
  %v1643 = vunpack.c.l.b16 %v319
  %v1644 = vunpack.c.h.b16 %v319
  %v1645 = vunpack.c.l.b16 %v320
  %v1646 = vunpack.c.h.b16 %v320
  %v1647 = vunpack.c.l.b16 %v321
  %v1648 = vunpack.c.h.b16 %v321
  %v1649 = vunpack.c.l.b16 %v322
  %v1650 = vunpack.c.h.b16 %v322
  %v1651 = vunpack.c.l.b16 %v323
  %v1652 = vunpack.c.h.b16 %v323
  %v1653 = vunpack.c.l.b16 %v324
  %v1654 = vunpack.c.h.b16 %v324
  %v1655 = vunpack.c.l.b16 %v325
  %v1656 = vunpack.c.h.b16 %v325
  %v1657 = vunpack.c.l.b16 %v326
  %v1658 = vunpack.c.h.b16 %v326
  %v1659 = vunpack.c.l.b16 %v327
  %v1660 = vunpack.c.h.b16 %v327
  %v1661 = vunpack.c.l.b16 %v328
  %v1662 = vunpack.c.h.b16 %v328
  %v1663 = vunpack.c.l.b16 %v329
  %v1664 = vunpack.c.h.b16 %v329
  %v1665 = vunpack.c.l.b16 %v330
  %v1666 = vunpack.c.h.b16 %v330
  %v1667 = vunpack.c.l.b16 %v331
  %v1668 = vunpack.c.h.b16 %v331
  %v1669 = vunpack.c.l.b16 %v332
  %v1670 = vunpack.c.h.b16 %v332
  %v1671 = vunpack.c.l.b16 %v333
  %v1672 = vunpack.c.h.b16 %v333
  %v1673 = vunpack.c.l.b16 %v334
  %v1674 = vunpack.c.h.b16 %v334
  %v1675 = vunpack.c.l.b16 %v335
  %v1676 = vunpack.c.h.b16 %v335
  %v1677 = vunpack.c.l.b16 %v336
  %v1678 = vunpack.c.h.b16 %v336
  %v1679 = vunpack.c.l.b16 %v337
  %v1680 = vunpack.c.h.b16 %v337
  %v1681 = vunpack.c.l.b16 %v338
  %v1682 = vunpack.c.h.b16 %v338
  %v1683 = vunpack.c.l.b16 %v339
  %v1684 = vunpack.c.h.b16 %v339
  %v1685 = vunpack.c.l.b16 %v340
  %v1686 = vunpack.c.h.b16 %v340
  %v1687 = vunpack.c.l.b16 %v341
  %v1688 = vunpack.c.h.b16 %v341
  %v1689 = vunpack.c.l.b16 %v342
  %v1690 = vunpack.c.h.b16 %v342
  %v1691 = vunpack.c.l.b16 %v343
  %v1692 = vunpack.c.h.b16 %v343
  %v1693 = vunpack.c.l.b16 %v344
  %v1694 = vunpack.c.h.b16 %v344
  %v1695 = vunpack.c.l.b16 %v345
  %v1696 = vunpack.c.h.b16 %v345
  %v1697 = vunpack.c.l.b16 %v346
  %v1698 = vunpack.c.h.b16 %v346
  %v1699 = vunpack.c.l.b16 %v347
  %v1700 = vunpack.c.h.b16 %v347
  %v1701 = vunpack.c.l.b16 %v348
  %v1702 = vunpack.c.h.b16 %v348
  %v1703 = vunpack.c.l.b16 %v349
  %v1704 = vunpack.c.h.b16 %v349
  %v1705 = vunpack.c.l.b16 %v350
  %v1706 = vunpack.c.h.b16 %v350
  %v1707 = vunpack.c.l.b16 %v351
  %v1708 = vunpack.c.h.b16 %v351
  %v1709 = vunpack.c.l.b16 %v352
  %v1710 = vunpack.c.h.b16 %v352
  %v1711 = vunpack.c.l.b16 %v353
  %v1712 = vunpack.c.h.b16 %v353
  %v1713 = vunpack.c.l.b16 %v354
  %v1714 = vunpack.c.h.b16 %v354
  %v1715 = vunpack.c.l.b16 %v355
  %v1716 = vunpack.c.h.b16 %v355
  %v1717 = vunpack.c.l.b16 %v356
  %v1718 = vunpack.c.h.b16 %v356
  %v1719 = vunpack.c.l.b16 %v357
  %v1720 = vunpack.c.h.b16 %v357
  %v1721 = vunpack.c.l.b16 %v358
  %v1722 = vunpack.c.h.b16 %v358
  %v1723 = vunpack.c.l.b16 %v359
  %v1724 = vunpack.c.h.b16 %v359
  %v1725 = vunpack.c.l.b16 %v360
  %v1726 = vunpack.c.h.b16 %v360
  %v1727 = vunpack.c.l.b16 %v361
  %v1728 = vunpack.c.h.b16 %v361
  %v1729 = vunpack.c.l.b16 %v362
  %v1730 = vunpack.c.h.b16 %v362
  %v1731 = vunpack.c.l.b16 %v363
  %v1732 = vunpack.c.h.b16 %v363
  %v1733 = vunpack.c.l.b16 %v364
  %v1734 = vunpack.c.h.b16 %v364
  %v1735 = vunpack.c.l.b16 %v365
  %v1736 = vunpack.c.h.b16 %v365
  %v1737 = vunpack.c.l.b16 %v366
  %v1738 = vunpack.c.h.b16 %v366
  %v1739 = vunpack.c.l.b16 %v367
  %v1740 = vunpack.c.h.b16 %v367
  %v1741 = vunpack.c.l.b16 %v368
  %v1742 = vunpack.c.h.b16 %v368
  %v1743 = vunpack.c.l.b16 %v369
  %v1744 = vunpack.c.h.b16 %v369
  %v1745 = vunpack.c.l.b16 %v370
  %v1746 = vunpack.c.h.b16 %v370
  %v1747 = vunpack.c.l.b16 %v371
  %v1748 = vunpack.c.h.b16 %v371
  %v1749 = vunpack.c.l.b16 %v372
  %v1750 = vunpack.c.h.b16 %v372
  %v1751 = vunpack.c.l.b16 %v373
  %v1752 = vunpack.c.h.b16 %v373
  %v1753 = vunpack.c.l.b16 %v374
  %v1754 = vunpack.c.h.b16 %v374
  %v1755 = vunpack.c.l.b16 %v375
  %v1756 = vunpack.c.h.b16 %v375
  %v1757 = vunpack.c.l.b16 %v376
  %v1758 = vunpack.c.h.b16 %v376
  %v1759 = vunpack.c.l.b16 %v377
  %v1760 = vunpack.c.h.b16 %v377
  %v1761 = vunpack.c.l.b16 %v378
  %v1762 = vunpack.c.h.b16 %v378
  %v1763 = vunpack.c.l.b16 %v379
  %v1764 = vunpack.c.h.b16 %v379
  %v1765 = vunpack.c.l.b16 %v380
  %v1766 = vunpack.c.h.b16 %v380
  %v1767 = vpack.c.b16 %v1337, %v1335
  %v1768 = vpack.c.b16 %v1338, %v1336
  %v1769 = vpack.c.b16 %v1341, %v1339
  %v1770 = vpack.c.b16 %v1342, %v1340
  %v1771 = vpack.c.b16 %v1345, %v1343
  %v1772 = vpack.c.b16 %v1346, %v1344
  %v1773 = vpack.c.b16 %v1349, %v1347
  %v1774 = vpack.c.b16 %v1350, %v1348
  %v1775 = vpack.c.b16 %v1353, %v1351
  %v1776 = vpack.c.b16 %v1354, %v1352
  %v1777 = vpack.c.b16 %v1357, %v1355
  %v1778 = vpack.c.b16 %v1358, %v1356
  %v1779 = vpack.c.b16 %v1361, %v1359
  %v1780 = vpack.c.b16 %v1362, %v1360
  %v1781 = vpack.c.b16 %v1365, %v1363
  %v1782 = vpack.c.b16 %v1366, %v1364
  %v1783 = vpack.c.b16 %v1369, %v1367
  %v1784 = vpack.c.b16 %v1370, %v1368
  %v1785 = vpack.c.b16 %v1373, %v1371
  %v1786 = vpack.c.b16 %v1374, %v1372
  %v1787 = vpack.c.b16 %v1377, %v1375
  %v1788 = vpack.c.b16 %v1378, %v1376
  %v1789 = vpack.c.b16 %v1381, %v1379
  %v1790 = vpack.c.b16 %v1382, %v1380
  %v1791 = vpack.c.b16 %v1385, %v1383
  %v1792 = vpack.c.b16 %v1386, %v1384
  %v1793 = vpack.c.b16 %v1389, %v1387
  %v1794 = vpack.c.b16 %v1390, %v1388
  %v1795 = vpack.c.b16 %v1393, %v1391
  %v1796 = vpack.c.b16 %v1394, %v1392
  %v1797 = vpack.c.b16 %v1397, %v1395
  %v1798 = vpack.c.b16 %v1398, %v1396
  %v1799 = vpack.c.b16 %v1401, %v1399
  %v1800 = vpack.c.b16 %v1402, %v1400
  %v1801 = vpack.c.b16 %v1405, %v1403
  %v1802 = vpack.c.b16 %v1406, %v1404
  %v1803 = vpack.c.b16 %v1409, %v1407
  %v1804 = vpack.c.b16 %v1410, %v1408
  %v1805 = vpack.c.b16 %v1413, %v1411
  %v1806 = vpack.c.b16 %v1414, %v1412
  %v1807 = vpack.c.b16 %v1417, %v1415
  %v1808 = vpack.c.b16 %v1418, %v1416
  %v1809 = vpack.c.b16 %v1421, %v1419
  %v1810 = vpack.c.b16 %v1422, %v1420
  %v1811 = vpack.c.b16 %v1425, %v1423
  %v1812 = vpack.c.b16 %v1426, %v1424
  %v1813 = vpack.c.b16 %v1429, %v1427
  %v1814 = vpack.c.b16 %v1430, %v1428
  %v1815 = vpack.c.b16 %v1433, %v1431
  %v1816 = vpack.c.b16 %v1434, %v1432
  %v1817 = vpack.c.b16 %v1437, %v1435
  %v1818 = vpack.c.b16 %v1438, %v1436
  %v1819 = vpack.c.b16 %v1441, %v1439
  %v1820 = vpack.c.b16 %v1442, %v1440
  %v1821 = vpack.c.b16 %v1445, %v1443
  %v1822 = vpack.c.b16 %v1446, %v1444
  %v1823 = vpack.c.b16 %v1449, %v1447
  %v1824 = vpack.c.b16 %v1450, %v1448
  %v1825 = vpack.c.b16 %v1453, %v1451
  %v1826 = vpack.c.b16 %v1454, %v1452
  %v1827 = vpack.c.b16 %v1457, %v1455
  %v1828 = vpack.c.b16 %v1458, %v1456
  %v1829 = vpack.c.b16 %v1461, %v1459
  %v1830 = vpack.c.b16 %v1462, %v1460
  %v1831 = vpack.c.b16 %v1465, %v1463
  %v1832 = vpack.c.b16 %v1466, %v1464
  %v1833 = vpack.c.b16 %v1469, %v1467
  %v1834 = vpack.c.b16 %v1470, %v1468
  %v1835 = vpack.c.b16 %v1473, %v1471
  %v1836 = vpack.c.b16 %v1474, %v1472
  %v1837 = vpack.c.b16 %v1477, %v1475
  %v1838 = vpack.c.b16 %v1478, %v1476
  %v1839 = vpack.c.b16 %v1481, %v1479
  %v1840 = vpack.c.b16 %v1482, %v1480
  %v1841 = vpack.c.b16 %v1485, %v1483
  %v1842 = vpack.c.b16 %v1486, %v1484
  %v1843 = vpack.c.b16 %v1489, %v1487
  %v1844 = vpack.c.b16 %v1490, %v1488
  %v1845 = vpack.c.b16 %v1493, %v1491
  %v1846 = vpack.c.b16 %v1494, %v1492
  %v1847 = vpack.c.b16 %v1497, %v1495
  %v1848 = vpack.c.b16 %v1498, %v1496
  %v1849 = vpack.c.b16 %v1501, %v1499
  %v1850 = vpack.c.b16 %v1502, %v1500
  %v1851 = vpack.c.b16 %v1505, %v1503
  %v1852 = vpack.c.b16 %v1506, %v1504
  %v1853 = vpack.c.b16 %v1509, %v1507
  %v1854 = vpack.c.b16 %v1510, %v1508
  %v1855 = vpack.c.b16 %v1513, %v1511
  %v1856 = vpack.c.b16 %v1514, %v1512
  %v1857 = vpack.c.b16 %v1517, %v1515
  %v1858 = vpack.c.b16 %v1518, %v1516
  %v1859 = vpack.c.b16 %v1521, %v1519
  %v1860 = vpack.c.b16 %v1522, %v1520
  %v1861 = vpack.c.b16 %v1525, %v1523
  %v1862 = vpack.c.b16 %v1526, %v1524
  %v1863 = vpack.c.b16 %v1529, %v1527
  %v1864 = vpack.c.b16 %v1530, %v1528
  %v1865 = vpack.c.b16 %v1533, %v1531
  %v1866 = vpack.c.b16 %v1534, %v1532
  %v1867 = vpack.c.b16 %v1537, %v1535
  %v1868 = vpack.c.b16 %v1538, %v1536
  %v1869 = vpack.c.b16 %v1541, %v1539
  %v1870 = vpack.c.b16 %v1542, %v1540
  %v1871 = vpack.c.b16 %v1545, %v1543
  %v1872 = vpack.c.b16 %v1546, %v1544
  %v1873 = vpack.c.b16 %v1549, %v1547
  %v1874 = vpack.c.b16 %v1550, %v1548
  %v1875 = vpack.c.b16 %v1553, %v1551
  %v1876 = vpack.c.b16 %v1554, %v1552
  %v1877 = vpack.c.b16 %v1557, %v1555
  %v1878 = vpack.c.b16 %v1558, %v1556
  %v1879 = vpack.c.b16 %v1561, %v1559
  %v1880 = vpack.c.b16 %v1562, %v1560
  %v1881 = vpack.c.b16 %v1565, %v1563
  %v1882 = vpack.c.b16 %v1566, %v1564
  %v1883 = vpack.c.b16 %v1569, %v1567
  %v1884 = vpack.c.b16 %v1570, %v1568
  %v1885 = vpack.c.b16 %v1573, %v1571
  %v1886 = vpack.c.b16 %v1574, %v1572
  %v1887 = vpack.c.b16 %v1577, %v1575
  %v1888 = vpack.c.b16 %v1578, %v1576
  %v1889 = vpack.c.b16 %v1581, %v1579
  %v1890 = vpack.c.b16 %v1582, %v1580
  %v1891 = vpack.c.b16 %v1585, %v1583
  %v1892 = vpack.c.b16 %v1586, %v1584
  %v1893 = vpack.c.b16 %v1589, %v1587
  %v1894 = vpack.c.b16 %v1590, %v1588
  %v1895 = vpack.c.b16 %v1593, %v1591
  %v1896 = vpack.c.b16 %v1594, %v1592
  %v1897 = vpack.c.b16 %v1597, %v1595
  %v1898 = vpack.c.b16 %v1598, %v1596
  %v1899 = vpack.c.b16 %v1601, %v1599
  %v1900 = vpack.c.b16 %v1602, %v1600
  %v1901 = vpack.c.b16 %v1605, %v1603
  %v1902 = vpack.c.b16 %v1606, %v1604
  %v1903 = vpack.c.b16 %v1609, %v1607
  %v1904 = vpack.c.b16 %v1610, %v1608
  %v1905 = vpack.c.b16 %v1613, %v1611
  %v1906 = vpack.c.b16 %v1614, %v1612
  %v1907 = vpack.c.b16 %v1617, %v1615
  %v1908 = vpack.c.b16 %v1618, %v1616
  %v1909 = vpack.c.b16 %v1621, %v1619
  %v1910 = vpack.c.b16 %v1622, %v1620
  %v1911 = vpack.c.b16 %v1625, %v1623
  %v1912 = vpack.c.b16 %v1626, %v1624
  %v1913 = vpack.c.b16 %v1629, %v1627
  %v1914 = vpack.c.b16 %v1630, %v1628
  %v1915 = vpack.c.b16 %v1633, %v1631
  %v1916 = vpack.c.b16 %v1634, %v1632
  %v1917 = vpack.c.b16 %v1637, %v1635
  %v1918 = vpack.c.b16 %v1638, %v1636
  %v1919 = vpack.c.b16 %v1641, %v1639
  %v1920 = vpack.c.b16 %v1642, %v1640
  %v1921 = vpack.c.b16 %v1645, %v1643
  %v1922 = vpack.c.b16 %v1646, %v1644
  %v1923 = vpack.c.b16 %v1649, %v1647
  %v1924 = vpack.c.b16 %v1650, %v1648
  %v1925 = vpack.c.b16 %v1653, %v1651
  %v1926 = vpack.c.b16 %v1654, %v1652
  %v1927 = vpack.c.b16 %v1657, %v1655
  %v1928 = vpack.c.b16 %v1658, %v1656
  %v1929 = vpack.c.b16 %v1661, %v1659
  %v1930 = vpack.c.b16 %v1662, %v1660
  %v1931 = vpack.c.b16 %v1665, %v1663
  %v1932 = vpack.c.b16 %v1666, %v1664
  %v1933 = vpack.c.b16 %v1669, %v1667
  %v1934 = vpack.c.b16 %v1670, %v1668
  %v1935 = vpack.c.b16 %v1673, %v1671
  %v1936 = vpack.c.b16 %v1674, %v1672
  %v1937 = vpack.c.b16 %v1677, %v1675
  %v1938 = vpack.c.b16 %v1678, %v1676
  %v1939 = vpack.c.b16 %v1681, %v1679
  %v1940 = vpack.c.b16 %v1682, %v1680
  %v1941 = vpack.c.b16 %v1685, %v1683
  %v1942 = vpack.c.b16 %v1686, %v1684
  %v1943 = vpack.c.b16 %v1689, %v1687
  %v1944 = vpack.c.b16 %v1690, %v1688
  %v1945 = vpack.c.b16 %v1693, %v1691
  %v1946 = vpack.c.b16 %v1694, %v1692
  %v1947 = vpack.c.b16 %v1697, %v1695
  %v1948 = vpack.c.b16 %v1698, %v1696
  %v1949 = vpack.c.b16 %v1701, %v1699
  %v1950 = vpack.c.b16 %v1702, %v1700
  %v1951 = vpack.c.b16 %v1705, %v1703
  %v1952 = vpack.c.b16 %v1706, %v1704
  %v1953 = vpack.c.b16 %v1709, %v1707
  %v1954 = vpack.c.b16 %v1710, %v1708
  %v1955 = vpack.c.b16 %v1713, %v1711
  %v1956 = vpack.c.b16 %v1714, %v1712
  %v1957 = vpack.c.b16 %v1717, %v1715
  %v1958 = vpack.c.b16 %v1718, %v1716
  %v1959 = vpack.c.b16 %v1721, %v1719
  %v1960 = vpack.c.b16 %v1722, %v1720
  %v1961 = vpack.c.b16 %v1725, %v1723
  %v1962 = vpack.c.b16 %v1726, %v1724
  %v1963 = vpack.c.b16 %v1729, %v1727
  %v1964 = vpack.c.b16 %v1730, %v1728
  %v1965 = vpack.c.b16 %v1733, %v1731
  %v1966 = vpack.c.b16 %v1734, %v1732
  %v1967 = vpack.c.b16 %v1737, %v1735
  %v1968 = vpack.c.b16 %v1738, %v1736
  %v1969 = vpack.c.b16 %v1741, %v1739
  %v1970 = vpack.c.b16 %v1742, %v1740
  %v1971 = vpack.c.b16 %v1745, %v1743
  %v1972 = vpack.c.b16 %v1746, %v1744
  %v1973 = vpack.c.b16 %v1749, %v1747
  %v1974 = vpack.c.b16 %v1750, %v1748
  %v1975 = vpack.c.b16 %v1753, %v1751
  %v1976 = vpack.c.b16 %v1754, %v1752
  %v1977 = vpack.c.b16 %v1757, %v1755
  %v1978 = vpack.c.b16 %v1758, %v1756
  %v1979 = vpack.c.b16 %v1761, %v1759
  %v1980 = vpack.c.b16 %v1762, %v1760
  %v1981 = vpack.c.b16 %v1765, %v1763
  %v1982 = vpack.c.b16 %v1766, %v1764
  %vm2199 = vcmask 523264
  %v2201 = vsel %vm2199, %v835, 0
  %v2204 = vsel %vm2199, %v849, 0
  %v2207 = vsel %vm2199, %v863, 0
  %v2210 = vsel %vm2199, %v877, 0
  %v2213 = vsel %vm2199, %v891, 0
  %v2216 = vsel %vm2199, %v905, 0
  %v2219 = vsel %vm2199, %v919, 0
  %v2222 = vsel %vm2199, %v933, 0
  %v2225 = vsel %vm2199, %v947, 0
  %v2228 = vsel %vm2199, %v961, 0
  %v2231 = vsel %vm2199, %v975, 0
  %2233 = vmatprep.subr.bf16.mxu0 %v1768
  %2234 = vmatpush1.bf16.msra.mxu0 %v1767
  %2235 = vmatprep.subr.bf16.mxu0 %v1770
  %2236 = vmatpush1.bf16.msra.mxu0 %v1769
  %2237 = vmatprep.subr.bf16.mxu0 %v1772
  %2238 = vmatpush1.bf16.msra.mxu0 %v1771
  %2239 = vmatprep.subr.bf16.mxu0 %v1774
  %2240 = vmatpush1.bf16.msra.mxu0 %v1773
  %2241 = vmatprep.subr.bf16.mxu0 %v1776
  %2242 = vmatpush1.bf16.msra.mxu0 %v1775
  %2243 = vmatprep.subr.bf16.mxu0 %v1778
  %2244 = vmatpush1.bf16.msra.mxu0 %v1777
  %2245 = vmatprep.subr.bf16.mxu0 %v1780
  %2246 = vmatpush1.bf16.msra.mxu0 %v1779
  %2247 = vmatprep.subr.bf16.mxu0 %v1782
  %2248 = vmatpush1.bf16.msra.mxu0 %v1781
  %2249 = vmatprep.subr.bf16.mxu0 %v1784
  %2250 = vmatpush1.bf16.msra.mxu0 %v1783
  %2251 = vmatprep.subr.bf16.mxu0 %v1786
  %2252 = vmatpush1.bf16.msra.mxu0 %v1785
  %2253 = vmatprep.subr.bf16.mxu0 %v1788
  %2254 = vmatpush1.bf16.msra.mxu0 %v1787
  %2255 = vmatprep.subr.bf16.mxu0 %v1790
  %2256 = vmatpush1.bf16.msra.mxu0 %v1789
  %2257 = vmatprep.subr.bf16.mxu0 %v1792
  %2258 = vmatpush1.bf16.msra.mxu0 %v1791
  %2259 = vmatprep.subr.bf16.mxu0 %v1794
  %2260 = vmatpush1.bf16.msra.mxu0 %v1793
  %2261 = vmatprep.subr.bf16.mxu0 %v1796
  %2262 = vmatpush1.bf16.msra.mxu0 %v1795
  %2263 = vmatprep.subr.bf16.mxu0 %v1798
  %2264 = vmatpush1.bf16.msra.mxu0 %v1797
  %2265 = vmatprep.mubr.bf16.mxu0 %v823
  %2266 = vmatmul.mubr.bf16.gmra.mrb[0].mxu0 %v822
  %v2267 = vpop.f32.mrb[0].mxu0
  %v2268 = vadd.f32 0.0, %v2267
  %v2269 = vpop.f32.mrb[0].mxu0
  %v2270 = vadd.f32 0.0, %v2269
  %v2271 = vpop.f32.mrb[0].mxu0
  %v2272 = vadd.f32 0.0, %v2271
  %v2273 = vpop.f32.mrb[0].mxu0
  %v2274 = vadd.f32 0.0, %v2273
  %2275 = vmatprep.mubr.bf16.mxu0 %v837
  %2276 = vmatmul.mubr.bf16.gmra.mrb[0].mxu0 %v836
  %v2277 = vpop.f32.mrb[0].mxu0
  %v2278 = vadd.f32 0.0, %v2277
  %v2279 = vpop.f32.mrb[0].mxu0
  %v2280 = vadd.f32 0.0, %v2279
  %v2281 = vpop.f32.mrb[0].mxu0
  %v2282 = vadd.f32 0.0, %v2281
  %v2283 = vpop.f32.mrb[0].mxu0
  %v2284 = vadd.f32 0.0, %v2283
  %2285 = vmatprep.mubr.bf16.mxu0 %v851
  %2286 = vmatmul.mubr.bf16.gmra.mrb[0].mxu0 %v850
  %v2287 = vpop.f32.mrb[0].mxu0
  %v2288 = vadd.f32 0.0, %v2287
  %v2289 = vpop.f32.mrb[0].mxu0
  %v2290 = vadd.f32 0.0, %v2289
  %v2291 = vpop.f32.mrb[0].mxu0
  %v2292 = vadd.f32 0.0, %v2291
  %v2293 = vpop.f32.mrb[0].mxu0
  %v2294 = vadd.f32 0.0, %v2293
  %2295 = vmatprep.mubr.bf16.mxu0 %v865
  %2296 = vmatmul.mubr.bf16.gmra.mrb[0].mxu0 %v864
  %v2297 = vpop.f32.mrb[0].mxu0
  %v2298 = vadd.f32 0.0, %v2297
  %v2299 = vpop.f32.mrb[0].mxu0
  %v2300 = vadd.f32 0.0, %v2299
  %v2301 = vpop.f32.mrb[0].mxu0
  %v2302 = vadd.f32 0.0, %v2301
  %v2303 = vpop.f32.mrb[0].mxu0
  %v2304 = vadd.f32 0.0, %v2303
  %2305 = vmatprep.mubr.bf16.mxu0 %v879
  %2306 = vmatmul.mubr.bf16.gmra.mrb[0].mxu0 %v878
  %v2307 = vpop.f32.mrb[0].mxu0
  %v2308 = vadd.f32 0.0, %v2307
  %v2309 = vpop.f32.mrb[0].mxu0
  %v2310 = vadd.f32 0.0, %v2309
  %v2311 = vpop.f32.mrb[0].mxu0
  %v2312 = vadd.f32 0.0, %v2311
  %v2313 = vpop.f32.mrb[0].mxu0
  %v2314 = vadd.f32 0.0, %v2313
  %2315 = vmatprep.mubr.bf16.mxu0 %v893
  %2316 = vmatmul.mubr.bf16.gmra.mrb[0].mxu0 %v892
  %v2317 = vpop.f32.mrb[0].mxu0
  %v2318 = vadd.f32 0.0, %v2317
  %v2319 = vpop.f32.mrb[0].mxu0
  %v2320 = vadd.f32 0.0, %v2319
  %v2321 = vpop.f32.mrb[0].mxu0
  %v2322 = vadd.f32 0.0, %v2321
  %v2323 = vpop.f32.mrb[0].mxu0
  %v2324 = vadd.f32 0.0, %v2323
  %2325 = vmatprep.mubr.bf16.mxu0 %v907
  %2326 = vmatmul.mubr.bf16.gmra.mrb[0].mxu0 %v906
  %v2327 = vpop.f32.mrb[0].mxu0
  %v2328 = vadd.f32 0.0, %v2327
  %v2329 = vpop.f32.mrb[0].mxu0
  %v2330 = vadd.f32 0.0, %v2329
  %v2331 = vpop.f32.mrb[0].mxu0
  %v2332 = vadd.f32 0.0, %v2331
  %v2333 = vpop.f32.mrb[0].mxu0
  %v2334 = vadd.f32 0.0, %v2333
  %2335 = vmatprep.mubr.bf16.mxu0 %v921
  %2336 = vmatmul.mubr.bf16.gmra.mrb[0].mxu0 %v920
  %v2337 = vpop.f32.mrb[0].mxu0
  %v2338 = vadd.f32 0.0, %v2337
  %v2339 = vpop.f32.mrb[0].mxu0
  %v2340 = vadd.f32 0.0, %v2339
  %v2341 = vpop.f32.mrb[0].mxu0
  %v2342 = vadd.f32 0.0, %v2341
  %v2343 = vpop.f32.mrb[0].mxu0
  %v2344 = vadd.f32 0.0, %v2343
  %2345 = vmatprep.mubr.bf16.mxu0 %v935
  %2346 = vmatmul.mubr.bf16.gmra.mrb[0].mxu0 %v934
  %v2347 = vpop.f32.mrb[0].mxu0
  %v2348 = vadd.f32 0.0, %v2347
  %v2349 = vpop.f32.mrb[0].mxu0
  %v2350 = vadd.f32 0.0, %v2349
  %v2351 = vpop.f32.mrb[0].mxu0
  %v2352 = vadd.f32 0.0, %v2351
  %v2353 = vpop.f32.mrb[0].mxu0
  %v2354 = vadd.f32 0.0, %v2353
  %2355 = vmatprep.mubr.bf16.mxu0 %v949
  %2356 = vmatmul.mubr.bf16.gmra.mrb[0].mxu0 %v948
  %v2357 = vpop.f32.mrb[0].mxu0
  %v2358 = vadd.f32 0.0, %v2357
  %v2359 = vpop.f32.mrb[0].mxu0
  %v2360 = vadd.f32 0.0, %v2359
  %v2361 = vpop.f32.mrb[0].mxu0
  %v2362 = vadd.f32 0.0, %v2361
  %v2363 = vpop.f32.mrb[0].mxu0
  %v2364 = vadd.f32 0.0, %v2363
  %2365 = vmatprep.mubr.bf16.mxu0 %v963
  %2366 = vmatmul.mubr.bf16.gmra.mrb[0].mxu0 %v962
  %v2367 = vpop.f32.mrb[0].mxu0
  %v2368 = vadd.f32 0.0, %v2367
  %v2369 = vpop.f32.mrb[0].mxu0
  %v2370 = vadd.f32 0.0, %v2369
  %v2371 = vpop.f32.mrb[0].mxu0
  %v2372 = vpop.f32.mrb[0].mxu0
  %2373 = vdwg.mxu0
  %2374 = vmatprep.subr.bf16.mxu0 %v1800
  %2375 = vmatpush1.bf16.msra.mxu0 %v1799
  %2376 = vmatprep.subr.bf16.mxu0 %v1802
  %2377 = vmatpush1.bf16.msra.mxu0 %v1801
  %2378 = vmatprep.subr.bf16.mxu0 %v1804
  %2379 = vmatpush1.bf16.msra.mxu0 %v1803
  %2380 = vmatprep.subr.bf16.mxu0 %v1806
  %2381 = vmatpush1.bf16.msra.mxu0 %v1805
  %2382 = vmatprep.subr.bf16.mxu0 %v1808
  %2383 = vmatpush1.bf16.msra.mxu0 %v1807
  %2384 = vmatprep.subr.bf16.mxu0 %v1810
  %2385 = vmatpush1.bf16.msra.mxu0 %v1809
  %2386 = vmatprep.subr.bf16.mxu0 %v1812
  %2387 = vmatpush1.bf16.msra.mxu0 %v1811
  %2388 = vmatprep.subr.bf16.mxu0 %v1814
  %2389 = vmatpush1.bf16.msra.mxu0 %v1813
  %2390 = vmatprep.subr.bf16.mxu0 %v1816
  %2391 = vmatpush1.bf16.msra.mxu0 %v1815
  %2392 = vmatprep.subr.bf16.mxu0 %v1818
  %2393 = vmatpush1.bf16.msra.mxu0 %v1817
  %2394 = vmatprep.subr.bf16.mxu0 %v1820
  %2395 = vmatpush1.bf16.msra.mxu0 %v1819
  %2396 = vmatprep.subr.bf16.mxu0 %v1822
  %2397 = vmatpush1.bf16.msra.mxu0 %v1821
  %2398 = vmatprep.subr.bf16.mxu0 %v1824
  %2399 = vmatpush1.bf16.msra.mxu0 %v1823
  %2400 = vmatprep.subr.bf16.mxu0 %v1826
  %2401 = vmatpush1.bf16.msra.mxu0 %v1825
  %2402 = vmatprep.subr.bf16.mxu0 %v1828
  %2403 = vmatpush1.bf16.msra.mxu0 %v1827
  %2404 = vmatprep.subr.bf16.mxu0 %v1830
  %2405 = vmatpush1.bf16.msra.mxu0 %v1829
  %2406 = vmatprep.mubr.bf16.mxu0 %v825
  %2407 = vmatmul.mubr.bf16.gmra.mrb[0].mxu0 %v824
  %v2408 = vpop.f32.mrb[0].mxu0
  %v2409 = vadd.f32 %v2268, %v2408
  %v2410 = vpop.f32.mrb[0].mxu0
  %v2411 = vadd.f32 %v2270, %v2410
  %v2412 = vpop.f32.mrb[0].mxu0
  %v2413 = vadd.f32 %v2272, %v2412
  %v2414 = vpop.f32.mrb[0].mxu0
  %v2415 = vadd.f32 %v2274, %v2414
  %2416 = vmatprep.mubr.bf16.mxu0 %v839
  %2417 = vmatmul.mubr.bf16.gmra.mrb[0].mxu0 %v838
  %v2418 = vpop.f32.mrb[0].mxu0
  %v2419 = vadd.f32 %v2278, %v2418
  %v2420 = vpop.f32.mrb[0].mxu0
  %v2421 = vadd.f32 %v2280, %v2420
  %v2422 = vpop.f32.mrb[0].mxu0
  %v2423 = vadd.f32 %v2282, %v2422
  %v2424 = vpop.f32.mrb[0].mxu0
  %v2425 = vadd.f32 %v2284, %v2424
  %2426 = vmatprep.mubr.bf16.mxu0 %v853
  %2427 = vmatmul.mubr.bf16.gmra.mrb[0].mxu0 %v852
  %v2428 = vpop.f32.mrb[0].mxu0
  %v2429 = vadd.f32 %v2288, %v2428
  %v2430 = vpop.f32.mrb[0].mxu0
  %v2431 = vadd.f32 %v2290, %v2430
  %v2432 = vpop.f32.mrb[0].mxu0
  %v2433 = vadd.f32 %v2292, %v2432
  %v2434 = vpop.f32.mrb[0].mxu0
  %v2435 = vadd.f32 %v2294, %v2434
  %2436 = vmatprep.mubr.bf16.mxu0 %v867
  %2437 = vmatmul.mubr.bf16.gmra.mrb[0].mxu0 %v866
  %v2438 = vpop.f32.mrb[0].mxu0
  %v2439 = vadd.f32 %v2298, %v2438
  %v2440 = vpop.f32.mrb[0].mxu0
  %v2441 = vadd.f32 %v2300, %v2440
  %v2442 = vpop.f32.mrb[0].mxu0
  %v2443 = vadd.f32 %v2302, %v2442
  %v2444 = vpop.f32.mrb[0].mxu0
  %v2445 = vadd.f32 %v2304, %v2444
  %2446 = vmatprep.mubr.bf16.mxu0 %v881
  %2447 = vmatmul.mubr.bf16.gmra.mrb[0].mxu0 %v880
  %v2448 = vpop.f32.mrb[0].mxu0
  %v2449 = vadd.f32 %v2308, %v2448
  %v2450 = vpop.f32.mrb[0].mxu0
  %v2451 = vadd.f32 %v2310, %v2450
  %v2452 = vpop.f32.mrb[0].mxu0
  %v2453 = vadd.f32 %v2312, %v2452
  %v2454 = vpop.f32.mrb[0].mxu0
  %v2455 = vadd.f32 %v2314, %v2454
  %2456 = vmatprep.mubr.bf16.mxu0 %v895
  %2457 = vmatmul.mubr.bf16.gmra.mrb[0].mxu0 %v894
  %v2458 = vpop.f32.mrb[0].mxu0
  %v2459 = vadd.f32 %v2318, %v2458
  %v2460 = vpop.f32.mrb[0].mxu0
  %v2461 = vadd.f32 %v2320, %v2460
  %v2462 = vpop.f32.mrb[0].mxu0
  %v2463 = vadd.f32 %v2322, %v2462
  %v2464 = vpop.f32.mrb[0].mxu0
  %v2465 = vadd.f32 %v2324, %v2464
  %2466 = vmatprep.mubr.bf16.mxu0 %v909
  %2467 = vmatmul.mubr.bf16.gmra.mrb[0].mxu0 %v908
  %v2468 = vpop.f32.mrb[0].mxu0
  %v2469 = vadd.f32 %v2328, %v2468
  %v2470 = vpop.f32.mrb[0].mxu0
  %v2471 = vadd.f32 %v2330, %v2470
  %v2472 = vpop.f32.mrb[0].mxu0
  %v2473 = vadd.f32 %v2332, %v2472
  %v2474 = vpop.f32.mrb[0].mxu0
  %v2475 = vadd.f32 %v2334, %v2474
  %2476 = vmatprep.mubr.bf16.mxu0 %v923
  %2477 = vmatmul.mubr.bf16.gmra.mrb[0].mxu0 %v922
  %v2478 = vpop.f32.mrb[0].mxu0
  %v2479 = vadd.f32 %v2338, %v2478
  %v2480 = vpop.f32.mrb[0].mxu0
  %v2481 = vadd.f32 %v2340, %v2480
  %v2482 = vpop.f32.mrb[0].mxu0
  %v2483 = vadd.f32 %v2342, %v2482
  %v2484 = vpop.f32.mrb[0].mxu0
  %v2485 = vadd.f32 %v2344, %v2484
  %2486 = vmatprep.mubr.bf16.mxu0 %v937
  %2487 = vmatmul.mubr.bf16.gmra.mrb[0].mxu0 %v936
  %v2488 = vpop.f32.mrb[0].mxu0
  %v2489 = vadd.f32 %v2348, %v2488
  %v2490 = vpop.f32.mrb[0].mxu0
  %v2491 = vadd.f32 %v2350, %v2490
  %v2492 = vpop.f32.mrb[0].mxu0
  %v2493 = vadd.f32 %v2352, %v2492
  %v2494 = vpop.f32.mrb[0].mxu0
  %v2495 = vadd.f32 %v2354, %v2494
  %2496 = vmatprep.mubr.bf16.mxu0 %v951
  %2497 = vmatmul.mubr.bf16.gmra.mrb[0].mxu0 %v950
  %v2498 = vpop.f32.mrb[0].mxu0
  %v2499 = vadd.f32 %v2358, %v2498
  %v2500 = vpop.f32.mrb[0].mxu0
  %v2501 = vadd.f32 %v2360, %v2500
  %v2502 = vpop.f32.mrb[0].mxu0
  %v2503 = vadd.f32 %v2362, %v2502
  %v2504 = vpop.f32.mrb[0].mxu0
  %v2505 = vadd.f32 %v2364, %v2504
  %2506 = vmatprep.mubr.bf16.mxu0 %v965
  %2507 = vmatmul.mubr.bf16.gmra.mrb[0].mxu0 %v964
  %v2508 = vpop.f32.mrb[0].mxu0
  %v2509 = vadd.f32 %v2368, %v2508
  %v2510 = vpop.f32.mrb[0].mxu0
  %v2511 = vadd.f32 %v2370, %v2510
  %v2512 = vpop.f32.mrb[0].mxu0
  %v2513 = vpop.f32.mrb[0].mxu0
  %2514 = vdwg.mxu0
  %2515 = vmatprep.subr.bf16.mxu0 %v1832
  %2516 = vmatpush1.bf16.msra.mxu0 %v1831
  %2517 = vmatprep.subr.bf16.mxu0 %v1834
  %2518 = vmatpush1.bf16.msra.mxu0 %v1833
  %2519 = vmatprep.subr.bf16.mxu0 %v1836
  %2520 = vmatpush1.bf16.msra.mxu0 %v1835
  %2521 = vmatprep.subr.bf16.mxu0 %v1838
  %2522 = vmatpush1.bf16.msra.mxu0 %v1837
  %2523 = vmatprep.subr.bf16.mxu0 %v1840
  %2524 = vmatpush1.bf16.msra.mxu0 %v1839
  %2525 = vmatprep.subr.bf16.mxu0 %v1842
  %2526 = vmatpush1.bf16.msra.mxu0 %v1841
  %2527 = vmatprep.subr.bf16.mxu0 %v1844
  %2528 = vmatpush1.bf16.msra.mxu0 %v1843
  %2529 = vmatprep.subr.bf16.mxu0 %v1846
  %2530 = vmatpush1.bf16.msra.mxu0 %v1845
  %2531 = vmatprep.subr.bf16.mxu0 %v1848
  %2532 = vmatpush1.bf16.msra.mxu0 %v1847
  %2533 = vmatprep.subr.bf16.mxu0 %v1850
  %2534 = vmatpush1.bf16.msra.mxu0 %v1849
  %2535 = vmatprep.subr.bf16.mxu0 %v1852
  %2536 = vmatpush1.bf16.msra.mxu0 %v1851
  %2537 = vmatprep.subr.bf16.mxu0 %v1854
  %2538 = vmatpush1.bf16.msra.mxu0 %v1853
  %2539 = vmatprep.subr.bf16.mxu0 %v1856
  %2540 = vmatpush1.bf16.msra.mxu0 %v1855
  %2541 = vmatprep.subr.bf16.mxu0 %v1858
  %2542 = vmatpush1.bf16.msra.mxu0 %v1857
  %2543 = vmatprep.subr.bf16.mxu0 %v1860
  %2544 = vmatpush1.bf16.msra.mxu0 %v1859
  %2545 = vmatprep.subr.bf16.mxu0 %v1862
  %2546 = vmatpush1.bf16.msra.mxu0 %v1861
  %2547 = vmatprep.mubr.bf16.mxu0 %v827
  %2548 = vmatmul.mubr.bf16.gmra.mrb[0].mxu0 %v826
  %v2549 = vpop.f32.mrb[0].mxu0
  %v2550 = vadd.f32 %v2409, %v2549
  %v2551 = vpop.f32.mrb[0].mxu0
  %v2552 = vadd.f32 %v2411, %v2551
  %v2553 = vpop.f32.mrb[0].mxu0
  %v2554 = vadd.f32 %v2413, %v2553
  %v2555 = vpop.f32.mrb[0].mxu0
  %v2556 = vadd.f32 %v2415, %v2555
  %2557 = vmatprep.mubr.bf16.mxu0 %v841
  %2558 = vmatmul.mubr.bf16.gmra.mrb[0].mxu0 %v840
  %v2559 = vpop.f32.mrb[0].mxu0
  %v2560 = vadd.f32 %v2419, %v2559
  %v2561 = vpop.f32.mrb[0].mxu0
  %v2562 = vadd.f32 %v2421, %v2561
  %v2563 = vpop.f32.mrb[0].mxu0
  %v2564 = vadd.f32 %v2423, %v2563
  %v2565 = vpop.f32.mrb[0].mxu0
  %v2566 = vadd.f32 %v2425, %v2565
  %2567 = vmatprep.mubr.bf16.mxu0 %v855
  %2568 = vmatmul.mubr.bf16.gmra.mrb[0].mxu0 %v854
  %v2569 = vpop.f32.mrb[0].mxu0
  %v2570 = vadd.f32 %v2429, %v2569
  %v2571 = vpop.f32.mrb[0].mxu0
  %v2572 = vadd.f32 %v2431, %v2571
  %v2573 = vpop.f32.mrb[0].mxu0
  %v2574 = vadd.f32 %v2433, %v2573
  %v2575 = vpop.f32.mrb[0].mxu0
  %v2576 = vadd.f32 %v2435, %v2575
  %2577 = vmatprep.mubr.bf16.mxu0 %v869
  %2578 = vmatmul.mubr.bf16.gmra.mrb[0].mxu0 %v868
  %v2579 = vpop.f32.mrb[0].mxu0
  %v2580 = vadd.f32 %v2439, %v2579
  %v2581 = vpop.f32.mrb[0].mxu0
  %v2582 = vadd.f32 %v2441, %v2581
  %v2583 = vpop.f32.mrb[0].mxu0
  %v2584 = vadd.f32 %v2443, %v2583
  %v2585 = vpop.f32.mrb[0].mxu0
  %v2586 = vadd.f32 %v2445, %v2585
  %2587 = vmatprep.mubr.bf16.mxu0 %v883
  %2588 = vmatmul.mubr.bf16.gmra.mrb[0].mxu0 %v882
  %v2589 = vpop.f32.mrb[0].mxu0
  %v2590 = vadd.f32 %v2449, %v2589
  %v2591 = vpop.f32.mrb[0].mxu0
  %v2592 = vadd.f32 %v2451, %v2591
  %v2593 = vpop.f32.mrb[0].mxu0
  %v2594 = vadd.f32 %v2453, %v2593
  %v2595 = vpop.f32.mrb[0].mxu0
  %v2596 = vadd.f32 %v2455, %v2595
  %2597 = vmatprep.mubr.bf16.mxu0 %v897
  %2598 = vmatmul.mubr.bf16.gmra.mrb[0].mxu0 %v896
  %v2599 = vpop.f32.mrb[0].mxu0
  %v2600 = vadd.f32 %v2459, %v2599
  %v2601 = vpop.f32.mrb[0].mxu0
  %v2602 = vadd.f32 %v2461, %v2601
  %v2603 = vpop.f32.mrb[0].mxu0
  %v2604 = vadd.f32 %v2463, %v2603
  %v2605 = vpop.f32.mrb[0].mxu0
  %v2606 = vadd.f32 %v2465, %v2605
  %2607 = vmatprep.mubr.bf16.mxu0 %v911
  %2608 = vmatmul.mubr.bf16.gmra.mrb[0].mxu0 %v910
  %v2609 = vpop.f32.mrb[0].mxu0
  %v2610 = vadd.f32 %v2469, %v2609
  %v2611 = vpop.f32.mrb[0].mxu0
  %v2612 = vadd.f32 %v2471, %v2611
  %v2613 = vpop.f32.mrb[0].mxu0
  %v2614 = vadd.f32 %v2473, %v2613
  %v2615 = vpop.f32.mrb[0].mxu0
  %v2616 = vadd.f32 %v2475, %v2615
  %2617 = vmatprep.mubr.bf16.mxu0 %v925
  %2618 = vmatmul.mubr.bf16.gmra.mrb[0].mxu0 %v924
  %v2619 = vpop.f32.mrb[0].mxu0
  %v2620 = vadd.f32 %v2479, %v2619
  %v2621 = vpop.f32.mrb[0].mxu0
  %v2622 = vadd.f32 %v2481, %v2621
  %v2623 = vpop.f32.mrb[0].mxu0
  %v2624 = vadd.f32 %v2483, %v2623
  %v2625 = vpop.f32.mrb[0].mxu0
  %v2626 = vadd.f32 %v2485, %v2625
  %2627 = vmatprep.mubr.bf16.mxu0 %v939
  %2628 = vmatmul.mubr.bf16.gmra.mrb[0].mxu0 %v938
  %v2629 = vpop.f32.mrb[0].mxu0
  %v2630 = vadd.f32 %v2489, %v2629
  %v2631 = vpop.f32.mrb[0].mxu0
  %v2632 = vadd.f32 %v2491, %v2631
  %v2633 = vpop.f32.mrb[0].mxu0
  %v2634 = vadd.f32 %v2493, %v2633
  %v2635 = vpop.f32.mrb[0].mxu0
  %v2636 = vadd.f32 %v2495, %v2635
  %2637 = vmatprep.mubr.bf16.mxu0 %v953
  %2638 = vmatmul.mubr.bf16.gmra.mrb[0].mxu0 %v952
  %v2639 = vpop.f32.mrb[0].mxu0
  %v2640 = vadd.f32 %v2499, %v2639
  %v2641 = vpop.f32.mrb[0].mxu0
  %v2642 = vadd.f32 %v2501, %v2641
  %v2643 = vpop.f32.mrb[0].mxu0
  %v2644 = vadd.f32 %v2503, %v2643
  %v2645 = vpop.f32.mrb[0].mxu0
  %v2646 = vadd.f32 %v2505, %v2645
  %2647 = vmatprep.mubr.bf16.mxu0 %v967
  %2648 = vmatmul.mubr.bf16.gmra.mrb[0].mxu0 %v966
  %v2649 = vpop.f32.mrb[0].mxu0
  %v2650 = vadd.f32 %v2509, %v2649
  %v2651 = vpop.f32.mrb[0].mxu0
  %v2652 = vadd.f32 %v2511, %v2651
  %v2653 = vpop.f32.mrb[0].mxu0
  %v2654 = vpop.f32.mrb[0].mxu0
  %2655 = vdwg.mxu0
  %2656 = vmatprep.subr.bf16.mxu0 %v1864
  %2657 = vmatpush1.bf16.msra.mxu0 %v1863
  %2658 = vmatprep.subr.bf16.mxu0 %v1866
  %2659 = vmatpush1.bf16.msra.mxu0 %v1865
  %2660 = vmatprep.subr.bf16.mxu0 %v1868
  %2661 = vmatpush1.bf16.msra.mxu0 %v1867
  %2662 = vmatprep.subr.bf16.mxu0 %v1870
  %2663 = vmatpush1.bf16.msra.mxu0 %v1869
  %2664 = vmatprep.subr.bf16.mxu0 %v1872
  %2665 = vmatpush1.bf16.msra.mxu0 %v1871
  %2666 = vmatprep.subr.bf16.mxu0 %v1874
  %2667 = vmatpush1.bf16.msra.mxu0 %v1873
  %2668 = vmatprep.subr.bf16.mxu0 %v1876
  %2669 = vmatpush1.bf16.msra.mxu0 %v1875
  %2670 = vmatprep.subr.bf16.mxu0 %v1878
  %2671 = vmatpush1.bf16.msra.mxu0 %v1877
  %2672 = vmatprep.subr.bf16.mxu0 %v1880
  %2673 = vmatpush1.bf16.msra.mxu0 %v1879
  %2674 = vmatprep.subr.bf16.mxu0 %v1882
  %2675 = vmatpush1.bf16.msra.mxu0 %v1881
  %2676 = vmatprep.subr.bf16.mxu0 %v1884
  %2677 = vmatpush1.bf16.msra.mxu0 %v1883
  %2678 = vmatprep.subr.bf16.mxu0 %v1886
  %2679 = vmatpush1.bf16.msra.mxu0 %v1885
  %2680 = vmatprep.subr.bf16.mxu0 %v1888
  %2681 = vmatpush1.bf16.msra.mxu0 %v1887
  %2682 = vmatprep.subr.bf16.mxu0 %v1890
  %2683 = vmatpush1.bf16.msra.mxu0 %v1889
  %2684 = vmatprep.subr.bf16.mxu0 %v1892
  %2685 = vmatpush1.bf16.msra.mxu0 %v1891
  %2686 = vmatprep.subr.bf16.mxu0 %v1894
  %2687 = vmatpush1.bf16.msra.mxu0 %v1893
  %2688 = vmatprep.mubr.bf16.mxu0 %v829
  %2689 = vmatmul.mubr.bf16.gmra.mrb[0].mxu0 %v828
  %v2690 = vpop.f32.mrb[0].mxu0
  %v2691 = vadd.f32 %v2550, %v2690
  %v2692 = vpop.f32.mrb[0].mxu0
  %v2693 = vadd.f32 %v2552, %v2692
  %v2694 = vpop.f32.mrb[0].mxu0
  %v2695 = vadd.f32 %v2554, %v2694
  %v2696 = vpop.f32.mrb[0].mxu0
  %v2697 = vadd.f32 %v2556, %v2696
  %2698 = vmatprep.mubr.bf16.mxu0 %v843
  %2699 = vmatmul.mubr.bf16.gmra.mrb[0].mxu0 %v842
  %v2700 = vpop.f32.mrb[0].mxu0
  %v2701 = vadd.f32 %v2560, %v2700
  %v2702 = vpop.f32.mrb[0].mxu0
  %v2703 = vadd.f32 %v2562, %v2702
  %v2704 = vpop.f32.mrb[0].mxu0
  %v2705 = vadd.f32 %v2564, %v2704
  %v2706 = vpop.f32.mrb[0].mxu0
  %v2707 = vadd.f32 %v2566, %v2706
  %2708 = vmatprep.mubr.bf16.mxu0 %v857
  %2709 = vmatmul.mubr.bf16.gmra.mrb[0].mxu0 %v856
  %v2710 = vpop.f32.mrb[0].mxu0
  %v2711 = vadd.f32 %v2570, %v2710
  %v2712 = vpop.f32.mrb[0].mxu0
  %v2713 = vadd.f32 %v2572, %v2712
  %v2714 = vpop.f32.mrb[0].mxu0
  %v2715 = vadd.f32 %v2574, %v2714
  %v2716 = vpop.f32.mrb[0].mxu0
  %v2717 = vadd.f32 %v2576, %v2716
  %2718 = vmatprep.mubr.bf16.mxu0 %v871
  %2719 = vmatmul.mubr.bf16.gmra.mrb[0].mxu0 %v870
  %v2720 = vpop.f32.mrb[0].mxu0
  %v2721 = vadd.f32 %v2580, %v2720
  %v2722 = vpop.f32.mrb[0].mxu0
  %v2723 = vadd.f32 %v2582, %v2722
  %v2724 = vpop.f32.mrb[0].mxu0
  %v2725 = vadd.f32 %v2584, %v2724
  %v2726 = vpop.f32.mrb[0].mxu0
  %v2727 = vadd.f32 %v2586, %v2726
  %2728 = vmatprep.mubr.bf16.mxu0 %v885
  %2729 = vmatmul.mubr.bf16.gmra.mrb[0].mxu0 %v884
  %v2730 = vpop.f32.mrb[0].mxu0
  %v2731 = vadd.f32 %v2590, %v2730
  %v2732 = vpop.f32.mrb[0].mxu0
  %v2733 = vadd.f32 %v2592, %v2732
  %v2734 = vpop.f32.mrb[0].mxu0
  %v2735 = vadd.f32 %v2594, %v2734
  %v2736 = vpop.f32.mrb[0].mxu0
  %v2737 = vadd.f32 %v2596, %v2736
  %2738 = vmatprep.mubr.bf16.mxu0 %v899
  %2739 = vmatmul.mubr.bf16.gmra.mrb[0].mxu0 %v898
  %v2740 = vpop.f32.mrb[0].mxu0
  %v2741 = vadd.f32 %v2600, %v2740
  %v2742 = vpop.f32.mrb[0].mxu0
  %v2743 = vadd.f32 %v2602, %v2742
  %v2744 = vpop.f32.mrb[0].mxu0
  %v2745 = vadd.f32 %v2604, %v2744
  %v2746 = vpop.f32.mrb[0].mxu0
  %v2747 = vadd.f32 %v2606, %v2746
  %2748 = vmatprep.mubr.bf16.mxu0 %v913
  %2749 = vmatmul.mubr.bf16.gmra.mrb[0].mxu0 %v912
  %v2750 = vpop.f32.mrb[0].mxu0
  %v2751 = vadd.f32 %v2610, %v2750
  %v2752 = vpop.f32.mrb[0].mxu0
  %v2753 = vadd.f32 %v2612, %v2752
  %v2754 = vpop.f32.mrb[0].mxu0
  %v2755 = vadd.f32 %v2614, %v2754
  %v2756 = vpop.f32.mrb[0].mxu0
  %v2757 = vadd.f32 %v2616, %v2756
  %2758 = vmatprep.mubr.bf16.mxu0 %v927
  %2759 = vmatmul.mubr.bf16.gmra.mrb[0].mxu0 %v926
  %v2760 = vpop.f32.mrb[0].mxu0
  %v2761 = vadd.f32 %v2620, %v2760
  %v2762 = vpop.f32.mrb[0].mxu0
  %v2763 = vadd.f32 %v2622, %v2762
  %v2764 = vpop.f32.mrb[0].mxu0
  %v2765 = vadd.f32 %v2624, %v2764
  %v2766 = vpop.f32.mrb[0].mxu0
  %v2767 = vadd.f32 %v2626, %v2766
  %2768 = vmatprep.mubr.bf16.mxu0 %v941
  %2769 = vmatmul.mubr.bf16.gmra.mrb[0].mxu0 %v940
  %v2770 = vpop.f32.mrb[0].mxu0
  %v2771 = vadd.f32 %v2630, %v2770
  %v2772 = vpop.f32.mrb[0].mxu0
  %v2773 = vadd.f32 %v2632, %v2772
  %v2774 = vpop.f32.mrb[0].mxu0
  %v2775 = vadd.f32 %v2634, %v2774
  %v2776 = vpop.f32.mrb[0].mxu0
  %v2777 = vadd.f32 %v2636, %v2776
  %2778 = vmatprep.mubr.bf16.mxu0 %v955
  %2779 = vmatmul.mubr.bf16.gmra.mrb[0].mxu0 %v954
  %v2780 = vpop.f32.mrb[0].mxu0
  %v2781 = vadd.f32 %v2640, %v2780
  %v2782 = vpop.f32.mrb[0].mxu0
  %v2783 = vadd.f32 %v2642, %v2782
  %v2784 = vpop.f32.mrb[0].mxu0
  %v2785 = vadd.f32 %v2644, %v2784
  %v2786 = vpop.f32.mrb[0].mxu0
  %v2787 = vadd.f32 %v2646, %v2786
  %2788 = vmatprep.mubr.bf16.mxu0 %v969
  %2789 = vmatmul.mubr.bf16.gmra.mrb[0].mxu0 %v968
  %v2790 = vpop.f32.mrb[0].mxu0
  %v2791 = vadd.f32 %v2650, %v2790
  %v2792 = vpop.f32.mrb[0].mxu0
  %v2793 = vadd.f32 %v2652, %v2792
  %v2794 = vpop.f32.mrb[0].mxu0
  %v2795 = vpop.f32.mrb[0].mxu0
  %2796 = vdwg.mxu0
  %2797 = vmatprep.subr.bf16.mxu0 %v1896
  %2798 = vmatpush1.bf16.msra.mxu0 %v1895
  %2799 = vmatprep.subr.bf16.mxu0 %v1898
  %2800 = vmatpush1.bf16.msra.mxu0 %v1897
  %2801 = vmatprep.subr.bf16.mxu0 %v1900
  %2802 = vmatpush1.bf16.msra.mxu0 %v1899
  %2803 = vmatprep.subr.bf16.mxu0 %v1902
  %2804 = vmatpush1.bf16.msra.mxu0 %v1901
  %2805 = vmatprep.subr.bf16.mxu0 %v1904
  %2806 = vmatpush1.bf16.msra.mxu0 %v1903
  %2807 = vmatprep.subr.bf16.mxu0 %v1906
  %2808 = vmatpush1.bf16.msra.mxu0 %v1905
  %2809 = vmatprep.subr.bf16.mxu0 %v1908
  %2810 = vmatpush1.bf16.msra.mxu0 %v1907
  %2811 = vmatprep.subr.bf16.mxu0 %v1910
  %2812 = vmatpush1.bf16.msra.mxu0 %v1909
  %2813 = vmatprep.subr.bf16.mxu0 %v1912
  %2814 = vmatpush1.bf16.msra.mxu0 %v1911
  %2815 = vmatprep.subr.bf16.mxu0 %v1914
  %2816 = vmatpush1.bf16.msra.mxu0 %v1913
  %2817 = vmatprep.subr.bf16.mxu0 %v1916
  %2818 = vmatpush1.bf16.msra.mxu0 %v1915
  %2819 = vmatprep.subr.bf16.mxu0 %v1918
  %2820 = vmatpush1.bf16.msra.mxu0 %v1917
  %2821 = vmatprep.subr.bf16.mxu0 %v1920
  %2822 = vmatpush1.bf16.msra.mxu0 %v1919
  %2823 = vmatprep.subr.bf16.mxu0 %v1922
  %2824 = vmatpush1.bf16.msra.mxu0 %v1921
  %2825 = vmatprep.subr.bf16.mxu0 %v1924
  %2826 = vmatpush1.bf16.msra.mxu0 %v1923
  %2827 = vmatprep.subr.bf16.mxu0 %v1926
  %2828 = vmatpush1.bf16.msra.mxu0 %v1925
  %2829 = vmatprep.mubr.bf16.mxu0 %v831
  %2830 = vmatmul.mubr.bf16.gmra.mrb[0].mxu0 %v830
  %v2831 = vpop.f32.mrb[0].mxu0
  %v2832 = vadd.f32 %v2691, %v2831
  %v2833 = vpop.f32.mrb[0].mxu0
  %v2834 = vadd.f32 %v2693, %v2833
  %v2835 = vpop.f32.mrb[0].mxu0
  %v2836 = vadd.f32 %v2695, %v2835
  %v2837 = vpop.f32.mrb[0].mxu0
  %v2838 = vadd.f32 %v2697, %v2837
  %2839 = vmatprep.mubr.bf16.mxu0 %v845
  %2840 = vmatmul.mubr.bf16.gmra.mrb[0].mxu0 %v844
  %v2841 = vpop.f32.mrb[0].mxu0
  %v2842 = vadd.f32 %v2701, %v2841
  %v2843 = vpop.f32.mrb[0].mxu0
  %v2844 = vadd.f32 %v2703, %v2843
  %v2845 = vpop.f32.mrb[0].mxu0
  %v2846 = vadd.f32 %v2705, %v2845
  %v2847 = vpop.f32.mrb[0].mxu0
  %v2848 = vadd.f32 %v2707, %v2847
  %2849 = vmatprep.mubr.bf16.mxu0 %v859
  %2850 = vmatmul.mubr.bf16.gmra.mrb[0].mxu0 %v858
  %v2851 = vpop.f32.mrb[0].mxu0
  %v2852 = vadd.f32 %v2711, %v2851
  %v2853 = vpop.f32.mrb[0].mxu0
  %v2854 = vadd.f32 %v2713, %v2853
  %v2855 = vpop.f32.mrb[0].mxu0
  %v2856 = vadd.f32 %v2715, %v2855
  %v2857 = vpop.f32.mrb[0].mxu0
  %v2858 = vadd.f32 %v2717, %v2857
  %2859 = vmatprep.mubr.bf16.mxu0 %v873
  %2860 = vmatmul.mubr.bf16.gmra.mrb[0].mxu0 %v872
  %v2861 = vpop.f32.mrb[0].mxu0
  %v2862 = vadd.f32 %v2721, %v2861
  %v2863 = vpop.f32.mrb[0].mxu0
  %v2864 = vadd.f32 %v2723, %v2863
  %v2865 = vpop.f32.mrb[0].mxu0
  %v2866 = vadd.f32 %v2725, %v2865
  %v2867 = vpop.f32.mrb[0].mxu0
  %v2868 = vadd.f32 %v2727, %v2867
  %2869 = vmatprep.mubr.bf16.mxu0 %v887
  %2870 = vmatmul.mubr.bf16.gmra.mrb[0].mxu0 %v886
  %v2871 = vpop.f32.mrb[0].mxu0
  %v2872 = vadd.f32 %v2731, %v2871
  %v2873 = vpop.f32.mrb[0].mxu0
  %v2874 = vadd.f32 %v2733, %v2873
  %v2875 = vpop.f32.mrb[0].mxu0
  %v2876 = vadd.f32 %v2735, %v2875
  %v2877 = vpop.f32.mrb[0].mxu0
  %v2878 = vadd.f32 %v2737, %v2877
  %2879 = vmatprep.mubr.bf16.mxu0 %v901
  %2880 = vmatmul.mubr.bf16.gmra.mrb[0].mxu0 %v900
  %v2881 = vpop.f32.mrb[0].mxu0
  %v2882 = vadd.f32 %v2741, %v2881
  %v2883 = vpop.f32.mrb[0].mxu0
  %v2884 = vadd.f32 %v2743, %v2883
  %v2885 = vpop.f32.mrb[0].mxu0
  %v2886 = vadd.f32 %v2745, %v2885
  %v2887 = vpop.f32.mrb[0].mxu0
  %v2888 = vadd.f32 %v2747, %v2887
  %2889 = vmatprep.mubr.bf16.mxu0 %v915
  %2890 = vmatmul.mubr.bf16.gmra.mrb[0].mxu0 %v914
  %v2891 = vpop.f32.mrb[0].mxu0
  %v2892 = vadd.f32 %v2751, %v2891
  %v2893 = vpop.f32.mrb[0].mxu0
  %v2894 = vadd.f32 %v2753, %v2893
  %v2895 = vpop.f32.mrb[0].mxu0
  %v2896 = vadd.f32 %v2755, %v2895
  %v2897 = vpop.f32.mrb[0].mxu0
  %v2898 = vadd.f32 %v2757, %v2897
  %2899 = vmatprep.mubr.bf16.mxu0 %v929
  %2900 = vmatmul.mubr.bf16.gmra.mrb[0].mxu0 %v928
  %v2901 = vpop.f32.mrb[0].mxu0
  %v2902 = vadd.f32 %v2761, %v2901
  %v2903 = vpop.f32.mrb[0].mxu0
  %v2904 = vadd.f32 %v2763, %v2903
  %v2905 = vpop.f32.mrb[0].mxu0
  %v2906 = vadd.f32 %v2765, %v2905
  %v2907 = vpop.f32.mrb[0].mxu0
  %v2908 = vadd.f32 %v2767, %v2907
  %2909 = vmatprep.mubr.bf16.mxu0 %v943
  %2910 = vmatmul.mubr.bf16.gmra.mrb[0].mxu0 %v942
  %v2911 = vpop.f32.mrb[0].mxu0
  %v2912 = vadd.f32 %v2771, %v2911
  %v2913 = vpop.f32.mrb[0].mxu0
  %v2914 = vadd.f32 %v2773, %v2913
  %v2915 = vpop.f32.mrb[0].mxu0
  %v2916 = vadd.f32 %v2775, %v2915
  %v2917 = vpop.f32.mrb[0].mxu0
  %v2918 = vadd.f32 %v2777, %v2917
  %2919 = vmatprep.mubr.bf16.mxu0 %v957
  %2920 = vmatmul.mubr.bf16.gmra.mrb[0].mxu0 %v956
  %v2921 = vpop.f32.mrb[0].mxu0
  %v2922 = vadd.f32 %v2781, %v2921
  %v2923 = vpop.f32.mrb[0].mxu0
  %v2924 = vadd.f32 %v2783, %v2923
  %v2925 = vpop.f32.mrb[0].mxu0
  %v2926 = vadd.f32 %v2785, %v2925
  %v2927 = vpop.f32.mrb[0].mxu0
  %v2928 = vadd.f32 %v2787, %v2927
  %2929 = vmatprep.mubr.bf16.mxu0 %v971
  %2930 = vmatmul.mubr.bf16.gmra.mrb[0].mxu0 %v970
  %v2931 = vpop.f32.mrb[0].mxu0
  %v2932 = vadd.f32 %v2791, %v2931
  %v2933 = vpop.f32.mrb[0].mxu0
  %v2934 = vadd.f32 %v2793, %v2933
  %v2935 = vpop.f32.mrb[0].mxu0
  %v2936 = vpop.f32.mrb[0].mxu0
  %2937 = vdwg.mxu0
  %2938 = vmatprep.subr.bf16.mxu0 %v1928
  %2939 = vmatpush1.bf16.msra.mxu0 %v1927
  %2940 = vmatprep.subr.bf16.mxu0 %v1930
  %2941 = vmatpush1.bf16.msra.mxu0 %v1929
  %2942 = vmatprep.subr.bf16.mxu0 %v1932
  %2943 = vmatpush1.bf16.msra.mxu0 %v1931
  %2944 = vmatprep.subr.bf16.mxu0 %v1934
  %2945 = vmatpush1.bf16.msra.mxu0 %v1933
  %2946 = vmatprep.subr.bf16.mxu0 %v1936
  %2947 = vmatpush1.bf16.msra.mxu0 %v1935
  %2948 = vmatprep.subr.bf16.mxu0 %v1938
  %2949 = vmatpush1.bf16.msra.mxu0 %v1937
  %2950 = vmatprep.subr.bf16.mxu0 %v1940
  %2951 = vmatpush1.bf16.msra.mxu0 %v1939
  %2952 = vmatprep.subr.bf16.mxu0 %v1942
  %2953 = vmatpush1.bf16.msra.mxu0 %v1941
  %2954 = vmatprep.subr.bf16.mxu0 %v1944
  %2955 = vmatpush1.bf16.msra.mxu0 %v1943
  %2956 = vmatprep.subr.bf16.mxu0 %v1946
  %2957 = vmatpush1.bf16.msra.mxu0 %v1945
  %2958 = vmatprep.subr.bf16.mxu0 %v1948
  %2959 = vmatpush1.bf16.msra.mxu0 %v1947
  %2960 = vmatprep.subr.bf16.mxu0 %v1950
  %2961 = vmatpush1.bf16.msra.mxu0 %v1949
  %2962 = vmatprep.subr.bf16.mxu0 %v1952
  %2963 = vmatpush1.bf16.msra.mxu0 %v1951
  %2964 = vmatprep.subr.bf16.mxu0 %v1954
  %2965 = vmatpush1.bf16.msra.mxu0 %v1953
  %2966 = vmatprep.subr.bf16.mxu0 %v1956
  %2967 = vmatpush1.bf16.msra.mxu0 %v1955
  %2968 = vmatprep.subr.bf16.mxu0 %v1958
  %2969 = vmatpush1.bf16.msra.mxu0 %v1957
  %2970 = vmatprep.mubr.bf16.mxu0 %v833
  %2971 = vmatmul.mubr.bf16.gmra.mrb[0].mxu0 %v832
  %v2972 = vpop.f32.mrb[0].mxu0
  %v2973 = vadd.f32 %v2832, %v2972
  %v2974 = vpop.f32.mrb[0].mxu0
  %v2975 = vadd.f32 %v2834, %v2974
  %v2976 = vpop.f32.mrb[0].mxu0
  %v2977 = vadd.f32 %v2836, %v2976
  %v2978 = vpop.f32.mrb[0].mxu0
  %v2979 = vadd.f32 %v2838, %v2978
  %2980 = vmatprep.mubr.bf16.mxu0 %v847
  %2981 = vmatmul.mubr.bf16.gmra.mrb[0].mxu0 %v846
  %v2982 = vpop.f32.mrb[0].mxu0
  %v2983 = vadd.f32 %v2842, %v2982
  %v2984 = vpop.f32.mrb[0].mxu0
  %v2985 = vadd.f32 %v2844, %v2984
  %v2986 = vpop.f32.mrb[0].mxu0
  %v2987 = vadd.f32 %v2846, %v2986
  %v2988 = vpop.f32.mrb[0].mxu0
  %v2989 = vadd.f32 %v2848, %v2988
  %2990 = vmatprep.mubr.bf16.mxu0 %v861
  %2991 = vmatmul.mubr.bf16.gmra.mrb[0].mxu0 %v860
  %v2992 = vpop.f32.mrb[0].mxu0
  %v2993 = vadd.f32 %v2852, %v2992
  %v2994 = vpop.f32.mrb[0].mxu0
  %v2995 = vadd.f32 %v2854, %v2994
  %v2996 = vpop.f32.mrb[0].mxu0
  %v2997 = vadd.f32 %v2856, %v2996
  %v2998 = vpop.f32.mrb[0].mxu0
  %v2999 = vadd.f32 %v2858, %v2998
  %3000 = vmatprep.mubr.bf16.mxu0 %v875
  %3001 = vmatmul.mubr.bf16.gmra.mrb[0].mxu0 %v874
  %v3002 = vpop.f32.mrb[0].mxu0
  %v3003 = vadd.f32 %v2862, %v3002
  %v3004 = vpop.f32.mrb[0].mxu0
  %v3005 = vadd.f32 %v2864, %v3004
  %v3006 = vpop.f32.mrb[0].mxu0
  %v3007 = vadd.f32 %v2866, %v3006
  %v3008 = vpop.f32.mrb[0].mxu0
  %v3009 = vadd.f32 %v2868, %v3008
  %3010 = vmatprep.mubr.bf16.mxu0 %v889
  %3011 = vmatmul.mubr.bf16.gmra.mrb[0].mxu0 %v888
  %v3012 = vpop.f32.mrb[0].mxu0
  %v3013 = vadd.f32 %v2872, %v3012
  %v3014 = vpop.f32.mrb[0].mxu0
  %v3015 = vadd.f32 %v2874, %v3014
  %v3016 = vpop.f32.mrb[0].mxu0
  %v3017 = vadd.f32 %v2876, %v3016
  %v3018 = vpop.f32.mrb[0].mxu0
  %v3019 = vadd.f32 %v2878, %v3018
  %3020 = vmatprep.mubr.bf16.mxu0 %v903
  %3021 = vmatmul.mubr.bf16.gmra.mrb[0].mxu0 %v902
  %v3022 = vpop.f32.mrb[0].mxu0
  %v3023 = vadd.f32 %v2882, %v3022
  %v3024 = vpop.f32.mrb[0].mxu0
  %v3025 = vadd.f32 %v2884, %v3024
  %v3026 = vpop.f32.mrb[0].mxu0
  %v3027 = vadd.f32 %v2886, %v3026
  %v3028 = vpop.f32.mrb[0].mxu0
  %v3029 = vadd.f32 %v2888, %v3028
  %3030 = vmatprep.mubr.bf16.mxu0 %v917
  %3031 = vmatmul.mubr.bf16.gmra.mrb[0].mxu0 %v916
  %v3032 = vpop.f32.mrb[0].mxu0
  %v3033 = vadd.f32 %v2892, %v3032
  %v3034 = vpop.f32.mrb[0].mxu0
  %v3035 = vadd.f32 %v2894, %v3034
  %v3036 = vpop.f32.mrb[0].mxu0
  %v3037 = vadd.f32 %v2896, %v3036
  %v3038 = vpop.f32.mrb[0].mxu0
  %v3039 = vadd.f32 %v2898, %v3038
  %3040 = vmatprep.mubr.bf16.mxu0 %v931
  %3041 = vmatmul.mubr.bf16.gmra.mrb[0].mxu0 %v930
  %v3042 = vpop.f32.mrb[0].mxu0
  %v3043 = vadd.f32 %v2902, %v3042
  %v3044 = vpop.f32.mrb[0].mxu0
  %v3045 = vadd.f32 %v2904, %v3044
  %v3046 = vpop.f32.mrb[0].mxu0
  %v3047 = vadd.f32 %v2906, %v3046
  %v3048 = vpop.f32.mrb[0].mxu0
  %v3049 = vadd.f32 %v2908, %v3048
  %3050 = vmatprep.mubr.bf16.mxu0 %v945
  %3051 = vmatmul.mubr.bf16.gmra.mrb[0].mxu0 %v944
  %v3052 = vpop.f32.mrb[0].mxu0
  %v3053 = vadd.f32 %v2912, %v3052
  %v3054 = vpop.f32.mrb[0].mxu0
  %v3055 = vadd.f32 %v2914, %v3054
  %v3056 = vpop.f32.mrb[0].mxu0
  %v3057 = vadd.f32 %v2916, %v3056
  %v3058 = vpop.f32.mrb[0].mxu0
  %v3059 = vadd.f32 %v2918, %v3058
  %3060 = vmatprep.mubr.bf16.mxu0 %v959
  %3061 = vmatmul.mubr.bf16.gmra.mrb[0].mxu0 %v958
  %v3062 = vpop.f32.mrb[0].mxu0
  %v3063 = vadd.f32 %v2922, %v3062
  %v3064 = vpop.f32.mrb[0].mxu0
  %v3065 = vadd.f32 %v2924, %v3064
  %v3066 = vpop.f32.mrb[0].mxu0
  %v3067 = vadd.f32 %v2926, %v3066
  %v3068 = vpop.f32.mrb[0].mxu0
  %v3069 = vadd.f32 %v2928, %v3068
  %3070 = vmatprep.mubr.bf16.mxu0 %v973
  %3071 = vmatmul.mubr.bf16.gmra.mrb[0].mxu0 %v972
  %v3072 = vpop.f32.mrb[0].mxu0
  %v3073 = vadd.f32 %v2932, %v3072
  %v3074 = vpop.f32.mrb[0].mxu0
  %v3075 = vadd.f32 %v2934, %v3074
  %v3076 = vpop.f32.mrb[0].mxu0
  %v3077 = vpop.f32.mrb[0].mxu0
  %3078 = vdwg.mxu0
  %3079 = vmatprep.subr.bf16.mxu0 %v1960
  %3080 = vmatpush1.bf16.msra.mxu0 %v1959
  %3081 = vmatprep.subr.bf16.mxu0 %v1962
  %3082 = vmatpush1.bf16.msra.mxu0 %v1961
  %3083 = vmatprep.subr.bf16.mxu0 %v1964
  %3084 = vmatpush1.bf16.msra.mxu0 %v1963
  %3085 = vmatprep.subr.bf16.mxu0 %v1966
  %3086 = vmatpush1.bf16.msra.mxu0 %v1965
  %3087 = vmatprep.subr.bf16.mxu0 %v1968
  %3088 = vmatpush1.bf16.msra.mxu0 %v1967
  %3089 = vmatprep.subr.bf16.mxu0 %v1970
  %3090 = vmatpush1.bf16.msra.mxu0 %v1969
  %3091 = vmatprep.subr.bf16.mxu0 %v1972
  %3092 = vmatpush1.bf16.msra.mxu0 %v1971
  %3093 = vmatprep.subr.bf16.mxu0 %v1974
  %3094 = vmatpush1.bf16.msra.mxu0 %v1973
  %3095 = vmatprep.subr.bf16.mxu0 %v1976
  %3096 = vmatpush1.bf16.msra.mxu0 %v1975
  %3097 = vmatprep.subr.bf16.mxu0 %v1978
  %3098 = vmatpush1.bf16.msra.mxu0 %v1977
  %3099 = vmatprep.subr.bf16.mxu0 %v1980
  %3100 = vmatpush1.bf16.msra.mxu0 %v1979
  %3101 = vmatprep.subr.bf16.mxu0 %v1982
  %3102 = vmatpush1.bf16.msra.mxu0 %v1981
  %3103 = vmatprep.subr.bf16.mxu0 0
  %3104 = vmatpush1.bf16.msra.mxu0 0
  %3105 = vmatprep.subr.bf16.mxu0 0
  %3106 = vmatpush1.bf16.msra.mxu0 0
  %3107 = vmatprep.subr.bf16.mxu0 0
  %3108 = vmatpush1.bf16.msra.mxu0 0
  %3109 = vmatprep.subr.bf16.mxu0 0
  %3110 = vmatpush1.bf16.msra.mxu0 0
  %3111 = vmatprep.mubr.bf16.mxu0 %v2201
  %3112 = vmatmul.mubr.bf16.gmra.mrb[0].mxu0 %v834
  %v3113 = vpop.f32.mrb[0].mxu0
  %v3114 = vadd.f32 %v2973, %v3113
  %v3115 = vpop.f32.mrb[0].mxu0
  %v3116 = vadd.f32 %v2975, %v3115
  %v3117 = vpop.f32.mrb[0].mxu0
  %v3118 = vadd.f32 %v2977, %v3117
  %v3119 = vpop.f32.mrb[0].mxu0
  %v3120 = vadd.f32 %v2979, %v3119
  %3121 = vmatprep.mubr.bf16.mxu0 %v2204
  %3122 = vmatmul.mubr.bf16.gmra.mrb[0].mxu0 %v848
  %v3123 = vpop.f32.mrb[0].mxu0
  %v3124 = vadd.f32 %v2983, %v3123
  %v3125 = vpop.f32.mrb[0].mxu0
  %v3126 = vadd.f32 %v2985, %v3125
  %v3127 = vpop.f32.mrb[0].mxu0
  %v3128 = vadd.f32 %v2987, %v3127
  %v3129 = vpop.f32.mrb[0].mxu0
  %v3130 = vadd.f32 %v2989, %v3129
  %3131 = vmatprep.mubr.bf16.mxu0 %v2207
  %3132 = vmatmul.mubr.bf16.gmra.mrb[0].mxu0 %v862
  %v3133 = vpop.f32.mrb[0].mxu0
  %v3134 = vadd.f32 %v2993, %v3133
  %v3135 = vpop.f32.mrb[0].mxu0
  %v3136 = vadd.f32 %v2995, %v3135
  %v3137 = vpop.f32.mrb[0].mxu0
  %v3138 = vadd.f32 %v2997, %v3137
  %v3139 = vpop.f32.mrb[0].mxu0
  %v3140 = vadd.f32 %v2999, %v3139
  %3141 = vmatprep.mubr.bf16.mxu0 %v2210
  %3142 = vmatmul.mubr.bf16.gmra.mrb[0].mxu0 %v876
  %v3143 = vpop.f32.mrb[0].mxu0
  %v3144 = vadd.f32 %v3003, %v3143
  %v3145 = vpop.f32.mrb[0].mxu0
  %v3146 = vadd.f32 %v3005, %v3145
  %v3147 = vpop.f32.mrb[0].mxu0
  %v3148 = vadd.f32 %v3007, %v3147
  %v3149 = vpop.f32.mrb[0].mxu0
  %v3150 = vadd.f32 %v3009, %v3149
  %3151 = vmatprep.mubr.bf16.mxu0 %v2213
  %3152 = vmatmul.mubr.bf16.gmra.mrb[0].mxu0 %v890
  %v3153 = vpop.f32.mrb[0].mxu0
  %v3154 = vadd.f32 %v3013, %v3153
  %v3155 = vpop.f32.mrb[0].mxu0
  %v3156 = vadd.f32 %v3015, %v3155
  %v3157 = vpop.f32.mrb[0].mxu0
  %v3158 = vadd.f32 %v3017, %v3157
  %v3159 = vpop.f32.mrb[0].mxu0
  %v3160 = vadd.f32 %v3019, %v3159
  %3161 = vmatprep.mubr.bf16.mxu0 %v2216
  %3162 = vmatmul.mubr.bf16.gmra.mrb[0].mxu0 %v904
  %v3163 = vpop.f32.mrb[0].mxu0
  %v3164 = vadd.f32 %v3023, %v3163
  %v3165 = vpop.f32.mrb[0].mxu0
  %v3166 = vadd.f32 %v3025, %v3165
  %v3167 = vpop.f32.mrb[0].mxu0
  %v3168 = vadd.f32 %v3027, %v3167
  %v3169 = vpop.f32.mrb[0].mxu0
  %v3170 = vadd.f32 %v3029, %v3169
  %3171 = vmatprep.mubr.bf16.mxu0 %v2219
  %3172 = vmatmul.mubr.bf16.gmra.mrb[0].mxu0 %v918
  %v3173 = vpop.f32.mrb[0].mxu0
  %v3174 = vadd.f32 %v3033, %v3173
  %v3175 = vpop.f32.mrb[0].mxu0
  %v3176 = vadd.f32 %v3035, %v3175
  %v3177 = vpop.f32.mrb[0].mxu0
  %v3178 = vadd.f32 %v3037, %v3177
  %v3179 = vpop.f32.mrb[0].mxu0
  %v3180 = vadd.f32 %v3039, %v3179
  %3181 = vmatprep.mubr.bf16.mxu0 %v2222
  %3182 = vmatmul.mubr.bf16.gmra.mrb[0].mxu0 %v932
  %v3183 = vpop.f32.mrb[0].mxu0
  %v3184 = vadd.f32 %v3043, %v3183
  %v3185 = vpop.f32.mrb[0].mxu0
  %v3186 = vadd.f32 %v3045, %v3185
  %v3187 = vpop.f32.mrb[0].mxu0
  %v3188 = vadd.f32 %v3047, %v3187
  %v3189 = vpop.f32.mrb[0].mxu0
  %v3190 = vadd.f32 %v3049, %v3189
  %3191 = vmatprep.mubr.bf16.mxu0 %v2225
  %3192 = vmatmul.mubr.bf16.gmra.mrb[0].mxu0 %v946
  %v3193 = vpop.f32.mrb[0].mxu0
  %v3194 = vadd.f32 %v3053, %v3193
  %v3195 = vpop.f32.mrb[0].mxu0
  %v3196 = vadd.f32 %v3055, %v3195
  %v3197 = vpop.f32.mrb[0].mxu0
  %v3198 = vadd.f32 %v3057, %v3197
  %v3199 = vpop.f32.mrb[0].mxu0
  %v3200 = vadd.f32 %v3059, %v3199
  %3201 = vmatprep.mubr.bf16.mxu0 %v2228
  %3202 = vmatmul.mubr.bf16.gmra.mrb[0].mxu0 %v960
  %v3203 = vpop.f32.mrb[0].mxu0
  %v3204 = vadd.f32 %v3063, %v3203
  %v3205 = vpop.f32.mrb[0].mxu0
  %v3206 = vadd.f32 %v3065, %v3205
  %v3207 = vpop.f32.mrb[0].mxu0
  %v3208 = vadd.f32 %v3067, %v3207
  %v3209 = vpop.f32.mrb[0].mxu0
  %v3210 = vadd.f32 %v3069, %v3209
  %3211 = vmatprep.mubr.bf16.mxu0 %v2231
  %3212 = vmatmul.mubr.bf16.gmra.mrb[0].mxu0 %v974
  %v3213 = vpop.f32.mrb[0].mxu0
  %v3214 = vadd.f32 %v3073, %v3213
  %v3215 = vpop.f32.mrb[0].mxu0
  %v3216 = vadd.f32 %v3075, %v3215
  %v3217 = vpop.f32.mrb[0].mxu0
  %v3218 = vpop.f32.mrb[0].mxu0
  %3219 = vdwg.mxu0
  %v3220 = vld [vmem:[%s2] sm:$0x3]
  %v3222 = vlaneseq
  %v3223 = vshrl.u32 %v3222, 7
  %v3224 = vsub.s32 0, %v3223
  %v3225 = vrot.slane %v3220, %v3224
  %v3226 = vlaneseq
  %v3227 = vshrl.u32 %v3226, 7
  %v3228 = vsub.s32 1, %v3227
  %v3229 = vrot.slane %v3220, %v3228
  %v3232 = vmul.f32 %v3114, %v3225
  %v3233 = vmul.f32 %v3116, %v3229
  %v3234 = vmul.f32 %v3118, %v3225
  %v3235 = vmul.f32 %v3120, %v3229
  %v3236 = vmul.f32 %v3124, %v3225
  %v3237 = vmul.f32 %v3126, %v3229
  %v3238 = vmul.f32 %v3128, %v3225
  %v3239 = vmul.f32 %v3130, %v3229
  %v3240 = vmul.f32 %v3134, %v3225
  %v3241 = vmul.f32 %v3136, %v3229
  %v3242 = vmul.f32 %v3138, %v3225
  %v3243 = vmul.f32 %v3140, %v3229
  %v3244 = vmul.f32 %v3144, %v3225
  %v3245 = vmul.f32 %v3146, %v3229
  %v3246 = vmul.f32 %v3148, %v3225
  %v3247 = vmul.f32 %v3150, %v3229
  %v3248 = vmul.f32 %v3154, %v3225
  %v3249 = vmul.f32 %v3156, %v3229
  %v3250 = vmul.f32 %v3158, %v3225
  %v3251 = vmul.f32 %v3160, %v3229
  %v3252 = vmul.f32 %v3164, %v3225
  %v3253 = vmul.f32 %v3166, %v3229
  %v3254 = vmul.f32 %v3168, %v3225
  %v3255 = vmul.f32 %v3170, %v3229
  %v3256 = vmul.f32 %v3174, %v3225
  %v3257 = vmul.f32 %v3176, %v3229
  %v3258 = vmul.f32 %v3178, %v3225
  %v3259 = vmul.f32 %v3180, %v3229
  %v3260 = vmul.f32 %v3184, %v3225
  %v3261 = vmul.f32 %v3186, %v3229
  %v3262 = vmul.f32 %v3188, %v3225
  %v3263 = vmul.f32 %v3190, %v3229
  %v3264 = vmul.f32 %v3194, %v3225
  %v3265 = vmul.f32 %v3196, %v3229
  %v3266 = vmul.f32 %v3198, %v3225
  %v3267 = vmul.f32 %v3200, %v3229
  %v3268 = vmul.f32 %v3204, %v3225
  %v3269 = vmul.f32 %v3206, %v3229
  %v3270 = vmul.f32 %v3208, %v3225
  %v3271 = vmul.f32 %v3210, %v3229
  %v3272 = vmul.f32 %v3214, %v3225
  %v3273 = vmul.f32 %v3216, %v3229
  %v3274 = vld [vmem:[%s3] sm:$0x3]
  %v3276 = vlaneseq
  %v3277 = vshrl.u32 %v3276, 7
  %v3278 = vsub.s32 0, %v3277
  %v3279 = vrot.slane %v3274, %v3278
  %v3280 = vlaneseq
  %v3281 = vshrl.u32 %v3280, 7
  %v3282 = vsub.s32 1, %v3281
  %v3283 = vrot.slane %v3274, %v3282
  %v3286 = vadd.f32 %v3232, %v3279
  %v3287 = vadd.f32 %v3233, %v3283
  %v3288 = vadd.f32 %v3234, %v3279
  %v3289 = vadd.f32 %v3235, %v3283
  %v3290 = vadd.f32 %v3236, %v3279
  %v3291 = vadd.f32 %v3237, %v3283
  %v3292 = vadd.f32 %v3238, %v3279
  %v3293 = vadd.f32 %v3239, %v3283
  %v3294 = vadd.f32 %v3240, %v3279
  %v3295 = vadd.f32 %v3241, %v3283
  %v3296 = vadd.f32 %v3242, %v3279
  %v3297 = vadd.f32 %v3243, %v3283
  %v3298 = vadd.f32 %v3244, %v3279
  %v3299 = vadd.f32 %v3245, %v3283
  %v3300 = vadd.f32 %v3246, %v3279
  %v3301 = vadd.f32 %v3247, %v3283
  %v3302 = vadd.f32 %v3248, %v3279
  %v3303 = vadd.f32 %v3249, %v3283
  %v3304 = vadd.f32 %v3250, %v3279
  %v3305 = vadd.f32 %v3251, %v3283
  %v3306 = vadd.f32 %v3252, %v3279
  %v3307 = vadd.f32 %v3253, %v3283
  %v3308 = vadd.f32 %v3254, %v3279
  %v3309 = vadd.f32 %v3255, %v3283
  %v3310 = vadd.f32 %v3256, %v3279
  %v3311 = vadd.f32 %v3257, %v3283
  %v3312 = vadd.f32 %v3258, %v3279
  %v3313 = vadd.f32 %v3259, %v3283
  %v3314 = vadd.f32 %v3260, %v3279
  %v3315 = vadd.f32 %v3261, %v3283
  %v3316 = vadd.f32 %v3262, %v3279
  %v3317 = vadd.f32 %v3263, %v3283
  %v3318 = vadd.f32 %v3264, %v3279
  %v3319 = vadd.f32 %v3265, %v3283
  %v3320 = vadd.f32 %v3266, %v3279
  %v3321 = vadd.f32 %v3267, %v3283
  %v3322 = vadd.f32 %v3268, %v3279
  %v3323 = vadd.f32 %v3269, %v3283
  %v3324 = vadd.f32 %v3270, %v3279
  %v3325 = vadd.f32 %v3271, %v3283
  %v3326 = vadd.f32 %v3272, %v3279
  %v3327 = vadd.f32 %v3273, %v3283
  %v3328 = vmax.f32 %v3286, 0.0
  %v3329 = vmax.f32 %v3287, 0.0
  %v3330 = vmax.f32 %v3288, 0.0
  %v3331 = vmax.f32 %v3289, 0.0
  %v3332 = vmax.f32 %v3290, 0.0
  %v3333 = vmax.f32 %v3291, 0.0
  %v3334 = vmax.f32 %v3292, 0.0
  %v3335 = vmax.f32 %v3293, 0.0
  %v3336 = vmax.f32 %v3294, 0.0
  %v3337 = vmax.f32 %v3295, 0.0
  %v3338 = vmax.f32 %v3296, 0.0
  %v3339 = vmax.f32 %v3297, 0.0
  %v3340 = vmax.f32 %v3298, 0.0
  %v3341 = vmax.f32 %v3299, 0.0
  %v3342 = vmax.f32 %v3300, 0.0
  %v3343 = vmax.f32 %v3301, 0.0
  %v3344 = vmax.f32 %v3302, 0.0
  %v3345 = vmax.f32 %v3303, 0.0
  %v3346 = vmax.f32 %v3304, 0.0
  %v3347 = vmax.f32 %v3305, 0.0
  %v3348 = vmax.f32 %v3306, 0.0
  %v3349 = vmax.f32 %v3307, 0.0
  %v3350 = vmax.f32 %v3308, 0.0
  %v3351 = vmax.f32 %v3309, 0.0
  %v3352 = vmax.f32 %v3310, 0.0
  %v3353 = vmax.f32 %v3311, 0.0
  %v3354 = vmax.f32 %v3312, 0.0
  %v3355 = vmax.f32 %v3313, 0.0
  %v3356 = vmax.f32 %v3314, 0.0
  %v3357 = vmax.f32 %v3315, 0.0
  %v3358 = vmax.f32 %v3316, 0.0
  %v3359 = vmax.f32 %v3317, 0.0
  %v3360 = vmax.f32 %v3318, 0.0
  %v3361 = vmax.f32 %v3319, 0.0
  %v3362 = vmax.f32 %v3320, 0.0
  %v3363 = vmax.f32 %v3321, 0.0
  %v3364 = vmax.f32 %v3322, 0.0
  %v3365 = vmax.f32 %v3323, 0.0
  %v3366 = vmax.f32 %v3324, 0.0
  %v3367 = vmax.f32 %v3325, 0.0
  %v3368 = vmax.f32 %v3326, 0.0
  %v3369 = vmax.f32 %v3327, 0.0
  %v3370 = vpack.c.bf16 %v3330, %v3328
  %v3371 = vpack.c.bf16 %v3331, %v3329
  %v3372 = vpack.c.bf16 %v3334, %v3332
  %v3373 = vpack.c.bf16 %v3335, %v3333
  %v3374 = vpack.c.bf16 %v3338, %v3336
  %v3375 = vpack.c.bf16 %v3339, %v3337
  %v3376 = vpack.c.bf16 %v3342, %v3340
  %v3377 = vpack.c.bf16 %v3343, %v3341
  %v3378 = vpack.c.bf16 %v3346, %v3344
  %v3379 = vpack.c.bf16 %v3347, %v3345
  %v3380 = vpack.c.bf16 %v3350, %v3348
  %v3381 = vpack.c.bf16 %v3351, %v3349
  %v3382 = vpack.c.bf16 %v3354, %v3352
  %v3383 = vpack.c.bf16 %v3355, %v3353
  %v3384 = vpack.c.bf16 %v3358, %v3356
  %v3385 = vpack.c.bf16 %v3359, %v3357
  %v3386 = vpack.c.bf16 %v3362, %v3360
  %v3387 = vpack.c.bf16 %v3363, %v3361
  %v3388 = vpack.c.bf16 %v3366, %v3364
  %v3389 = vpack.c.bf16 %v3367, %v3365
  %v3390 = vpack.c.bf16 %v3368, %v3368
  %v3391 = vpack.c.bf16 %v3369, %v3369
  %v3414 = vunpack.c.l.b16 %v3370
  %v3415 = vunpack.c.l.b16 %v3371
  %v3416 = vunpack.c.h.b16 %v3370
  %v3417 = vunpack.c.h.b16 %v3371
  %v3418 = vunpack.c.l.b16 %v3372
  %v3419 = vunpack.c.l.b16 %v3373
  %v3420 = vunpack.c.h.b16 %v3372
  %v3421 = vunpack.c.h.b16 %v3373
  %v3422 = vunpack.c.l.b16 %v3374
  %v3423 = vunpack.c.l.b16 %v3375
  %v3424 = vunpack.c.h.b16 %v3374
  %v3425 = vunpack.c.h.b16 %v3375
  %v3426 = vunpack.c.l.b16 %v3376
  %v3427 = vunpack.c.l.b16 %v3377
  %v3428 = vunpack.c.h.b16 %v3376
  %v3429 = vunpack.c.h.b16 %v3377
  %v3430 = vunpack.c.l.b16 %v3378
  %v3431 = vunpack.c.l.b16 %v3379
  %v3432 = vunpack.c.h.b16 %v3378
  %v3433 = vunpack.c.h.b16 %v3379
  %v3434 = vunpack.c.l.b16 %v3380
  %v3435 = vunpack.c.l.b16 %v3381
  %v3436 = vunpack.c.h.b16 %v3380
  %v3437 = vunpack.c.h.b16 %v3381
  %v3438 = vunpack.c.l.b16 %v3382
  %v3439 = vunpack.c.l.b16 %v3383
  %v3440 = vunpack.c.h.b16 %v3382
  %v3441 = vunpack.c.h.b16 %v3383
  %v3442 = vunpack.c.l.b16 %v3384
  %v3443 = vunpack.c.l.b16 %v3385
  %v3444 = vunpack.c.h.b16 %v3384
  %v3445 = vunpack.c.h.b16 %v3385
  %v3446 = vunpack.c.l.b16 %v3386
  %v3447 = vunpack.c.l.b16 %v3387
  %v3448 = vunpack.c.h.b16 %v3386
  %v3449 = vunpack.c.h.b16 %v3387
  %v3450 = vunpack.c.l.b16 %v3388
  %v3451 = vunpack.c.l.b16 %v3389
  %v3452 = vunpack.c.h.b16 %v3388
  %v3453 = vunpack.c.h.b16 %v3389
  %v3454 = vunpack.c.l.b16 %v3390
  %v3455 = vunpack.c.l.b16 %v3391
  %v3456 = vpack.c.b16 %v3415, %v3414
  %v3457 = vpack.c.b16 %v3417, %v3416
  %v3458 = vpack.c.b16 %v3419, %v3418
  %v3459 = vpack.c.b16 %v3421, %v3420
  %v3460 = vpack.c.b16 %v3423, %v3422
  %v3461 = vpack.c.b16 %v3425, %v3424
  %v3462 = vpack.c.b16 %v3427, %v3426
  %v3463 = vpack.c.b16 %v3429, %v3428
  %v3464 = vpack.c.b16 %v3431, %v3430
  %v3465 = vpack.c.b16 %v3433, %v3432
  %v3466 = vpack.c.b16 %v3435, %v3434
  %v3467 = vpack.c.b16 %v3437, %v3436
  %v3468 = vpack.c.b16 %v3439, %v3438
  %v3469 = vpack.c.b16 %v3441, %v3440
  %v3470 = vpack.c.b16 %v3443, %v3442
  %v3471 = vpack.c.b16 %v3445, %v3444
  %v3472 = vpack.c.b16 %v3447, %v3446
  %v3473 = vpack.c.b16 %v3449, %v3448
  %v3474 = vpack.c.b16 %v3451, %v3450
  %v3475 = vpack.c.b16 %v3453, %v3452
  %v3476 = vpack.c.b16 %v3455, %v3454
  %vm3498 = vcmask 1043456
  %vm3499 = vcmask 785412
  %vm3500 = vmor %vm3499, %vm3498
  %3501 = vst.msk [vmem:[%s4] sm:$0xff] %vm3500, %v3456
  %3502 = vst.msk [vmem:[%s4 + $0x8] sm:$0xff] %vm3500, %v3457
  %3503 = vst.msk [vmem:[%s4 + $0x10] sm:$0xff] %vm3500, %v3458
  %3504 = vst.msk [vmem:[%s4 + $0x18] sm:$0xff] %vm3500, %v3459
  %3505 = vst.msk [vmem:[%s4 + $0x20] sm:$0xff] %vm3500, %v3460
  %3506 = vst.msk [vmem:[%s4 + $0x28] sm:$0xff] %vm3500, %v3461
  %3507 = vst.msk [vmem:[%s4 + $0x30] sm:$0xff] %vm3500, %v3462
  %3508 = vst.msk [vmem:[%s4 + $0x38] sm:$0xff] %vm3500, %v3463
  %3509 = vst.msk [vmem:[%s4 + $0x40] sm:$0xff] %vm3500, %v3464
  %3510 = vst.msk [vmem:[%s4 + $0x48] sm:$0xff] %vm3500, %v3465
  %3511 = vst.msk [vmem:[%s4 + $0x50] sm:$0xff] %vm3500, %v3466
  %3512 = vst.msk [vmem:[%s4 + $0x58] sm:$0xff] %vm3500, %v3467
  %3513 = vst.msk [vmem:[%s4 + $0x60] sm:$0xff] %vm3500, %v3468
  %3514 = vst.msk [vmem:[%s4 + $0x68] sm:$0xff] %vm3500, %v3469
  %3515 = vst.msk [vmem:[%s4 + $0x70] sm:$0xff] %vm3500, %v3470
  %3516 = vst.msk [vmem:[%s4 + $0x78] sm:$0xff] %vm3500, %v3471
  %3517 = vst.msk [vmem:[%s4 + $0x80] sm:$0xff] %vm3500, %v3472
  %3518 = vst.msk [vmem:[%s4 + $0x88] sm:$0xff] %vm3500, %v3473
  %3519 = vst.msk [vmem:[%s4 + $0x90] sm:$0xff] %vm3500, %v3474
  %3520 = vst.msk [vmem:[%s4 + $0x98] sm:$0xff] %vm3500, %v3475
  %3521 = vst.msk [vmem:[%s4 + $0xa0] sm:$0xff] %vm3500, %v3476
  // Predicated region
  $region18: #{reduction_a_forward.4} parent=0 // pred_check
    _
  $region19: #{reduction_a_forward.4} parent=0 // pred_check_branch
    %3523 = sbr.rel (0) target = $region21
  $region20: #{reduction_a_forward.4} parent=0 // pred_region
    _
  $region21: #{reduction_a_forward.4} parent=0 // pred_fallthru
    _
  // Predicated region
  $region22: #{reduction_a_forward.4} parent=0 // pred_check
    _
  $region23: #{reduction_a_forward.4} parent=0 // pred_check_branch
    %3525 = sbr.rel (0) target = $region25
  $region24: #{reduction_a_forward.4} parent=0 // pred_region
    _
  $region25: #{reduction_a_forward.4} parent=0 // pred_fallthru
    _

// kernel: reduction_a_forward.5
$region0: #{reduction_a_forward.5}
  #allocation0 [shape = 'u32[]', space=smem, size = 0x4, offset = 0x4, fixed_abs, tag = 'smem constant byte address 0x4 - core index']
  #allocation1 [shape = 'u32[144,128]{1,0:T(1,128)}', space=vmem, size = 0x12000, scoped, tag = 'internal scratch']
  %s0 = inlined_call_operand.vmem [shape: bf16[32,3456], index: 0, kind: input, shape index: {}]
  %s1 = inlined_call_operand.vmem [shape: bf16[3456,384], index: 1, kind: input, shape index: {}]
  %s2 = inlined_call_operand.vmem [shape: f32[1,384], index: 2, kind: input, shape index: {}]
  %s3 = inlined_call_operand.vmem [shape: f32[1,384], index: 3, kind: input, shape index: {}]
  %s4 = inlined_call_operand.vmem [shape: bf16[32,2016], index: 4, kind: input, shape index: {}]
  %s5 = inlined_call_operand.vmem [shape: bf16[2016,256], index: 5, kind: input, shape index: {}]
  %s6 = inlined_call_operand.vmem [shape: f32[1,256], index: 6, kind: input, shape index: {}]
  %s7 = inlined_call_operand.vmem [shape: f32[1,256], index: 7, kind: input, shape index: {}]
  %s8 = inlined_call_operand.vmem [shape: f32[9,32,384], index: 8, kind: input, shape index: {}]
  %s9 = inlined_call_operand.vmem [shape: f32[32,1024], index: 9, kind: output, shape index: {}]
  %s10 = sld [smem:[#allocation0]]
  $region46: #{reduction_a_forward.5} parent=0
    _
  %s12 = ssub.s32 1, %s10
  %s13 = scalar_select 0, %s12, %s10
  // Predicated region
  $region2: #{reduction_a_forward.5} parent=0 // pred_check
    _
  $region3: #{reduction_a_forward.5} parent=0 // pred_check_branch
    %15 = sbr.rel (0) target = $region5
  $region4: #{reduction_a_forward.5} parent=0 // pred_region
    _
  $region5: #{reduction_a_forward.5} parent=0 // pred_fallthru
    _
  // Predicated region
  $region6: #{reduction_a_forward.5} parent=0 // pred_check
    _
  $region7: #{reduction_a_forward.5} parent=0 // pred_check_branch
    %17 = sbr.rel (0) target = $region9
  $region8: #{reduction_a_forward.5} parent=0 // pred_region
    _
  $region9: #{reduction_a_forward.5} parent=0 // pred_fallthru
    _
  // Predicated region
  $region10: #{reduction_a_forward.5} parent=0 // pred_check
    _
  $region11: #{reduction_a_forward.5} parent=0 // pred_check_branch
    %19 = sbr.rel (0) target = $region13
  $region12: #{reduction_a_forward.5} parent=0 // pred_region
    _
  $region13: #{reduction_a_forward.5} parent=0 // pred_fallthru
    _
  // Predicated region
  $region14: #{reduction_a_forward.5} parent=0 // pred_check
    _
  $region15: #{reduction_a_forward.5} parent=0 // pred_check_branch
    %21 = sbr.rel (0) target = $region17
  $region16: #{reduction_a_forward.5} parent=0 // pred_region
    _
  $region17: #{reduction_a_forward.5} parent=0 // pred_fallthru
    _
  // Predicated region
  $region18: #{reduction_a_forward.5} parent=0 // pred_check
    _
  $region19: #{reduction_a_forward.5} parent=0 // pred_check_branch
    %23 = sbr.rel (0) target = $region21
  $region20: #{reduction_a_forward.5} parent=0 // pred_region
    _
  $region21: #{reduction_a_forward.5} parent=0 // pred_fallthru
    _
  // Predicated region
  $region22: #{reduction_a_forward.5} parent=0 // pred_check
    _
  $region23: #{reduction_a_forward.5} parent=0 // pred_check_branch
    %25 = sbr.rel (0) target = $region25
  $region24: #{reduction_a_forward.5} parent=0 // pred_region
    _
  $region25: #{reduction_a_forward.5} parent=0 // pred_fallthru
    _
  // Predicated region
  $region26: #{reduction_a_forward.5} parent=0 // pred_check
    _
  $region27: #{reduction_a_forward.5} parent=0 // pred_check_branch
    %27 = sbr.rel (0) target = $region29
  $region28: #{reduction_a_forward.5} parent=0 // pred_region
    _
  $region29: #{reduction_a_forward.5} parent=0 // pred_fallthru
    _
  // Predicated region
  $region30: #{reduction_a_forward.5} parent=0 // pred_check
    _
  $region31: #{reduction_a_forward.5} parent=0 // pred_check_branch
    %29 = sbr.rel (0) target = $region33
  $region32: #{reduction_a_forward.5} parent=0 // pred_region
    _
  $region33: #{reduction_a_forward.5} parent=0 // pred_fallthru
    _
  // Predicated region
  $region34: #{reduction_a_forward.5} parent=0 // pred_check
    _
  $region35: #{reduction_a_forward.5} parent=0 // pred_check_branch
    %31 = sbr.rel (0) target = $region37
  $region36: #{reduction_a_forward.5} parent=0 // pred_region
    _
  $region37: #{reduction_a_forward.5} parent=0 // pred_fallthru
    _
  %v33 = vld [vmem:[%s0] sm:$0xff]
  %v34 = vld [vmem:[%s0 + $0x8] sm:$0xff]
  %v35 = vld [vmem:[%s0 + $0x10] sm:$0xff]
  %v36 = vld [vmem:[%s0 + $0x18] sm:$0xff]
  %v37 = vld [vmem:[%s0 + $0x20] sm:$0xff]
  %v38 = vld [vmem:[%s0 + $0x28] sm:$0xff]
  %v39 = vld [vmem:[%s0 + $0x30] sm:$0xff]
  %v40 = vld [vmem:[%s0 + $0x38] sm:$0xff]
  %v41 = vld [vmem:[%s0 + $0x40] sm:$0xff]
  %v42 = vld [vmem:[%s0 + $0x48] sm:$0xff]
  %v43 = vld [vmem:[%s0 + $0x50] sm:$0xff]
  %v44 = vld [vmem:[%s0 + $0x58] sm:$0xff]
  %v45 = vld [vmem:[%s0 + $0x60] sm:$0xff]
  %v46 = vld [vmem:[%s0 + $0x68] sm:$0xf]
  %v47 = vld [vmem:[%s0 + $0x6c] sm:$0xff]
  %v48 = vld [vmem:[%s0 + $0x74] sm:$0xff]
  %v49 = vld [vmem:[%s0 + $0x7c] sm:$0xff]
  %v50 = vld [vmem:[%s0 + $0x84] sm:$0xff]
  %v51 = vld [vmem:[%s0 + $0x8c] sm:$0xff]
  %v52 = vld [vmem:[%s0 + $0x94] sm:$0xff]
  %v53 = vld [vmem:[%s0 + $0x9c] sm:$0xff]
  %v54 = vld [vmem:[%s0 + $0xa4] sm:$0xff]
  %v55 = vld [vmem:[%s0 + $0xac] sm:$0xff]
  %v56 = vld [vmem:[%s0 + $0xb4] sm:$0xff]
  %v57 = vld [vmem:[%s0 + $0xbc] sm:$0xff]
  %v58 = vld [vmem:[%s0 + $0xc4] sm:$0xff]
  %v59 = vld [vmem:[%s0 + $0xcc] sm:$0xff]
  %v60 = vld [vmem:[%s0 + $0xd4] sm:$0xf]
  %v61 = vld [vmem:[%s0 + $0xd8] sm:$0xff]
  %v62 = vld [vmem:[%s0 + $0xe0] sm:$0xff]
  %v63 = vld [vmem:[%s0 + $0xe8] sm:$0xff]
  %v64 = vld [vmem:[%s0 + $0xf0] sm:$0xff]
  %v65 = vld [vmem:[%s0 + $0xf8] sm:$0xff]
  %v66 = vld [vmem:[%s0 + $0x100] sm:$0xff]
  %v67 = vld [vmem:[%s0 + $0x108] sm:$0xff]
  %v68 = vld [vmem:[%s0 + $0x110] sm:$0xff]
  %v69 = vld [vmem:[%s0 + $0x118] sm:$0xff]
  %v70 = vld [vmem:[%s0 + $0x120] sm:$0xff]
  %v71 = vld [vmem:[%s0 + $0x128] sm:$0xff]
  %v72 = vld [vmem:[%s0 + $0x130] sm:$0xff]
  %v73 = vld [vmem:[%s0 + $0x138] sm:$0xff]
  %v74 = vld [vmem:[%s0 + $0x140] sm:$0xf]
  %v75 = vld [vmem:[%s0 + $0x144] sm:$0xff]
  %v76 = vld [vmem:[%s0 + $0x14c] sm:$0xff]
  %v77 = vld [vmem:[%s0 + $0x154] sm:$0xff]
  %v78 = vld [vmem:[%s0 + $0x15c] sm:$0xff]
  %v79 = vld [vmem:[%s0 + $0x164] sm:$0xff]
  %v80 = vld [vmem:[%s0 + $0x16c] sm:$0xff]
  %v81 = vld [vmem:[%s0 + $0x174] sm:$0xff]
  %v82 = vld [vmem:[%s0 + $0x17c] sm:$0xff]
  %v83 = vld [vmem:[%s0 + $0x184] sm:$0xff]
  %v84 = vld [vmem:[%s0 + $0x18c] sm:$0xff]
  %v85 = vld [vmem:[%s0 + $0x194] sm:$0xff]
  %v86 = vld [vmem:[%s0 + $0x19c] sm:$0xff]
  %v87 = vld [vmem:[%s0 + $0x1a4] sm:$0xff]
  %v88 = vld [vmem:[%s0 + $0x1ac] sm:$0xf]
  %v89 = vld [vmem:[%s1] sm:$0xff]
  %v90 = vld [vmem:[%s1 + $0x8] sm:$0xf]
  %v91 = vld [vmem:[%s1 + $0xc] sm:$0xff]
  %v92 = vld [vmem:[%s1 + $0x14] sm:$0xf]
  %v93 = vld [vmem:[%s1 + $0x18] sm:$0xff]
  %v94 = vld [vmem:[%s1 + $0x20] sm:$0xf]
  %v95 = vld [vmem:[%s1 + $0x24] sm:$0xff]
  %v96 = vld [vmem:[%s1 + $0x2c] sm:$0xf]
  %v97 = vld [vmem:[%s1 + $0x30] sm:$0xff]
  %v98 = vld [vmem:[%s1 + $0x38] sm:$0xf]
  %v99 = vld [vmem:[%s1 + $0x3c] sm:$0xff]
  %v100 = vld [vmem:[%s1 + $0x44] sm:$0xf]
  %v101 = vld [vmem:[%s1 + $0x48] sm:$0xff]
  %v102 = vld [vmem:[%s1 + $0x50] sm:$0xf]
  %v103 = vld [vmem:[%s1 + $0x54] sm:$0xff]
  %v104 = vld [vmem:[%s1 + $0x5c] sm:$0xf]
  %v105 = vld [vmem:[%s1 + $0x60] sm:$0xff]
  %v106 = vld [vmem:[%s1 + $0x68] sm:$0xf]
  %v107 = vld [vmem:[%s1 + $0x6c] sm:$0xff]
  %v108 = vld [vmem:[%s1 + $0x74] sm:$0xf]
  %v109 = vld [vmem:[%s1 + $0x78] sm:$0xff]
  %v110 = vld [vmem:[%s1 + $0x80] sm:$0xf]
  %v111 = vld [vmem:[%s1 + $0x84] sm:$0xff]
  %v112 = vld [vmem:[%s1 + $0x8c] sm:$0xf]
  %v113 = vld [vmem:[%s1 + $0x90] sm:$0xff]
  %v114 = vld [vmem:[%s1 + $0x98] sm:$0xf]
  %v115 = vld [vmem:[%s1 + $0x9c] sm:$0xff]
  %v116 = vld [vmem:[%s1 + $0xa4] sm:$0xf]
  %v117 = vld [vmem:[%s1 + $0xa8] sm:$0xff]
  %v118 = vld [vmem:[%s1 + $0xb0] sm:$0xf]
  %v119 = vld [vmem:[%s1 + $0xb4] sm:$0xff]
  %v120 = vld [vmem:[%s1 + $0xbc] sm:$0xf]
  %v121 = vld [vmem:[%s1 + $0xc0] sm:$0xff]
  %v122 = vld [vmem:[%s1 + $0xc8] sm:$0xf]
  %v123 = vld [vmem:[%s1 + $0xcc] sm:$0xff]
  %v124 = vld [vmem:[%s1 + $0xd4] sm:$0xf]
  %v125 = vld [vmem:[%s1 + $0xd8] sm:$0xff]
  %v126 = vld [vmem:[%s1 + $0xe0] sm:$0xf]
  %v127 = vld [vmem:[%s1 + $0xe4] sm:$0xff]
  %v128 = vld [vmem:[%s1 + $0xec] sm:$0xf]
  %v129 = vld [vmem:[%s1 + $0xf0] sm:$0xff]
  %v130 = vld [vmem:[%s1 + $0xf8] sm:$0xf]
  %v131 = vld [vmem:[%s1 + $0xfc] sm:$0xff]
  %v132 = vld [vmem:[%s1 + $0x104] sm:$0xf]
  %v133 = vld [vmem:[%s1 + $0x108] sm:$0xff]
  %v134 = vld [vmem:[%s1 + $0x110] sm:$0xf]
  %v135 = vld [vmem:[%s1 + $0x114] sm:$0xff]
  %v136 = vld [vmem:[%s1 + $0x11c] sm:$0xf]
  %v137 = vld [vmem:[%s1 + $0x120] sm:$0xff]
  %v138 = vld [vmem:[%s1 + $0x128] sm:$0xf]
  %v139 = vld [vmem:[%s1 + $0x12c] sm:$0xff]
  %v140 = vld [vmem:[%s1 + $0x134] sm:$0xf]
  %v141 = vld [vmem:[%s1 + $0x138] sm:$0xff]
  %v142 = vld [vmem:[%s1 + $0x140] sm:$0xf]
  %v143 = vld [vmem:[%s1 + $0x144] sm:$0xff]
  %v144 = vld [vmem:[%s1 + $0x14c] sm:$0xf]
  %v145 = vld [vmem:[%s1 + $0x150] sm:$0xff]
  %v146 = vld [vmem:[%s1 + $0x158] sm:$0xf]
  %v147 = vld [vmem:[%s1 + $0x15c] sm:$0xff]
  %v148 = vld [vmem:[%s1 + $0x164] sm:$0xf]
  %v149 = vld [vmem:[%s1 + $0x168] sm:$0xff]
  %v150 = vld [vmem:[%s1 + $0x170] sm:$0xf]
  %v151 = vld [vmem:[%s1 + $0x174] sm:$0xff]
  %v152 = vld [vmem:[%s1 + $0x17c] sm:$0xf]
  %v153 = vld [vmem:[%s1 + $0x180] sm:$0xff]
  %v154 = vld [vmem:[%s1 + $0x188] sm:$0xf]
  %v155 = vld [vmem:[%s1 + $0x18c] sm:$0xff]
  %v156 = vld [vmem:[%s1 + $0x194] sm:$0xf]
  %v157 = vld [vmem:[%s1 + $0x198] sm:$0xff]
  %v158 = vld [vmem:[%s1 + $0x1a0] sm:$0xf]
  %v159 = vld [vmem:[%s1 + $0x1a4] sm:$0xff]
  %v160 = vld [vmem:[%s1 + $0x1ac] sm:$0xf]
  %v161 = vld [vmem:[%s1 + $0x1b0] sm:$0xff]
  %v162 = vld [vmem:[%s1 + $0x1b8] sm:$0xf]
  %v163 = vld [vmem:[%s1 + $0x1bc] sm:$0xff]
  %v164 = vld [vmem:[%s1 + $0x1c4] sm:$0xf]
  %v165 = vld [vmem:[%s1 + $0x1c8] sm:$0xff]
  %v166 = vld [vmem:[%s1 + $0x1d0] sm:$0xf]
  %v167 = vld [vmem:[%s1 + $0x1d4] sm:$0xff]
  %v168 = vld [vmem:[%s1 + $0x1dc] sm:$0xf]
  %v169 = vld [vmem:[%s1 + $0x1e0] sm:$0xff]
  %v170 = vld [vmem:[%s1 + $0x1e8] sm:$0xf]
  %v171 = vld [vmem:[%s1 + $0x1ec] sm:$0xff]
  %v172 = vld [vmem:[%s1 + $0x1f4] sm:$0xf]
  %v173 = vld [vmem:[%s1 + $0x1f8] sm:$0xff]
  %v174 = vld [vmem:[%s1 + $0x200] sm:$0xf]
  %v175 = vld [vmem:[%s1 + $0x204] sm:$0xff]
  %v176 = vld [vmem:[%s1 + $0x20c] sm:$0xf]
  %v177 = vld [vmem:[%s1 + $0x210] sm:$0xff]
  %v178 = vld [vmem:[%s1 + $0x218] sm:$0xf]
  %v179 = vld [vmem:[%s1 + $0x21c] sm:$0xff]
  %v180 = vld [vmem:[%s1 + $0x224] sm:$0xf]
  %v181 = vld [vmem:[%s1 + $0x228] sm:$0xff]
  %v182 = vld [vmem:[%s1 + $0x230] sm:$0xf]
  %v183 = vld [vmem:[%s1 + $0x234] sm:$0xff]
  %v184 = vld [vmem:[%s1 + $0x23c] sm:$0xf]
  %v185 = vld [vmem:[%s1 + $0x240] sm:$0xff]
  %v186 = vld [vmem:[%s1 + $0x248] sm:$0xf]
  %v187 = vld [vmem:[%s1 + $0x24c] sm:$0xff]
  %v188 = vld [vmem:[%s1 + $0x254] sm:$0xf]
  %v189 = vld [vmem:[%s1 + $0x258] sm:$0xff]
  %v190 = vld [vmem:[%s1 + $0x260] sm:$0xf]
  %v191 = vld [vmem:[%s1 + $0x264] sm:$0xff]
  %v192 = vld [vmem:[%s1 + $0x26c] sm:$0xf]
  %v193 = vld [vmem:[%s1 + $0x270] sm:$0xff]
  %v194 = vld [vmem:[%s1 + $0x278] sm:$0xf]
  %v195 = vld [vmem:[%s1 + $0x27c] sm:$0xff]
  %v196 = vld [vmem:[%s1 + $0x284] sm:$0xf]
  %v197 = vld [vmem:[%s1 + $0x288] sm:$0xff]
  %v198 = vld [vmem:[%s1 + $0x290] sm:$0xf]
  %v199 = vld [vmem:[%s1 + $0x294] sm:$0xff]
  %v200 = vld [vmem:[%s1 + $0x29c] sm:$0xf]
  %v201 = vld [vmem:[%s1 + $0x2a0] sm:$0xff]
  %v202 = vld [vmem:[%s1 + $0x2a8] sm:$0xf]
  %v203 = vld [vmem:[%s1 + $0x2ac] sm:$0xff]
  %v204 = vld [vmem:[%s1 + $0x2b4] sm:$0xf]
  %v205 = vld [vmem:[%s1 + $0x2b8] sm:$0xff]
  %v206 = vld [vmem:[%s1 + $0x2c0] sm:$0xf]
  %v207 = vld [vmem:[%s1 + $0x2c4] sm:$0xff]
  %v208 = vld [vmem:[%s1 + $0x2cc] sm:$0xf]
  %v209 = vld [vmem:[%s1 + $0x2d0] sm:$0xff]
  %v210 = vld [vmem:[%s1 + $0x2d8] sm:$0xf]
  %v211 = vld [vmem:[%s1 + $0x2dc] sm:$0xff]
  %v212 = vld [vmem:[%s1 + $0x2e4] sm:$0xf]
  %v213 = vld [vmem:[%s1 + $0x2e8] sm:$0xff]
  %v214 = vld [vmem:[%s1 + $0x2f0] sm:$0xf]
  %v215 = vld [vmem:[%s1 + $0x2f4] sm:$0xff]
  %v216 = vld [vmem:[%s1 + $0x2fc] sm:$0xf]
  %v217 = vld [vmem:[%s1 + $0x300] sm:$0xff]
  %v218 = vld [vmem:[%s1 + $0x308] sm:$0xf]
  %v219 = vld [vmem:[%s1 + $0x30c] sm:$0xff]
  %v220 = vld [vmem:[%s1 + $0x314] sm:$0xf]
  %v221 = vld [vmem:[%s1 + $0x318] sm:$0xff]
  %v222 = vld [vmem:[%s1 + $0x320] sm:$0xf]
  %v223 = vld [vmem:[%s1 + $0x324] sm:$0xff]
  %v224 = vld [vmem:[%s1 + $0x32c] sm:$0xf]
  %v225 = vld [vmem:[%s1 + $0x330] sm:$0xff]
  %v226 = vld [vmem:[%s1 + $0x338] sm:$0xf]
  %v227 = vld [vmem:[%s1 + $0x33c] sm:$0xff]
  %v228 = vld [vmem:[%s1 + $0x344] sm:$0xf]
  %v229 = vld [vmem:[%s1 + $0x348] sm:$0xff]
  %v230 = vld [vmem:[%s1 + $0x350] sm:$0xf]
  %v231 = vld [vmem:[%s1 + $0x354] sm:$0xff]
  %v232 = vld [vmem:[%s1 + $0x35c] sm:$0xf]
  %v233 = vld [vmem:[%s1 + $0x360] sm:$0xff]
  %v234 = vld [vmem:[%s1 + $0x368] sm:$0xf]
  %v235 = vld [vmem:[%s1 + $0x36c] sm:$0xff]
  %v236 = vld [vmem:[%s1 + $0x374] sm:$0xf]
  %v237 = vld [vmem:[%s1 + $0x378] sm:$0xff]
  %v238 = vld [vmem:[%s1 + $0x380] sm:$0xf]
  %v239 = vld [vmem:[%s1 + $0x384] sm:$0xff]
  %v240 = vld [vmem:[%s1 + $0x38c] sm:$0xf]
  %v241 = vld [vmem:[%s1 + $0x390] sm:$0xff]
  %v242 = vld [vmem:[%s1 + $0x398] sm:$0xf]
  %v243 = vld [vmem:[%s1 + $0x39c] sm:$0xff]
  %v244 = vld [vmem:[%s1 + $0x3a4] sm:$0xf]
  %v245 = vld [vmem:[%s1 + $0x3a8] sm:$0xff]
  %v246 = vld [vmem:[%s1 + $0x3b0] sm:$0xf]
  %v247 = vld [vmem:[%s1 + $0x3b4] sm:$0xff]
  %v248 = vld [vmem:[%s1 + $0x3bc] sm:$0xf]
  %v249 = vld [vmem:[%s1 + $0x3c0] sm:$0xff]
  %v250 = vld [vmem:[%s1 + $0x3c8] sm:$0xf]
  %v251 = vld [vmem:[%s1 + $0x3cc] sm:$0xff]
  %v252 = vld [vmem:[%s1 + $0x3d4] sm:$0xf]
  %v253 = vld [vmem:[%s1 + $0x3d8] sm:$0xff]
  %v254 = vld [vmem:[%s1 + $0x3e0] sm:$0xf]
  %v255 = vld [vmem:[%s1 + $0x3e4] sm:$0xff]
  %v256 = vld [vmem:[%s1 + $0x3ec] sm:$0xf]
  %v257 = vld [vmem:[%s1 + $0x3f0] sm:$0xff]
  %v258 = vld [vmem:[%s1 + $0x3f8] sm:$0xf]
  %v259 = vld [vmem:[%s1 + $0x3fc] sm:$0xff]
  %v260 = vld [vmem:[%s1 + $0x404] sm:$0xf]
  %v261 = vld [vmem:[%s1 + $0x408] sm:$0xff]
  %v262 = vld [vmem:[%s1 + $0x410] sm:$0xf]
  %v263 = vld [vmem:[%s1 + $0x414] sm:$0xff]
  %v264 = vld [vmem:[%s1 + $0x41c] sm:$0xf]
  %v265 = vld [vmem:[%s1 + $0x420] sm:$0xff]
  %v266 = vld [vmem:[%s1 + $0x428] sm:$0xf]
  %v267 = vld [vmem:[%s1 + $0x42c] sm:$0xff]
  %v268 = vld [vmem:[%s1 + $0x434] sm:$0xf]
  %v269 = vld [vmem:[%s1 + $0x438] sm:$0xff]
  %v270 = vld [vmem:[%s1 + $0x440] sm:$0xf]
  %v271 = vld [vmem:[%s1 + $0x444] sm:$0xff]
  %v272 = vld [vmem:[%s1 + $0x44c] sm:$0xf]
  %v273 = vld [vmem:[%s1 + $0x450] sm:$0xff]
  %v274 = vld [vmem:[%s1 + $0x458] sm:$0xf]
  %v275 = vld [vmem:[%s1 + $0x45c] sm:$0xff]
  %v276 = vld [vmem:[%s1 + $0x464] sm:$0xf]
  %v277 = vld [vmem:[%s1 + $0x468] sm:$0xff]
  %v278 = vld [vmem:[%s1 + $0x470] sm:$0xf]
  %v279 = vld [vmem:[%s1 + $0x474] sm:$0xff]
  %v280 = vld [vmem:[%s1 + $0x47c] sm:$0xf]
  %v281 = vld [vmem:[%s1 + $0x480] sm:$0xff]
  %v282 = vld [vmem:[%s1 + $0x488] sm:$0xf]
  %v283 = vld [vmem:[%s1 + $0x48c] sm:$0xff]
  %v284 = vld [vmem:[%s1 + $0x494] sm:$0xf]
  %v285 = vld [vmem:[%s1 + $0x498] sm:$0xff]
  %v286 = vld [vmem:[%s1 + $0x4a0] sm:$0xf]
  %v287 = vld [vmem:[%s1 + $0x4a4] sm:$0xff]
  %v288 = vld [vmem:[%s1 + $0x4ac] sm:$0xf]
  %v289 = vld [vmem:[%s1 + $0x4b0] sm:$0xff]
  %v290 = vld [vmem:[%s1 + $0x4b8] sm:$0xf]
  %v291 = vld [vmem:[%s1 + $0x4bc] sm:$0xff]
  %v292 = vld [vmem:[%s1 + $0x4c4] sm:$0xf]
  %v293 = vld [vmem:[%s1 + $0x4c8] sm:$0xff]
  %v294 = vld [vmem:[%s1 + $0x4d0] sm:$0xf]
  %v295 = vld [vmem:[%s1 + $0x4d4] sm:$0xff]
  %v296 = vld [vmem:[%s1 + $0x4dc] sm:$0xf]
  %v297 = vld [vmem:[%s1 + $0x4e0] sm:$0xff]
  %v298 = vld [vmem:[%s1 + $0x4e8] sm:$0xf]
  %v299 = vld [vmem:[%s1 + $0x4ec] sm:$0xff]
  %v300 = vld [vmem:[%s1 + $0x4f4] sm:$0xf]
  %v301 = vld [vmem:[%s1 + $0x4f8] sm:$0xff]
  %v302 = vld [vmem:[%s1 + $0x500] sm:$0xf]
  %v303 = vld [vmem:[%s1 + $0x504] sm:$0xff]
  %v304 = vld [vmem:[%s1 + $0x50c] sm:$0xf]
  %v305 = vld [vmem:[%s1 + $0x510] sm:$0xff]
  %v306 = vld [vmem:[%s1 + $0x518] sm:$0xf]
  %v307 = vld [vmem:[%s1 + $0x51c] sm:$0xff]
  %v308 = vld [vmem:[%s1 + $0x524] sm:$0xf]
  %v309 = vld [vmem:[%s1 + $0x528] sm:$0xff]
  %v310 = vld [vmem:[%s1 + $0x530] sm:$0xf]
  %v311 = vld [vmem:[%s1 + $0x534] sm:$0xff]
  %v312 = vld [vmem:[%s1 + $0x53c] sm:$0xf]
  %v313 = vld [vmem:[%s1 + $0x540] sm:$0xff]
  %v314 = vld [vmem:[%s1 + $0x548] sm:$0xf]
  %v315 = vld [vmem:[%s1 + $0x54c] sm:$0xff]
  %v316 = vld [vmem:[%s1 + $0x554] sm:$0xf]
  %v317 = vld [vmem:[%s1 + $0x558] sm:$0xff]
  %v318 = vld [vmem:[%s1 + $0x560] sm:$0xf]
  %v319 = vld [vmem:[%s1 + $0x564] sm:$0xff]
  %v320 = vld [vmem:[%s1 + $0x56c] sm:$0xf]
  %v321 = vld [vmem:[%s1 + $0x570] sm:$0xff]
  %v322 = vld [vmem:[%s1 + $0x578] sm:$0xf]
  %v323 = vld [vmem:[%s1 + $0x57c] sm:$0xff]
  %v324 = vld [vmem:[%s1 + $0x584] sm:$0xf]
  %v325 = vld [vmem:[%s1 + $0x588] sm:$0xff]
  %v326 = vld [vmem:[%s1 + $0x590] sm:$0xf]
  %v327 = vld [vmem:[%s1 + $0x594] sm:$0xff]
  %v328 = vld [vmem:[%s1 + $0x59c] sm:$0xf]
  %v329 = vld [vmem:[%s1 + $0x5a0] sm:$0xff]
  %v330 = vld [vmem:[%s1 + $0x5a8] sm:$0xf]
  %v331 = vld [vmem:[%s1 + $0x5ac] sm:$0xff]
  %v332 = vld [vmem:[%s1 + $0x5b4] sm:$0xf]
  %v333 = vld [vmem:[%s1 + $0x5b8] sm:$0xff]
  %v334 = vld [vmem:[%s1 + $0x5c0] sm:$0xf]
  %v335 = vld [vmem:[%s1 + $0x5c4] sm:$0xff]
  %v336 = vld [vmem:[%s1 + $0x5cc] sm:$0xf]
  %v337 = vld [vmem:[%s1 + $0x5d0] sm:$0xff]
  %v338 = vld [vmem:[%s1 + $0x5d8] sm:$0xf]
  %v339 = vld [vmem:[%s1 + $0x5dc] sm:$0xff]
  %v340 = vld [vmem:[%s1 + $0x5e4] sm:$0xf]
  %v341 = vld [vmem:[%s1 + $0x5e8] sm:$0xff]
  %v342 = vld [vmem:[%s1 + $0x5f0] sm:$0xf]
  %v343 = vld [vmem:[%s1 + $0x5f4] sm:$0xff]
  %v344 = vld [vmem:[%s1 + $0x5fc] sm:$0xf]
  %v345 = vld [vmem:[%s1 + $0x600] sm:$0xff]
  %v346 = vld [vmem:[%s1 + $0x608] sm:$0xf]
  %v347 = vld [vmem:[%s1 + $0x60c] sm:$0xff]
  %v348 = vld [vmem:[%s1 + $0x614] sm:$0xf]
  %v349 = vld [vmem:[%s1 + $0x618] sm:$0xff]
  %v350 = vld [vmem:[%s1 + $0x620] sm:$0xf]
  %v351 = vld [vmem:[%s1 + $0x624] sm:$0xff]
  %v352 = vld [vmem:[%s1 + $0x62c] sm:$0xf]
  %v353 = vld [vmem:[%s1 + $0x630] sm:$0xff]
  %v354 = vld [vmem:[%s1 + $0x638] sm:$0xf]
  %v355 = vld [vmem:[%s1 + $0x63c] sm:$0xff]
  %v356 = vld [vmem:[%s1 + $0x644] sm:$0xf]
  %v357 = vld [vmem:[%s1 + $0x648] sm:$0xff]
  %v358 = vld [vmem:[%s1 + $0x650] sm:$0xf]
  %v359 = vld [vmem:[%s1 + $0x654] sm:$0xff]
  %v360 = vld [vmem:[%s1 + $0x65c] sm:$0xf]
  %v361 = vld [vmem:[%s1 + $0x660] sm:$0xff]
  %v362 = vld [vmem:[%s1 + $0x668] sm:$0xf]
  %v363 = vld [vmem:[%s1 + $0x66c] sm:$0xff]
  %v364 = vld [vmem:[%s1 + $0x674] sm:$0xf]
  %v365 = vld [vmem:[%s1 + $0x678] sm:$0xff]
  %v366 = vld [vmem:[%s1 + $0x680] sm:$0xf]
  %v367 = vld [vmem:[%s1 + $0x684] sm:$0xff]
  %v368 = vld [vmem:[%s1 + $0x68c] sm:$0xf]
  %v369 = vld [vmem:[%s1 + $0x690] sm:$0xff]
  %v370 = vld [vmem:[%s1 + $0x698] sm:$0xf]
  %v371 = vld [vmem:[%s1 + $0x69c] sm:$0xff]
  %v372 = vld [vmem:[%s1 + $0x6a4] sm:$0xf]
  %v373 = vld [vmem:[%s1 + $0x6a8] sm:$0xff]
  %v374 = vld [vmem:[%s1 + $0x6b0] sm:$0xf]
  %v375 = vld [vmem:[%s1 + $0x6b4] sm:$0xff]
  %v376 = vld [vmem:[%s1 + $0x6bc] sm:$0xf]
  %v377 = vld [vmem:[%s1 + $0x6c0] sm:$0xff]
  %v378 = vld [vmem:[%s1 + $0x6c8] sm:$0xf]
  %v379 = vld [vmem:[%s1 + $0x6cc] sm:$0xff]
  %v380 = vld [vmem:[%s1 + $0x6d4] sm:$0xf]
  %v381 = vld [vmem:[%s1 + $0x6d8] sm:$0xff]
  %v382 = vld [vmem:[%s1 + $0x6e0] sm:$0xf]
  %v383 = vld [vmem:[%s1 + $0x6e4] sm:$0xff]
  %v384 = vld [vmem:[%s1 + $0x6ec] sm:$0xf]
  %v385 = vld [vmem:[%s1 + $0x6f0] sm:$0xff]
  %v386 = vld [vmem:[%s1 + $0x6f8] sm:$0xf]
  %v387 = vld [vmem:[%s1 + $0x6fc] sm:$0xff]
  %v388 = vld [vmem:[%s1 + $0x704] sm:$0xf]
  %v389 = vld [vmem:[%s1 + $0x708] sm:$0xff]
  %v390 = vld [vmem:[%s1 + $0x710] sm:$0xf]
  %v391 = vld [vmem:[%s1 + $0x714] sm:$0xff]
  %v392 = vld [vmem:[%s1 + $0x71c] sm:$0xf]
  %v393 = vld [vmem:[%s1 + $0x720] sm:$0xff]
  %v394 = vld [vmem:[%s1 + $0x728] sm:$0xf]
  %v395 = vld [vmem:[%s1 + $0x72c] sm:$0xff]
  %v396 = vld [vmem:[%s1 + $0x734] sm:$0xf]
  %v397 = vld [vmem:[%s1 + $0x738] sm:$0xff]
  %v398 = vld [vmem:[%s1 + $0x740] sm:$0xf]
  %v399 = vld [vmem:[%s1 + $0x744] sm:$0xff]
  %v400 = vld [vmem:[%s1 + $0x74c] sm:$0xf]
  %v401 = vld [vmem:[%s1 + $0x750] sm:$0xff]
  %v402 = vld [vmem:[%s1 + $0x758] sm:$0xf]
  %v403 = vld [vmem:[%s1 + $0x75c] sm:$0xff]
  %v404 = vld [vmem:[%s1 + $0x764] sm:$0xf]
  %v405 = vld [vmem:[%s1 + $0x768] sm:$0xff]
  %v406 = vld [vmem:[%s1 + $0x770] sm:$0xf]
  %v407 = vld [vmem:[%s1 + $0x774] sm:$0xff]
  %v408 = vld [vmem:[%s1 + $0x77c] sm:$0xf]
  %v409 = vld [vmem:[%s1 + $0x780] sm:$0xff]
  %v410 = vld [vmem:[%s1 + $0x788] sm:$0xf]
  %v411 = vld [vmem:[%s1 + $0x78c] sm:$0xff]
  %v412 = vld [vmem:[%s1 + $0x794] sm:$0xf]
  %v413 = vld [vmem:[%s1 + $0x798] sm:$0xff]
  %v414 = vld [vmem:[%s1 + $0x7a0] sm:$0xf]
  %v415 = vld [vmem:[%s1 + $0x7a4] sm:$0xff]
  %v416 = vld [vmem:[%s1 + $0x7ac] sm:$0xf]
  %v417 = vld [vmem:[%s1 + $0x7b0] sm:$0xff]
  %v418 = vld [vmem:[%s1 + $0x7b8] sm:$0xf]
  %v419 = vld [vmem:[%s1 + $0x7bc] sm:$0xff]
  %v420 = vld [vmem:[%s1 + $0x7c4] sm:$0xf]
  %v421 = vld [vmem:[%s1 + $0x7c8] sm:$0xff]
  %v422 = vld [vmem:[%s1 + $0x7d0] sm:$0xf]
  %v423 = vld [vmem:[%s1 + $0x7d4] sm:$0xff]
  %v424 = vld [vmem:[%s1 + $0x7dc] sm:$0xf]
  %v425 = vld [vmem:[%s1 + $0x7e0] sm:$0xff]
  %v426 = vld [vmem:[%s1 + $0x7e8] sm:$0xf]
  %v427 = vld [vmem:[%s1 + $0x7ec] sm:$0xff]
  %v428 = vld [vmem:[%s1 + $0x7f4] sm:$0xf]
  %v429 = vld [vmem:[%s1 + $0x7f8] sm:$0xff]
  %v430 = vld [vmem:[%s1 + $0x800] sm:$0xf]
  %v431 = vld [vmem:[%s1 + $0x804] sm:$0xff]
  %v432 = vld [vmem:[%s1 + $0x80c] sm:$0xf]
  %v433 = vld [vmem:[%s1 + $0x810] sm:$0xff]
  %v434 = vld [vmem:[%s1 + $0x818] sm:$0xf]
  %v435 = vld [vmem:[%s1 + $0x81c] sm:$0xff]
  %v436 = vld [vmem:[%s1 + $0x824] sm:$0xf]
  %v437 = vld [vmem:[%s1 + $0x828] sm:$0xff]
  %v438 = vld [vmem:[%s1 + $0x830] sm:$0xf]
  %v439 = vld [vmem:[%s1 + $0x834] sm:$0xff]
  %v440 = vld [vmem:[%s1 + $0x83c] sm:$0xf]
  %v441 = vld [vmem:[%s1 + $0x840] sm:$0xff]
  %v442 = vld [vmem:[%s1 + $0x848] sm:$0xf]
  %v443 = vld [vmem:[%s1 + $0x84c] sm:$0xff]
  %v444 = vld [vmem:[%s1 + $0x854] sm:$0xf]
  %v445 = vld [vmem:[%s1 + $0x858] sm:$0xff]
  %v446 = vld [vmem:[%s1 + $0x860] sm:$0xf]
  %v447 = vld [vmem:[%s1 + $0x864] sm:$0xff]
  %v448 = vld [vmem:[%s1 + $0x86c] sm:$0xf]
  %v449 = vld [vmem:[%s1 + $0x870] sm:$0xff]
  %v450 = vld [vmem:[%s1 + $0x878] sm:$0xf]
  %v451 = vld [vmem:[%s1 + $0x87c] sm:$0xff]
  %v452 = vld [vmem:[%s1 + $0x884] sm:$0xf]
  %v453 = vld [vmem:[%s1 + $0x888] sm:$0xff]
  %v454 = vld [vmem:[%s1 + $0x890] sm:$0xf]
  %v455 = vld [vmem:[%s1 + $0x894] sm:$0xff]
  %v456 = vld [vmem:[%s1 + $0x89c] sm:$0xf]
  %v457 = vld [vmem:[%s1 + $0x8a0] sm:$0xff]
  %v458 = vld [vmem:[%s1 + $0x8a8] sm:$0xf]
  %v459 = vld [vmem:[%s1 + $0x8ac] sm:$0xff]
  %v460 = vld [vmem:[%s1 + $0x8b4] sm:$0xf]
  %v461 = vld [vmem:[%s1 + $0x8b8] sm:$0xff]
  %v462 = vld [vmem:[%s1 + $0x8c0] sm:$0xf]
  %v463 = vld [vmem:[%s1 + $0x8c4] sm:$0xff]
  %v464 = vld [vmem:[%s1 + $0x8cc] sm:$0xf]
  %v465 = vld [vmem:[%s1 + $0x8d0] sm:$0xff]
  %v466 = vld [vmem:[%s1 + $0x8d8] sm:$0xf]
  %v467 = vld [vmem:[%s1 + $0x8dc] sm:$0xff]
  %v468 = vld [vmem:[%s1 + $0x8e4] sm:$0xf]
  %v469 = vld [vmem:[%s1 + $0x8e8] sm:$0xff]
  %v470 = vld [vmem:[%s1 + $0x8f0] sm:$0xf]
  %v471 = vld [vmem:[%s1 + $0x8f4] sm:$0xff]
  %v472 = vld [vmem:[%s1 + $0x8fc] sm:$0xf]
  %v473 = vld [vmem:[%s1 + $0x900] sm:$0xff]
  %v474 = vld [vmem:[%s1 + $0x908] sm:$0xf]
  %v475 = vld [vmem:[%s1 + $0x90c] sm:$0xff]
  %v476 = vld [vmem:[%s1 + $0x914] sm:$0xf]
  %v477 = vld [vmem:[%s1 + $0x918] sm:$0xff]
  %v478 = vld [vmem:[%s1 + $0x920] sm:$0xf]
  %v479 = vld [vmem:[%s1 + $0x924] sm:$0xff]
  %v480 = vld [vmem:[%s1 + $0x92c] sm:$0xf]
  %v481 = vld [vmem:[%s1 + $0x930] sm:$0xff]
  %v482 = vld [vmem:[%s1 + $0x938] sm:$0xf]
  %v483 = vld [vmem:[%s1 + $0x93c] sm:$0xff]
  %v484 = vld [vmem:[%s1 + $0x944] sm:$0xf]
  %v485 = vld [vmem:[%s1 + $0x948] sm:$0xff]
  %v486 = vld [vmem:[%s1 + $0x950] sm:$0xf]
  %v487 = vld [vmem:[%s1 + $0x954] sm:$0xff]
  %v488 = vld [vmem:[%s1 + $0x95c] sm:$0xf]
  %v489 = vld [vmem:[%s1 + $0x960] sm:$0xff]
  %v490 = vld [vmem:[%s1 + $0x968] sm:$0xf]
  %v491 = vld [vmem:[%s1 + $0x96c] sm:$0xff]
  %v492 = vld [vmem:[%s1 + $0x974] sm:$0xf]
  %v493 = vld [vmem:[%s1 + $0x978] sm:$0xff]
  %v494 = vld [vmem:[%s1 + $0x980] sm:$0xf]
  %v495 = vld [vmem:[%s1 + $0x984] sm:$0xff]
  %v496 = vld [vmem:[%s1 + $0x98c] sm:$0xf]
  %v497 = vld [vmem:[%s1 + $0x990] sm:$0xff]
  %v498 = vld [vmem:[%s1 + $0x998] sm:$0xf]
  %v499 = vld [vmem:[%s1 + $0x99c] sm:$0xff]
  %v500 = vld [vmem:[%s1 + $0x9a4] sm:$0xf]
  %v501 = vld [vmem:[%s1 + $0x9a8] sm:$0xff]
  %v502 = vld [vmem:[%s1 + $0x9b0] sm:$0xf]
  %v503 = vld [vmem:[%s1 + $0x9b4] sm:$0xff]
  %v504 = vld [vmem:[%s1 + $0x9bc] sm:$0xf]
  %v505 = vld [vmem:[%s1 + $0x9c0] sm:$0xff]
  %v506 = vld [vmem:[%s1 + $0x9c8] sm:$0xf]
  %v507 = vld [vmem:[%s1 + $0x9cc] sm:$0xff]
  %v508 = vld [vmem:[%s1 + $0x9d4] sm:$0xf]
  %v509 = vld [vmem:[%s1 + $0x9d8] sm:$0xff]
  %v510 = vld [vmem:[%s1 + $0x9e0] sm:$0xf]
  %v511 = vld [vmem:[%s1 + $0x9e4] sm:$0xff]
  %v512 = vld [vmem:[%s1 + $0x9ec] sm:$0xf]
  %v513 = vld [vmem:[%s1 + $0x9f0] sm:$0xff]
  %v514 = vld [vmem:[%s1 + $0x9f8] sm:$0xf]
  %v515 = vld [vmem:[%s1 + $0x9fc] sm:$0xff]
  %v516 = vld [vmem:[%s1 + $0xa04] sm:$0xf]
  %v517 = vld [vmem:[%s1 + $0xa08] sm:$0xff]
  %v518 = vld [vmem:[%s1 + $0xa10] sm:$0xf]
  %v519 = vld [vmem:[%s1 + $0xa14] sm:$0xff]
  %v520 = vld [vmem:[%s1 + $0xa1c] sm:$0xf]
  %v521 = vld [vmem:[%s1 + $0xa20] sm:$0xff]
  %v522 = vld [vmem:[%s1 + $0xa28] sm:$0xf]
  %v523 = vld [vmem:[%s1 + $0xa2c] sm:$0xff]
  %v524 = vld [vmem:[%s1 + $0xa34] sm:$0xf]
  %v525 = vld [vmem:[%s1 + $0xa38] sm:$0xff]
  %v526 = vld [vmem:[%s1 + $0xa40] sm:$0xf]
  %v527 = vld [vmem:[%s1 + $0xa44] sm:$0xff]
  %v528 = vld [vmem:[%s1 + $0xa4c] sm:$0xf]
  %v529 = vld [vmem:[%s1 + $0xa50] sm:$0xff]
  %v530 = vld [vmem:[%s1 + $0xa58] sm:$0xf]
  %v531 = vld [vmem:[%s1 + $0xa5c] sm:$0xff]
  %v532 = vld [vmem:[%s1 + $0xa64] sm:$0xf]
  %v533 = vld [vmem:[%s1 + $0xa68] sm:$0xff]
  %v534 = vld [vmem:[%s1 + $0xa70] sm:$0xf]
  %v535 = vld [vmem:[%s1 + $0xa74] sm:$0xff]
  %v536 = vld [vmem:[%s1 + $0xa7c] sm:$0xf]
  %v537 = vld [vmem:[%s1 + $0xa80] sm:$0xff]
  %v538 = vld [vmem:[%s1 + $0xa88] sm:$0xf]
  %v539 = vld [vmem:[%s1 + $0xa8c] sm:$0xff]
  %v540 = vld [vmem:[%s1 + $0xa94] sm:$0xf]
  %v541 = vld [vmem:[%s1 + $0xa98] sm:$0xff]
  %v542 = vld [vmem:[%s1 + $0xaa0] sm:$0xf]
  %v543 = vld [vmem:[%s1 + $0xaa4] sm:$0xff]
  %v544 = vld [vmem:[%s1 + $0xaac] sm:$0xf]
  %v545 = vld [vmem:[%s1 + $0xab0] sm:$0xff]
  %v546 = vld [vmem:[%s1 + $0xab8] sm:$0xf]
  %v547 = vld [vmem:[%s1 + $0xabc] sm:$0xff]
  %v548 = vld [vmem:[%s1 + $0xac4] sm:$0xf]
  %v549 = vld [vmem:[%s1 + $0xac8] sm:$0xff]
  %v550 = vld [vmem:[%s1 + $0xad0] sm:$0xf]
  %v551 = vld [vmem:[%s1 + $0xad4] sm:$0xff]
  %v552 = vld [vmem:[%s1 + $0xadc] sm:$0xf]
  %v553 = vld [vmem:[%s1 + $0xae0] sm:$0xff]
  %v554 = vld [vmem:[%s1 + $0xae8] sm:$0xf]
  %v555 = vld [vmem:[%s1 + $0xaec] sm:$0xff]
  %v556 = vld [vmem:[%s1 + $0xaf4] sm:$0xf]
  %v557 = vld [vmem:[%s1 + $0xaf8] sm:$0xff]
  %v558 = vld [vmem:[%s1 + $0xb00] sm:$0xf]
  %v559 = vld [vmem:[%s1 + $0xb04] sm:$0xff]
  %v560 = vld [vmem:[%s1 + $0xb0c] sm:$0xf]
  %v561 = vld [vmem:[%s1 + $0xb10] sm:$0xff]
  %v562 = vld [vmem:[%s1 + $0xb18] sm:$0xf]
  %v563 = vld [vmem:[%s1 + $0xb1c] sm:$0xff]
  %v564 = vld [vmem:[%s1 + $0xb24] sm:$0xf]
  %v565 = vld [vmem:[%s1 + $0xb28] sm:$0xff]
  %v566 = vld [vmem:[%s1 + $0xb30] sm:$0xf]
  %v567 = vld [vmem:[%s1 + $0xb34] sm:$0xff]
  %v568 = vld [vmem:[%s1 + $0xb3c] sm:$0xf]
  %v569 = vld [vmem:[%s1 + $0xb40] sm:$0xff]
  %v570 = vld [vmem:[%s1 + $0xb48] sm:$0xf]
  %v571 = vld [vmem:[%s1 + $0xb4c] sm:$0xff]
  %v572 = vld [vmem:[%s1 + $0xb54] sm:$0xf]
  %v573 = vld [vmem:[%s1 + $0xb58] sm:$0xff]
  %v574 = vld [vmem:[%s1 + $0xb60] sm:$0xf]
  %v575 = vld [vmem:[%s1 + $0xb64] sm:$0xff]
  %v576 = vld [vmem:[%s1 + $0xb6c] sm:$0xf]
  %v577 = vld [vmem:[%s1 + $0xb70] sm:$0xff]
  %v578 = vld [vmem:[%s1 + $0xb78] sm:$0xf]
  %v579 = vld [vmem:[%s1 + $0xb7c] sm:$0xff]
  %v580 = vld [vmem:[%s1 + $0xb84] sm:$0xf]
  %v581 = vld [vmem:[%s1 + $0xb88] sm:$0xff]
  %v582 = vld [vmem:[%s1 + $0xb90] sm:$0xf]
  %v583 = vld [vmem:[%s1 + $0xb94] sm:$0xff]
  %v584 = vld [vmem:[%s1 + $0xb9c] sm:$0xf]
  %v585 = vld [vmem:[%s1 + $0xba0] sm:$0xff]
  %v586 = vld [vmem:[%s1 + $0xba8] sm:$0xf]
  %v587 = vld [vmem:[%s1 + $0xbac] sm:$0xff]
  %v588 = vld [vmem:[%s1 + $0xbb4] sm:$0xf]
  %v589 = vld [vmem:[%s1 + $0xbb8] sm:$0xff]
  %v590 = vld [vmem:[%s1 + $0xbc0] sm:$0xf]
  %v591 = vld [vmem:[%s1 + $0xbc4] sm:$0xff]
  %v592 = vld [vmem:[%s1 + $0xbcc] sm:$0xf]
  %v593 = vld [vmem:[%s1 + $0xbd0] sm:$0xff]
  %v594 = vld [vmem:[%s1 + $0xbd8] sm:$0xf]
  %v595 = vld [vmem:[%s1 + $0xbdc] sm:$0xff]
  %v596 = vld [vmem:[%s1 + $0xbe4] sm:$0xf]
  %v597 = vld [vmem:[%s1 + $0xbe8] sm:$0xff]
  %v598 = vld [vmem:[%s1 + $0xbf0] sm:$0xf]
  %v599 = vld [vmem:[%s1 + $0xbf4] sm:$0xff]
  %v600 = vld [vmem:[%s1 + $0xbfc] sm:$0xf]
  %v601 = vld [vmem:[%s1 + $0xc00] sm:$0xff]
  %v602 = vld [vmem:[%s1 + $0xc08] sm:$0xf]
  %v603 = vld [vmem:[%s1 + $0xc0c] sm:$0xff]
  %v604 = vld [vmem:[%s1 + $0xc14] sm:$0xf]
  %v605 = vld [vmem:[%s1 + $0xc18] sm:$0xff]
  %v606 = vld [vmem:[%s1 + $0xc20] sm:$0xf]
  %v607 = vld [vmem:[%s1 + $0xc24] sm:$0xff]
  %v608 = vld [vmem:[%s1 + $0xc2c] sm:$0xf]
  %v609 = vld [vmem:[%s1 + $0xc30] sm:$0xff]
  %v610 = vld [vmem:[%s1 + $0xc38] sm:$0xf]
  %v611 = vld [vmem:[%s1 + $0xc3c] sm:$0xff]
  %v612 = vld [vmem:[%s1 + $0xc44] sm:$0xf]
  %v613 = vld [vmem:[%s1 + $0xc48] sm:$0xff]
  %v614 = vld [vmem:[%s1 + $0xc50] sm:$0xf]
  %v615 = vld [vmem:[%s1 + $0xc54] sm:$0xff]
  %v616 = vld [vmem:[%s1 + $0xc5c] sm:$0xf]
  %v617 = vld [vmem:[%s1 + $0xc60] sm:$0xff]
  %v618 = vld [vmem:[%s1 + $0xc68] sm:$0xf]
  %v619 = vld [vmem:[%s1 + $0xc6c] sm:$0xff]
  %v620 = vld [vmem:[%s1 + $0xc74] sm:$0xf]
  %v621 = vld [vmem:[%s1 + $0xc78] sm:$0xff]
  %v622 = vld [vmem:[%s1 + $0xc80] sm:$0xf]
  %v623 = vld [vmem:[%s1 + $0xc84] sm:$0xff]
  %v624 = vld [vmem:[%s1 + $0xc8c] sm:$0xf]
  %v625 = vld [vmem:[%s1 + $0xc90] sm:$0xff]
  %v626 = vld [vmem:[%s1 + $0xc98] sm:$0xf]
  %v627 = vld [vmem:[%s1 + $0xc9c] sm:$0xff]
  %v628 = vld [vmem:[%s1 + $0xca4] sm:$0xf]
  %v629 = vld [vmem:[%s1 + $0xca8] sm:$0xff]
  %v630 = vld [vmem:[%s1 + $0xcb0] sm:$0xf]
  %v631 = vld [vmem:[%s1 + $0xcb4] sm:$0xff]
  %v632 = vld [vmem:[%s1 + $0xcbc] sm:$0xf]
  %v633 = vld [vmem:[%s1 + $0xcc0] sm:$0xff]
  %v634 = vld [vmem:[%s1 + $0xcc8] sm:$0xf]
  %v635 = vld [vmem:[%s1 + $0xccc] sm:$0xff]
  %v636 = vld [vmem:[%s1 + $0xcd4] sm:$0xf]
  %v637 = vld [vmem:[%s1 + $0xcd8] sm:$0xff]
  %v638 = vld [vmem:[%s1 + $0xce0] sm:$0xf]
  %v639 = vld [vmem:[%s1 + $0xce4] sm:$0xff]
  %v640 = vld [vmem:[%s1 + $0xcec] sm:$0xf]
  %v641 = vld [vmem:[%s1 + $0xcf0] sm:$0xff]
  %v642 = vld [vmem:[%s1 + $0xcf8] sm:$0xf]
  %v643 = vld [vmem:[%s1 + $0xcfc] sm:$0xff]
  %v644 = vld [vmem:[%s1 + $0xd04] sm:$0xf]
  %v645 = vld [vmem:[%s1 + $0xd08] sm:$0xff]
  %v646 = vld [vmem:[%s1 + $0xd10] sm:$0xf]
  %v647 = vld [vmem:[%s1 + $0xd14] sm:$0xff]
  %v648 = vld [vmem:[%s1 + $0xd1c] sm:$0xf]
  %v649 = vld [vmem:[%s1 + $0xd20] sm:$0xff]
  %v650 = vld [vmem:[%s1 + $0xd28] sm:$0xf]
  %v651 = vld [vmem:[%s1 + $0xd2c] sm:$0xff]
  %v652 = vld [vmem:[%s1 + $0xd34] sm:$0xf]
  %v653 = vld [vmem:[%s1 + $0xd38] sm:$0xff]
  %v654 = vld [vmem:[%s1 + $0xd40] sm:$0xf]
  %v655 = vld [vmem:[%s1 + $0xd44] sm:$0xff]
  %v656 = vld [vmem:[%s1 + $0xd4c] sm:$0xf]
  %v657 = vld [vmem:[%s1 + $0xd50] sm:$0xff]
  %v658 = vld [vmem:[%s1 + $0xd58] sm:$0xf]
  %v659 = vld [vmem:[%s1 + $0xd5c] sm:$0xff]
  %v660 = vld [vmem:[%s1 + $0xd64] sm:$0xf]
  %v661 = vld [vmem:[%s1 + $0xd68] sm:$0xff]
  %v662 = vld [vmem:[%s1 + $0xd70] sm:$0xf]
  %v663 = vld [vmem:[%s1 + $0xd74] sm:$0xff]
  %v664 = vld [vmem:[%s1 + $0xd7c] sm:$0xf]
  %v665 = vld [vmem:[%s1 + $0xd80] sm:$0xff]
  %v666 = vld [vmem:[%s1 + $0xd88] sm:$0xf]
  %v667 = vld [vmem:[%s1 + $0xd8c] sm:$0xff]
  %v668 = vld [vmem:[%s1 + $0xd94] sm:$0xf]
  %v669 = vld [vmem:[%s1 + $0xd98] sm:$0xff]
  %v670 = vld [vmem:[%s1 + $0xda0] sm:$0xf]
  %v671 = vld [vmem:[%s1 + $0xda4] sm:$0xff]
  %v672 = vld [vmem:[%s1 + $0xdac] sm:$0xf]
  %v673 = vld [vmem:[%s1 + $0xdb0] sm:$0xff]
  %v674 = vld [vmem:[%s1 + $0xdb8] sm:$0xf]
  %v675 = vld [vmem:[%s1 + $0xdbc] sm:$0xff]
  %v676 = vld [vmem:[%s1 + $0xdc4] sm:$0xf]
  %v677 = vld [vmem:[%s1 + $0xdc8] sm:$0xff]
  %v678 = vld [vmem:[%s1 + $0xdd0] sm:$0xf]
  %v679 = vld [vmem:[%s1 + $0xdd4] sm:$0xff]
  %v680 = vld [vmem:[%s1 + $0xddc] sm:$0xf]
  %v681 = vld [vmem:[%s1 + $0xde0] sm:$0xff]
  %v682 = vld [vmem:[%s1 + $0xde8] sm:$0xf]
  %v683 = vld [vmem:[%s1 + $0xdec] sm:$0xff]
  %v684 = vld [vmem:[%s1 + $0xdf4] sm:$0xf]
  %v685 = vld [vmem:[%s1 + $0xdf8] sm:$0xff]
  %v686 = vld [vmem:[%s1 + $0xe00] sm:$0xf]
  %v687 = vld [vmem:[%s1 + $0xe04] sm:$0xff]
  %v688 = vld [vmem:[%s1 + $0xe0c] sm:$0xf]
  %v689 = vld [vmem:[%s1 + $0xe10] sm:$0xff]
  %v690 = vld [vmem:[%s1 + $0xe18] sm:$0xf]
  %v691 = vld [vmem:[%s1 + $0xe1c] sm:$0xff]
  %v692 = vld [vmem:[%s1 + $0xe24] sm:$0xf]
  %v693 = vld [vmem:[%s1 + $0xe28] sm:$0xff]
  %v694 = vld [vmem:[%s1 + $0xe30] sm:$0xf]
  %v695 = vld [vmem:[%s1 + $0xe34] sm:$0xff]
  %v696 = vld [vmem:[%s1 + $0xe3c] sm:$0xf]
  %v697 = vld [vmem:[%s1 + $0xe40] sm:$0xff]
  %v698 = vld [vmem:[%s1 + $0xe48] sm:$0xf]
  %v699 = vld [vmem:[%s1 + $0xe4c] sm:$0xff]
  %v700 = vld [vmem:[%s1 + $0xe54] sm:$0xf]
  %v701 = vld [vmem:[%s1 + $0xe58] sm:$0xff]
  %v702 = vld [vmem:[%s1 + $0xe60] sm:$0xf]
  %v703 = vld [vmem:[%s1 + $0xe64] sm:$0xff]
  %v704 = vld [vmem:[%s1 + $0xe6c] sm:$0xf]
  %v705 = vld [vmem:[%s1 + $0xe70] sm:$0xff]
  %v706 = vld [vmem:[%s1 + $0xe78] sm:$0xf]
  %v707 = vld [vmem:[%s1 + $0xe7c] sm:$0xff]
  %v708 = vld [vmem:[%s1 + $0xe84] sm:$0xf]
  %v709 = vld [vmem:[%s1 + $0xe88] sm:$0xff]
  %v710 = vld [vmem:[%s1 + $0xe90] sm:$0xf]
  %v711 = vld [vmem:[%s1 + $0xe94] sm:$0xff]
  %v712 = vld [vmem:[%s1 + $0xe9c] sm:$0xf]
  %v713 = vld [vmem:[%s1 + $0xea0] sm:$0xff]
  %v714 = vld [vmem:[%s1 + $0xea8] sm:$0xf]
  %v715 = vld [vmem:[%s1 + $0xeac] sm:$0xff]
  %v716 = vld [vmem:[%s1 + $0xeb4] sm:$0xf]
  %v717 = vld [vmem:[%s1 + $0xeb8] sm:$0xff]
  %v718 = vld [vmem:[%s1 + $0xec0] sm:$0xf]
  %v719 = vld [vmem:[%s1 + $0xec4] sm:$0xff]
  %v720 = vld [vmem:[%s1 + $0xecc] sm:$0xf]
  %v721 = vld [vmem:[%s1 + $0xed0] sm:$0xff]
  %v722 = vld [vmem:[%s1 + $0xed8] sm:$0xf]
  %v723 = vld [vmem:[%s1 + $0xedc] sm:$0xff]
  %v724 = vld [vmem:[%s1 + $0xee4] sm:$0xf]
  %v725 = vld [vmem:[%s1 + $0xee8] sm:$0xff]
  %v726 = vld [vmem:[%s1 + $0xef0] sm:$0xf]
  %v727 = vld [vmem:[%s1 + $0xef4] sm:$0xff]
  %v728 = vld [vmem:[%s1 + $0xefc] sm:$0xf]
  %v729 = vld [vmem:[%s1 + $0xf00] sm:$0xff]
  %v730 = vld [vmem:[%s1 + $0xf08] sm:$0xf]
  %v731 = vld [vmem:[%s1 + $0xf0c] sm:$0xff]
  %v732 = vld [vmem:[%s1 + $0xf14] sm:$0xf]
  %v733 = vld [vmem:[%s1 + $0xf18] sm:$0xff]
  %v734 = vld [vmem:[%s1 + $0xf20] sm:$0xf]
  %v735 = vld [vmem:[%s1 + $0xf24] sm:$0xff]
  %v736 = vld [vmem:[%s1 + $0xf2c] sm:$0xf]
  %v737 = vld [vmem:[%s1 + $0xf30] sm:$0xff]
  %v738 = vld [vmem:[%s1 + $0xf38] sm:$0xf]
  %v739 = vld [vmem:[%s1 + $0xf3c] sm:$0xff]
  %v740 = vld [vmem:[%s1 + $0xf44] sm:$0xf]
  %v741 = vld [vmem:[%s1 + $0xf48] sm:$0xff]
  %v742 = vld [vmem:[%s1 + $0xf50] sm:$0xf]
  %v743 = vld [vmem:[%s1 + $0xf54] sm:$0xff]
  %v744 = vld [vmem:[%s1 + $0xf5c] sm:$0xf]
  %v745 = vld [vmem:[%s1 + $0xf60] sm:$0xff]
  %v746 = vld [vmem:[%s1 + $0xf68] sm:$0xf]
  %v747 = vld [vmem:[%s1 + $0xf6c] sm:$0xff]
  %v748 = vld [vmem:[%s1 + $0xf74] sm:$0xf]
  %v749 = vld [vmem:[%s1 + $0xf78] sm:$0xff]
  %v750 = vld [vmem:[%s1 + $0xf80] sm:$0xf]
  %v751 = vld [vmem:[%s1 + $0xf84] sm:$0xff]
  %v752 = vld [vmem:[%s1 + $0xf8c] sm:$0xf]
  %v753 = vld [vmem:[%s1 + $0xf90] sm:$0xff]
  %v754 = vld [vmem:[%s1 + $0xf98] sm:$0xf]
  %v755 = vld [vmem:[%s1 + $0xf9c] sm:$0xff]
  %v756 = vld [vmem:[%s1 + $0xfa4] sm:$0xf]
  %v757 = vld [vmem:[%s1 + $0xfa8] sm:$0xff]
  %v758 = vld [vmem:[%s1 + $0xfb0] sm:$0xf]
  %v759 = vld [vmem:[%s1 + $0xfb4] sm:$0xff]
  %v760 = vld [vmem:[%s1 + $0xfbc] sm:$0xf]
  %v761 = vld [vmem:[%s1 + $0xfc0] sm:$0xff]
  %v762 = vld [vmem:[%s1 + $0xfc8] sm:$0xf]
  %v763 = vld [vmem:[%s1 + $0xfcc] sm:$0xff]
  %v764 = vld [vmem:[%s1 + $0xfd4] sm:$0xf]
  %v765 = vld [vmem:[%s1 + $0xfd8] sm:$0xff]
  %v766 = vld [vmem:[%s1 + $0xfe0] sm:$0xf]
  %v767 = vld [vmem:[%s1 + $0xfe4] sm:$0xff]
  %v768 = vld [vmem:[%s1 + $0xfec] sm:$0xf]
  %v769 = vld [vmem:[%s1 + $0xff0] sm:$0xff]
  %v770 = vld [vmem:[%s1 + $0xff8] sm:$0xf]
  %v771 = vld [vmem:[%s1 + $0xffc] sm:$0xff]
  %v772 = vld [vmem:[%s1 + $0x1004] sm:$0xf]
  %v773 = vld [vmem:[%s1 + $0x1008] sm:$0xff]
  %v774 = vld [vmem:[%s1 + $0x1010] sm:$0xf]
  %v775 = vld [vmem:[%s1 + $0x1014] sm:$0xff]
  %v776 = vld [vmem:[%s1 + $0x101c] sm:$0xf]
  %v777 = vld [vmem:[%s1 + $0x1020] sm:$0xff]
  %v778 = vld [vmem:[%s1 + $0x1028] sm:$0xf]
  %v779 = vld [vmem:[%s1 + $0x102c] sm:$0xff]
  %v780 = vld [vmem:[%s1 + $0x1034] sm:$0xf]
  %v781 = vld [vmem:[%s1 + $0x1038] sm:$0xff]
  %v782 = vld [vmem:[%s1 + $0x1040] sm:$0xf]
  %v783 = vld [vmem:[%s1 + $0x1044] sm:$0xff]
  %v784 = vld [vmem:[%s1 + $0x104c] sm:$0xf]
  %v785 = vld [vmem:[%s1 + $0x1050] sm:$0xff]
  %v786 = vld [vmem:[%s1 + $0x1058] sm:$0xf]
  %v787 = vld [vmem:[%s1 + $0x105c] sm:$0xff]
  %v788 = vld [vmem:[%s1 + $0x1064] sm:$0xf]
  %v789 = vld [vmem:[%s1 + $0x1068] sm:$0xff]
  %v790 = vld [vmem:[%s1 + $0x1070] sm:$0xf]
  %v791 = vld [vmem:[%s1 + $0x1074] sm:$0xff]
  %v792 = vld [vmem:[%s1 + $0x107c] sm:$0xf]
  %v793 = vld [vmem:[%s1 + $0x1080] sm:$0xff]
  %v794 = vld [vmem:[%s1 + $0x1088] sm:$0xf]
  %v795 = vld [vmem:[%s1 + $0x108c] sm:$0xff]
  %v796 = vld [vmem:[%s1 + $0x1094] sm:$0xf]
  %v797 = vld [vmem:[%s1 + $0x1098] sm:$0xff]
  %v798 = vld [vmem:[%s1 + $0x10a0] sm:$0xf]
  %v799 = vld [vmem:[%s1 + $0x10a4] sm:$0xff]
  %v800 = vld [vmem:[%s1 + $0x10ac] sm:$0xf]
  %v801 = vld [vmem:[%s1 + $0x10b0] sm:$0xff]
  %v802 = vld [vmem:[%s1 + $0x10b8] sm:$0xf]
  %v803 = vld [vmem:[%s1 + $0x10bc] sm:$0xff]
  %v804 = vld [vmem:[%s1 + $0x10c4] sm:$0xf]
  %v805 = vld [vmem:[%s1 + $0x10c8] sm:$0xff]
  %v806 = vld [vmem:[%s1 + $0x10d0] sm:$0xf]
  %v807 = vld [vmem:[%s1 + $0x10d4] sm:$0xff]
  %v808 = vld [vmem:[%s1 + $0x10dc] sm:$0xf]
  %v809 = vld [vmem:[%s1 + $0x10e0] sm:$0xff]
  %v810 = vld [vmem:[%s1 + $0x10e8] sm:$0xf]
  %v811 = vld [vmem:[%s1 + $0x10ec] sm:$0xff]
  %v812 = vld [vmem:[%s1 + $0x10f4] sm:$0xf]
  %v813 = vld [vmem:[%s1 + $0x10f8] sm:$0xff]
  %v814 = vld [vmem:[%s1 + $0x1100] sm:$0xf]
  %v815 = vld [vmem:[%s1 + $0x1104] sm:$0xff]
  %v816 = vld [vmem:[%s1 + $0x110c] sm:$0xf]
  %v817 = vld [vmem:[%s1 + $0x1110] sm:$0xff]
  %v818 = vld [vmem:[%s1 + $0x1118] sm:$0xf]
  %v819 = vld [vmem:[%s1 + $0x111c] sm:$0xff]
  %v820 = vld [vmem:[%s1 + $0x1124] sm:$0xf]
  %v821 = vld [vmem:[%s1 + $0x1128] sm:$0xff]
  %v822 = vld [vmem:[%s1 + $0x1130] sm:$0xf]
  %v823 = vld [vmem:[%s1 + $0x1134] sm:$0xff]
  %v824 = vld [vmem:[%s1 + $0x113c] sm:$0xf]
  %v825 = vld [vmem:[%s1 + $0x1140] sm:$0xff]
  %v826 = vld [vmem:[%s1 + $0x1148] sm:$0xf]
  %v827 = vld [vmem:[%s1 + $0x114c] sm:$0xff]
  %v828 = vld [vmem:[%s1 + $0x1154] sm:$0xf]
  %v829 = vld [vmem:[%s1 + $0x1158] sm:$0xff]
  %v830 = vld [vmem:[%s1 + $0x1160] sm:$0xf]
  %v831 = vld [vmem:[%s1 + $0x1164] sm:$0xff]
  %v832 = vld [vmem:[%s1 + $0x116c] sm:$0xf]
  %v833 = vld [vmem:[%s1 + $0x1170] sm:$0xff]
  %v834 = vld [vmem:[%s1 + $0x1178] sm:$0xf]
  %v835 = vld [vmem:[%s1 + $0x117c] sm:$0xff]
  %v836 = vld [vmem:[%s1 + $0x1184] sm:$0xf]
  %v837 = vld [vmem:[%s1 + $0x1188] sm:$0xff]
  %v838 = vld [vmem:[%s1 + $0x1190] sm:$0xf]
  %v839 = vld [vmem:[%s1 + $0x1194] sm:$0xff]
  %v840 = vld [vmem:[%s1 + $0x119c] sm:$0xf]
  %v841 = vld [vmem:[%s1 + $0x11a0] sm:$0xff]
  %v842 = vld [vmem:[%s1 + $0x11a8] sm:$0xf]
  %v843 = vld [vmem:[%s1 + $0x11ac] sm:$0xff]
  %v844 = vld [vmem:[%s1 + $0x11b4] sm:$0xf]
  %v845 = vld [vmem:[%s1 + $0x11b8] sm:$0xff]
  %v846 = vld [vmem:[%s1 + $0x11c0] sm:$0xf]
  %v847 = vld [vmem:[%s1 + $0x11c4] sm:$0xff]
  %v848 = vld [vmem:[%s1 + $0x11cc] sm:$0xf]
  %v849 = vld [vmem:[%s1 + $0x11d0] sm:$0xff]
  %v850 = vld [vmem:[%s1 + $0x11d8] sm:$0xf]
  %v851 = vld [vmem:[%s1 + $0x11dc] sm:$0xff]
  %v852 = vld [vmem:[%s1 + $0x11e4] sm:$0xf]
  %v853 = vld [vmem:[%s1 + $0x11e8] sm:$0xff]
  %v854 = vld [vmem:[%s1 + $0x11f0] sm:$0xf]
  %v855 = vld [vmem:[%s1 + $0x11f4] sm:$0xff]
  %v856 = vld [vmem:[%s1 + $0x11fc] sm:$0xf]
  %v857 = vld [vmem:[%s1 + $0x1200] sm:$0xff]
  %v858 = vld [vmem:[%s1 + $0x1208] sm:$0xf]
  %v859 = vld [vmem:[%s1 + $0x120c] sm:$0xff]
  %v860 = vld [vmem:[%s1 + $0x1214] sm:$0xf]
  %v861 = vld [vmem:[%s1 + $0x1218] sm:$0xff]
  %v862 = vld [vmem:[%s1 + $0x1220] sm:$0xf]
  %v863 = vld [vmem:[%s1 + $0x1224] sm:$0xff]
  %v864 = vld [vmem:[%s1 + $0x122c] sm:$0xf]
  %v865 = vld [vmem:[%s1 + $0x1230] sm:$0xff]
  %v866 = vld [vmem:[%s1 + $0x1238] sm:$0xf]
  %v867 = vld [vmem:[%s1 + $0x123c] sm:$0xff]
  %v868 = vld [vmem:[%s1 + $0x1244] sm:$0xf]
  %v869 = vld [vmem:[%s1 + $0x1248] sm:$0xff]
  %v870 = vld [vmem:[%s1 + $0x1250] sm:$0xf]
  %v871 = vld [vmem:[%s1 + $0x1254] sm:$0xff]
  %v872 = vld [vmem:[%s1 + $0x125c] sm:$0xf]
  %v873 = vld [vmem:[%s1 + $0x1260] sm:$0xff]
  %v874 = vld [vmem:[%s1 + $0x1268] sm:$0xf]
  %v875 = vld [vmem:[%s1 + $0x126c] sm:$0xff]
  %v876 = vld [vmem:[%s1 + $0x1274] sm:$0xf]
  %v877 = vld [vmem:[%s1 + $0x1278] sm:$0xff]
  %v878 = vld [vmem:[%s1 + $0x1280] sm:$0xf]
  %v879 = vld [vmem:[%s1 + $0x1284] sm:$0xff]
  %v880 = vld [vmem:[%s1 + $0x128c] sm:$0xf]
  %v881 = vld [vmem:[%s1 + $0x1290] sm:$0xff]
  %v882 = vld [vmem:[%s1 + $0x1298] sm:$0xf]
  %v883 = vld [vmem:[%s1 + $0x129c] sm:$0xff]
  %v884 = vld [vmem:[%s1 + $0x12a4] sm:$0xf]
  %v885 = vld [vmem:[%s1 + $0x12a8] sm:$0xff]
  %v886 = vld [vmem:[%s1 + $0x12b0] sm:$0xf]
  %v887 = vld [vmem:[%s1 + $0x12b4] sm:$0xff]
  %v888 = vld [vmem:[%s1 + $0x12bc] sm:$0xf]
  %v889 = vld [vmem:[%s1 + $0x12c0] sm:$0xff]
  %v890 = vld [vmem:[%s1 + $0x12c8] sm:$0xf]
  %v891 = vld [vmem:[%s1 + $0x12cc] sm:$0xff]
  %v892 = vld [vmem:[%s1 + $0x12d4] sm:$0xf]
  %v893 = vld [vmem:[%s1 + $0x12d8] sm:$0xff]
  %v894 = vld [vmem:[%s1 + $0x12e0] sm:$0xf]
  %v895 = vld [vmem:[%s1 + $0x12e4] sm:$0xff]
  %v896 = vld [vmem:[%s1 + $0x12ec] sm:$0xf]
  %v897 = vld [vmem:[%s1 + $0x12f0] sm:$0xff]
  %v898 = vld [vmem:[%s1 + $0x12f8] sm:$0xf]
  %v899 = vld [vmem:[%s1 + $0x12fc] sm:$0xff]
  %v900 = vld [vmem:[%s1 + $0x1304] sm:$0xf]
  %v901 = vld [vmem:[%s1 + $0x1308] sm:$0xff]
  %v902 = vld [vmem:[%s1 + $0x1310] sm:$0xf]
  %v903 = vld [vmem:[%s1 + $0x1314] sm:$0xff]
  %v904 = vld [vmem:[%s1 + $0x131c] sm:$0xf]
  %v905 = vld [vmem:[%s1 + $0x1320] sm:$0xff]
  %v906 = vld [vmem:[%s1 + $0x1328] sm:$0xf]
  %v907 = vld [vmem:[%s1 + $0x132c] sm:$0xff]
  %v908 = vld [vmem:[%s1 + $0x1334] sm:$0xf]
  %v909 = vld [vmem:[%s1 + $0x1338] sm:$0xff]
  %v910 = vld [vmem:[%s1 + $0x1340] sm:$0xf]
  %v911 = vld [vmem:[%s1 + $0x1344] sm:$0xff]
  %v912 = vld [vmem:[%s1 + $0x134c] sm:$0xf]
  %v913 = vld [vmem:[%s1 + $0x1350] sm:$0xff]
  %v914 = vld [vmem:[%s1 + $0x1358] sm:$0xf]
  %v915 = vld [vmem:[%s1 + $0x135c] sm:$0xff]
  %v916 = vld [vmem:[%s1 + $0x1364] sm:$0xf]
  %v917 = vld [vmem:[%s1 + $0x1368] sm:$0xff]
  %v918 = vld [vmem:[%s1 + $0x1370] sm:$0xf]
  %v919 = vld [vmem:[%s1 + $0x1374] sm:$0xff]
  %v920 = vld [vmem:[%s1 + $0x137c] sm:$0xf]
  %v921 = vld [vmem:[%s1 + $0x1380] sm:$0xff]
  %v922 = vld [vmem:[%s1 + $0x1388] sm:$0xf]
  %v923 = vld [vmem:[%s1 + $0x138c] sm:$0xff]
  %v924 = vld [vmem:[%s1 + $0x1394] sm:$0xf]
  %v925 = vld [vmem:[%s1 + $0x1398] sm:$0xff]
  %v926 = vld [vmem:[%s1 + $0x13a0] sm:$0xf]
  %v927 = vld [vmem:[%s1 + $0x13a4] sm:$0xff]
  %v928 = vld [vmem:[%s1 + $0x13ac] sm:$0xf]
  %v929 = vld [vmem:[%s1 + $0x13b0] sm:$0xff]
  %v930 = vld [vmem:[%s1 + $0x13b8] sm:$0xf]
  %v931 = vld [vmem:[%s1 + $0x13bc] sm:$0xff]
  %v932 = vld [vmem:[%s1 + $0x13c4] sm:$0xf]
  %v933 = vld [vmem:[%s1 + $0x13c8] sm:$0xff]
  %v934 = vld [vmem:[%s1 + $0x13d0] sm:$0xf]
  %v935 = vld [vmem:[%s1 + $0x13d4] sm:$0xff]
  %v936 = vld [vmem:[%s1 + $0x13dc] sm:$0xf]
  %v937 = vld [vmem:[%s1 + $0x13e0] sm:$0xff]
  %v938 = vld [vmem:[%s1 + $0x13e8] sm:$0xf]
  %v939 = vld [vmem:[%s1 + $0x13ec] sm:$0xff]
  %v940 = vld [vmem:[%s1 + $0x13f4] sm:$0xf]
  %v941 = vld [vmem:[%s1 + $0x13f8] sm:$0xff]
  %v942 = vld [vmem:[%s1 + $0x1400] sm:$0xf]
  %v943 = vld [vmem:[%s1 + $0x1404] sm:$0xff]
  %v944 = vld [vmem:[%s1 + $0x140c] sm:$0xf]
  %v945 = vld [vmem:[%s1 + $0x1410] sm:$0xff]
  %v946 = vld [vmem:[%s1 + $0x1418] sm:$0xf]
  %v947 = vld [vmem:[%s1 + $0x141c] sm:$0xff]
  %v948 = vld [vmem:[%s1 + $0x1424] sm:$0xf]
  %v949 = vld [vmem:[%s1 + $0x1428] sm:$0xff]
  %v950 = vld [vmem:[%s1 + $0x1430] sm:$0xf]
  %v951 = vld [vmem:[%s1 + $0x1434] sm:$0xff]
  %v952 = vld [vmem:[%s1 + $0x143c] sm:$0xf]
  %v1009 = vunpack.c.l.b16 %v33
  %v1010 = vunpack.c.h.b16 %v33
  %v1011 = vunpack.c.l.b16 %v34
  %v1012 = vunpack.c.h.b16 %v34
  %v1013 = vunpack.c.l.b16 %v35
  %v1014 = vunpack.c.h.b16 %v35
  %v1015 = vunpack.c.l.b16 %v36
  %v1016 = vunpack.c.h.b16 %v36
  %v1017 = vunpack.c.l.b16 %v37
  %v1018 = vunpack.c.h.b16 %v37
  %v1019 = vunpack.c.l.b16 %v38
  %v1020 = vunpack.c.h.b16 %v38
  %v1021 = vunpack.c.l.b16 %v39
  %v1022 = vunpack.c.h.b16 %v39
  %v1023 = vunpack.c.l.b16 %v40
  %v1024 = vunpack.c.h.b16 %v40
  %v1025 = vunpack.c.l.b16 %v41
  %v1026 = vunpack.c.h.b16 %v41
  %v1027 = vunpack.c.l.b16 %v42
  %v1028 = vunpack.c.h.b16 %v42
  %v1029 = vunpack.c.l.b16 %v43
  %v1030 = vunpack.c.h.b16 %v43
  %v1031 = vunpack.c.l.b16 %v44
  %v1032 = vunpack.c.h.b16 %v44
  %v1033 = vunpack.c.l.b16 %v45
  %v1034 = vunpack.c.h.b16 %v45
  %v1035 = vunpack.c.l.b16 %v46
  %v1036 = vunpack.c.l.b16 %v47
  %v1037 = vunpack.c.h.b16 %v47
  %v1038 = vunpack.c.l.b16 %v48
  %v1039 = vunpack.c.h.b16 %v48
  %v1040 = vunpack.c.l.b16 %v49
  %v1041 = vunpack.c.h.b16 %v49
  %v1042 = vunpack.c.l.b16 %v50
  %v1043 = vunpack.c.h.b16 %v50
  %v1044 = vunpack.c.l.b16 %v51
  %v1045 = vunpack.c.h.b16 %v51
  %v1046 = vunpack.c.l.b16 %v52
  %v1047 = vunpack.c.h.b16 %v52
  %v1048 = vunpack.c.l.b16 %v53
  %v1049 = vunpack.c.h.b16 %v53
  %v1050 = vunpack.c.l.b16 %v54
  %v1051 = vunpack.c.h.b16 %v54
  %v1052 = vunpack.c.l.b16 %v55
  %v1053 = vunpack.c.h.b16 %v55
  %v1054 = vunpack.c.l.b16 %v56
  %v1055 = vunpack.c.h.b16 %v56
  %v1056 = vunpack.c.l.b16 %v57
  %v1057 = vunpack.c.h.b16 %v57
  %v1058 = vunpack.c.l.b16 %v58
  %v1059 = vunpack.c.h.b16 %v58
  %v1060 = vunpack.c.l.b16 %v59
  %v1061 = vunpack.c.h.b16 %v59
  %v1062 = vunpack.c.l.b16 %v60
  %v1063 = vunpack.c.l.b16 %v61
  %v1064 = vunpack.c.h.b16 %v61
  %v1065 = vunpack.c.l.b16 %v62
  %v1066 = vunpack.c.h.b16 %v62
  %v1067 = vunpack.c.l.b16 %v63
  %v1068 = vunpack.c.h.b16 %v63
  %v1069 = vunpack.c.l.b16 %v64
  %v1070 = vunpack.c.h.b16 %v64
  %v1071 = vunpack.c.l.b16 %v65
  %v1072 = vunpack.c.h.b16 %v65
  %v1073 = vunpack.c.l.b16 %v66
  %v1074 = vunpack.c.h.b16 %v66
  %v1075 = vunpack.c.l.b16 %v67
  %v1076 = vunpack.c.h.b16 %v67
  %v1077 = vunpack.c.l.b16 %v68
  %v1078 = vunpack.c.h.b16 %v68
  %v1079 = vunpack.c.l.b16 %v69
  %v1080 = vunpack.c.h.b16 %v69
  %v1081 = vunpack.c.l.b16 %v70
  %v1082 = vunpack.c.h.b16 %v70
  %v1083 = vunpack.c.l.b16 %v71
  %v1084 = vunpack.c.h.b16 %v71
  %v1085 = vunpack.c.l.b16 %v72
  %v1086 = vunpack.c.h.b16 %v72
  %v1087 = vunpack.c.l.b16 %v73
  %v1088 = vunpack.c.h.b16 %v73
  %v1089 = vunpack.c.l.b16 %v74
  %v1090 = vunpack.c.l.b16 %v75
  %v1091 = vunpack.c.h.b16 %v75
  %v1092 = vunpack.c.l.b16 %v76
  %v1093 = vunpack.c.h.b16 %v76
  %v1094 = vunpack.c.l.b16 %v77
  %v1095 = vunpack.c.h.b16 %v77
  %v1096 = vunpack.c.l.b16 %v78
  %v1097 = vunpack.c.h.b16 %v78
  %v1098 = vunpack.c.l.b16 %v79
  %v1099 = vunpack.c.h.b16 %v79
  %v1100 = vunpack.c.l.b16 %v80
  %v1101 = vunpack.c.h.b16 %v80
  %v1102 = vunpack.c.l.b16 %v81
  %v1103 = vunpack.c.h.b16 %v81
  %v1104 = vunpack.c.l.b16 %v82
  %v1105 = vunpack.c.h.b16 %v82
  %v1106 = vunpack.c.l.b16 %v83
  %v1107 = vunpack.c.h.b16 %v83
  %v1108 = vunpack.c.l.b16 %v84
  %v1109 = vunpack.c.h.b16 %v84
  %v1110 = vunpack.c.l.b16 %v85
  %v1111 = vunpack.c.h.b16 %v85
  %v1112 = vunpack.c.l.b16 %v86
  %v1113 = vunpack.c.h.b16 %v86
  %v1114 = vunpack.c.l.b16 %v87
  %v1115 = vunpack.c.h.b16 %v87
  %v1116 = vunpack.c.l.b16 %v88
  %v1117 = vpack.c.b16 %v1036, %v1009
  %v1118 = vpack.c.b16 %v1037, %v1010
  %v1119 = vpack.c.b16 %v1038, %v1011
  %v1120 = vpack.c.b16 %v1039, %v1012
  %v1121 = vpack.c.b16 %v1040, %v1013
  %v1122 = vpack.c.b16 %v1041, %v1014
  %v1123 = vpack.c.b16 %v1042, %v1015
  %v1124 = vpack.c.b16 %v1043, %v1016
  %v1125 = vpack.c.b16 %v1044, %v1017
  %v1126 = vpack.c.b16 %v1045, %v1018
  %v1127 = vpack.c.b16 %v1046, %v1019
  %v1128 = vpack.c.b16 %v1047, %v1020
  %v1129 = vpack.c.b16 %v1048, %v1021
  %v1130 = vpack.c.b16 %v1049, %v1022
  %v1131 = vpack.c.b16 %v1050, %v1023
  %v1132 = vpack.c.b16 %v1051, %v1024
  %v1133 = vpack.c.b16 %v1052, %v1025
  %v1134 = vpack.c.b16 %v1053, %v1026
  %v1135 = vpack.c.b16 %v1054, %v1027
  %v1136 = vpack.c.b16 %v1055, %v1028
  %v1137 = vpack.c.b16 %v1056, %v1029
  %v1138 = vpack.c.b16 %v1057, %v1030
  %v1139 = vpack.c.b16 %v1058, %v1031
  %v1140 = vpack.c.b16 %v1059, %v1032
  %v1141 = vpack.c.b16 %v1060, %v1033
  %v1142 = vpack.c.b16 %v1061, %v1034
  %v1143 = vpack.c.b16 %v1062, %v1035
  %v1144 = vpack.c.b16 %v1090, %v1063
  %v1145 = vpack.c.b16 %v1091, %v1064
  %v1146 = vpack.c.b16 %v1092, %v1065
  %v1147 = vpack.c.b16 %v1093, %v1066
  %v1148 = vpack.c.b16 %v1094, %v1067
  %v1149 = vpack.c.b16 %v1095, %v1068
  %v1150 = vpack.c.b16 %v1096, %v1069
  %v1151 = vpack.c.b16 %v1097, %v1070
  %v1152 = vpack.c.b16 %v1098, %v1071
  %v1153 = vpack.c.b16 %v1099, %v1072
  %v1154 = vpack.c.b16 %v1100, %v1073
  %v1155 = vpack.c.b16 %v1101, %v1074
  %v1156 = vpack.c.b16 %v1102, %v1075
  %v1157 = vpack.c.b16 %v1103, %v1076
  %v1158 = vpack.c.b16 %v1104, %v1077
  %v1159 = vpack.c.b16 %v1105, %v1078
  %v1160 = vpack.c.b16 %v1106, %v1079
  %v1161 = vpack.c.b16 %v1107, %v1080
  %v1162 = vpack.c.b16 %v1108, %v1081
  %v1163 = vpack.c.b16 %v1109, %v1082
  %v1164 = vpack.c.b16 %v1110, %v1083
  %v1165 = vpack.c.b16 %v1111, %v1084
  %v1166 = vpack.c.b16 %v1112, %v1085
  %v1167 = vpack.c.b16 %v1113, %v1086
  %v1168 = vpack.c.b16 %v1114, %v1087
  %v1169 = vpack.c.b16 %v1115, %v1088
  %v1170 = vpack.c.b16 %v1116, %v1089
  %v2089 = vunpack.c.l.b16 %v89
  %v2090 = vunpack.c.h.b16 %v89
  %v2091 = vunpack.c.l.b16 %v90
  %v2092 = vunpack.c.l.b16 %v91
  %v2093 = vunpack.c.h.b16 %v91
  %v2094 = vunpack.c.l.b16 %v92
  %v2095 = vunpack.c.l.b16 %v93
  %v2096 = vunpack.c.h.b16 %v93
  %v2097 = vunpack.c.l.b16 %v94
  %v2098 = vunpack.c.l.b16 %v95
  %v2099 = vunpack.c.h.b16 %v95
  %v2100 = vunpack.c.l.b16 %v96
  %v2101 = vunpack.c.l.b16 %v97
  %v2102 = vunpack.c.h.b16 %v97
  %v2103 = vunpack.c.l.b16 %v98
  %v2104 = vunpack.c.l.b16 %v99
  %v2105 = vunpack.c.h.b16 %v99
  %v2106 = vunpack.c.l.b16 %v100
  %v2107 = vunpack.c.l.b16 %v101
  %v2108 = vunpack.c.h.b16 %v101
  %v2109 = vunpack.c.l.b16 %v102
  %v2110 = vunpack.c.l.b16 %v103
  %v2111 = vunpack.c.h.b16 %v103
  %v2112 = vunpack.c.l.b16 %v104
  %v2113 = vunpack.c.l.b16 %v105
  %v2114 = vunpack.c.h.b16 %v105
  %v2115 = vunpack.c.l.b16 %v106
  %v2116 = vunpack.c.l.b16 %v107
  %v2117 = vunpack.c.h.b16 %v107
  %v2118 = vunpack.c.l.b16 %v108
  %v2119 = vunpack.c.l.b16 %v109
  %v2120 = vunpack.c.h.b16 %v109
  %v2121 = vunpack.c.l.b16 %v110
  %v2122 = vunpack.c.l.b16 %v111
  %v2123 = vunpack.c.h.b16 %v111
  %v2124 = vunpack.c.l.b16 %v112
  %v2125 = vunpack.c.l.b16 %v113
  %v2126 = vunpack.c.h.b16 %v113
  %v2127 = vunpack.c.l.b16 %v114
  %v2128 = vunpack.c.l.b16 %v115
  %v2129 = vunpack.c.h.b16 %v115
  %v2130 = vunpack.c.l.b16 %v116
  %v2131 = vunpack.c.l.b16 %v117
  %v2132 = vunpack.c.h.b16 %v117
  %v2133 = vunpack.c.l.b16 %v118
  %v2134 = vunpack.c.l.b16 %v119
  %v2135 = vunpack.c.h.b16 %v119
  %v2136 = vunpack.c.l.b16 %v120
  %v2137 = vunpack.c.l.b16 %v121
  %v2138 = vunpack.c.h.b16 %v121
  %v2139 = vunpack.c.l.b16 %v122
  %v2140 = vunpack.c.l.b16 %v123
  %v2141 = vunpack.c.h.b16 %v123
  %v2142 = vunpack.c.l.b16 %v124
  %v2143 = vunpack.c.l.b16 %v125
  %v2144 = vunpack.c.h.b16 %v125
  %v2145 = vunpack.c.l.b16 %v126
  %v2146 = vunpack.c.l.b16 %v127
  %v2147 = vunpack.c.h.b16 %v127
  %v2148 = vunpack.c.l.b16 %v128
  %v2149 = vunpack.c.l.b16 %v129
  %v2150 = vunpack.c.h.b16 %v129
  %v2151 = vunpack.c.l.b16 %v130
  %v2152 = vunpack.c.l.b16 %v131
  %v2153 = vunpack.c.h.b16 %v131
  %v2154 = vunpack.c.l.b16 %v132
  %v2155 = vunpack.c.l.b16 %v133
  %v2156 = vunpack.c.h.b16 %v133
  %v2157 = vunpack.c.l.b16 %v134
  %v2158 = vunpack.c.l.b16 %v135
  %v2159 = vunpack.c.h.b16 %v135
  %v2160 = vunpack.c.l.b16 %v136
  %v2161 = vunpack.c.l.b16 %v137
  %v2162 = vunpack.c.h.b16 %v137
  %v2163 = vunpack.c.l.b16 %v138
  %v2164 = vunpack.c.l.b16 %v139
  %v2165 = vunpack.c.h.b16 %v139
  %v2166 = vunpack.c.l.b16 %v140
  %v2167 = vunpack.c.l.b16 %v141
  %v2168 = vunpack.c.h.b16 %v141
  %v2169 = vunpack.c.l.b16 %v142
  %v2170 = vunpack.c.l.b16 %v143
  %v2171 = vunpack.c.h.b16 %v143
  %v2172 = vunpack.c.l.b16 %v144
  %v2173 = vunpack.c.l.b16 %v145
  %v2174 = vunpack.c.h.b16 %v145
  %v2175 = vunpack.c.l.b16 %v146
  %v2176 = vunpack.c.l.b16 %v147
  %v2177 = vunpack.c.h.b16 %v147
  %v2178 = vunpack.c.l.b16 %v148
  %v2179 = vunpack.c.l.b16 %v149
  %v2180 = vunpack.c.h.b16 %v149
  %v2181 = vunpack.c.l.b16 %v150
  %v2182 = vunpack.c.l.b16 %v151
  %v2183 = vunpack.c.h.b16 %v151
  %v2184 = vunpack.c.l.b16 %v152
  %v2185 = vunpack.c.l.b16 %v153
  %v2186 = vunpack.c.h.b16 %v153
  %v2187 = vunpack.c.l.b16 %v154
  %v2188 = vunpack.c.l.b16 %v155
  %v2189 = vunpack.c.h.b16 %v155
  %v2190 = vunpack.c.l.b16 %v156
  %v2191 = vunpack.c.l.b16 %v157
  %v2192 = vunpack.c.h.b16 %v157
  %v2193 = vunpack.c.l.b16 %v158
  %v2194 = vunpack.c.l.b16 %v159
  %v2195 = vunpack.c.h.b16 %v159
  %v2196 = vunpack.c.l.b16 %v160
  %v2197 = vunpack.c.l.b16 %v161
  %v2198 = vunpack.c.h.b16 %v161
  %v2199 = vunpack.c.l.b16 %v162
  %v2200 = vunpack.c.l.b16 %v163
  %v2201 = vunpack.c.h.b16 %v163
  %v2202 = vunpack.c.l.b16 %v164
  %v2203 = vunpack.c.l.b16 %v165
  %v2204 = vunpack.c.h.b16 %v165
  %v2205 = vunpack.c.l.b16 %v166
  %v2206 = vunpack.c.l.b16 %v167
  %v2207 = vunpack.c.h.b16 %v167
  %v2208 = vunpack.c.l.b16 %v168
  %v2209 = vunpack.c.l.b16 %v169
  %v2210 = vunpack.c.h.b16 %v169
  %v2211 = vunpack.c.l.b16 %v170
  %v2212 = vunpack.c.l.b16 %v171
  %v2213 = vunpack.c.h.b16 %v171
  %v2214 = vunpack.c.l.b16 %v172
  %v2215 = vunpack.c.l.b16 %v173
  %v2216 = vunpack.c.h.b16 %v173
  %v2217 = vunpack.c.l.b16 %v174
  %v2218 = vunpack.c.l.b16 %v175
  %v2219 = vunpack.c.h.b16 %v175
  %v2220 = vunpack.c.l.b16 %v176
  %v2221 = vunpack.c.l.b16 %v177
  %v2222 = vunpack.c.h.b16 %v177
  %v2223 = vunpack.c.l.b16 %v178
  %v2224 = vunpack.c.l.b16 %v179
  %v2225 = vunpack.c.h.b16 %v179
  %v2226 = vunpack.c.l.b16 %v180
  %v2227 = vunpack.c.l.b16 %v181
  %v2228 = vunpack.c.h.b16 %v181
  %v2229 = vunpack.c.l.b16 %v182
  %v2230 = vunpack.c.l.b16 %v183
  %v2231 = vunpack.c.h.b16 %v183
  %v2232 = vunpack.c.l.b16 %v184
  %v2233 = vunpack.c.l.b16 %v185
  %v2234 = vunpack.c.h.b16 %v185
  %v2235 = vunpack.c.l.b16 %v186
  %v2236 = vunpack.c.l.b16 %v187
  %v2237 = vunpack.c.h.b16 %v187
  %v2238 = vunpack.c.l.b16 %v188
  %v2239 = vunpack.c.l.b16 %v189
  %v2240 = vunpack.c.h.b16 %v189
  %v2241 = vunpack.c.l.b16 %v190
  %v2242 = vunpack.c.l.b16 %v191
  %v2243 = vunpack.c.h.b16 %v191
  %v2244 = vunpack.c.l.b16 %v192
  %v2245 = vunpack.c.l.b16 %v193
  %v2246 = vunpack.c.h.b16 %v193
  %v2247 = vunpack.c.l.b16 %v194
  %v2248 = vunpack.c.l.b16 %v195
  %v2249 = vunpack.c.h.b16 %v195
  %v2250 = vunpack.c.l.b16 %v196
  %v2251 = vunpack.c.l.b16 %v197
  %v2252 = vunpack.c.h.b16 %v197
  %v2253 = vunpack.c.l.b16 %v198
  %v2254 = vunpack.c.l.b16 %v199
  %v2255 = vunpack.c.h.b16 %v199
  %v2256 = vunpack.c.l.b16 %v200
  %v2257 = vunpack.c.l.b16 %v201
  %v2258 = vunpack.c.h.b16 %v201
  %v2259 = vunpack.c.l.b16 %v202
  %v2260 = vunpack.c.l.b16 %v203
  %v2261 = vunpack.c.h.b16 %v203
  %v2262 = vunpack.c.l.b16 %v204
  %v2263 = vunpack.c.l.b16 %v205
  %v2264 = vunpack.c.h.b16 %v205
  %v2265 = vunpack.c.l.b16 %v206
  %v2266 = vunpack.c.l.b16 %v207
  %v2267 = vunpack.c.h.b16 %v207
  %v2268 = vunpack.c.l.b16 %v208
  %v2269 = vunpack.c.l.b16 %v209
  %v2270 = vunpack.c.h.b16 %v209
  %v2271 = vunpack.c.l.b16 %v210
  %v2272 = vunpack.c.l.b16 %v211
  %v2273 = vunpack.c.h.b16 %v211
  %v2274 = vunpack.c.l.b16 %v212
  %v2275 = vunpack.c.l.b16 %v213
  %v2276 = vunpack.c.h.b16 %v213
  %v2277 = vunpack.c.l.b16 %v214
  %v2278 = vunpack.c.l.b16 %v215
  %v2279 = vunpack.c.h.b16 %v215
  %v2280 = vunpack.c.l.b16 %v216
  %v2281 = vunpack.c.l.b16 %v217
  %v2282 = vunpack.c.h.b16 %v217
  %v2283 = vunpack.c.l.b16 %v218
  %v2284 = vunpack.c.l.b16 %v219
  %v2285 = vunpack.c.h.b16 %v219
  %v2286 = vunpack.c.l.b16 %v220
  %v2287 = vunpack.c.l.b16 %v221
  %v2288 = vunpack.c.h.b16 %v221
  %v2289 = vunpack.c.l.b16 %v222
  %v2290 = vunpack.c.l.b16 %v223
  %v2291 = vunpack.c.h.b16 %v223
  %v2292 = vunpack.c.l.b16 %v224
  %v2293 = vunpack.c.l.b16 %v225
  %v2294 = vunpack.c.h.b16 %v225
  %v2295 = vunpack.c.l.b16 %v226
  %v2296 = vunpack.c.l.b16 %v227
  %v2297 = vunpack.c.h.b16 %v227
  %v2298 = vunpack.c.l.b16 %v228
  %v2299 = vunpack.c.l.b16 %v229
  %v2300 = vunpack.c.h.b16 %v229
  %v2301 = vunpack.c.l.b16 %v230
  %v2302 = vunpack.c.l.b16 %v231
  %v2303 = vunpack.c.h.b16 %v231
  %v2304 = vunpack.c.l.b16 %v232
  %v2305 = vunpack.c.l.b16 %v233
  %v2306 = vunpack.c.h.b16 %v233
  %v2307 = vunpack.c.l.b16 %v234
  %v2308 = vunpack.c.l.b16 %v235
  %v2309 = vunpack.c.h.b16 %v235
  %v2310 = vunpack.c.l.b16 %v236
  %v2311 = vunpack.c.l.b16 %v237
  %v2312 = vunpack.c.h.b16 %v237
  %v2313 = vunpack.c.l.b16 %v238
  %v2314 = vunpack.c.l.b16 %v239
  %v2315 = vunpack.c.h.b16 %v239
  %v2316 = vunpack.c.l.b16 %v240
  %v2317 = vunpack.c.l.b16 %v241
  %v2318 = vunpack.c.h.b16 %v241
  %v2319 = vunpack.c.l.b16 %v242
  %v2320 = vunpack.c.l.b16 %v243
  %v2321 = vunpack.c.h.b16 %v243
  %v2322 = vunpack.c.l.b16 %v244
  %v2323 = vunpack.c.l.b16 %v245
  %v2324 = vunpack.c.h.b16 %v245
  %v2325 = vunpack.c.l.b16 %v246
  %v2326 = vunpack.c.l.b16 %v247
  %v2327 = vunpack.c.h.b16 %v247
  %v2328 = vunpack.c.l.b16 %v248
  %v2329 = vunpack.c.l.b16 %v249
  %v2330 = vunpack.c.h.b16 %v249
  %v2331 = vunpack.c.l.b16 %v250
  %v2332 = vunpack.c.l.b16 %v251
  %v2333 = vunpack.c.h.b16 %v251
  %v2334 = vunpack.c.l.b16 %v252
  %v2335 = vunpack.c.l.b16 %v253
  %v2336 = vunpack.c.h.b16 %v253
  %v2337 = vunpack.c.l.b16 %v254
  %v2338 = vunpack.c.l.b16 %v255
  %v2339 = vunpack.c.h.b16 %v255
  %v2340 = vunpack.c.l.b16 %v256
  %v2341 = vunpack.c.l.b16 %v257
  %v2342 = vunpack.c.h.b16 %v257
  %v2343 = vunpack.c.l.b16 %v258
  %v2344 = vunpack.c.l.b16 %v259
  %v2345 = vunpack.c.h.b16 %v259
  %v2346 = vunpack.c.l.b16 %v260
  %v2347 = vunpack.c.l.b16 %v261
  %v2348 = vunpack.c.h.b16 %v261
  %v2349 = vunpack.c.l.b16 %v262
  %v2350 = vunpack.c.l.b16 %v263
  %v2351 = vunpack.c.h.b16 %v263
  %v2352 = vunpack.c.l.b16 %v264
  %v2353 = vunpack.c.l.b16 %v265
  %v2354 = vunpack.c.h.b16 %v265
  %v2355 = vunpack.c.l.b16 %v266
  %v2356 = vunpack.c.l.b16 %v267
  %v2357 = vunpack.c.h.b16 %v267
  %v2358 = vunpack.c.l.b16 %v268
  %v2359 = vunpack.c.l.b16 %v269
  %v2360 = vunpack.c.h.b16 %v269
  %v2361 = vunpack.c.l.b16 %v270
  %v2362 = vunpack.c.l.b16 %v271
  %v2363 = vunpack.c.h.b16 %v271
  %v2364 = vunpack.c.l.b16 %v272
  %v2365 = vunpack.c.l.b16 %v273
  %v2366 = vunpack.c.h.b16 %v273
  %v2367 = vunpack.c.l.b16 %v274
  %v2368 = vunpack.c.l.b16 %v275
  %v2369 = vunpack.c.h.b16 %v275
  %v2370 = vunpack.c.l.b16 %v276
  %v2371 = vunpack.c.l.b16 %v277
  %v2372 = vunpack.c.h.b16 %v277
  %v2373 = vunpack.c.l.b16 %v278
  %v2374 = vunpack.c.l.b16 %v279
  %v2375 = vunpack.c.h.b16 %v279
  %v2376 = vunpack.c.l.b16 %v280
  %v2377 = vunpack.c.l.b16 %v281
  %v2378 = vunpack.c.h.b16 %v281
  %v2379 = vunpack.c.l.b16 %v282
  %v2380 = vunpack.c.l.b16 %v283
  %v2381 = vunpack.c.h.b16 %v283
  %v2382 = vunpack.c.l.b16 %v284
  %v2383 = vunpack.c.l.b16 %v285
  %v2384 = vunpack.c.h.b16 %v285
  %v2385 = vunpack.c.l.b16 %v286
  %v2386 = vunpack.c.l.b16 %v287
  %v2387 = vunpack.c.h.b16 %v287
  %v2388 = vunpack.c.l.b16 %v288
  %v2389 = vunpack.c.l.b16 %v289
  %v2390 = vunpack.c.h.b16 %v289
  %v2391 = vunpack.c.l.b16 %v290
  %v2392 = vunpack.c.l.b16 %v291
  %v2393 = vunpack.c.h.b16 %v291
  %v2394 = vunpack.c.l.b16 %v292
  %v2395 = vunpack.c.l.b16 %v293
  %v2396 = vunpack.c.h.b16 %v293
  %v2397 = vunpack.c.l.b16 %v294
  %v2398 = vunpack.c.l.b16 %v295
  %v2399 = vunpack.c.h.b16 %v295
  %v2400 = vunpack.c.l.b16 %v296
  %v2401 = vunpack.c.l.b16 %v297
  %v2402 = vunpack.c.h.b16 %v297
  %v2403 = vunpack.c.l.b16 %v298
  %v2404 = vunpack.c.l.b16 %v299
  %v2405 = vunpack.c.h.b16 %v299
  %v2406 = vunpack.c.l.b16 %v300
  %v2407 = vunpack.c.l.b16 %v301
  %v2408 = vunpack.c.h.b16 %v301
  %v2409 = vunpack.c.l.b16 %v302
  %v2410 = vunpack.c.l.b16 %v303
  %v2411 = vunpack.c.h.b16 %v303
  %v2412 = vunpack.c.l.b16 %v304
  %v2413 = vunpack.c.l.b16 %v305
  %v2414 = vunpack.c.h.b16 %v305
  %v2415 = vunpack.c.l.b16 %v306
  %v2416 = vunpack.c.l.b16 %v307
  %v2417 = vunpack.c.h.b16 %v307
  %v2418 = vunpack.c.l.b16 %v308
  %v2419 = vunpack.c.l.b16 %v309
  %v2420 = vunpack.c.h.b16 %v309
  %v2421 = vunpack.c.l.b16 %v310
  %v2422 = vunpack.c.l.b16 %v311
  %v2423 = vunpack.c.h.b16 %v311
  %v2424 = vunpack.c.l.b16 %v312
  %v2425 = vunpack.c.l.b16 %v313
  %v2426 = vunpack.c.h.b16 %v313
  %v2427 = vunpack.c.l.b16 %v314
  %v2428 = vunpack.c.l.b16 %v315
  %v2429 = vunpack.c.h.b16 %v315
  %v2430 = vunpack.c.l.b16 %v316
  %v2431 = vunpack.c.l.b16 %v317
  %v2432 = vunpack.c.h.b16 %v317
  %v2433 = vunpack.c.l.b16 %v318
  %v2434 = vunpack.c.l.b16 %v319
  %v2435 = vunpack.c.h.b16 %v319
  %v2436 = vunpack.c.l.b16 %v320
  %v2437 = vunpack.c.l.b16 %v321
  %v2438 = vunpack.c.h.b16 %v321
  %v2439 = vunpack.c.l.b16 %v322
  %v2440 = vunpack.c.l.b16 %v323
  %v2441 = vunpack.c.h.b16 %v323
  %v2442 = vunpack.c.l.b16 %v324
  %v2443 = vunpack.c.l.b16 %v325
  %v2444 = vunpack.c.h.b16 %v325
  %v2445 = vunpack.c.l.b16 %v326
  %v2446 = vunpack.c.l.b16 %v327
  %v2447 = vunpack.c.h.b16 %v327
  %v2448 = vunpack.c.l.b16 %v328
  %v2449 = vunpack.c.l.b16 %v329
  %v2450 = vunpack.c.h.b16 %v329
  %v2451 = vunpack.c.l.b16 %v330
  %v2452 = vunpack.c.l.b16 %v331
  %v2453 = vunpack.c.h.b16 %v331
  %v2454 = vunpack.c.l.b16 %v332
  %v2455 = vunpack.c.l.b16 %v333
  %v2456 = vunpack.c.h.b16 %v333
  %v2457 = vunpack.c.l.b16 %v334
  %v2458 = vunpack.c.l.b16 %v335
  %v2459 = vunpack.c.h.b16 %v335
  %v2460 = vunpack.c.l.b16 %v336
  %v2461 = vunpack.c.l.b16 %v337
  %v2462 = vunpack.c.h.b16 %v337
  %v2463 = vunpack.c.l.b16 %v338
  %v2464 = vunpack.c.l.b16 %v339
  %v2465 = vunpack.c.h.b16 %v339
  %v2466 = vunpack.c.l.b16 %v340
  %v2467 = vunpack.c.l.b16 %v341
  %v2468 = vunpack.c.h.b16 %v341
  %v2469 = vunpack.c.l.b16 %v342
  %v2470 = vunpack.c.l.b16 %v343
  %v2471 = vunpack.c.h.b16 %v343
  %v2472 = vunpack.c.l.b16 %v344
  %v2473 = vunpack.c.l.b16 %v345
  %v2474 = vunpack.c.h.b16 %v345
  %v2475 = vunpack.c.l.b16 %v346
  %v2476 = vunpack.c.l.b16 %v347
  %v2477 = vunpack.c.h.b16 %v347
  %v2478 = vunpack.c.l.b16 %v348
  %v2479 = vunpack.c.l.b16 %v349
  %v2480 = vunpack.c.h.b16 %v349
  %v2481 = vunpack.c.l.b16 %v350
  %v2482 = vunpack.c.l.b16 %v351
  %v2483 = vunpack.c.h.b16 %v351
  %v2484 = vunpack.c.l.b16 %v352
  %v2485 = vunpack.c.l.b16 %v353
  %v2486 = vunpack.c.h.b16 %v353
  %v2487 = vunpack.c.l.b16 %v354
  %v2488 = vunpack.c.l.b16 %v355
  %v2489 = vunpack.c.h.b16 %v355
  %v2490 = vunpack.c.l.b16 %v356
  %v2491 = vunpack.c.l.b16 %v357
  %v2492 = vunpack.c.h.b16 %v357
  %v2493 = vunpack.c.l.b16 %v358
  %v2494 = vunpack.c.l.b16 %v359
  %v2495 = vunpack.c.h.b16 %v359
  %v2496 = vunpack.c.l.b16 %v360
  %v2497 = vunpack.c.l.b16 %v361
  %v2498 = vunpack.c.h.b16 %v361
  %v2499 = vunpack.c.l.b16 %v362
  %v2500 = vunpack.c.l.b16 %v363
  %v2501 = vunpack.c.h.b16 %v363
  %v2502 = vunpack.c.l.b16 %v364
  %v2503 = vunpack.c.l.b16 %v365
  %v2504 = vunpack.c.h.b16 %v365
  %v2505 = vunpack.c.l.b16 %v366
  %v2506 = vunpack.c.l.b16 %v367
  %v2507 = vunpack.c.h.b16 %v367
  %v2508 = vunpack.c.l.b16 %v368
  %v2509 = vunpack.c.l.b16 %v369
  %v2510 = vunpack.c.h.b16 %v369
  %v2511 = vunpack.c.l.b16 %v370
  %v2512 = vunpack.c.l.b16 %v371
  %v2513 = vunpack.c.h.b16 %v371
  %v2514 = vunpack.c.l.b16 %v372
  %v2515 = vunpack.c.l.b16 %v373
  %v2516 = vunpack.c.h.b16 %v373
  %v2517 = vunpack.c.l.b16 %v374
  %v2518 = vunpack.c.l.b16 %v375
  %v2519 = vunpack.c.h.b16 %v375
  %v2520 = vunpack.c.l.b16 %v376
  %v2521 = vunpack.c.l.b16 %v377
  %v2522 = vunpack.c.h.b16 %v377
  %v2523 = vunpack.c.l.b16 %v378
  %v2524 = vunpack.c.l.b16 %v379
  %v2525 = vunpack.c.h.b16 %v379
  %v2526 = vunpack.c.l.b16 %v380
  %v2527 = vunpack.c.l.b16 %v381
  %v2528 = vunpack.c.h.b16 %v381
  %v2529 = vunpack.c.l.b16 %v382
  %v2530 = vunpack.c.l.b16 %v383
  %v2531 = vunpack.c.h.b16 %v383
  %v2532 = vunpack.c.l.b16 %v384
  %v2533 = vunpack.c.l.b16 %v385
  %v2534 = vunpack.c.h.b16 %v385
  %v2535 = vunpack.c.l.b16 %v386
  %v2536 = vunpack.c.l.b16 %v387
  %v2537 = vunpack.c.h.b16 %v387
  %v2538 = vunpack.c.l.b16 %v388
  %v2539 = vunpack.c.l.b16 %v389
  %v2540 = vunpack.c.h.b16 %v389
  %v2541 = vunpack.c.l.b16 %v390
  %v2542 = vunpack.c.l.b16 %v391
  %v2543 = vunpack.c.h.b16 %v391
  %v2544 = vunpack.c.l.b16 %v392
  %v2545 = vunpack.c.l.b16 %v393
  %v2546 = vunpack.c.h.b16 %v393
  %v2547 = vunpack.c.l.b16 %v394
  %v2548 = vunpack.c.l.b16 %v395
  %v2549 = vunpack.c.h.b16 %v395
  %v2550 = vunpack.c.l.b16 %v396
  %v2551 = vunpack.c.l.b16 %v397
  %v2552 = vunpack.c.h.b16 %v397
  %v2553 = vunpack.c.l.b16 %v398
  %v2554 = vunpack.c.l.b16 %v399
  %v2555 = vunpack.c.h.b16 %v399
  %v2556 = vunpack.c.l.b16 %v400
  %v2557 = vunpack.c.l.b16 %v401
  %v2558 = vunpack.c.h.b16 %v401
  %v2559 = vunpack.c.l.b16 %v402
  %v2560 = vunpack.c.l.b16 %v403
  %v2561 = vunpack.c.h.b16 %v403
  %v2562 = vunpack.c.l.b16 %v404
  %v2563 = vunpack.c.l.b16 %v405
  %v2564 = vunpack.c.h.b16 %v405
  %v2565 = vunpack.c.l.b16 %v406
  %v2566 = vunpack.c.l.b16 %v407
  %v2567 = vunpack.c.h.b16 %v407
  %v2568 = vunpack.c.l.b16 %v408
  %v2569 = vunpack.c.l.b16 %v409
  %v2570 = vunpack.c.h.b16 %v409
  %v2571 = vunpack.c.l.b16 %v410
  %v2572 = vunpack.c.l.b16 %v411
  %v2573 = vunpack.c.h.b16 %v411
  %v2574 = vunpack.c.l.b16 %v412
  %v2575 = vunpack.c.l.b16 %v413
  %v2576 = vunpack.c.h.b16 %v413
  %v2577 = vunpack.c.l.b16 %v414
  %v2578 = vunpack.c.l.b16 %v415
  %v2579 = vunpack.c.h.b16 %v415
  %v2580 = vunpack.c.l.b16 %v416
  %v2581 = vunpack.c.l.b16 %v417
  %v2582 = vunpack.c.h.b16 %v417
  %v2583 = vunpack.c.l.b16 %v418
  %v2584 = vunpack.c.l.b16 %v419
  %v2585 = vunpack.c.h.b16 %v419
  %v2586 = vunpack.c.l.b16 %v420
  %v2587 = vunpack.c.l.b16 %v421
  %v2588 = vunpack.c.h.b16 %v421
  %v2589 = vunpack.c.l.b16 %v422
  %v2590 = vunpack.c.l.b16 %v423
  %v2591 = vunpack.c.h.b16 %v423
  %v2592 = vunpack.c.l.b16 %v424
  %v2593 = vunpack.c.l.b16 %v425
  %v2594 = vunpack.c.h.b16 %v425
  %v2595 = vunpack.c.l.b16 %v426
  %v2596 = vunpack.c.l.b16 %v427
  %v2597 = vunpack.c.h.b16 %v427
  %v2598 = vunpack.c.l.b16 %v428
  %v2599 = vunpack.c.l.b16 %v429
  %v2600 = vunpack.c.h.b16 %v429
  %v2601 = vunpack.c.l.b16 %v430
  %v2602 = vunpack.c.l.b16 %v431
  %v2603 = vunpack.c.h.b16 %v431
  %v2604 = vunpack.c.l.b16 %v432
  %v2605 = vunpack.c.l.b16 %v433
  %v2606 = vunpack.c.h.b16 %v433
  %v2607 = vunpack.c.l.b16 %v434
  %v2608 = vunpack.c.l.b16 %v435
  %v2609 = vunpack.c.h.b16 %v435
  %v2610 = vunpack.c.l.b16 %v436
  %v2611 = vunpack.c.l.b16 %v437
  %v2612 = vunpack.c.h.b16 %v437
  %v2613 = vunpack.c.l.b16 %v438
  %v2614 = vunpack.c.l.b16 %v439
  %v2615 = vunpack.c.h.b16 %v439
  %v2616 = vunpack.c.l.b16 %v440
  %v2617 = vunpack.c.l.b16 %v441
  %v2618 = vunpack.c.h.b16 %v441
  %v2619 = vunpack.c.l.b16 %v442
  %v2620 = vunpack.c.l.b16 %v443
  %v2621 = vunpack.c.h.b16 %v443
  %v2622 = vunpack.c.l.b16 %v444
  %v2623 = vunpack.c.l.b16 %v445
  %v2624 = vunpack.c.h.b16 %v445
  %v2625 = vunpack.c.l.b16 %v446
  %v2626 = vunpack.c.l.b16 %v447
  %v2627 = vunpack.c.h.b16 %v447
  %v2628 = vunpack.c.l.b16 %v448
  %v2629 = vunpack.c.l.b16 %v449
  %v2630 = vunpack.c.h.b16 %v449
  %v2631 = vunpack.c.l.b16 %v450
  %v2632 = vunpack.c.l.b16 %v451
  %v2633 = vunpack.c.h.b16 %v451
  %v2634 = vunpack.c.l.b16 %v452
  %v2635 = vunpack.c.l.b16 %v453
  %v2636 = vunpack.c.h.b16 %v453
  %v2637 = vunpack.c.l.b16 %v454
  %v2638 = vunpack.c.l.b16 %v455
  %v2639 = vunpack.c.h.b16 %v455
  %v2640 = vunpack.c.l.b16 %v456
  %v2641 = vunpack.c.l.b16 %v457
  %v2642 = vunpack.c.h.b16 %v457
  %v2643 = vunpack.c.l.b16 %v458
  %v2644 = vunpack.c.l.b16 %v459
  %v2645 = vunpack.c.h.b16 %v459
  %v2646 = vunpack.c.l.b16 %v460
  %v2647 = vunpack.c.l.b16 %v461
  %v2648 = vunpack.c.h.b16 %v461
  %v2649 = vunpack.c.l.b16 %v462
  %v2650 = vunpack.c.l.b16 %v463
  %v2651 = vunpack.c.h.b16 %v463
  %v2652 = vunpack.c.l.b16 %v464
  %v2653 = vunpack.c.l.b16 %v465
  %v2654 = vunpack.c.h.b16 %v465
  %v2655 = vunpack.c.l.b16 %v466
  %v2656 = vunpack.c.l.b16 %v467
  %v2657 = vunpack.c.h.b16 %v467
  %v2658 = vunpack.c.l.b16 %v468
  %v2659 = vunpack.c.l.b16 %v469
  %v2660 = vunpack.c.h.b16 %v469
  %v2661 = vunpack.c.l.b16 %v470
  %v2662 = vunpack.c.l.b16 %v471
  %v2663 = vunpack.c.h.b16 %v471
  %v2664 = vunpack.c.l.b16 %v472
  %v2665 = vunpack.c.l.b16 %v473
  %v2666 = vunpack.c.h.b16 %v473
  %v2667 = vunpack.c.l.b16 %v474
  %v2668 = vunpack.c.l.b16 %v475
  %v2669 = vunpack.c.h.b16 %v475
  %v2670 = vunpack.c.l.b16 %v476
  %v2671 = vunpack.c.l.b16 %v477
  %v2672 = vunpack.c.h.b16 %v477
  %v2673 = vunpack.c.l.b16 %v478
  %v2674 = vunpack.c.l.b16 %v479
  %v2675 = vunpack.c.h.b16 %v479
  %v2676 = vunpack.c.l.b16 %v480
  %v2677 = vunpack.c.l.b16 %v481
  %v2678 = vunpack.c.h.b16 %v481
  %v2679 = vunpack.c.l.b16 %v482
  %v2680 = vunpack.c.l.b16 %v483
  %v2681 = vunpack.c.h.b16 %v483
  %v2682 = vunpack.c.l.b16 %v484
  %v2683 = vunpack.c.l.b16 %v485
  %v2684 = vunpack.c.h.b16 %v485
  %v2685 = vunpack.c.l.b16 %v486
  %v2686 = vunpack.c.l.b16 %v487
  %v2687 = vunpack.c.h.b16 %v487
  %v2688 = vunpack.c.l.b16 %v488
  %v2689 = vunpack.c.l.b16 %v489
  %v2690 = vunpack.c.h.b16 %v489
  %v2691 = vunpack.c.l.b16 %v490
  %v2692 = vunpack.c.l.b16 %v491
  %v2693 = vunpack.c.h.b16 %v491
  %v2694 = vunpack.c.l.b16 %v492
  %v2695 = vunpack.c.l.b16 %v493
  %v2696 = vunpack.c.h.b16 %v493
  %v2697 = vunpack.c.l.b16 %v494
  %v2698 = vunpack.c.l.b16 %v495
  %v2699 = vunpack.c.h.b16 %v495
  %v2700 = vunpack.c.l.b16 %v496
  %v2701 = vunpack.c.l.b16 %v497
  %v2702 = vunpack.c.h.b16 %v497
  %v2703 = vunpack.c.l.b16 %v498
  %v2704 = vunpack.c.l.b16 %v499
  %v2705 = vunpack.c.h.b16 %v499
  %v2706 = vunpack.c.l.b16 %v500
  %v2707 = vunpack.c.l.b16 %v501
  %v2708 = vunpack.c.h.b16 %v501
  %v2709 = vunpack.c.l.b16 %v502
  %v2710 = vunpack.c.l.b16 %v503
  %v2711 = vunpack.c.h.b16 %v503
  %v2712 = vunpack.c.l.b16 %v504
  %v2713 = vunpack.c.l.b16 %v505
  %v2714 = vunpack.c.h.b16 %v505
  %v2715 = vunpack.c.l.b16 %v506
  %v2716 = vunpack.c.l.b16 %v507
  %v2717 = vunpack.c.h.b16 %v507
  %v2718 = vunpack.c.l.b16 %v508
  %v2719 = vunpack.c.l.b16 %v509
  %v2720 = vunpack.c.h.b16 %v509
  %v2721 = vunpack.c.l.b16 %v510
  %v2722 = vunpack.c.l.b16 %v511
  %v2723 = vunpack.c.h.b16 %v511
  %v2724 = vunpack.c.l.b16 %v512
  %v2725 = vunpack.c.l.b16 %v513
  %v2726 = vunpack.c.h.b16 %v513
  %v2727 = vunpack.c.l.b16 %v514
  %v2728 = vunpack.c.l.b16 %v515
  %v2729 = vunpack.c.h.b16 %v515
  %v2730 = vunpack.c.l.b16 %v516
  %v2731 = vunpack.c.l.b16 %v517
  %v2732 = vunpack.c.h.b16 %v517
  %v2733 = vunpack.c.l.b16 %v518
  %v2734 = vunpack.c.l.b16 %v519
  %v2735 = vunpack.c.h.b16 %v519
  %v2736 = vunpack.c.l.b16 %v520
  %v2737 = vunpack.c.l.b16 %v521
  %v2738 = vunpack.c.h.b16 %v521
  %v2739 = vunpack.c.l.b16 %v522
  %v2740 = vunpack.c.l.b16 %v523
  %v2741 = vunpack.c.h.b16 %v523
  %v2742 = vunpack.c.l.b16 %v524
  %v2743 = vunpack.c.l.b16 %v525
  %v2744 = vunpack.c.h.b16 %v525
  %v2745 = vunpack.c.l.b16 %v526
  %v2746 = vunpack.c.l.b16 %v527
  %v2747 = vunpack.c.h.b16 %v527
  %v2748 = vunpack.c.l.b16 %v528
  %v2749 = vunpack.c.l.b16 %v529
  %v2750 = vunpack.c.h.b16 %v529
  %v2751 = vunpack.c.l.b16 %v530
  %v2752 = vunpack.c.l.b16 %v531
  %v2753 = vunpack.c.h.b16 %v531
  %v2754 = vunpack.c.l.b16 %v532
  %v2755 = vunpack.c.l.b16 %v533
  %v2756 = vunpack.c.h.b16 %v533
  %v2757 = vunpack.c.l.b16 %v534
  %v2758 = vunpack.c.l.b16 %v535
  %v2759 = vunpack.c.h.b16 %v535
  %v2760 = vunpack.c.l.b16 %v536
  %v2761 = vunpack.c.l.b16 %v537
  %v2762 = vunpack.c.h.b16 %v537
  %v2763 = vunpack.c.l.b16 %v538
  %v2764 = vunpack.c.l.b16 %v539
  %v2765 = vunpack.c.h.b16 %v539
  %v2766 = vunpack.c.l.b16 %v540
  %v2767 = vunpack.c.l.b16 %v541
  %v2768 = vunpack.c.h.b16 %v541
  %v2769 = vunpack.c.l.b16 %v542
  %v2770 = vunpack.c.l.b16 %v543
  %v2771 = vunpack.c.h.b16 %v543
  %v2772 = vunpack.c.l.b16 %v544
  %v2773 = vunpack.c.l.b16 %v545
  %v2774 = vunpack.c.h.b16 %v545
  %v2775 = vunpack.c.l.b16 %v546
  %v2776 = vunpack.c.l.b16 %v547
  %v2777 = vunpack.c.h.b16 %v547
  %v2778 = vunpack.c.l.b16 %v548
  %v2779 = vunpack.c.l.b16 %v549
  %v2780 = vunpack.c.h.b16 %v549
  %v2781 = vunpack.c.l.b16 %v550
  %v2782 = vunpack.c.l.b16 %v551
  %v2783 = vunpack.c.h.b16 %v551
  %v2784 = vunpack.c.l.b16 %v552
  %v2785 = vunpack.c.l.b16 %v553
  %v2786 = vunpack.c.h.b16 %v553
  %v2787 = vunpack.c.l.b16 %v554
  %v2788 = vunpack.c.l.b16 %v555
  %v2789 = vunpack.c.h.b16 %v555
  %v2790 = vunpack.c.l.b16 %v556
  %v2791 = vunpack.c.l.b16 %v557
  %v2792 = vunpack.c.h.b16 %v557
  %v2793 = vunpack.c.l.b16 %v558
  %v2794 = vunpack.c.l.b16 %v559
  %v2795 = vunpack.c.h.b16 %v559
  %v2796 = vunpack.c.l.b16 %v560
  %v2797 = vunpack.c.l.b16 %v561
  %v2798 = vunpack.c.h.b16 %v561
  %v2799 = vunpack.c.l.b16 %v562
  %v2800 = vunpack.c.l.b16 %v563
  %v2801 = vunpack.c.h.b16 %v563
  %v2802 = vunpack.c.l.b16 %v564
  %v2803 = vunpack.c.l.b16 %v565
  %v2804 = vunpack.c.h.b16 %v565
  %v2805 = vunpack.c.l.b16 %v566
  %v2806 = vunpack.c.l.b16 %v567
  %v2807 = vunpack.c.h.b16 %v567
  %v2808 = vunpack.c.l.b16 %v568
  %v2809 = vunpack.c.l.b16 %v569
  %v2810 = vunpack.c.h.b16 %v569
  %v2811 = vunpack.c.l.b16 %v570
  %v2812 = vunpack.c.l.b16 %v571
  %v2813 = vunpack.c.h.b16 %v571
  %v2814 = vunpack.c.l.b16 %v572
  %v2815 = vunpack.c.l.b16 %v573
  %v2816 = vunpack.c.h.b16 %v573
  %v2817 = vunpack.c.l.b16 %v574
  %v2818 = vunpack.c.l.b16 %v575
  %v2819 = vunpack.c.h.b16 %v575
  %v2820 = vunpack.c.l.b16 %v576
  %v2821 = vunpack.c.l.b16 %v577
  %v2822 = vunpack.c.h.b16 %v577
  %v2823 = vunpack.c.l.b16 %v578
  %v2824 = vunpack.c.l.b16 %v579
  %v2825 = vunpack.c.h.b16 %v579
  %v2826 = vunpack.c.l.b16 %v580
  %v2827 = vunpack.c.l.b16 %v581
  %v2828 = vunpack.c.h.b16 %v581
  %v2829 = vunpack.c.l.b16 %v582
  %v2830 = vunpack.c.l.b16 %v583
  %v2831 = vunpack.c.h.b16 %v583
  %v2832 = vunpack.c.l.b16 %v584
  %v2833 = vunpack.c.l.b16 %v585
  %v2834 = vunpack.c.h.b16 %v585
  %v2835 = vunpack.c.l.b16 %v586
  %v2836 = vunpack.c.l.b16 %v587
  %v2837 = vunpack.c.h.b16 %v587
  %v2838 = vunpack.c.l.b16 %v588
  %v2839 = vunpack.c.l.b16 %v589
  %v2840 = vunpack.c.h.b16 %v589
  %v2841 = vunpack.c.l.b16 %v590
  %v2842 = vunpack.c.l.b16 %v591
  %v2843 = vunpack.c.h.b16 %v591
  %v2844 = vunpack.c.l.b16 %v592
  %v2845 = vunpack.c.l.b16 %v593
  %v2846 = vunpack.c.h.b16 %v593
  %v2847 = vunpack.c.l.b16 %v594
  %v2848 = vunpack.c.l.b16 %v595
  %v2849 = vunpack.c.h.b16 %v595
  %v2850 = vunpack.c.l.b16 %v596
  %v2851 = vunpack.c.l.b16 %v597
  %v2852 = vunpack.c.h.b16 %v597
  %v2853 = vunpack.c.l.b16 %v598
  %v2854 = vunpack.c.l.b16 %v599
  %v2855 = vunpack.c.h.b16 %v599
  %v2856 = vunpack.c.l.b16 %v600
  %v2857 = vunpack.c.l.b16 %v601
  %v2858 = vunpack.c.h.b16 %v601
  %v2859 = vunpack.c.l.b16 %v602
  %v2860 = vunpack.c.l.b16 %v603
  %v2861 = vunpack.c.h.b16 %v603
  %v2862 = vunpack.c.l.b16 %v604
  %v2863 = vunpack.c.l.b16 %v605
  %v2864 = vunpack.c.h.b16 %v605
  %v2865 = vunpack.c.l.b16 %v606
  %v2866 = vunpack.c.l.b16 %v607
  %v2867 = vunpack.c.h.b16 %v607
  %v2868 = vunpack.c.l.b16 %v608
  %v2869 = vunpack.c.l.b16 %v609
  %v2870 = vunpack.c.h.b16 %v609
  %v2871 = vunpack.c.l.b16 %v610
  %v2872 = vunpack.c.l.b16 %v611
  %v2873 = vunpack.c.h.b16 %v611
  %v2874 = vunpack.c.l.b16 %v612
  %v2875 = vunpack.c.l.b16 %v613
  %v2876 = vunpack.c.h.b16 %v613
  %v2877 = vunpack.c.l.b16 %v614
  %v2878 = vunpack.c.l.b16 %v615
  %v2879 = vunpack.c.h.b16 %v615
  %v2880 = vunpack.c.l.b16 %v616
  %v2881 = vunpack.c.l.b16 %v617
  %v2882 = vunpack.c.h.b16 %v617
  %v2883 = vunpack.c.l.b16 %v618
  %v2884 = vunpack.c.l.b16 %v619
  %v2885 = vunpack.c.h.b16 %v619
  %v2886 = vunpack.c.l.b16 %v620
  %v2887 = vunpack.c.l.b16 %v621
  %v2888 = vunpack.c.h.b16 %v621
  %v2889 = vunpack.c.l.b16 %v622
  %v2890 = vunpack.c.l.b16 %v623
  %v2891 = vunpack.c.h.b16 %v623
  %v2892 = vunpack.c.l.b16 %v624
  %v2893 = vunpack.c.l.b16 %v625
  %v2894 = vunpack.c.h.b16 %v625
  %v2895 = vunpack.c.l.b16 %v626
  %v2896 = vunpack.c.l.b16 %v627
  %v2897 = vunpack.c.h.b16 %v627
  %v2898 = vunpack.c.l.b16 %v628
  %v2899 = vunpack.c.l.b16 %v629
  %v2900 = vunpack.c.h.b16 %v629
  %v2901 = vunpack.c.l.b16 %v630
  %v2902 = vunpack.c.l.b16 %v631
  %v2903 = vunpack.c.h.b16 %v631
  %v2904 = vunpack.c.l.b16 %v632
  %v2905 = vunpack.c.l.b16 %v633
  %v2906 = vunpack.c.h.b16 %v633
  %v2907 = vunpack.c.l.b16 %v634
  %v2908 = vunpack.c.l.b16 %v635
  %v2909 = vunpack.c.h.b16 %v635
  %v2910 = vunpack.c.l.b16 %v636
  %v2911 = vunpack.c.l.b16 %v637
  %v2912 = vunpack.c.h.b16 %v637
  %v2913 = vunpack.c.l.b16 %v638
  %v2914 = vunpack.c.l.b16 %v639
  %v2915 = vunpack.c.h.b16 %v639
  %v2916 = vunpack.c.l.b16 %v640
  %v2917 = vunpack.c.l.b16 %v641
  %v2918 = vunpack.c.h.b16 %v641
  %v2919 = vunpack.c.l.b16 %v642
  %v2920 = vunpack.c.l.b16 %v643
  %v2921 = vunpack.c.h.b16 %v643
  %v2922 = vunpack.c.l.b16 %v644
  %v2923 = vunpack.c.l.b16 %v645
  %v2924 = vunpack.c.h.b16 %v645
  %v2925 = vunpack.c.l.b16 %v646
  %v2926 = vunpack.c.l.b16 %v647
  %v2927 = vunpack.c.h.b16 %v647
  %v2928 = vunpack.c.l.b16 %v648
  %v2929 = vunpack.c.l.b16 %v649
  %v2930 = vunpack.c.h.b16 %v649
  %v2931 = vunpack.c.l.b16 %v650
  %v2932 = vunpack.c.l.b16 %v651
  %v2933 = vunpack.c.h.b16 %v651
  %v2934 = vunpack.c.l.b16 %v652
  %v2935 = vunpack.c.l.b16 %v653
  %v2936 = vunpack.c.h.b16 %v653
  %v2937 = vunpack.c.l.b16 %v654
  %v2938 = vunpack.c.l.b16 %v655
  %v2939 = vunpack.c.h.b16 %v655
  %v2940 = vunpack.c.l.b16 %v656
  %v2941 = vunpack.c.l.b16 %v657
  %v2942 = vunpack.c.h.b16 %v657
  %v2943 = vunpack.c.l.b16 %v658
  %v2944 = vunpack.c.l.b16 %v659
  %v2945 = vunpack.c.h.b16 %v659
  %v2946 = vunpack.c.l.b16 %v660
  %v2947 = vunpack.c.l.b16 %v661
  %v2948 = vunpack.c.h.b16 %v661
  %v2949 = vunpack.c.l.b16 %v662
  %v2950 = vunpack.c.l.b16 %v663
  %v2951 = vunpack.c.h.b16 %v663
  %v2952 = vunpack.c.l.b16 %v664
  %v2953 = vunpack.c.l.b16 %v665
  %v2954 = vunpack.c.h.b16 %v665
  %v2955 = vunpack.c.l.b16 %v666
  %v2956 = vunpack.c.l.b16 %v667
  %v2957 = vunpack.c.h.b16 %v667
  %v2958 = vunpack.c.l.b16 %v668
  %v2959 = vunpack.c.l.b16 %v669
  %v2960 = vunpack.c.h.b16 %v669
  %v2961 = vunpack.c.l.b16 %v670
  %v2962 = vunpack.c.l.b16 %v671
  %v2963 = vunpack.c.h.b16 %v671
  %v2964 = vunpack.c.l.b16 %v672
  %v2965 = vunpack.c.l.b16 %v673
  %v2966 = vunpack.c.h.b16 %v673
  %v2967 = vunpack.c.l.b16 %v674
  %v2968 = vunpack.c.l.b16 %v675
  %v2969 = vunpack.c.h.b16 %v675
  %v2970 = vunpack.c.l.b16 %v676
  %v2971 = vunpack.c.l.b16 %v677
  %v2972 = vunpack.c.h.b16 %v677
  %v2973 = vunpack.c.l.b16 %v678
  %v2974 = vunpack.c.l.b16 %v679
  %v2975 = vunpack.c.h.b16 %v679
  %v2976 = vunpack.c.l.b16 %v680
  %v2977 = vunpack.c.l.b16 %v681
  %v2978 = vunpack.c.h.b16 %v681
  %v2979 = vunpack.c.l.b16 %v682
  %v2980 = vunpack.c.l.b16 %v683
  %v2981 = vunpack.c.h.b16 %v683
  %v2982 = vunpack.c.l.b16 %v684
  %v2983 = vunpack.c.l.b16 %v685
  %v2984 = vunpack.c.h.b16 %v685
  %v2985 = vunpack.c.l.b16 %v686
  %v2986 = vunpack.c.l.b16 %v687
  %v2987 = vunpack.c.h.b16 %v687
  %v2988 = vunpack.c.l.b16 %v688
  %v2989 = vunpack.c.l.b16 %v689
  %v2990 = vunpack.c.h.b16 %v689
  %v2991 = vunpack.c.l.b16 %v690
  %v2992 = vunpack.c.l.b16 %v691
  %v2993 = vunpack.c.h.b16 %v691
  %v2994 = vunpack.c.l.b16 %v692
  %v2995 = vunpack.c.l.b16 %v693
  %v2996 = vunpack.c.h.b16 %v693
  %v2997 = vunpack.c.l.b16 %v694
  %v2998 = vunpack.c.l.b16 %v695
  %v2999 = vunpack.c.h.b16 %v695
  %v3000 = vunpack.c.l.b16 %v696
  %v3001 = vunpack.c.l.b16 %v697
  %v3002 = vunpack.c.h.b16 %v697
  %v3003 = vunpack.c.l.b16 %v698
  %v3004 = vunpack.c.l.b16 %v699
  %v3005 = vunpack.c.h.b16 %v699
  %v3006 = vunpack.c.l.b16 %v700
  %v3007 = vunpack.c.l.b16 %v701
  %v3008 = vunpack.c.h.b16 %v701
  %v3009 = vunpack.c.l.b16 %v702
  %v3010 = vunpack.c.l.b16 %v703
  %v3011 = vunpack.c.h.b16 %v703
  %v3012 = vunpack.c.l.b16 %v704
  %v3013 = vunpack.c.l.b16 %v705
  %v3014 = vunpack.c.h.b16 %v705
  %v3015 = vunpack.c.l.b16 %v706
  %v3016 = vunpack.c.l.b16 %v707
  %v3017 = vunpack.c.h.b16 %v707
  %v3018 = vunpack.c.l.b16 %v708
  %v3019 = vunpack.c.l.b16 %v709
  %v3020 = vunpack.c.h.b16 %v709
  %v3021 = vunpack.c.l.b16 %v710
  %v3022 = vunpack.c.l.b16 %v711
  %v3023 = vunpack.c.h.b16 %v711
  %v3024 = vunpack.c.l.b16 %v712
  %v3025 = vunpack.c.l.b16 %v713
  %v3026 = vunpack.c.h.b16 %v713
  %v3027 = vunpack.c.l.b16 %v714
  %v3028 = vunpack.c.l.b16 %v715
  %v3029 = vunpack.c.h.b16 %v715
  %v3030 = vunpack.c.l.b16 %v716
  %v3031 = vunpack.c.l.b16 %v717
  %v3032 = vunpack.c.h.b16 %v717
  %v3033 = vunpack.c.l.b16 %v718
  %v3034 = vunpack.c.l.b16 %v719
  %v3035 = vunpack.c.h.b16 %v719
  %v3036 = vunpack.c.l.b16 %v720
  %v3037 = vunpack.c.l.b16 %v721
  %v3038 = vunpack.c.h.b16 %v721
  %v3039 = vunpack.c.l.b16 %v722
  %v3040 = vunpack.c.l.b16 %v723
  %v3041 = vunpack.c.h.b16 %v723
  %v3042 = vunpack.c.l.b16 %v724
  %v3043 = vunpack.c.l.b16 %v725
  %v3044 = vunpack.c.h.b16 %v725
  %v3045 = vunpack.c.l.b16 %v726
  %v3046 = vunpack.c.l.b16 %v727
  %v3047 = vunpack.c.h.b16 %v727
  %v3048 = vunpack.c.l.b16 %v728
  %v3049 = vunpack.c.l.b16 %v729
  %v3050 = vunpack.c.h.b16 %v729
  %v3051 = vunpack.c.l.b16 %v730
  %v3052 = vunpack.c.l.b16 %v731
  %v3053 = vunpack.c.h.b16 %v731
  %v3054 = vunpack.c.l.b16 %v732
  %v3055 = vunpack.c.l.b16 %v733
  %v3056 = vunpack.c.h.b16 %v733
  %v3057 = vunpack.c.l.b16 %v734
  %v3058 = vunpack.c.l.b16 %v735
  %v3059 = vunpack.c.h.b16 %v735
  %v3060 = vunpack.c.l.b16 %v736
  %v3061 = vunpack.c.l.b16 %v737
  %v3062 = vunpack.c.h.b16 %v737
  %v3063 = vunpack.c.l.b16 %v738
  %v3064 = vunpack.c.l.b16 %v739
  %v3065 = vunpack.c.h.b16 %v739
  %v3066 = vunpack.c.l.b16 %v740
  %v3067 = vunpack.c.l.b16 %v741
  %v3068 = vunpack.c.h.b16 %v741
  %v3069 = vunpack.c.l.b16 %v742
  %v3070 = vunpack.c.l.b16 %v743
  %v3071 = vunpack.c.h.b16 %v743
  %v3072 = vunpack.c.l.b16 %v744
  %v3073 = vunpack.c.l.b16 %v745
  %v3074 = vunpack.c.h.b16 %v745
  %v3075 = vunpack.c.l.b16 %v746
  %v3076 = vunpack.c.l.b16 %v747
  %v3077 = vunpack.c.h.b16 %v747
  %v3078 = vunpack.c.l.b16 %v748
  %v3079 = vunpack.c.l.b16 %v749
  %v3080 = vunpack.c.h.b16 %v749
  %v3081 = vunpack.c.l.b16 %v750
  %v3082 = vunpack.c.l.b16 %v751
  %v3083 = vunpack.c.h.b16 %v751
  %v3084 = vunpack.c.l.b16 %v752
  %v3085 = vunpack.c.l.b16 %v753
  %v3086 = vunpack.c.h.b16 %v753
  %v3087 = vunpack.c.l.b16 %v754
  %v3088 = vunpack.c.l.b16 %v755
  %v3089 = vunpack.c.h.b16 %v755
  %v3090 = vunpack.c.l.b16 %v756
  %v3091 = vunpack.c.l.b16 %v757
  %v3092 = vunpack.c.h.b16 %v757
  %v3093 = vunpack.c.l.b16 %v758
  %v3094 = vunpack.c.l.b16 %v759
  %v3095 = vunpack.c.h.b16 %v759
  %v3096 = vunpack.c.l.b16 %v760
  %v3097 = vunpack.c.l.b16 %v761
  %v3098 = vunpack.c.h.b16 %v761
  %v3099 = vunpack.c.l.b16 %v762
  %v3100 = vunpack.c.l.b16 %v763
  %v3101 = vunpack.c.h.b16 %v763
  %v3102 = vunpack.c.l.b16 %v764
  %v3103 = vunpack.c.l.b16 %v765
  %v3104 = vunpack.c.h.b16 %v765
  %v3105 = vunpack.c.l.b16 %v766
  %v3106 = vunpack.c.l.b16 %v767
  %v3107 = vunpack.c.h.b16 %v767
  %v3108 = vunpack.c.l.b16 %v768
  %v3109 = vunpack.c.l.b16 %v769
  %v3110 = vunpack.c.h.b16 %v769
  %v3111 = vunpack.c.l.b16 %v770
  %v3112 = vunpack.c.l.b16 %v771
  %v3113 = vunpack.c.h.b16 %v771
  %v3114 = vunpack.c.l.b16 %v772
  %v3115 = vunpack.c.l.b16 %v773
  %v3116 = vunpack.c.h.b16 %v773
  %v3117 = vunpack.c.l.b16 %v774
  %v3118 = vunpack.c.l.b16 %v775
  %v3119 = vunpack.c.h.b16 %v775
  %v3120 = vunpack.c.l.b16 %v776
  %v3121 = vunpack.c.l.b16 %v777
  %v3122 = vunpack.c.h.b16 %v777
  %v3123 = vunpack.c.l.b16 %v778
  %v3124 = vunpack.c.l.b16 %v779
  %v3125 = vunpack.c.h.b16 %v779
  %v3126 = vunpack.c.l.b16 %v780
  %v3127 = vunpack.c.l.b16 %v781
  %v3128 = vunpack.c.h.b16 %v781
  %v3129 = vunpack.c.l.b16 %v782
  %v3130 = vunpack.c.l.b16 %v783
  %v3131 = vunpack.c.h.b16 %v783
  %v3132 = vunpack.c.l.b16 %v784
  %v3133 = vunpack.c.l.b16 %v785
  %v3134 = vunpack.c.h.b16 %v785
  %v3135 = vunpack.c.l.b16 %v786
  %v3136 = vunpack.c.l.b16 %v787
  %v3137 = vunpack.c.h.b16 %v787
  %v3138 = vunpack.c.l.b16 %v788
  %v3139 = vunpack.c.l.b16 %v789
  %v3140 = vunpack.c.h.b16 %v789
  %v3141 = vunpack.c.l.b16 %v790
  %v3142 = vunpack.c.l.b16 %v791
  %v3143 = vunpack.c.h.b16 %v791
  %v3144 = vunpack.c.l.b16 %v792
  %v3145 = vunpack.c.l.b16 %v793
  %v3146 = vunpack.c.h.b16 %v793
  %v3147 = vunpack.c.l.b16 %v794
  %v3148 = vunpack.c.l.b16 %v795
  %v3149 = vunpack.c.h.b16 %v795
  %v3150 = vunpack.c.l.b16 %v796
  %v3151 = vunpack.c.l.b16 %v797
  %v3152 = vunpack.c.h.b16 %v797
  %v3153 = vunpack.c.l.b16 %v798
  %v3154 = vunpack.c.l.b16 %v799
  %v3155 = vunpack.c.h.b16 %v799
  %v3156 = vunpack.c.l.b16 %v800
  %v3157 = vunpack.c.l.b16 %v801
  %v3158 = vunpack.c.h.b16 %v801
  %v3159 = vunpack.c.l.b16 %v802
  %v3160 = vunpack.c.l.b16 %v803
  %v3161 = vunpack.c.h.b16 %v803
  %v3162 = vunpack.c.l.b16 %v804
  %v3163 = vunpack.c.l.b16 %v805
  %v3164 = vunpack.c.h.b16 %v805
  %v3165 = vunpack.c.l.b16 %v806
  %v3166 = vunpack.c.l.b16 %v807
  %v3167 = vunpack.c.h.b16 %v807
  %v3168 = vunpack.c.l.b16 %v808
  %v3169 = vunpack.c.l.b16 %v809
  %v3170 = vunpack.c.h.b16 %v809
  %v3171 = vunpack.c.l.b16 %v810
  %v3172 = vunpack.c.l.b16 %v811
  %v3173 = vunpack.c.h.b16 %v811
  %v3174 = vunpack.c.l.b16 %v812
  %v3175 = vunpack.c.l.b16 %v813
  %v3176 = vunpack.c.h.b16 %v813
  %v3177 = vunpack.c.l.b16 %v814
  %v3178 = vunpack.c.l.b16 %v815
  %v3179 = vunpack.c.h.b16 %v815
  %v3180 = vunpack.c.l.b16 %v816
  %v3181 = vunpack.c.l.b16 %v817
  %v3182 = vunpack.c.h.b16 %v817
  %v3183 = vunpack.c.l.b16 %v818
  %v3184 = vunpack.c.l.b16 %v819
  %v3185 = vunpack.c.h.b16 %v819
  %v3186 = vunpack.c.l.b16 %v820
  %v3187 = vunpack.c.l.b16 %v821
  %v3188 = vunpack.c.h.b16 %v821
  %v3189 = vunpack.c.l.b16 %v822
  %v3190 = vunpack.c.l.b16 %v823
  %v3191 = vunpack.c.h.b16 %v823
  %v3192 = vunpack.c.l.b16 %v824
  %v3193 = vunpack.c.l.b16 %v825
  %v3194 = vunpack.c.h.b16 %v825
  %v3195 = vunpack.c.l.b16 %v826
  %v3196 = vunpack.c.l.b16 %v827
  %v3197 = vunpack.c.h.b16 %v827
  %v3198 = vunpack.c.l.b16 %v828
  %v3199 = vunpack.c.l.b16 %v829
  %v3200 = vunpack.c.h.b16 %v829
  %v3201 = vunpack.c.l.b16 %v830
  %v3202 = vunpack.c.l.b16 %v831
  %v3203 = vunpack.c.h.b16 %v831
  %v3204 = vunpack.c.l.b16 %v832
  %v3205 = vunpack.c.l.b16 %v833
  %v3206 = vunpack.c.h.b16 %v833
  %v3207 = vunpack.c.l.b16 %v834
  %v3208 = vunpack.c.l.b16 %v835
  %v3209 = vunpack.c.h.b16 %v835
  %v3210 = vunpack.c.l.b16 %v836
  %v3211 = vunpack.c.l.b16 %v837
  %v3212 = vunpack.c.h.b16 %v837
  %v3213 = vunpack.c.l.b16 %v838
  %v3214 = vunpack.c.l.b16 %v839
  %v3215 = vunpack.c.h.b16 %v839
  %v3216 = vunpack.c.l.b16 %v840
  %v3217 = vunpack.c.l.b16 %v841
  %v3218 = vunpack.c.h.b16 %v841
  %v3219 = vunpack.c.l.b16 %v842
  %v3220 = vunpack.c.l.b16 %v843
  %v3221 = vunpack.c.h.b16 %v843
  %v3222 = vunpack.c.l.b16 %v844
  %v3223 = vunpack.c.l.b16 %v845
  %v3224 = vunpack.c.h.b16 %v845
  %v3225 = vunpack.c.l.b16 %v846
  %v3226 = vunpack.c.l.b16 %v847
  %v3227 = vunpack.c.h.b16 %v847
  %v3228 = vunpack.c.l.b16 %v848
  %v3229 = vunpack.c.l.b16 %v849
  %v3230 = vunpack.c.h.b16 %v849
  %v3231 = vunpack.c.l.b16 %v850
  %v3232 = vunpack.c.l.b16 %v851
  %v3233 = vunpack.c.h.b16 %v851
  %v3234 = vunpack.c.l.b16 %v852
  %v3235 = vunpack.c.l.b16 %v853
  %v3236 = vunpack.c.h.b16 %v853
  %v3237 = vunpack.c.l.b16 %v854
  %v3238 = vunpack.c.l.b16 %v855
  %v3239 = vunpack.c.h.b16 %v855
  %v3240 = vunpack.c.l.b16 %v856
  %v3241 = vunpack.c.l.b16 %v857
  %v3242 = vunpack.c.h.b16 %v857
  %v3243 = vunpack.c.l.b16 %v858
  %v3244 = vunpack.c.l.b16 %v859
  %v3245 = vunpack.c.h.b16 %v859
  %v3246 = vunpack.c.l.b16 %v860
  %v3247 = vunpack.c.l.b16 %v861
  %v3248 = vunpack.c.h.b16 %v861
  %v3249 = vunpack.c.l.b16 %v862
  %v3250 = vunpack.c.l.b16 %v863
  %v3251 = vunpack.c.h.b16 %v863
  %v3252 = vunpack.c.l.b16 %v864
  %v3253 = vunpack.c.l.b16 %v865
  %v3254 = vunpack.c.h.b16 %v865
  %v3255 = vunpack.c.l.b16 %v866
  %v3256 = vunpack.c.l.b16 %v867
  %v3257 = vunpack.c.h.b16 %v867
  %v3258 = vunpack.c.l.b16 %v868
  %v3259 = vunpack.c.l.b16 %v869
  %v3260 = vunpack.c.h.b16 %v869
  %v3261 = vunpack.c.l.b16 %v870
  %v3262 = vunpack.c.l.b16 %v871
  %v3263 = vunpack.c.h.b16 %v871
  %v3264 = vunpack.c.l.b16 %v872
  %v3265 = vunpack.c.l.b16 %v873
  %v3266 = vunpack.c.h.b16 %v873
  %v3267 = vunpack.c.l.b16 %v874
  %v3268 = vunpack.c.l.b16 %v875
  %v3269 = vunpack.c.h.b16 %v875
  %v3270 = vunpack.c.l.b16 %v876
  %v3271 = vunpack.c.l.b16 %v877
  %v3272 = vunpack.c.h.b16 %v877
  %v3273 = vunpack.c.l.b16 %v878
  %v3274 = vunpack.c.l.b16 %v879
  %v3275 = vunpack.c.h.b16 %v879
  %v3276 = vunpack.c.l.b16 %v880
  %v3277 = vunpack.c.l.b16 %v881
  %v3278 = vunpack.c.h.b16 %v881
  %v3279 = vunpack.c.l.b16 %v882
  %v3280 = vunpack.c.l.b16 %v883
  %v3281 = vunpack.c.h.b16 %v883
  %v3282 = vunpack.c.l.b16 %v884
  %v3283 = vunpack.c.l.b16 %v885
  %v3284 = vunpack.c.h.b16 %v885
  %v3285 = vunpack.c.l.b16 %v886
  %v3286 = vunpack.c.l.b16 %v887
  %v3287 = vunpack.c.h.b16 %v887
  %v3288 = vunpack.c.l.b16 %v888
  %v3289 = vunpack.c.l.b16 %v889
  %v3290 = vunpack.c.h.b16 %v889
  %v3291 = vunpack.c.l.b16 %v890
  %v3292 = vunpack.c.l.b16 %v891
  %v3293 = vunpack.c.h.b16 %v891
  %v3294 = vunpack.c.l.b16 %v892
  %v3295 = vunpack.c.l.b16 %v893
  %v3296 = vunpack.c.h.b16 %v893
  %v3297 = vunpack.c.l.b16 %v894
  %v3298 = vunpack.c.l.b16 %v895
  %v3299 = vunpack.c.h.b16 %v895
  %v3300 = vunpack.c.l.b16 %v896
  %v3301 = vunpack.c.l.b16 %v897
  %v3302 = vunpack.c.h.b16 %v897
  %v3303 = vunpack.c.l.b16 %v898
  %v3304 = vunpack.c.l.b16 %v899
  %v3305 = vunpack.c.h.b16 %v899
  %v3306 = vunpack.c.l.b16 %v900
  %v3307 = vunpack.c.l.b16 %v901
  %v3308 = vunpack.c.h.b16 %v901
  %v3309 = vunpack.c.l.b16 %v902
  %v3310 = vunpack.c.l.b16 %v903
  %v3311 = vunpack.c.h.b16 %v903
  %v3312 = vunpack.c.l.b16 %v904
  %v3313 = vunpack.c.l.b16 %v905
  %v3314 = vunpack.c.h.b16 %v905
  %v3315 = vunpack.c.l.b16 %v906
  %v3316 = vunpack.c.l.b16 %v907
  %v3317 = vunpack.c.h.b16 %v907
  %v3318 = vunpack.c.l.b16 %v908
  %v3319 = vunpack.c.l.b16 %v909
  %v3320 = vunpack.c.h.b16 %v909
  %v3321 = vunpack.c.l.b16 %v910
  %v3322 = vunpack.c.l.b16 %v911
  %v3323 = vunpack.c.h.b16 %v911
  %v3324 = vunpack.c.l.b16 %v912
  %v3325 = vunpack.c.l.b16 %v913
  %v3326 = vunpack.c.h.b16 %v913
  %v3327 = vunpack.c.l.b16 %v914
  %v3328 = vunpack.c.l.b16 %v915
  %v3329 = vunpack.c.h.b16 %v915
  %v3330 = vunpack.c.l.b16 %v916
  %v3331 = vunpack.c.l.b16 %v917
  %v3332 = vunpack.c.h.b16 %v917
  %v3333 = vunpack.c.l.b16 %v918
  %v3334 = vunpack.c.l.b16 %v919
  %v3335 = vunpack.c.h.b16 %v919
  %v3336 = vunpack.c.l.b16 %v920
  %v3337 = vunpack.c.l.b16 %v921
  %v3338 = vunpack.c.h.b16 %v921
  %v3339 = vunpack.c.l.b16 %v922
  %v3340 = vunpack.c.l.b16 %v923
  %v3341 = vunpack.c.h.b16 %v923
  %v3342 = vunpack.c.l.b16 %v924
  %v3343 = vunpack.c.l.b16 %v925
  %v3344 = vunpack.c.h.b16 %v925
  %v3345 = vunpack.c.l.b16 %v926
  %v3346 = vunpack.c.l.b16 %v927
  %v3347 = vunpack.c.h.b16 %v927
  %v3348 = vunpack.c.l.b16 %v928
  %v3349 = vunpack.c.l.b16 %v929
  %v3350 = vunpack.c.h.b16 %v929
  %v3351 = vunpack.c.l.b16 %v930
  %v3352 = vunpack.c.l.b16 %v931
  %v3353 = vunpack.c.h.b16 %v931
  %v3354 = vunpack.c.l.b16 %v932
  %v3355 = vunpack.c.l.b16 %v933
  %v3356 = vunpack.c.h.b16 %v933
  %v3357 = vunpack.c.l.b16 %v934
  %v3358 = vunpack.c.l.b16 %v935
  %v3359 = vunpack.c.h.b16 %v935
  %v3360 = vunpack.c.l.b16 %v936
  %v3361 = vunpack.c.l.b16 %v937
  %v3362 = vunpack.c.h.b16 %v937
  %v3363 = vunpack.c.l.b16 %v938
  %v3364 = vunpack.c.l.b16 %v939
  %v3365 = vunpack.c.h.b16 %v939
  %v3366 = vunpack.c.l.b16 %v940
  %v3367 = vunpack.c.l.b16 %v941
  %v3368 = vunpack.c.h.b16 %v941
  %v3369 = vunpack.c.l.b16 %v942
  %v3370 = vunpack.c.l.b16 %v943
  %v3371 = vunpack.c.h.b16 %v943
  %v3372 = vunpack.c.l.b16 %v944
  %v3373 = vunpack.c.l.b16 %v945
  %v3374 = vunpack.c.h.b16 %v945
  %v3375 = vunpack.c.l.b16 %v946
  %v3376 = vunpack.c.l.b16 %v947
  %v3377 = vunpack.c.h.b16 %v947
  %v3378 = vunpack.c.l.b16 %v948
  %v3379 = vunpack.c.l.b16 %v949
  %v3380 = vunpack.c.h.b16 %v949
  %v3381 = vunpack.c.l.b16 %v950
  %v3382 = vunpack.c.l.b16 %v951
  %v3383 = vunpack.c.h.b16 %v951
  %v3384 = vunpack.c.l.b16 %v952
  %v3385 = vpack.c.b16 %v2092, %v2089
  %v3386 = vpack.c.b16 %v2093, %v2090
  %v3387 = vpack.c.b16 %v2094, %v2091
  %v3388 = vpack.c.b16 %v2098, %v2095
  %v3389 = vpack.c.b16 %v2099, %v2096
  %v3390 = vpack.c.b16 %v2100, %v2097
  %v3391 = vpack.c.b16 %v2104, %v2101
  %v3392 = vpack.c.b16 %v2105, %v2102
  %v3393 = vpack.c.b16 %v2106, %v2103
  %v3394 = vpack.c.b16 %v2110, %v2107
  %v3395 = vpack.c.b16 %v2111, %v2108
  %v3396 = vpack.c.b16 %v2112, %v2109
  %v3397 = vpack.c.b16 %v2116, %v2113
  %v3398 = vpack.c.b16 %v2117, %v2114
  %v3399 = vpack.c.b16 %v2118, %v2115
  %v3400 = vpack.c.b16 %v2122, %v2119
  %v3401 = vpack.c.b16 %v2123, %v2120
  %v3402 = vpack.c.b16 %v2124, %v2121
  %v3403 = vpack.c.b16 %v2128, %v2125
  %v3404 = vpack.c.b16 %v2129, %v2126
  %v3405 = vpack.c.b16 %v2130, %v2127
  %v3406 = vpack.c.b16 %v2134, %v2131
  %v3407 = vpack.c.b16 %v2135, %v2132
  %v3408 = vpack.c.b16 %v2136, %v2133
  %v3409 = vpack.c.b16 %v2140, %v2137
  %v3410 = vpack.c.b16 %v2141, %v2138
  %v3411 = vpack.c.b16 %v2142, %v2139
  %v3412 = vpack.c.b16 %v2146, %v2143
  %v3413 = vpack.c.b16 %v2147, %v2144
  %v3414 = vpack.c.b16 %v2148, %v2145
  %v3415 = vpack.c.b16 %v2152, %v2149
  %v3416 = vpack.c.b16 %v2153, %v2150
  %v3417 = vpack.c.b16 %v2154, %v2151
  %v3418 = vpack.c.b16 %v2158, %v2155
  %v3419 = vpack.c.b16 %v2159, %v2156
  %v3420 = vpack.c.b16 %v2160, %v2157
  %v3421 = vpack.c.b16 %v2164, %v2161
  %v3422 = vpack.c.b16 %v2165, %v2162
  %v3423 = vpack.c.b16 %v2166, %v2163
  %v3424 = vpack.c.b16 %v2170, %v2167
  %v3425 = vpack.c.b16 %v2171, %v2168
  %v3426 = vpack.c.b16 %v2172, %v2169
  %v3427 = vpack.c.b16 %v2176, %v2173
  %v3428 = vpack.c.b16 %v2177, %v2174
  %v3429 = vpack.c.b16 %v2178, %v2175
  %v3430 = vpack.c.b16 %v2182, %v2179
  %v3431 = vpack.c.b16 %v2183, %v2180
  %v3432 = vpack.c.b16 %v2184, %v2181
  %v3433 = vpack.c.b16 %v2188, %v2185
  %v3434 = vpack.c.b16 %v2189, %v2186
  %v3435 = vpack.c.b16 %v2190, %v2187
  %v3436 = vpack.c.b16 %v2194, %v2191
  %v3437 = vpack.c.b16 %v2195, %v2192
  %v3438 = vpack.c.b16 %v2196, %v2193
  %v3439 = vpack.c.b16 %v2200, %v2197
  %v3440 = vpack.c.b16 %v2201, %v2198
  %v3441 = vpack.c.b16 %v2202, %v2199
  %v3442 = vpack.c.b16 %v2206, %v2203
  %v3443 = vpack.c.b16 %v2207, %v2204
  %v3444 = vpack.c.b16 %v2208, %v2205
  %v3445 = vpack.c.b16 %v2212, %v2209
  %v3446 = vpack.c.b16 %v2213, %v2210
  %v3447 = vpack.c.b16 %v2214, %v2211
  %v3448 = vpack.c.b16 %v2218, %v2215
  %v3449 = vpack.c.b16 %v2219, %v2216
  %v3450 = vpack.c.b16 %v2220, %v2217
  %v3451 = vpack.c.b16 %v2224, %v2221
  %v3452 = vpack.c.b16 %v2225, %v2222
  %v3453 = vpack.c.b16 %v2226, %v2223
  %v3454 = vpack.c.b16 %v2230, %v2227
  %v3455 = vpack.c.b16 %v2231, %v2228
  %v3456 = vpack.c.b16 %v2232, %v2229
  %v3457 = vpack.c.b16 %v2236, %v2233
  %v3458 = vpack.c.b16 %v2237, %v2234
  %v3459 = vpack.c.b16 %v2238, %v2235
  %v3460 = vpack.c.b16 %v2242, %v2239
  %v3461 = vpack.c.b16 %v2243, %v2240
  %v3462 = vpack.c.b16 %v2244, %v2241
  %v3463 = vpack.c.b16 %v2248, %v2245
  %v3464 = vpack.c.b16 %v2249, %v2246
  %v3465 = vpack.c.b16 %v2250, %v2247
  %v3466 = vpack.c.b16 %v2254, %v2251
  %v3467 = vpack.c.b16 %v2255, %v2252
  %v3468 = vpack.c.b16 %v2256, %v2253
  %v3469 = vpack.c.b16 %v2260, %v2257
  %v3470 = vpack.c.b16 %v2261, %v2258
  %v3471 = vpack.c.b16 %v2262, %v2259
  %v3472 = vpack.c.b16 %v2266, %v2263
  %v3473 = vpack.c.b16 %v2267, %v2264
  %v3474 = vpack.c.b16 %v2268, %v2265
  %v3475 = vpack.c.b16 %v2272, %v2269
  %v3476 = vpack.c.b16 %v2273, %v2270
  %v3477 = vpack.c.b16 %v2274, %v2271
  %v3478 = vpack.c.b16 %v2278, %v2275
  %v3479 = vpack.c.b16 %v2279, %v2276
  %v3480 = vpack.c.b16 %v2280, %v2277
  %v3481 = vpack.c.b16 %v2284, %v2281
  %v3482 = vpack.c.b16 %v2285, %v2282
  %v3483 = vpack.c.b16 %v2286, %v2283
  %v3484 = vpack.c.b16 %v2290, %v2287
  %v3485 = vpack.c.b16 %v2291, %v2288
  %v3486 = vpack.c.b16 %v2292, %v2289
  %v3487 = vpack.c.b16 %v2296, %v2293
  %v3488 = vpack.c.b16 %v2297, %v2294
  %v3489 = vpack.c.b16 %v2298, %v2295
  %v3490 = vpack.c.b16 %v2302, %v2299
  %v3491 = vpack.c.b16 %v2303, %v2300
  %v3492 = vpack.c.b16 %v2304, %v2301
  %v3493 = vpack.c.b16 %v2308, %v2305
  %v3494 = vpack.c.b16 %v2309, %v2306
  %v3495 = vpack.c.b16 %v2310, %v2307
  %v3496 = vpack.c.b16 %v2314, %v2311
  %v3497 = vpack.c.b16 %v2315, %v2312
  %v3498 = vpack.c.b16 %v2316, %v2313
  %v3499 = vpack.c.b16 %v2320, %v2317
  %v3500 = vpack.c.b16 %v2321, %v2318
  %v3501 = vpack.c.b16 %v2322, %v2319
  %v3502 = vpack.c.b16 %v2326, %v2323
  %v3503 = vpack.c.b16 %v2327, %v2324
  %v3504 = vpack.c.b16 %v2328, %v2325
  %v3505 = vpack.c.b16 %v2332, %v2329
  %v3506 = vpack.c.b16 %v2333, %v2330
  %v3507 = vpack.c.b16 %v2334, %v2331
  %v3508 = vpack.c.b16 %v2338, %v2335
  %v3509 = vpack.c.b16 %v2339, %v2336
  %v3510 = vpack.c.b16 %v2340, %v2337
  %v3511 = vpack.c.b16 %v2344, %v2341
  %v3512 = vpack.c.b16 %v2345, %v2342
  %v3513 = vpack.c.b16 %v2346, %v2343
  %v3514 = vpack.c.b16 %v2350, %v2347
  %v3515 = vpack.c.b16 %v2351, %v2348
  %v3516 = vpack.c.b16 %v2352, %v2349
  %v3517 = vpack.c.b16 %v2356, %v2353
  %v3518 = vpack.c.b16 %v2357, %v2354
  %v3519 = vpack.c.b16 %v2358, %v2355
  %v3520 = vpack.c.b16 %v2362, %v2359
  %v3521 = vpack.c.b16 %v2363, %v2360
  %v3522 = vpack.c.b16 %v2364, %v2361
  %v3523 = vpack.c.b16 %v2368, %v2365
  %v3524 = vpack.c.b16 %v2369, %v2366
  %v3525 = vpack.c.b16 %v2370, %v2367
  %v3526 = vpack.c.b16 %v2374, %v2371
  %v3527 = vpack.c.b16 %v2375, %v2372
  %v3528 = vpack.c.b16 %v2376, %v2373
  %v3529 = vpack.c.b16 %v2380, %v2377
  %v3530 = vpack.c.b16 %v2381, %v2378
  %v3531 = vpack.c.b16 %v2382, %v2379
  %v3532 = vpack.c.b16 %v2386, %v2383
  %v3533 = vpack.c.b16 %v2387, %v2384
  %v3534 = vpack.c.b16 %v2388, %v2385
  %v3535 = vpack.c.b16 %v2392, %v2389
  %v3536 = vpack.c.b16 %v2393, %v2390
  %v3537 = vpack.c.b16 %v2394, %v2391
  %v3538 = vpack.c.b16 %v2398, %v2395
  %v3539 = vpack.c.b16 %v2399, %v2396
  %v3540 = vpack.c.b16 %v2400, %v2397
  %v3541 = vpack.c.b16 %v2404, %v2401
  %v3542 = vpack.c.b16 %v2405, %v2402
  %v3543 = vpack.c.b16 %v2406, %v2403
  %v3544 = vpack.c.b16 %v2410, %v2407
  %v3545 = vpack.c.b16 %v2411, %v2408
  %v3546 = vpack.c.b16 %v2412, %v2409
  %v3547 = vpack.c.b16 %v2416, %v2413
  %v3548 = vpack.c.b16 %v2417, %v2414
  %v3549 = vpack.c.b16 %v2418, %v2415
  %v3550 = vpack.c.b16 %v2422, %v2419
  %v3551 = vpack.c.b16 %v2423, %v2420
  %v3552 = vpack.c.b16 %v2424, %v2421
  %v3553 = vpack.c.b16 %v2428, %v2425
  %v3554 = vpack.c.b16 %v2429, %v2426
  %v3555 = vpack.c.b16 %v2430, %v2427
  %v3556 = vpack.c.b16 %v2434, %v2431
  %v3557 = vpack.c.b16 %v2435, %v2432
  %v3558 = vpack.c.b16 %v2436, %v2433
  %v3559 = vpack.c.b16 %v2440, %v2437
  %v3560 = vpack.c.b16 %v2441, %v2438
  %v3561 = vpack.c.b16 %v2442, %v2439
  %v3562 = vpack.c.b16 %v2446, %v2443
  %v3563 = vpack.c.b16 %v2447, %v2444
  %v3564 = vpack.c.b16 %v2448, %v2445
  %v3565 = vpack.c.b16 %v2452, %v2449
  %v3566 = vpack.c.b16 %v2453, %v2450
  %v3567 = vpack.c.b16 %v2454, %v2451
  %v3568 = vpack.c.b16 %v2458, %v2455
  %v3569 = vpack.c.b16 %v2459, %v2456
  %v3570 = vpack.c.b16 %v2460, %v2457
  %v3571 = vpack.c.b16 %v2464, %v2461
  %v3572 = vpack.c.b16 %v2465, %v2462
  %v3573 = vpack.c.b16 %v2466, %v2463
  %v3574 = vpack.c.b16 %v2470, %v2467
  %v3575 = vpack.c.b16 %v2471, %v2468
  %v3576 = vpack.c.b16 %v2472, %v2469
  %v3577 = vpack.c.b16 %v2476, %v2473
  %v3578 = vpack.c.b16 %v2477, %v2474
  %v3579 = vpack.c.b16 %v2478, %v2475
  %v3580 = vpack.c.b16 %v2482, %v2479
  %v3581 = vpack.c.b16 %v2483, %v2480
  %v3582 = vpack.c.b16 %v2484, %v2481
  %v3583 = vpack.c.b16 %v2488, %v2485
  %v3584 = vpack.c.b16 %v2489, %v2486
  %v3585 = vpack.c.b16 %v2490, %v2487
  %v3586 = vpack.c.b16 %v2494, %v2491
  %v3587 = vpack.c.b16 %v2495, %v2492
  %v3588 = vpack.c.b16 %v2496, %v2493
  %v3589 = vpack.c.b16 %v2500, %v2497
  %v3590 = vpack.c.b16 %v2501, %v2498
  %v3591 = vpack.c.b16 %v2502, %v2499
  %v3592 = vpack.c.b16 %v2506, %v2503
  %v3593 = vpack.c.b16 %v2507, %v2504
  %v3594 = vpack.c.b16 %v2508, %v2505
  %v3595 = vpack.c.b16 %v2512, %v2509
  %v3596 = vpack.c.b16 %v2513, %v2510
  %v3597 = vpack.c.b16 %v2514, %v2511
  %v3598 = vpack.c.b16 %v2518, %v2515
  %v3599 = vpack.c.b16 %v2519, %v2516
  %v3600 = vpack.c.b16 %v2520, %v2517
  %v3601 = vpack.c.b16 %v2524, %v2521
  %v3602 = vpack.c.b16 %v2525, %v2522
  %v3603 = vpack.c.b16 %v2526, %v2523
  %v3604 = vpack.c.b16 %v2530, %v2527
  %v3605 = vpack.c.b16 %v2531, %v2528
  %v3606 = vpack.c.b16 %v2532, %v2529
  %v3607 = vpack.c.b16 %v2536, %v2533
  %v3608 = vpack.c.b16 %v2537, %v2534
  %v3609 = vpack.c.b16 %v2538, %v2535
  %v3610 = vpack.c.b16 %v2542, %v2539
  %v3611 = vpack.c.b16 %v2543, %v2540
  %v3612 = vpack.c.b16 %v2544, %v2541
  %v3613 = vpack.c.b16 %v2548, %v2545
  %v3614 = vpack.c.b16 %v2549, %v2546
  %v3615 = vpack.c.b16 %v2550, %v2547
  %v3616 = vpack.c.b16 %v2554, %v2551
  %v3617 = vpack.c.b16 %v2555, %v2552
  %v3618 = vpack.c.b16 %v2556, %v2553
  %v3619 = vpack.c.b16 %v2560, %v2557
  %v3620 = vpack.c.b16 %v2561, %v2558
  %v3621 = vpack.c.b16 %v2562, %v2559
  %v3622 = vpack.c.b16 %v2566, %v2563
  %v3623 = vpack.c.b16 %v2567, %v2564
  %v3624 = vpack.c.b16 %v2568, %v2565
  %v3625 = vpack.c.b16 %v2572, %v2569
  %v3626 = vpack.c.b16 %v2573, %v2570
  %v3627 = vpack.c.b16 %v2574, %v2571
  %v3628 = vpack.c.b16 %v2578, %v2575
  %v3629 = vpack.c.b16 %v2579, %v2576
  %v3630 = vpack.c.b16 %v2580, %v2577
  %v3631 = vpack.c.b16 %v2584, %v2581
  %v3632 = vpack.c.b16 %v2585, %v2582
  %v3633 = vpack.c.b16 %v2586, %v2583
  %v3634 = vpack.c.b16 %v2590, %v2587
  %v3635 = vpack.c.b16 %v2591, %v2588
  %v3636 = vpack.c.b16 %v2592, %v2589
  %v3637 = vpack.c.b16 %v2596, %v2593
  %v3638 = vpack.c.b16 %v2597, %v2594
  %v3639 = vpack.c.b16 %v2598, %v2595
  %v3640 = vpack.c.b16 %v2602, %v2599
  %v3641 = vpack.c.b16 %v2603, %v2600
  %v3642 = vpack.c.b16 %v2604, %v2601
  %v3643 = vpack.c.b16 %v2608, %v2605
  %v3644 = vpack.c.b16 %v2609, %v2606
  %v3645 = vpack.c.b16 %v2610, %v2607
  %v3646 = vpack.c.b16 %v2614, %v2611
  %v3647 = vpack.c.b16 %v2615, %v2612
  %v3648 = vpack.c.b16 %v2616, %v2613
  %v3649 = vpack.c.b16 %v2620, %v2617
  %v3650 = vpack.c.b16 %v2621, %v2618
  %v3651 = vpack.c.b16 %v2622, %v2619
  %v3652 = vpack.c.b16 %v2626, %v2623
  %v3653 = vpack.c.b16 %v2627, %v2624
  %v3654 = vpack.c.b16 %v2628, %v2625
  %v3655 = vpack.c.b16 %v2632, %v2629
  %v3656 = vpack.c.b16 %v2633, %v2630
  %v3657 = vpack.c.b16 %v2634, %v2631
  %v3658 = vpack.c.b16 %v2638, %v2635
  %v3659 = vpack.c.b16 %v2639, %v2636
  %v3660 = vpack.c.b16 %v2640, %v2637
  %v3661 = vpack.c.b16 %v2644, %v2641
  %v3662 = vpack.c.b16 %v2645, %v2642
  %v3663 = vpack.c.b16 %v2646, %v2643
  %v3664 = vpack.c.b16 %v2650, %v2647
  %v3665 = vpack.c.b16 %v2651, %v2648
  %v3666 = vpack.c.b16 %v2652, %v2649
  %v3667 = vpack.c.b16 %v2656, %v2653
  %v3668 = vpack.c.b16 %v2657, %v2654
  %v3669 = vpack.c.b16 %v2658, %v2655
  %v3670 = vpack.c.b16 %v2662, %v2659
  %v3671 = vpack.c.b16 %v2663, %v2660
  %v3672 = vpack.c.b16 %v2664, %v2661
  %v3673 = vpack.c.b16 %v2668, %v2665
  %v3674 = vpack.c.b16 %v2669, %v2666
  %v3675 = vpack.c.b16 %v2670, %v2667
  %v3676 = vpack.c.b16 %v2674, %v2671
  %v3677 = vpack.c.b16 %v2675, %v2672
  %v3678 = vpack.c.b16 %v2676, %v2673
  %v3679 = vpack.c.b16 %v2680, %v2677
  %v3680 = vpack.c.b16 %v2681, %v2678
  %v3681 = vpack.c.b16 %v2682, %v2679
  %v3682 = vpack.c.b16 %v2686, %v2683
  %v3683 = vpack.c.b16 %v2687, %v2684
  %v3684 = vpack.c.b16 %v2688, %v2685
  %v3685 = vpack.c.b16 %v2692, %v2689
  %v3686 = vpack.c.b16 %v2693, %v2690
  %v3687 = vpack.c.b16 %v2694, %v2691
  %v3688 = vpack.c.b16 %v2698, %v2695
  %v3689 = vpack.c.b16 %v2699, %v2696
  %v3690 = vpack.c.b16 %v2700, %v2697
  %v3691 = vpack.c.b16 %v2704, %v2701
  %v3692 = vpack.c.b16 %v2705, %v2702
  %v3693 = vpack.c.b16 %v2706, %v2703
  %v3694 = vpack.c.b16 %v2710, %v2707
  %v3695 = vpack.c.b16 %v2711, %v2708
  %v3696 = vpack.c.b16 %v2712, %v2709
  %v3697 = vpack.c.b16 %v2716, %v2713
  %v3698 = vpack.c.b16 %v2717, %v2714
  %v3699 = vpack.c.b16 %v2718, %v2715
  %v3700 = vpack.c.b16 %v2722, %v2719
  %v3701 = vpack.c.b16 %v2723, %v2720
  %v3702 = vpack.c.b16 %v2724, %v2721
  %v3703 = vpack.c.b16 %v2728, %v2725
  %v3704 = vpack.c.b16 %v2729, %v2726
  %v3705 = vpack.c.b16 %v2730, %v2727
  %v3706 = vpack.c.b16 %v2734, %v2731
  %v3707 = vpack.c.b16 %v2735, %v2732
  %v3708 = vpack.c.b16 %v2736, %v2733
  %v3709 = vpack.c.b16 %v2740, %v2737
  %v3710 = vpack.c.b16 %v2741, %v2738
  %v3711 = vpack.c.b16 %v2742, %v2739
  %v3712 = vpack.c.b16 %v2746, %v2743
  %v3713 = vpack.c.b16 %v2747, %v2744
  %v3714 = vpack.c.b16 %v2748, %v2745
  %v3715 = vpack.c.b16 %v2752, %v2749
  %v3716 = vpack.c.b16 %v2753, %v2750
  %v3717 = vpack.c.b16 %v2754, %v2751
  %v3718 = vpack.c.b16 %v2758, %v2755
  %v3719 = vpack.c.b16 %v2759, %v2756
  %v3720 = vpack.c.b16 %v2760, %v2757
  %v3721 = vpack.c.b16 %v2764, %v2761
  %v3722 = vpack.c.b16 %v2765, %v2762
  %v3723 = vpack.c.b16 %v2766, %v2763
  %v3724 = vpack.c.b16 %v2770, %v2767
  %v3725 = vpack.c.b16 %v2771, %v2768
  %v3726 = vpack.c.b16 %v2772, %v2769
  %v3727 = vpack.c.b16 %v2776, %v2773
  %v3728 = vpack.c.b16 %v2777, %v2774
  %v3729 = vpack.c.b16 %v2778, %v2775
  %v3730 = vpack.c.b16 %v2782, %v2779
  %v3731 = vpack.c.b16 %v2783, %v2780
  %v3732 = vpack.c.b16 %v2784, %v2781
  %v3733 = vpack.c.b16 %v2788, %v2785
  %v3734 = vpack.c.b16 %v2789, %v2786
  %v3735 = vpack.c.b16 %v2790, %v2787
  %v3736 = vpack.c.b16 %v2794, %v2791
  %v3737 = vpack.c.b16 %v2795, %v2792
  %v3738 = vpack.c.b16 %v2796, %v2793
  %v3739 = vpack.c.b16 %v2800, %v2797
  %v3740 = vpack.c.b16 %v2801, %v2798
  %v3741 = vpack.c.b16 %v2802, %v2799
  %v3742 = vpack.c.b16 %v2806, %v2803
  %v3743 = vpack.c.b16 %v2807, %v2804
  %v3744 = vpack.c.b16 %v2808, %v2805
  %v3745 = vpack.c.b16 %v2812, %v2809
  %v3746 = vpack.c.b16 %v2813, %v2810
  %v3747 = vpack.c.b16 %v2814, %v2811
  %v3748 = vpack.c.b16 %v2818, %v2815
  %v3749 = vpack.c.b16 %v2819, %v2816
  %v3750 = vpack.c.b16 %v2820, %v2817
  %v3751 = vpack.c.b16 %v2824, %v2821
  %v3752 = vpack.c.b16 %v2825, %v2822
  %v3753 = vpack.c.b16 %v2826, %v2823
  %v3754 = vpack.c.b16 %v2830, %v2827
  %v3755 = vpack.c.b16 %v2831, %v2828
  %v3756 = vpack.c.b16 %v2832, %v2829
  %v3757 = vpack.c.b16 %v2836, %v2833
  %v3758 = vpack.c.b16 %v2837, %v2834
  %v3759 = vpack.c.b16 %v2838, %v2835
  %v3760 = vpack.c.b16 %v2842, %v2839
  %v3761 = vpack.c.b16 %v2843, %v2840
  %v3762 = vpack.c.b16 %v2844, %v2841
  %v3763 = vpack.c.b16 %v2848, %v2845
  %v3764 = vpack.c.b16 %v2849, %v2846
  %v3765 = vpack.c.b16 %v2850, %v2847
  %v3766 = vpack.c.b16 %v2854, %v2851
  %v3767 = vpack.c.b16 %v2855, %v2852
  %v3768 = vpack.c.b16 %v2856, %v2853
  %v3769 = vpack.c.b16 %v2860, %v2857
  %v3770 = vpack.c.b16 %v2861, %v2858
  %v3771 = vpack.c.b16 %v2862, %v2859
  %v3772 = vpack.c.b16 %v2866, %v2863
  %v3773 = vpack.c.b16 %v2867, %v2864
  %v3774 = vpack.c.b16 %v2868, %v2865
  %v3775 = vpack.c.b16 %v2872, %v2869
  %v3776 = vpack.c.b16 %v2873, %v2870
  %v3777 = vpack.c.b16 %v2874, %v2871
  %v3778 = vpack.c.b16 %v2878, %v2875
  %v3779 = vpack.c.b16 %v2879, %v2876
  %v3780 = vpack.c.b16 %v2880, %v2877
  %v3781 = vpack.c.b16 %v2884, %v2881
  %v3782 = vpack.c.b16 %v2885, %v2882
  %v3783 = vpack.c.b16 %v2886, %v2883
  %v3784 = vpack.c.b16 %v2890, %v2887
  %v3785 = vpack.c.b16 %v2891, %v2888
  %v3786 = vpack.c.b16 %v2892, %v2889
  %v3787 = vpack.c.b16 %v2896, %v2893
  %v3788 = vpack.c.b16 %v2897, %v2894
  %v3789 = vpack.c.b16 %v2898, %v2895
  %v3790 = vpack.c.b16 %v2902, %v2899
  %v3791 = vpack.c.b16 %v2903, %v2900
  %v3792 = vpack.c.b16 %v2904, %v2901
  %v3793 = vpack.c.b16 %v2908, %v2905
  %v3794 = vpack.c.b16 %v2909, %v2906
  %v3795 = vpack.c.b16 %v2910, %v2907
  %v3796 = vpack.c.b16 %v2914, %v2911
  %v3797 = vpack.c.b16 %v2915, %v2912
  %v3798 = vpack.c.b16 %v2916, %v2913
  %v3799 = vpack.c.b16 %v2920, %v2917
  %v3800 = vpack.c.b16 %v2921, %v2918
  %v3801 = vpack.c.b16 %v2922, %v2919
  %v3802 = vpack.c.b16 %v2926, %v2923
  %v3803 = vpack.c.b16 %v2927, %v2924
  %v3804 = vpack.c.b16 %v2928, %v2925
  %v3805 = vpack.c.b16 %v2932, %v2929
  %v3806 = vpack.c.b16 %v2933, %v2930
  %v3807 = vpack.c.b16 %v2934, %v2931
  %v3808 = vpack.c.b16 %v2938, %v2935
  %v3809 = vpack.c.b16 %v2939, %v2936
  %v3810 = vpack.c.b16 %v2940, %v2937
  %v3811 = vpack.c.b16 %v2944, %v2941
  %v3812 = vpack.c.b16 %v2945, %v2942
  %v3813 = vpack.c.b16 %v2946, %v2943
  %v3814 = vpack.c.b16 %v2950, %v2947
  %v3815 = vpack.c.b16 %v2951, %v2948
  %v3816 = vpack.c.b16 %v2952, %v2949
  %v3817 = vpack.c.b16 %v2956, %v2953
  %v3818 = vpack.c.b16 %v2957, %v2954
  %v3819 = vpack.c.b16 %v2958, %v2955
  %v3820 = vpack.c.b16 %v2962, %v2959
  %v3821 = vpack.c.b16 %v2963, %v2960
  %v3822 = vpack.c.b16 %v2964, %v2961
  %v3823 = vpack.c.b16 %v2968, %v2965
  %v3824 = vpack.c.b16 %v2969, %v2966
  %v3825 = vpack.c.b16 %v2970, %v2967
  %v3826 = vpack.c.b16 %v2974, %v2971
  %v3827 = vpack.c.b16 %v2975, %v2972
  %v3828 = vpack.c.b16 %v2976, %v2973
  %v3829 = vpack.c.b16 %v2980, %v2977
  %v3830 = vpack.c.b16 %v2981, %v2978
  %v3831 = vpack.c.b16 %v2982, %v2979
  %v3832 = vpack.c.b16 %v2986, %v2983
  %v3833 = vpack.c.b16 %v2987, %v2984
  %v3834 = vpack.c.b16 %v2988, %v2985
  %v3835 = vpack.c.b16 %v2992, %v2989
  %v3836 = vpack.c.b16 %v2993, %v2990
  %v3837 = vpack.c.b16 %v2994, %v2991
  %v3838 = vpack.c.b16 %v2998, %v2995
  %v3839 = vpack.c.b16 %v2999, %v2996
  %v3840 = vpack.c.b16 %v3000, %v2997
  %v3841 = vpack.c.b16 %v3004, %v3001
  %v3842 = vpack.c.b16 %v3005, %v3002
  %v3843 = vpack.c.b16 %v3006, %v3003
  %v3844 = vpack.c.b16 %v3010, %v3007
  %v3845 = vpack.c.b16 %v3011, %v3008
  %v3846 = vpack.c.b16 %v3012, %v3009
  %v3847 = vpack.c.b16 %v3016, %v3013
  %v3848 = vpack.c.b16 %v3017, %v3014
  %v3849 = vpack.c.b16 %v3018, %v3015
  %v3850 = vpack.c.b16 %v3022, %v3019
  %v3851 = vpack.c.b16 %v3023, %v3020
  %v3852 = vpack.c.b16 %v3024, %v3021
  %v3853 = vpack.c.b16 %v3028, %v3025
  %v3854 = vpack.c.b16 %v3029, %v3026
  %v3855 = vpack.c.b16 %v3030, %v3027
  %v3856 = vpack.c.b16 %v3034, %v3031
  %v3857 = vpack.c.b16 %v3035, %v3032
  %v3858 = vpack.c.b16 %v3036, %v3033
  %v3859 = vpack.c.b16 %v3040, %v3037
  %v3860 = vpack.c.b16 %v3041, %v3038
  %v3861 = vpack.c.b16 %v3042, %v3039
  %v3862 = vpack.c.b16 %v3046, %v3043
  %v3863 = vpack.c.b16 %v3047, %v3044
  %v3864 = vpack.c.b16 %v3048, %v3045
  %v3865 = vpack.c.b16 %v3052, %v3049
  %v3866 = vpack.c.b16 %v3053, %v3050
  %v3867 = vpack.c.b16 %v3054, %v3051
  %v3868 = vpack.c.b16 %v3058, %v3055
  %v3869 = vpack.c.b16 %v3059, %v3056
  %v3870 = vpack.c.b16 %v3060, %v3057
  %v3871 = vpack.c.b16 %v3064, %v3061
  %v3872 = vpack.c.b16 %v3065, %v3062
  %v3873 = vpack.c.b16 %v3066, %v3063
  %v3874 = vpack.c.b16 %v3070, %v3067
  %v3875 = vpack.c.b16 %v3071, %v3068
  %v3876 = vpack.c.b16 %v3072, %v3069
  %v3877 = vpack.c.b16 %v3076, %v3073
  %v3878 = vpack.c.b16 %v3077, %v3074
  %v3879 = vpack.c.b16 %v3078, %v3075
  %v3880 = vpack.c.b16 %v3082, %v3079
  %v3881 = vpack.c.b16 %v3083, %v3080
  %v3882 = vpack.c.b16 %v3084, %v3081
  %v3883 = vpack.c.b16 %v3088, %v3085
  %v3884 = vpack.c.b16 %v3089, %v3086
  %v3885 = vpack.c.b16 %v3090, %v3087
  %v3886 = vpack.c.b16 %v3094, %v3091
  %v3887 = vpack.c.b16 %v3095, %v3092
  %v3888 = vpack.c.b16 %v3096, %v3093
  %v3889 = vpack.c.b16 %v3100, %v3097
  %v3890 = vpack.c.b16 %v3101, %v3098
  %v3891 = vpack.c.b16 %v3102, %v3099
  %v3892 = vpack.c.b16 %v3106, %v3103
  %v3893 = vpack.c.b16 %v3107, %v3104
  %v3894 = vpack.c.b16 %v3108, %v3105
  %v3895 = vpack.c.b16 %v3112, %v3109
  %v3896 = vpack.c.b16 %v3113, %v3110
  %v3897 = vpack.c.b16 %v3114, %v3111
  %v3898 = vpack.c.b16 %v3118, %v3115
  %v3899 = vpack.c.b16 %v3119, %v3116
  %v3900 = vpack.c.b16 %v3120, %v3117
  %v3901 = vpack.c.b16 %v3124, %v3121
  %v3902 = vpack.c.b16 %v3125, %v3122
  %v3903 = vpack.c.b16 %v3126, %v3123
  %v3904 = vpack.c.b16 %v3130, %v3127
  %v3905 = vpack.c.b16 %v3131, %v3128
  %v3906 = vpack.c.b16 %v3132, %v3129
  %v3907 = vpack.c.b16 %v3136, %v3133
  %v3908 = vpack.c.b16 %v3137, %v3134
  %v3909 = vpack.c.b16 %v3138, %v3135
  %v3910 = vpack.c.b16 %v3142, %v3139
  %v3911 = vpack.c.b16 %v3143, %v3140
  %v3912 = vpack.c.b16 %v3144, %v3141
  %v3913 = vpack.c.b16 %v3148, %v3145
  %v3914 = vpack.c.b16 %v3149, %v3146
  %v3915 = vpack.c.b16 %v3150, %v3147
  %v3916 = vpack.c.b16 %v3154, %v3151
  %v3917 = vpack.c.b16 %v3155, %v3152
  %v3918 = vpack.c.b16 %v3156, %v3153
  %v3919 = vpack.c.b16 %v3160, %v3157
  %v3920 = vpack.c.b16 %v3161, %v3158
  %v3921 = vpack.c.b16 %v3162, %v3159
  %v3922 = vpack.c.b16 %v3166, %v3163
  %v3923 = vpack.c.b16 %v3167, %v3164
  %v3924 = vpack.c.b16 %v3168, %v3165
  %v3925 = vpack.c.b16 %v3172, %v3169
  %v3926 = vpack.c.b16 %v3173, %v3170
  %v3927 = vpack.c.b16 %v3174, %v3171
  %v3928 = vpack.c.b16 %v3178, %v3175
  %v3929 = vpack.c.b16 %v3179, %v3176
  %v3930 = vpack.c.b16 %v3180, %v3177
  %v3931 = vpack.c.b16 %v3184, %v3181
  %v3932 = vpack.c.b16 %v3185, %v3182
  %v3933 = vpack.c.b16 %v3186, %v3183
  %v3934 = vpack.c.b16 %v3190, %v3187
  %v3935 = vpack.c.b16 %v3191, %v3188
  %v3936 = vpack.c.b16 %v3192, %v3189
  %v3937 = vpack.c.b16 %v3196, %v3193
  %v3938 = vpack.c.b16 %v3197, %v3194
  %v3939 = vpack.c.b16 %v3198, %v3195
  %v3940 = vpack.c.b16 %v3202, %v3199
  %v3941 = vpack.c.b16 %v3203, %v3200
  %v3942 = vpack.c.b16 %v3204, %v3201
  %v3943 = vpack.c.b16 %v3208, %v3205
  %v3944 = vpack.c.b16 %v3209, %v3206
  %v3945 = vpack.c.b16 %v3210, %v3207
  %v3946 = vpack.c.b16 %v3214, %v3211
  %v3947 = vpack.c.b16 %v3215, %v3212
  %v3948 = vpack.c.b16 %v3216, %v3213
  %v3949 = vpack.c.b16 %v3220, %v3217
  %v3950 = vpack.c.b16 %v3221, %v3218
  %v3951 = vpack.c.b16 %v3222, %v3219
  %v3952 = vpack.c.b16 %v3226, %v3223
  %v3953 = vpack.c.b16 %v3227, %v3224
  %v3954 = vpack.c.b16 %v3228, %v3225
  %v3955 = vpack.c.b16 %v3232, %v3229
  %v3956 = vpack.c.b16 %v3233, %v3230
  %v3957 = vpack.c.b16 %v3234, %v3231
  %v3958 = vpack.c.b16 %v3238, %v3235
  %v3959 = vpack.c.b16 %v3239, %v3236
  %v3960 = vpack.c.b16 %v3240, %v3237
  %v3961 = vpack.c.b16 %v3244, %v3241
  %v3962 = vpack.c.b16 %v3245, %v3242
  %v3963 = vpack.c.b16 %v3246, %v3243
  %v3964 = vpack.c.b16 %v3250, %v3247
  %v3965 = vpack.c.b16 %v3251, %v3248
  %v3966 = vpack.c.b16 %v3252, %v3249
  %v3967 = vpack.c.b16 %v3256, %v3253
  %v3968 = vpack.c.b16 %v3257, %v3254
  %v3969 = vpack.c.b16 %v3258, %v3255
  %v3970 = vpack.c.b16 %v3262, %v3259
  %v3971 = vpack.c.b16 %v3263, %v3260
  %v3972 = vpack.c.b16 %v3264, %v3261
  %v3973 = vpack.c.b16 %v3268, %v3265
  %v3974 = vpack.c.b16 %v3269, %v3266
  %v3975 = vpack.c.b16 %v3270, %v3267
  %v3976 = vpack.c.b16 %v3274, %v3271
  %v3977 = vpack.c.b16 %v3275, %v3272
  %v3978 = vpack.c.b16 %v3276, %v3273
  %v3979 = vpack.c.b16 %v3280, %v3277
  %v3980 = vpack.c.b16 %v3281, %v3278
  %v3981 = vpack.c.b16 %v3282, %v3279
  %v3982 = vpack.c.b16 %v3286, %v3283
  %v3983 = vpack.c.b16 %v3287, %v3284
  %v3984 = vpack.c.b16 %v3288, %v3285
  %v3985 = vpack.c.b16 %v3292, %v3289
  %v3986 = vpack.c.b16 %v3293, %v3290
  %v3987 = vpack.c.b16 %v3294, %v3291
  %v3988 = vpack.c.b16 %v3298, %v3295
  %v3989 = vpack.c.b16 %v3299, %v3296
  %v3990 = vpack.c.b16 %v3300, %v3297
  %v3991 = vpack.c.b16 %v3304, %v3301
  %v3992 = vpack.c.b16 %v3305, %v3302
  %v3993 = vpack.c.b16 %v3306, %v3303
  %v3994 = vpack.c.b16 %v3310, %v3307
  %v3995 = vpack.c.b16 %v3311, %v3308
  %v3996 = vpack.c.b16 %v3312, %v3309
  %v3997 = vpack.c.b16 %v3316, %v3313
  %v3998 = vpack.c.b16 %v3317, %v3314
  %v3999 = vpack.c.b16 %v3318, %v3315
  %v4000 = vpack.c.b16 %v3322, %v3319
  %v4001 = vpack.c.b16 %v3323, %v3320
  %v4002 = vpack.c.b16 %v3324, %v3321
  %v4003 = vpack.c.b16 %v3328, %v3325
  %v4004 = vpack.c.b16 %v3329, %v3326
  %v4005 = vpack.c.b16 %v3330, %v3327
  %v4006 = vpack.c.b16 %v3334, %v3331
  %v4007 = vpack.c.b16 %v3335, %v3332
  %v4008 = vpack.c.b16 %v3336, %v3333
  %v4009 = vpack.c.b16 %v3340, %v3337
  %v4010 = vpack.c.b16 %v3341, %v3338
  %v4011 = vpack.c.b16 %v3342, %v3339
  %v4012 = vpack.c.b16 %v3346, %v3343
  %v4013 = vpack.c.b16 %v3347, %v3344
  %v4014 = vpack.c.b16 %v3348, %v3345
  %v4015 = vpack.c.b16 %v3352, %v3349
  %v4016 = vpack.c.b16 %v3353, %v3350
  %v4017 = vpack.c.b16 %v3354, %v3351
  %v4018 = vpack.c.b16 %v3358, %v3355
  %v4019 = vpack.c.b16 %v3359, %v3356
  %v4020 = vpack.c.b16 %v3360, %v3357
  %v4021 = vpack.c.b16 %v3364, %v3361
  %v4022 = vpack.c.b16 %v3365, %v3362
  %v4023 = vpack.c.b16 %v3366, %v3363
  %v4024 = vpack.c.b16 %v3370, %v3367
  %v4025 = vpack.c.b16 %v3371, %v3368
  %v4026 = vpack.c.b16 %v3372, %v3369
  %v4027 = vpack.c.b16 %v3376, %v3373
  %v4028 = vpack.c.b16 %v3377, %v3374
  %v4029 = vpack.c.b16 %v3378, %v3375
  %v4030 = vpack.c.b16 %v3382, %v3379
  %v4031 = vpack.c.b16 %v3383, %v3380
  %v4032 = vpack.c.b16 %v3384, %v3381
  %4681 = vmatprep.subr.bf16.mxu0 %v3386
  %4682 = vmatpush1.bf16.msra.mxu0 %v3385
  %4683 = vmatprep.subr.bf16.mxu0 %v3389
  %4684 = vmatpush1.bf16.msra.mxu0 %v3388
  %4685 = vmatprep.subr.bf16.mxu0 %v3392
  %4686 = vmatpush1.bf16.msra.mxu0 %v3391
  %4687 = vmatprep.subr.bf16.mxu0 %v3395
  %4688 = vmatpush1.bf16.msra.mxu0 %v3394
  %4689 = vmatprep.subr.bf16.mxu0 %v3398
  %4690 = vmatpush1.bf16.msra.mxu0 %v3397
  %4691 = vmatprep.subr.bf16.mxu0 %v3401
  %4692 = vmatpush1.bf16.msra.mxu0 %v3400
  %4693 = vmatprep.subr.bf16.mxu0 %v3404
  %4694 = vmatpush1.bf16.msra.mxu0 %v3403
  %4695 = vmatprep.subr.bf16.mxu0 %v3407
  %4696 = vmatpush1.bf16.msra.mxu0 %v3406
  %4697 = vmatprep.subr.bf16.mxu0 %v3410
  %4698 = vmatpush1.bf16.msra.mxu0 %v3409
  %4699 = vmatprep.subr.bf16.mxu0 %v3413
  %4700 = vmatpush1.bf16.msra.mxu0 %v3412
  %4701 = vmatprep.subr.bf16.mxu0 %v3416
  %4702 = vmatpush1.bf16.msra.mxu0 %v3415
  %4703 = vmatprep.subr.bf16.mxu0 %v3419
  %4704 = vmatpush1.bf16.msra.mxu0 %v3418
  %4705 = vmatprep.subr.bf16.mxu0 %v3422
  %4706 = vmatpush1.bf16.msra.mxu0 %v3421
  %4707 = vmatprep.subr.bf16.mxu0 %v3425
  %4708 = vmatpush1.bf16.msra.mxu0 %v3424
  %4709 = vmatprep.subr.bf16.mxu0 %v3428
  %4710 = vmatpush1.bf16.msra.mxu0 %v3427
  %4711 = vmatprep.subr.bf16.mxu0 %v3431
  %4712 = vmatpush1.bf16.msra.mxu0 %v3430
  %4713 = vmatprep.mubr.bf16.mxu0 %v1118
  %4714 = vmatmul.mubr.bf16.gmra.mrb[0].mxu0 %v1117
  %v4715 = vpop.f32.mrb[0].mxu0
  %v4716 = vadd.f32 0.0, %v4715
  %v4717 = vpop.f32.mrb[0].mxu0
  %v4718 = vadd.f32 0.0, %v4717
  %v4719 = vpop.f32.mrb[0].mxu0
  %v4720 = vadd.f32 0.0, %v4719
  %v4721 = vpop.f32.mrb[0].mxu0
  %v4722 = vadd.f32 0.0, %v4721
  %4723 = vmatprep.mubr.bf16.mxu0 %v1145
  %4724 = vmatmul.mubr.bf16.gmra.mrb[0].mxu0 %v1144
  %v4725 = vpop.f32.mrb[0].mxu0
  %v4726 = vadd.f32 0.0, %v4725
  %v4727 = vpop.f32.mrb[0].mxu0
  %v4728 = vadd.f32 0.0, %v4727
  %v4729 = vpop.f32.mrb[0].mxu0
  %v4730 = vadd.f32 0.0, %v4729
  %v4731 = vpop.f32.mrb[0].mxu0
  %v4732 = vadd.f32 0.0, %v4731
  %4733 = vdwg.mxu0
  %4734 = vmatprep.subr.bf16.mxu0 %v3434
  %4735 = vmatpush1.bf16.msra.mxu0 %v3433
  %4736 = vmatprep.subr.bf16.mxu0 %v3437
  %4737 = vmatpush1.bf16.msra.mxu0 %v3436
  %4738 = vmatprep.subr.bf16.mxu0 %v3440
  %4739 = vmatpush1.bf16.msra.mxu0 %v3439
  %4740 = vmatprep.subr.bf16.mxu0 %v3443
  %4741 = vmatpush1.bf16.msra.mxu0 %v3442
  %4742 = vmatprep.subr.bf16.mxu0 %v3446
  %4743 = vmatpush1.bf16.msra.mxu0 %v3445
  %4744 = vmatprep.subr.bf16.mxu0 %v3449
  %4745 = vmatpush1.bf16.msra.mxu0 %v3448
  %4746 = vmatprep.subr.bf16.mxu0 %v3452
  %4747 = vmatpush1.bf16.msra.mxu0 %v3451
  %4748 = vmatprep.subr.bf16.mxu0 %v3455
  %4749 = vmatpush1.bf16.msra.mxu0 %v3454
  %4750 = vmatprep.subr.bf16.mxu0 %v3458
  %4751 = vmatpush1.bf16.msra.mxu0 %v3457
  %4752 = vmatprep.subr.bf16.mxu0 %v3461
  %4753 = vmatpush1.bf16.msra.mxu0 %v3460
  %4754 = vmatprep.subr.bf16.mxu0 %v3464
  %4755 = vmatpush1.bf16.msra.mxu0 %v3463
  %4756 = vmatprep.subr.bf16.mxu0 %v3467
  %4757 = vmatpush1.bf16.msra.mxu0 %v3466
  %4758 = vmatprep.subr.bf16.mxu0 %v3470
  %4759 = vmatpush1.bf16.msra.mxu0 %v3469
  %4760 = vmatprep.subr.bf16.mxu0 %v3473
  %4761 = vmatpush1.bf16.msra.mxu0 %v3472
  %4762 = vmatprep.subr.bf16.mxu0 %v3476
  %4763 = vmatpush1.bf16.msra.mxu0 %v3475
  %4764 = vmatprep.subr.bf16.mxu0 %v3479
  %4765 = vmatpush1.bf16.msra.mxu0 %v3478
  %4766 = vmatprep.mubr.bf16.mxu0 %v1120
  %4767 = vmatmul.mubr.bf16.gmra.mrb[0].mxu0 %v1119
  %v4768 = vpop.f32.mrb[0].mxu0
  %v4769 = vadd.f32 %v4716, %v4768
  %v4770 = vpop.f32.mrb[0].mxu0
  %v4771 = vadd.f32 %v4718, %v4770
  %v4772 = vpop.f32.mrb[0].mxu0
  %v4773 = vadd.f32 %v4720, %v4772
  %v4774 = vpop.f32.mrb[0].mxu0
  %v4775 = vadd.f32 %v4722, %v4774
  %4776 = vmatprep.mubr.bf16.mxu0 %v1147
  %4777 = vmatmul.mubr.bf16.gmra.mrb[0].mxu0 %v1146
  %v4778 = vpop.f32.mrb[0].mxu0
  %v4779 = vadd.f32 %v4726, %v4778
  %v4780 = vpop.f32.mrb[0].mxu0
  %v4781 = vadd.f32 %v4728, %v4780
  %v4782 = vpop.f32.mrb[0].mxu0
  %v4783 = vadd.f32 %v4730, %v4782
  %v4784 = vpop.f32.mrb[0].mxu0
  %v4785 = vadd.f32 %v4732, %v4784
  %4786 = vdwg.mxu0
  %4787 = vmatprep.subr.bf16.mxu0 %v3482
  %4788 = vmatpush1.bf16.msra.mxu0 %v3481
  %4789 = vmatprep.subr.bf16.mxu0 %v3485
  %4790 = vmatpush1.bf16.msra.mxu0 %v3484
  %4791 = vmatprep.subr.bf16.mxu0 %v3488
  %4792 = vmatpush1.bf16.msra.mxu0 %v3487
  %4793 = vmatprep.subr.bf16.mxu0 %v3491
  %4794 = vmatpush1.bf16.msra.mxu0 %v3490
  %4795 = vmatprep.subr.bf16.mxu0 %v3494
  %4796 = vmatpush1.bf16.msra.mxu0 %v3493
  %4797 = vmatprep.subr.bf16.mxu0 %v3497
  %4798 = vmatpush1.bf16.msra.mxu0 %v3496
  %4799 = vmatprep.subr.bf16.mxu0 %v3500
  %4800 = vmatpush1.bf16.msra.mxu0 %v3499
  %4801 = vmatprep.subr.bf16.mxu0 %v3503
  %4802 = vmatpush1.bf16.msra.mxu0 %v3502
  %4803 = vmatprep.subr.bf16.mxu0 %v3506
  %4804 = vmatpush1.bf16.msra.mxu0 %v3505
  %4805 = vmatprep.subr.bf16.mxu0 %v3509
  %4806 = vmatpush1.bf16.msra.mxu0 %v3508
  %4807 = vmatprep.subr.bf16.mxu0 %v3512
  %4808 = vmatpush1.bf16.msra.mxu0 %v3511
  %4809 = vmatprep.subr.bf16.mxu0 %v3515
  %4810 = vmatpush1.bf16.msra.mxu0 %v3514
  %4811 = vmatprep.subr.bf16.mxu0 %v3518
  %4812 = vmatpush1.bf16.msra.mxu0 %v3517
  %4813 = vmatprep.subr.bf16.mxu0 %v3521
  %4814 = vmatpush1.bf16.msra.mxu0 %v3520
  %4815 = vmatprep.subr.bf16.mxu0 %v3524
  %4816 = vmatpush1.bf16.msra.mxu0 %v3523
  %4817 = vmatprep.subr.bf16.mxu0 %v3527
  %4818 = vmatpush1.bf16.msra.mxu0 %v3526
  %4819 = vmatprep.mubr.bf16.mxu0 %v1122
  %4820 = vmatmul.mubr.bf16.gmra.mrb[0].mxu0 %v1121
  %v4821 = vpop.f32.mrb[0].mxu0
  %v4822 = vadd.f32 %v4769, %v4821
  %v4823 = vpop.f32.mrb[0].mxu0
  %v4824 = vadd.f32 %v4771, %v4823
  %v4825 = vpop.f32.mrb[0].mxu0
  %v4826 = vadd.f32 %v4773, %v4825
  %v4827 = vpop.f32.mrb[0].mxu0
  %v4828 = vadd.f32 %v4775, %v4827
  %4829 = vmatprep.mubr.bf16.mxu0 %v1149
  %4830 = vmatmul.mubr.bf16.gmra.mrb[0].mxu0 %v1148
  %v4831 = vpop.f32.mrb[0].mxu0
  %v4832 = vadd.f32 %v4779, %v4831
  %v4833 = vpop.f32.mrb[0].mxu0
  %v4834 = vadd.f32 %v4781, %v4833
  %v4835 = vpop.f32.mrb[0].mxu0
  %v4836 = vadd.f32 %v4783, %v4835
  %v4837 = vpop.f32.mrb[0].mxu0
  %v4838 = vadd.f32 %v4785, %v4837
  %4839 = vdwg.mxu0
  %4840 = vmatprep.subr.bf16.mxu0 %v3530
  %4841 = vmatpush1.bf16.msra.mxu0 %v3529
  %4842 = vmatprep.subr.bf16.mxu0 %v3533
  %4843 = vmatpush1.bf16.msra.mxu0 %v3532
  %4844 = vmatprep.subr.bf16.mxu0 %v3536
  %4845 = vmatpush1.bf16.msra.mxu0 %v3535
  %4846 = vmatprep.subr.bf16.mxu0 %v3539
  %4847 = vmatpush1.bf16.msra.mxu0 %v3538
  %4848 = vmatprep.subr.bf16.mxu0 %v3542
  %4849 = vmatpush1.bf16.msra.mxu0 %v3541
  %4850 = vmatprep.subr.bf16.mxu0 %v3545
  %4851 = vmatpush1.bf16.msra.mxu0 %v3544
  %4852 = vmatprep.subr.bf16.mxu0 %v3548
  %4853 = vmatpush1.bf16.msra.mxu0 %v3547
  %4854 = vmatprep.subr.bf16.mxu0 %v3551
  %4855 = vmatpush1.bf16.msra.mxu0 %v3550
  %4856 = vmatprep.subr.bf16.mxu0 %v3554
  %4857 = vmatpush1.bf16.msra.mxu0 %v3553
  %4858 = vmatprep.subr.bf16.mxu0 %v3557
  %4859 = vmatpush1.bf16.msra.mxu0 %v3556
  %4860 = vmatprep.subr.bf16.mxu0 %v3560
  %4861 = vmatpush1.bf16.msra.mxu0 %v3559
  %4862 = vmatprep.subr.bf16.mxu0 %v3563
  %4863 = vmatpush1.bf16.msra.mxu0 %v3562
  %4864 = vmatprep.subr.bf16.mxu0 %v3566
  %4865 = vmatpush1.bf16.msra.mxu0 %v3565
  %4866 = vmatprep.subr.bf16.mxu0 %v3569
  %4867 = vmatpush1.bf16.msra.mxu0 %v3568
  %4868 = vmatprep.subr.bf16.mxu0 %v3572
  %4869 = vmatpush1.bf16.msra.mxu0 %v3571
  %4870 = vmatprep.subr.bf16.mxu0 %v3575
  %4871 = vmatpush1.bf16.msra.mxu0 %v3574
  %4872 = vmatprep.mubr.bf16.mxu0 %v1124
  %4873 = vmatmul.mubr.bf16.gmra.mrb[0].mxu0 %v1123
  %v4874 = vpop.f32.mrb[0].mxu0
  %v4875 = vadd.f32 %v4822, %v4874
  %v4876 = vpop.f32.mrb[0].mxu0
  %v4877 = vadd.f32 %v4824, %v4876
  %v4878 = vpop.f32.mrb[0].mxu0
  %v4879 = vadd.f32 %v4826, %v4878
  %v4880 = vpop.f32.mrb[0].mxu0
  %v4881 = vadd.f32 %v4828, %v4880
  %4882 = vmatprep.mubr.bf16.mxu0 %v1151
  %4883 = vmatmul.mubr.bf16.gmra.mrb[0].mxu0 %v1150
  %v4884 = vpop.f32.mrb[0].mxu0
  %v4885 = vadd.f32 %v4832, %v4884
  %v4886 = vpop.f32.mrb[0].mxu0
  %v4887 = vadd.f32 %v4834, %v4886
  %v4888 = vpop.f32.mrb[0].mxu0
  %v4889 = vadd.f32 %v4836, %v4888
  %v4890 = vpop.f32.mrb[0].mxu0
  %v4891 = vadd.f32 %v4838, %v4890
  %4892 = vdwg.mxu0
  %4893 = vmatprep.subr.bf16.mxu0 %v3578
  %4894 = vmatpush1.bf16.msra.mxu0 %v3577
  %4895 = vmatprep.subr.bf16.mxu0 %v3581
  %4896 = vmatpush1.bf16.msra.mxu0 %v3580
  %4897 = vmatprep.subr.bf16.mxu0 %v3584
  %4898 = vmatpush1.bf16.msra.mxu0 %v3583
  %4899 = vmatprep.subr.bf16.mxu0 %v3587
  %4900 = vmatpush1.bf16.msra.mxu0 %v3586
  %4901 = vmatprep.subr.bf16.mxu0 %v3590
  %4902 = vmatpush1.bf16.msra.mxu0 %v3589
  %4903 = vmatprep.subr.bf16.mxu0 %v3593
  %4904 = vmatpush1.bf16.msra.mxu0 %v3592
  %4905 = vmatprep.subr.bf16.mxu0 %v3596
  %4906 = vmatpush1.bf16.msra.mxu0 %v3595
  %4907 = vmatprep.subr.bf16.mxu0 %v3599
  %4908 = vmatpush1.bf16.msra.mxu0 %v3598
  %4909 = vmatprep.subr.bf16.mxu0 %v3602
  %4910 = vmatpush1.bf16.msra.mxu0 %v3601
  %4911 = vmatprep.subr.bf16.mxu0 %v3605
  %4912 = vmatpush1.bf16.msra.mxu0 %v3604
  %4913 = vmatprep.subr.bf16.mxu0 %v3608
  %4914 = vmatpush1.bf16.msra.mxu0 %v3607
  %4915 = vmatprep.subr.bf16.mxu0 %v3611
  %4916 = vmatpush1.bf16.msra.mxu0 %v3610
  %4917 = vmatprep.subr.bf16.mxu0 %v3614
  %4918 = vmatpush1.bf16.msra.mxu0 %v3613
  %4919 = vmatprep.subr.bf16.mxu0 %v3617
  %4920 = vmatpush1.bf16.msra.mxu0 %v3616
  %4921 = vmatprep.subr.bf16.mxu0 %v3620
  %4922 = vmatpush1.bf16.msra.mxu0 %v3619
  %4923 = vmatprep.subr.bf16.mxu0 %v3623
  %4924 = vmatpush1.bf16.msra.mxu0 %v3622
  %4925 = vmatprep.mubr.bf16.mxu0 %v1126
  %4926 = vmatmul.mubr.bf16.gmra.mrb[0].mxu0 %v1125
  %v4927 = vpop.f32.mrb[0].mxu0
  %v4928 = vadd.f32 %v4875, %v4927
  %v4929 = vpop.f32.mrb[0].mxu0
  %v4930 = vadd.f32 %v4877, %v4929
  %v4931 = vpop.f32.mrb[0].mxu0
  %v4932 = vadd.f32 %v4879, %v4931
  %v4933 = vpop.f32.mrb[0].mxu0
  %v4934 = vadd.f32 %v4881, %v4933
  %4935 = vmatprep.mubr.bf16.mxu0 %v1153
  %4936 = vmatmul.mubr.bf16.gmra.mrb[0].mxu0 %v1152
  %v4937 = vpop.f32.mrb[0].mxu0
  %v4938 = vadd.f32 %v4885, %v4937
  %v4939 = vpop.f32.mrb[0].mxu0
  %v4940 = vadd.f32 %v4887, %v4939
  %v4941 = vpop.f32.mrb[0].mxu0
  %v4942 = vadd.f32 %v4889, %v4941
  %v4943 = vpop.f32.mrb[0].mxu0
  %v4944 = vadd.f32 %v4891, %v4943
  %4945 = vdwg.mxu0
  %4946 = vmatprep.subr.bf16.mxu0 %v3626
  %4947 = vmatpush1.bf16.msra.mxu0 %v3625
  %4948 = vmatprep.subr.bf16.mxu0 %v3629
  %4949 = vmatpush1.bf16.msra.mxu0 %v3628
  %4950 = vmatprep.subr.bf16.mxu0 %v3632
  %4951 = vmatpush1.bf16.msra.mxu0 %v3631
  %4952 = vmatprep.subr.bf16.mxu0 %v3635
  %4953 = vmatpush1.bf16.msra.mxu0 %v3634
  %4954 = vmatprep.subr.bf16.mxu0 %v3638
  %4955 = vmatpush1.bf16.msra.mxu0 %v3637
  %4956 = vmatprep.subr.bf16.mxu0 %v3641
  %4957 = vmatpush1.bf16.msra.mxu0 %v3640
  %4958 = vmatprep.subr.bf16.mxu0 %v3644
  %4959 = vmatpush1.bf16.msra.mxu0 %v3643
  %4960 = vmatprep.subr.bf16.mxu0 %v3647
  %4961 = vmatpush1.bf16.msra.mxu0 %v3646
  %4962 = vmatprep.subr.bf16.mxu0 %v3650
  %4963 = vmatpush1.bf16.msra.mxu0 %v3649
  %4964 = vmatprep.subr.bf16.mxu0 %v3653
  %4965 = vmatpush1.bf16.msra.mxu0 %v3652
  %4966 = vmatprep.subr.bf16.mxu0 %v3656
  %4967 = vmatpush1.bf16.msra.mxu0 %v3655
  %4968 = vmatprep.subr.bf16.mxu0 %v3659
  %4969 = vmatpush1.bf16.msra.mxu0 %v3658
  %4970 = vmatprep.subr.bf16.mxu0 %v3662
  %4971 = vmatpush1.bf16.msra.mxu0 %v3661
  %4972 = vmatprep.subr.bf16.mxu0 %v3665
  %4973 = vmatpush1.bf16.msra.mxu0 %v3664
  %4974 = vmatprep.subr.bf16.mxu0 %v3668
  %4975 = vmatpush1.bf16.msra.mxu0 %v3667
  %4976 = vmatprep.subr.bf16.mxu0 %v3671
  %4977 = vmatpush1.bf16.msra.mxu0 %v3670
  %4978 = vmatprep.mubr.bf16.mxu0 %v1128
  %4979 = vmatmul.mubr.bf16.gmra.mrb[0].mxu0 %v1127
  %v4980 = vpop.f32.mrb[0].mxu0
  %v4981 = vadd.f32 %v4928, %v4980
  %v4982 = vpop.f32.mrb[0].mxu0
  %v4983 = vadd.f32 %v4930, %v4982
  %v4984 = vpop.f32.mrb[0].mxu0
  %v4985 = vadd.f32 %v4932, %v4984
  %v4986 = vpop.f32.mrb[0].mxu0
  %v4987 = vadd.f32 %v4934, %v4986
  %4988 = vmatprep.mubr.bf16.mxu0 %v1155
  %4989 = vmatmul.mubr.bf16.gmra.mrb[0].mxu0 %v1154
  %v4990 = vpop.f32.mrb[0].mxu0
  %v4991 = vadd.f32 %v4938, %v4990
  %v4992 = vpop.f32.mrb[0].mxu0
  %v4993 = vadd.f32 %v4940, %v4992
  %v4994 = vpop.f32.mrb[0].mxu0
  %v4995 = vadd.f32 %v4942, %v4994
  %v4996 = vpop.f32.mrb[0].mxu0
  %v4997 = vadd.f32 %v4944, %v4996
  %4998 = vdwg.mxu0
  %4999 = vmatprep.subr.bf16.mxu0 %v3674
  %5000 = vmatpush1.bf16.msra.mxu0 %v3673
  %5001 = vmatprep.subr.bf16.mxu0 %v3677
  %5002 = vmatpush1.bf16.msra.mxu0 %v3676
  %5003 = vmatprep.subr.bf16.mxu0 %v3680
  %5004 = vmatpush1.bf16.msra.mxu0 %v3679
  %5005 = vmatprep.subr.bf16.mxu0 %v3683
  %5006 = vmatpush1.bf16.msra.mxu0 %v3682
  %5007 = vmatprep.subr.bf16.mxu0 %v3686
  %5008 = vmatpush1.bf16.msra.mxu0 %v3685
  %5009 = vmatprep.subr.bf16.mxu0 %v3689
  %5010 = vmatpush1.bf16.msra.mxu0 %v3688
  %5011 = vmatprep.subr.bf16.mxu0 %v3692
  %5012 = vmatpush1.bf16.msra.mxu0 %v3691
  %5013 = vmatprep.subr.bf16.mxu0 %v3695
  %5014 = vmatpush1.bf16.msra.mxu0 %v3694
  %5015 = vmatprep.subr.bf16.mxu0 %v3698
  %5016 = vmatpush1.bf16.msra.mxu0 %v3697
  %5017 = vmatprep.subr.bf16.mxu0 %v3701
  %5018 = vmatpush1.bf16.msra.mxu0 %v3700
  %5019 = vmatprep.subr.bf16.mxu0 %v3704
  %5020 = vmatpush1.bf16.msra.mxu0 %v3703
  %5021 = vmatprep.subr.bf16.mxu0 %v3707
  %5022 = vmatpush1.bf16.msra.mxu0 %v3706
  %5023 = vmatprep.subr.bf16.mxu0 %v3710
  %5024 = vmatpush1.bf16.msra.mxu0 %v3709
  %5025 = vmatprep.subr.bf16.mxu0 %v3713
  %5026 = vmatpush1.bf16.msra.mxu0 %v3712
  %5027 = vmatprep.subr.bf16.mxu0 %v3716
  %5028 = vmatpush1.bf16.msra.mxu0 %v3715
  %5029 = vmatprep.subr.bf16.mxu0 %v3719
  %5030 = vmatpush1.bf16.msra.mxu0 %v3718
  %5031 = vmatprep.mubr.bf16.mxu0 %v1130
  %5032 = vmatmul.mubr.bf16.gmra.mrb[0].mxu0 %v1129
  %v5033 = vpop.f32.mrb[0].mxu0
  %v5034 = vadd.f32 %v4981, %v5033
  %v5035 = vpop.f32.mrb[0].mxu0
  %v5036 = vadd.f32 %v4983, %v5035
  %v5037 = vpop.f32.mrb[0].mxu0
  %v5038 = vadd.f32 %v4985, %v5037
  %v5039 = vpop.f32.mrb[0].mxu0
  %v5040 = vadd.f32 %v4987, %v5039
  %5041 = vmatprep.mubr.bf16.mxu0 %v1157
  %5042 = vmatmul.mubr.bf16.gmra.mrb[0].mxu0 %v1156
  %v5043 = vpop.f32.mrb[0].mxu0
  %v5044 = vadd.f32 %v4991, %v5043
  %v5045 = vpop.f32.mrb[0].mxu0
  %v5046 = vadd.f32 %v4993, %v5045
  %v5047 = vpop.f32.mrb[0].mxu0
  %v5048 = vadd.f32 %v4995, %v5047
  %v5049 = vpop.f32.mrb[0].mxu0
  %v5050 = vadd.f32 %v4997, %v5049
  %5051 = vdwg.mxu0
  %5052 = vmatprep.subr.bf16.mxu0 %v3722
  %5053 = vmatpush1.bf16.msra.mxu0 %v3721
  %5054 = vmatprep.subr.bf16.mxu0 %v3725
  %5055 = vmatpush1.bf16.msra.mxu0 %v3724
  %5056 = vmatprep.subr.bf16.mxu0 %v3728
  %5057 = vmatpush1.bf16.msra.mxu0 %v3727
  %5058 = vmatprep.subr.bf16.mxu0 %v3731
  %5059 = vmatpush1.bf16.msra.mxu0 %v3730
  %5060 = vmatprep.subr.bf16.mxu0 %v3734
  %5061 = vmatpush1.bf16.msra.mxu0 %v3733
  %5062 = vmatprep.subr.bf16.mxu0 %v3737
  %5063 = vmatpush1.bf16.msra.mxu0 %v3736
  %5064 = vmatprep.subr.bf16.mxu0 %v3740
  %5065 = vmatpush1.bf16.msra.mxu0 %v3739
  %5066 = vmatprep.subr.bf16.mxu0 %v3743
  %5067 = vmatpush1.bf16.msra.mxu0 %v3742
  %5068 = vmatprep.subr.bf16.mxu0 %v3746
  %5069 = vmatpush1.bf16.msra.mxu0 %v3745
  %5070 = vmatprep.subr.bf16.mxu0 %v3749
  %5071 = vmatpush1.bf16.msra.mxu0 %v3748
  %5072 = vmatprep.subr.bf16.mxu0 %v3752
  %5073 = vmatpush1.bf16.msra.mxu0 %v3751
  %5074 = vmatprep.subr.bf16.mxu0 %v3755
  %5075 = vmatpush1.bf16.msra.mxu0 %v3754
  %5076 = vmatprep.subr.bf16.mxu0 %v3758
  %5077 = vmatpush1.bf16.msra.mxu0 %v3757
  %5078 = vmatprep.subr.bf16.mxu0 %v3761
  %5079 = vmatpush1.bf16.msra.mxu0 %v3760
  %5080 = vmatprep.subr.bf16.mxu0 %v3764
  %5081 = vmatpush1.bf16.msra.mxu0 %v3763
  %5082 = vmatprep.subr.bf16.mxu0 %v3767
  %5083 = vmatpush1.bf16.msra.mxu0 %v3766
  %5084 = vmatprep.mubr.bf16.mxu0 %v1132
  %5085 = vmatmul.mubr.bf16.gmra.mrb[0].mxu0 %v1131
  %v5086 = vpop.f32.mrb[0].mxu0
  %v5087 = vadd.f32 %v5034, %v5086
  %v5088 = vpop.f32.mrb[0].mxu0
  %v5089 = vadd.f32 %v5036, %v5088
  %v5090 = vpop.f32.mrb[0].mxu0
  %v5091 = vadd.f32 %v5038, %v5090
  %v5092 = vpop.f32.mrb[0].mxu0
  %v5093 = vadd.f32 %v5040, %v5092
  %5094 = vmatprep.mubr.bf16.mxu0 %v1159
  %5095 = vmatmul.mubr.bf16.gmra.mrb[0].mxu0 %v1158
  %v5096 = vpop.f32.mrb[0].mxu0
  %v5097 = vadd.f32 %v5044, %v5096
  %v5098 = vpop.f32.mrb[0].mxu0
  %v5099 = vadd.f32 %v5046, %v5098
  %v5100 = vpop.f32.mrb[0].mxu0
  %v5101 = vadd.f32 %v5048, %v5100
  %v5102 = vpop.f32.mrb[0].mxu0
  %v5103 = vadd.f32 %v5050, %v5102
  %5104 = vdwg.mxu0
  %5105 = vmatprep.subr.bf16.mxu0 %v3770
  %5106 = vmatpush1.bf16.msra.mxu0 %v3769
  %5107 = vmatprep.subr.bf16.mxu0 %v3773
  %5108 = vmatpush1.bf16.msra.mxu0 %v3772
  %5109 = vmatprep.subr.bf16.mxu0 %v3776
  %5110 = vmatpush1.bf16.msra.mxu0 %v3775
  %5111 = vmatprep.subr.bf16.mxu0 %v3779
  %5112 = vmatpush1.bf16.msra.mxu0 %v3778
  %5113 = vmatprep.subr.bf16.mxu0 %v3782
  %5114 = vmatpush1.bf16.msra.mxu0 %v3781
  %5115 = vmatprep.subr.bf16.mxu0 %v3785
  %5116 = vmatpush1.bf16.msra.mxu0 %v3784
  %5117 = vmatprep.subr.bf16.mxu0 %v3788
  %5118 = vmatpush1.bf16.msra.mxu0 %v3787
  %5119 = vmatprep.subr.bf16.mxu0 %v3791
  %5120 = vmatpush1.bf16.msra.mxu0 %v3790
  %5121 = vmatprep.subr.bf16.mxu0 %v3794
  %5122 = vmatpush1.bf16.msra.mxu0 %v3793
  %5123 = vmatprep.subr.bf16.mxu0 %v3797
  %5124 = vmatpush1.bf16.msra.mxu0 %v3796
  %5125 = vmatprep.subr.bf16.mxu0 %v3800
  %5126 = vmatpush1.bf16.msra.mxu0 %v3799
  %5127 = vmatprep.subr.bf16.mxu0 %v3803
  %5128 = vmatpush1.bf16.msra.mxu0 %v3802
  %5129 = vmatprep.subr.bf16.mxu0 %v3806
  %5130 = vmatpush1.bf16.msra.mxu0 %v3805
  %5131 = vmatprep.subr.bf16.mxu0 %v3809
  %5132 = vmatpush1.bf16.msra.mxu0 %v3808
  %5133 = vmatprep.subr.bf16.mxu0 %v3812
  %5134 = vmatpush1.bf16.msra.mxu0 %v3811
  %5135 = vmatprep.subr.bf16.mxu0 %v3815
  %5136 = vmatpush1.bf16.msra.mxu0 %v3814
  %5137 = vmatprep.mubr.bf16.mxu0 %v1134
  %5138 = vmatmul.mubr.bf16.gmra.mrb[0].mxu0 %v1133
  %v5139 = vpop.f32.mrb[0].mxu0
  %v5140 = vadd.f32 %v5087, %v5139
  %v5141 = vpop.f32.mrb[0].mxu0
  %v5142 = vadd.f32 %v5089, %v5141
  %v5143 = vpop.f32.mrb[0].mxu0
  %v5144 = vadd.f32 %v5091, %v5143
  %v5145 = vpop.f32.mrb[0].mxu0
  %v5146 = vadd.f32 %v5093, %v5145
  %5147 = vmatprep.mubr.bf16.mxu0 %v1161
  %5148 = vmatmul.mubr.bf16.gmra.mrb[0].mxu0 %v1160
  %v5149 = vpop.f32.mrb[0].mxu0
  %v5150 = vadd.f32 %v5097, %v5149
  %v5151 = vpop.f32.mrb[0].mxu0
  %v5152 = vadd.f32 %v5099, %v5151
  %v5153 = vpop.f32.mrb[0].mxu0
  %v5154 = vadd.f32 %v5101, %v5153
  %v5155 = vpop.f32.mrb[0].mxu0
  %v5156 = vadd.f32 %v5103, %v5155
  %5157 = vdwg.mxu0
  %5158 = vmatprep.subr.bf16.mxu0 %v3818
  %5159 = vmatpush1.bf16.msra.mxu0 %v3817
  %5160 = vmatprep.subr.bf16.mxu0 %v3821
  %5161 = vmatpush1.bf16.msra.mxu0 %v3820
  %5162 = vmatprep.subr.bf16.mxu0 %v3824
  %5163 = vmatpush1.bf16.msra.mxu0 %v3823
  %5164 = vmatprep.subr.bf16.mxu0 %v3827
  %5165 = vmatpush1.bf16.msra.mxu0 %v3826
  %5166 = vmatprep.subr.bf16.mxu0 %v3830
  %5167 = vmatpush1.bf16.msra.mxu0 %v3829
  %5168 = vmatprep.subr.bf16.mxu0 %v3833
  %5169 = vmatpush1.bf16.msra.mxu0 %v3832
  %5170 = vmatprep.subr.bf16.mxu0 %v3836
  %5171 = vmatpush1.bf16.msra.mxu0 %v3835
  %5172 = vmatprep.subr.bf16.mxu0 %v3839
  %5173 = vmatpush1.bf16.msra.mxu0 %v3838
  %5174 = vmatprep.subr.bf16.mxu0 %v3842
  %5175 = vmatpush1.bf16.msra.mxu0 %v3841
  %5176 = vmatprep.subr.bf16.mxu0 %v3845
  %5177 = vmatpush1.bf16.msra.mxu0 %v3844
  %5178 = vmatprep.subr.bf16.mxu0 %v3848
  %5179 = vmatpush1.bf16.msra.mxu0 %v3847
  %5180 = vmatprep.subr.bf16.mxu0 %v3851
  %5181 = vmatpush1.bf16.msra.mxu0 %v3850
  %5182 = vmatprep.subr.bf16.mxu0 %v3854
  %5183 = vmatpush1.bf16.msra.mxu0 %v3853
  %5184 = vmatprep.subr.bf16.mxu0 %v3857
  %5185 = vmatpush1.bf16.msra.mxu0 %v3856
  %5186 = vmatprep.subr.bf16.mxu0 %v3860
  %5187 = vmatpush1.bf16.msra.mxu0 %v3859
  %5188 = vmatprep.subr.bf16.mxu0 %v3863
  %5189 = vmatpush1.bf16.msra.mxu0 %v3862
  %5190 = vmatprep.mubr.bf16.mxu0 %v1136
  %5191 = vmatmul.mubr.bf16.gmra.mrb[0].mxu0 %v1135
  %v5192 = vpop.f32.mrb[0].mxu0
  %v5193 = vadd.f32 %v5140, %v5192
  %v5194 = vpop.f32.mrb[0].mxu0
  %v5195 = vadd.f32 %v5142, %v5194
  %v5196 = vpop.f32.mrb[0].mxu0
  %v5197 = vadd.f32 %v5144, %v5196
  %v5198 = vpop.f32.mrb[0].mxu0
  %v5199 = vadd.f32 %v5146, %v5198
  %5200 = vmatprep.mubr.bf16.mxu0 %v1163
  %5201 = vmatmul.mubr.bf16.gmra.mrb[0].mxu0 %v1162
  %v5202 = vpop.f32.mrb[0].mxu0
  %v5203 = vadd.f32 %v5150, %v5202
  %v5204 = vpop.f32.mrb[0].mxu0
  %v5205 = vadd.f32 %v5152, %v5204
  %v5206 = vpop.f32.mrb[0].mxu0
  %v5207 = vadd.f32 %v5154, %v5206
  %v5208 = vpop.f32.mrb[0].mxu0
  %v5209 = vadd.f32 %v5156, %v5208
  %5210 = vdwg.mxu0
  %5211 = vmatprep.subr.bf16.mxu0 %v3866
  %5212 = vmatpush1.bf16.msra.mxu0 %v3865
  %5213 = vmatprep.subr.bf16.mxu0 %v3869
  %5214 = vmatpush1.bf16.msra.mxu0 %v3868
  %5215 = vmatprep.subr.bf16.mxu0 %v3872
  %5216 = vmatpush1.bf16.msra.mxu0 %v3871
  %5217 = vmatprep.subr.bf16.mxu0 %v3875
  %5218 = vmatpush1.bf16.msra.mxu0 %v3874
  %5219 = vmatprep.subr.bf16.mxu0 %v3878
  %5220 = vmatpush1.bf16.msra.mxu0 %v3877
  %5221 = vmatprep.subr.bf16.mxu0 %v3881
  %5222 = vmatpush1.bf16.msra.mxu0 %v3880
  %5223 = vmatprep.subr.bf16.mxu0 %v3884
  %5224 = vmatpush1.bf16.msra.mxu0 %v3883
  %5225 = vmatprep.subr.bf16.mxu0 %v3887
  %5226 = vmatpush1.bf16.msra.mxu0 %v3886
  %5227 = vmatprep.subr.bf16.mxu0 %v3890
  %5228 = vmatpush1.bf16.msra.mxu0 %v3889
  %5229 = vmatprep.subr.bf16.mxu0 %v3893
  %5230 = vmatpush1.bf16.msra.mxu0 %v3892
  %5231 = vmatprep.subr.bf16.mxu0 %v3896
  %5232 = vmatpush1.bf16.msra.mxu0 %v3895
  %5233 = vmatprep.subr.bf16.mxu0 %v3899
  %5234 = vmatpush1.bf16.msra.mxu0 %v3898
  %5235 = vmatprep.subr.bf16.mxu0 %v3902
  %5236 = vmatpush1.bf16.msra.mxu0 %v3901
  %5237 = vmatprep.subr.bf16.mxu0 %v3905
  %5238 = vmatpush1.bf16.msra.mxu0 %v3904
  %5239 = vmatprep.subr.bf16.mxu0 %v3908
  %5240 = vmatpush1.bf16.msra.mxu0 %v3907
  %5241 = vmatprep.subr.bf16.mxu0 %v3911
  %5242 = vmatpush1.bf16.msra.mxu0 %v3910
  %5243 = vmatprep.mubr.bf16.mxu0 %v1138
  %5244 = vmatmul.mubr.bf16.gmra.mrb[0].mxu0 %v1137
  %v5245 = vpop.f32.mrb[0].mxu0
  %v5246 = vadd.f32 %v5193, %v5245
  %v5247 = vpop.f32.mrb[0].mxu0
  %v5248 = vadd.f32 %v5195, %v5247
  %v5249 = vpop.f32.mrb[0].mxu0
  %v5250 = vadd.f32 %v5197, %v5249
  %v5251 = vpop.f32.mrb[0].mxu0
  %v5252 = vadd.f32 %v5199, %v5251
  %5253 = vmatprep.mubr.bf16.mxu0 %v1165
  %5254 = vmatmul.mubr.bf16.gmra.mrb[0].mxu0 %v1164
  %v5255 = vpop.f32.mrb[0].mxu0
  %v5256 = vadd.f32 %v5203, %v5255
  %v5257 = vpop.f32.mrb[0].mxu0
  %v5258 = vadd.f32 %v5205, %v5257
  %v5259 = vpop.f32.mrb[0].mxu0
  %v5260 = vadd.f32 %v5207, %v5259
  %v5261 = vpop.f32.mrb[0].mxu0
  %v5262 = vadd.f32 %v5209, %v5261
  %5263 = vdwg.mxu0
  %5264 = vmatprep.subr.bf16.mxu0 %v3914
  %5265 = vmatpush1.bf16.msra.mxu0 %v3913
  %5266 = vmatprep.subr.bf16.mxu0 %v3917
  %5267 = vmatpush1.bf16.msra.mxu0 %v3916
  %5268 = vmatprep.subr.bf16.mxu0 %v3920
  %5269 = vmatpush1.bf16.msra.mxu0 %v3919
  %5270 = vmatprep.subr.bf16.mxu0 %v3923
  %5271 = vmatpush1.bf16.msra.mxu0 %v3922
  %5272 = vmatprep.subr.bf16.mxu0 %v3926
  %5273 = vmatpush1.bf16.msra.mxu0 %v3925
  %5274 = vmatprep.subr.bf16.mxu0 %v3929
  %5275 = vmatpush1.bf16.msra.mxu0 %v3928
  %5276 = vmatprep.subr.bf16.mxu0 %v3932
  %5277 = vmatpush1.bf16.msra.mxu0 %v3931
  %5278 = vmatprep.subr.bf16.mxu0 %v3935
  %5279 = vmatpush1.bf16.msra.mxu0 %v3934
  %5280 = vmatprep.subr.bf16.mxu0 %v3938
  %5281 = vmatpush1.bf16.msra.mxu0 %v3937
  %5282 = vmatprep.subr.bf16.mxu0 %v3941
  %5283 = vmatpush1.bf16.msra.mxu0 %v3940
  %5284 = vmatprep.subr.bf16.mxu0 %v3944
  %5285 = vmatpush1.bf16.msra.mxu0 %v3943
  %5286 = vmatprep.subr.bf16.mxu0 %v3947
  %5287 = vmatpush1.bf16.msra.mxu0 %v3946
  %5288 = vmatprep.subr.bf16.mxu0 %v3950
  %5289 = vmatpush1.bf16.msra.mxu0 %v3949
  %5290 = vmatprep.subr.bf16.mxu0 %v3953
  %5291 = vmatpush1.bf16.msra.mxu0 %v3952
  %5292 = vmatprep.subr.bf16.mxu0 %v3956
  %5293 = vmatpush1.bf16.msra.mxu0 %v3955
  %5294 = vmatprep.subr.bf16.mxu0 %v3959
  %5295 = vmatpush1.bf16.msra.mxu0 %v3958
  %5296 = vmatprep.mubr.bf16.mxu0 %v1140
  %5297 = vmatmul.mubr.bf16.gmra.mrb[0].mxu0 %v1139
  %v5298 = vpop.f32.mrb[0].mxu0
  %v5299 = vadd.f32 %v5246, %v5298
  %v5300 = vpop.f32.mrb[0].mxu0
  %v5301 = vadd.f32 %v5248, %v5300
  %v5302 = vpop.f32.mrb[0].mxu0
  %v5303 = vadd.f32 %v5250, %v5302
  %v5304 = vpop.f32.mrb[0].mxu0
  %v5305 = vadd.f32 %v5252, %v5304
  %5306 = vmatprep.mubr.bf16.mxu0 %v1167
  %5307 = vmatmul.mubr.bf16.gmra.mrb[0].mxu0 %v1166
  %v5308 = vpop.f32.mrb[0].mxu0
  %v5309 = vadd.f32 %v5256, %v5308
  %v5310 = vpop.f32.mrb[0].mxu0
  %v5311 = vadd.f32 %v5258, %v5310
  %v5312 = vpop.f32.mrb[0].mxu0
  %v5313 = vadd.f32 %v5260, %v5312
  %v5314 = vpop.f32.mrb[0].mxu0
  %v5315 = vadd.f32 %v5262, %v5314
  %5316 = vdwg.mxu0
  %5317 = vmatprep.subr.bf16.mxu0 %v3962
  %5318 = vmatpush1.bf16.msra.mxu0 %v3961
  %5319 = vmatprep.subr.bf16.mxu0 %v3965
  %5320 = vmatpush1.bf16.msra.mxu0 %v3964
  %5321 = vmatprep.subr.bf16.mxu0 %v3968
  %5322 = vmatpush1.bf16.msra.mxu0 %v3967
  %5323 = vmatprep.subr.bf16.mxu0 %v3971
  %5324 = vmatpush1.bf16.msra.mxu0 %v3970
  %5325 = vmatprep.subr.bf16.mxu0 %v3974
  %5326 = vmatpush1.bf16.msra.mxu0 %v3973
  %5327 = vmatprep.subr.bf16.mxu0 %v3977
  %5328 = vmatpush1.bf16.msra.mxu0 %v3976
  %5329 = vmatprep.subr.bf16.mxu0 %v3980
  %5330 = vmatpush1.bf16.msra.mxu0 %v3979
  %5331 = vmatprep.subr.bf16.mxu0 %v3983
  %5332 = vmatpush1.bf16.msra.mxu0 %v3982
  %5333 = vmatprep.subr.bf16.mxu0 %v3986
  %5334 = vmatpush1.bf16.msra.mxu0 %v3985
  %5335 = vmatprep.subr.bf16.mxu0 %v3989
  %5336 = vmatpush1.bf16.msra.mxu0 %v3988
  %5337 = vmatprep.subr.bf16.mxu0 %v3992
  %5338 = vmatpush1.bf16.msra.mxu0 %v3991
  %5339 = vmatprep.subr.bf16.mxu0 %v3995
  %5340 = vmatpush1.bf16.msra.mxu0 %v3994
  %5341 = vmatprep.subr.bf16.mxu0 %v3998
  %5342 = vmatpush1.bf16.msra.mxu0 %v3997
  %5343 = vmatprep.subr.bf16.mxu0 %v4001
  %5344 = vmatpush1.bf16.msra.mxu0 %v4000
  %5345 = vmatprep.subr.bf16.mxu0 %v4004
  %5346 = vmatpush1.bf16.msra.mxu0 %v4003
  %5347 = vmatprep.subr.bf16.mxu0 %v4007
  %5348 = vmatpush1.bf16.msra.mxu0 %v4006
  %5349 = vmatprep.mubr.bf16.mxu0 %v1142
  %5350 = vmatmul.mubr.bf16.gmra.mrb[0].mxu0 %v1141
  %v5351 = vpop.f32.mrb[0].mxu0
  %v5352 = vadd.f32 %v5299, %v5351
  %v5353 = vpop.f32.mrb[0].mxu0
  %v5354 = vadd.f32 %v5301, %v5353
  %v5355 = vpop.f32.mrb[0].mxu0
  %v5356 = vadd.f32 %v5303, %v5355
  %v5357 = vpop.f32.mrb[0].mxu0
  %v5358 = vadd.f32 %v5305, %v5357
  %5359 = vmatprep.mubr.bf16.mxu0 %v1169
  %5360 = vmatmul.mubr.bf16.gmra.mrb[0].mxu0 %v1168
  %v5361 = vpop.f32.mrb[0].mxu0
  %v5362 = vadd.f32 %v5309, %v5361
  %v5363 = vpop.f32.mrb[0].mxu0
  %v5364 = vadd.f32 %v5311, %v5363
  %v5365 = vpop.f32.mrb[0].mxu0
  %v5366 = vadd.f32 %v5313, %v5365
  %v5367 = vpop.f32.mrb[0].mxu0
  %v5368 = vadd.f32 %v5315, %v5367
  %5369 = vdwg.mxu0
  %5370 = vmatprep.subr.bf16.mxu0 %v4010
  %5371 = vmatpush1.bf16.msra.mxu0 %v4009
  %5372 = vmatprep.subr.bf16.mxu0 %v4013
  %5373 = vmatpush1.bf16.msra.mxu0 %v4012
  %5374 = vmatprep.subr.bf16.mxu0 %v4016
  %5375 = vmatpush1.bf16.msra.mxu0 %v4015
  %5376 = vmatprep.subr.bf16.mxu0 %v4019
  %5377 = vmatpush1.bf16.msra.mxu0 %v4018
  %5378 = vmatprep.subr.bf16.mxu0 %v4022
  %5379 = vmatpush1.bf16.msra.mxu0 %v4021
  %5380 = vmatprep.subr.bf16.mxu0 %v4025
  %5381 = vmatpush1.bf16.msra.mxu0 %v4024
  %5382 = vmatprep.subr.bf16.mxu0 %v4028
  %5383 = vmatpush1.bf16.msra.mxu0 %v4027
  %5384 = vmatprep.subr.bf16.mxu0 %v4031
  %5385 = vmatpush1.bf16.msra.mxu0 %v4030
  %5386 = vmatprep.subr.bf16.mxu0 0
  %5387 = vmatpush1.bf16.msra.mxu0 0
  %5388 = vmatprep.subr.bf16.mxu0 0
  %5389 = vmatpush1.bf16.msra.mxu0 0
  %5390 = vmatprep.subr.bf16.mxu0 0
  %5391 = vmatpush1.bf16.msra.mxu0 0
  %5392 = vmatprep.subr.bf16.mxu0 0
  %5393 = vmatpush1.bf16.msra.mxu0 0
  %5394 = vmatprep.subr.bf16.mxu0 0
  %5395 = vmatpush1.bf16.msra.mxu0 0
  %5396 = vmatprep.subr.bf16.mxu0 0
  %5397 = vmatpush1.bf16.msra.mxu0 0
  %5398 = vmatprep.subr.bf16.mxu0 0
  %5399 = vmatpush1.bf16.msra.mxu0 0
  %5400 = vmatprep.subr.bf16.mxu0 0
  %5401 = vmatpush1.bf16.msra.mxu0 0
  %5402 = vmatprep.mubr.bf16.mxu0 0
  %5403 = vmatmul.mubr.bf16.gmra.mrb[0].mxu0 %v1143
  %v5404 = vpop.f32.mrb[0].mxu0
  %v5405 = vadd.f32 %v5352, %v5404
  %v5406 = vpop.f32.mrb[0].mxu0
  %v5407 = vadd.f32 %v5354, %v5406
  %v5408 = vpop.f32.mrb[0].mxu0
  %v5409 = vadd.f32 %v5356, %v5408
  %v5410 = vpop.f32.mrb[0].mxu0
  %v5411 = vadd.f32 %v5358, %v5410
  %5412 = vmatprep.mubr.bf16.mxu0 0
  %5413 = vmatmul.mubr.bf16.gmra.mrb[0].mxu0 %v1170
  %v5414 = vpop.f32.mrb[0].mxu0
  %v5415 = vadd.f32 %v5362, %v5414
  %v5416 = vpop.f32.mrb[0].mxu0
  %v5417 = vadd.f32 %v5364, %v5416
  %v5418 = vpop.f32.mrb[0].mxu0
  %v5419 = vadd.f32 %v5366, %v5418
  %v5420 = vpop.f32.mrb[0].mxu0
  %v5421 = vadd.f32 %v5368, %v5420
  %5422 = vdwg.mxu0
  %5423 = vmatprep.subr.bf16.mxu0 0
  %5424 = vmatpush1.bf16.msra.mxu0 %v3387
  %5425 = vmatprep.subr.bf16.mxu0 0
  %5426 = vmatpush1.bf16.msra.mxu0 %v3390
  %5427 = vmatprep.subr.bf16.mxu0 0
  %5428 = vmatpush1.bf16.msra.mxu0 %v3393
  %5429 = vmatprep.subr.bf16.mxu0 0
  %5430 = vmatpush1.bf16.msra.mxu0 %v3396
  %5431 = vmatprep.subr.bf16.mxu0 0
  %5432 = vmatpush1.bf16.msra.mxu0 %v3399
  %5433 = vmatprep.subr.bf16.mxu0 0
  %5434 = vmatpush1.bf16.msra.mxu0 %v3402
  %5435 = vmatprep.subr.bf16.mxu0 0
  %5436 = vmatpush1.bf16.msra.mxu0 %v3405
  %5437 = vmatprep.subr.bf16.mxu0 0
  %5438 = vmatpush1.bf16.msra.mxu0 %v3408
  %5439 = vmatprep.subr.bf16.mxu0 0
  %5440 = vmatpush1.bf16.msra.mxu0 %v3411
  %5441 = vmatprep.subr.bf16.mxu0 0
  %5442 = vmatpush1.bf16.msra.mxu0 %v3414
  %5443 = vmatprep.subr.bf16.mxu0 0
  %5444 = vmatpush1.bf16.msra.mxu0 %v3417
  %5445 = vmatprep.subr.bf16.mxu0 0
  %5446 = vmatpush1.bf16.msra.mxu0 %v3420
  %5447 = vmatprep.subr.bf16.mxu0 0
  %5448 = vmatpush1.bf16.msra.mxu0 %v3423
  %5449 = vmatprep.subr.bf16.mxu0 0
  %5450 = vmatpush1.bf16.msra.mxu0 %v3426
  %5451 = vmatprep.subr.bf16.mxu0 0
  %5452 = vmatpush1.bf16.msra.mxu0 %v3429
  %5453 = vmatprep.subr.bf16.mxu0 0
  %5454 = vmatpush1.bf16.msra.mxu0 %v3432
  %5455 = vmatprep.mubr.bf16.mxu0 %v1118
  %5456 = vmatmul.mubr.bf16.gmra.mrb[0].mxu0 %v1117
  %v5457 = vpop.f32.mrb[0].mxu0
  %v5458 = vadd.f32 0.0, %v5457
  %v5459 = vpop.f32.mrb[0].mxu0
  %v5460 = vpop.f32.mrb[0].mxu0
  %v5461 = vadd.f32 0.0, %v5460
  %v5462 = vpop.f32.mrb[0].mxu0
  %5463 = vmatprep.mubr.bf16.mxu0 %v1145
  %5464 = vmatmul.mubr.bf16.gmra.mrb[0].mxu0 %v1144
  %v5465 = vpop.f32.mrb[0].mxu0
  %v5466 = vadd.f32 0.0, %v5465
  %v5467 = vpop.f32.mrb[0].mxu0
  %v5468 = vpop.f32.mrb[0].mxu0
  %v5469 = vadd.f32 0.0, %v5468
  %v5470 = vpop.f32.mrb[0].mxu0
  %5471 = vdwg.mxu0
  %5472 = vmatprep.subr.bf16.mxu0 0
  %5473 = vmatpush1.bf16.msra.mxu0 %v3435
  %5474 = vmatprep.subr.bf16.mxu0 0
  %5475 = vmatpush1.bf16.msra.mxu0 %v3438
  %5476 = vmatprep.subr.bf16.mxu0 0
  %5477 = vmatpush1.bf16.msra.mxu0 %v3441
  %5478 = vmatprep.subr.bf16.mxu0 0
  %5479 = vmatpush1.bf16.msra.mxu0 %v3444
  %5480 = vmatprep.subr.bf16.mxu0 0
  %5481 = vmatpush1.bf16.msra.mxu0 %v3447
  %5482 = vmatprep.subr.bf16.mxu0 0
  %5483 = vmatpush1.bf16.msra.mxu0 %v3450
  %5484 = vmatprep.subr.bf16.mxu0 0
  %5485 = vmatpush1.bf16.msra.mxu0 %v3453
  %5486 = vmatprep.subr.bf16.mxu0 0
  %5487 = vmatpush1.bf16.msra.mxu0 %v3456
  %5488 = vmatprep.subr.bf16.mxu0 0
  %5489 = vmatpush1.bf16.msra.mxu0 %v3459
  %5490 = vmatprep.subr.bf16.mxu0 0
  %5491 = vmatpush1.bf16.msra.mxu0 %v3462
  %5492 = vmatprep.subr.bf16.mxu0 0
  %5493 = vmatpush1.bf16.msra.mxu0 %v3465
  %5494 = vmatprep.subr.bf16.mxu0 0
  %5495 = vmatpush1.bf16.msra.mxu0 %v3468
  %5496 = vmatprep.subr.bf16.mxu0 0
  %5497 = vmatpush1.bf16.msra.mxu0 %v3471
  %5498 = vmatprep.subr.bf16.mxu0 0
  %5499 = vmatpush1.bf16.msra.mxu0 %v3474
  %5500 = vmatprep.subr.bf16.mxu0 0
  %5501 = vmatpush1.bf16.msra.mxu0 %v3477
  %5502 = vmatprep.subr.bf16.mxu0 0
  %5503 = vmatpush1.bf16.msra.mxu0 %v3480
  %5504 = vmatprep.mubr.bf16.mxu0 %v1120
  %5505 = vmatmul.mubr.bf16.gmra.mrb[0].mxu0 %v1119
  %v5506 = vpop.f32.mrb[0].mxu0
  %v5507 = vadd.f32 %v5458, %v5506
  %v5508 = vpop.f32.mrb[0].mxu0
  %v5509 = vpop.f32.mrb[0].mxu0
  %v5510 = vadd.f32 %v5461, %v5509
  %v5511 = vpop.f32.mrb[0].mxu0
  %5512 = vmatprep.mubr.bf16.mxu0 %v1147
  %5513 = vmatmul.mubr.bf16.gmra.mrb[0].mxu0 %v1146
  %v5514 = vpop.f32.mrb[0].mxu0
  %v5515 = vadd.f32 %v5466, %v5514
  %v5516 = vpop.f32.mrb[0].mxu0
  %v5517 = vpop.f32.mrb[0].mxu0
  %v5518 = vadd.f32 %v5469, %v5517
  %v5519 = vpop.f32.mrb[0].mxu0
  %5520 = vdwg.mxu0
  %5521 = vmatprep.subr.bf16.mxu0 0
  %5522 = vmatpush1.bf16.msra.mxu0 %v3483
  %5523 = vmatprep.subr.bf16.mxu0 0
  %5524 = vmatpush1.bf16.msra.mxu0 %v3486
  %5525 = vmatprep.subr.bf16.mxu0 0
  %5526 = vmatpush1.bf16.msra.mxu0 %v3489
  %5527 = vmatprep.subr.bf16.mxu0 0
  %5528 = vmatpush1.bf16.msra.mxu0 %v3492
  %5529 = vmatprep.subr.bf16.mxu0 0
  %5530 = vmatpush1.bf16.msra.mxu0 %v3495
  %5531 = vmatprep.subr.bf16.mxu0 0
  %5532 = vmatpush1.bf16.msra.mxu0 %v3498
  %5533 = vmatprep.subr.bf16.mxu0 0
  %5534 = vmatpush1.bf16.msra.mxu0 %v3501
  %5535 = vmatprep.subr.bf16.mxu0 0
  %5536 = vmatpush1.bf16.msra.mxu0 %v3504
  %5537 = vmatprep.subr.bf16.mxu0 0
  %5538 = vmatpush1.bf16.msra.mxu0 %v3507
  %5539 = vmatprep.subr.bf16.mxu0 0
  %5540 = vmatpush1.bf16.msra.mxu0 %v3510
  %5541 = vmatprep.subr.bf16.mxu0 0
  %5542 = vmatpush1.bf16.msra.mxu0 %v3513
  %5543 = vmatprep.subr.bf16.mxu0 0
  %5544 = vmatpush1.bf16.msra.mxu0 %v3516
  %5545 = vmatprep.subr.bf16.mxu0 0
  %5546 = vmatpush1.bf16.msra.mxu0 %v3519
  %5547 = vmatprep.subr.bf16.mxu0 0
  %5548 = vmatpush1.bf16.msra.mxu0 %v3522
  %5549 = vmatprep.subr.bf16.mxu0 0
  %5550 = vmatpush1.bf16.msra.mxu0 %v3525
  %5551 = vmatprep.subr.bf16.mxu0 0
  %5552 = vmatpush1.bf16.msra.mxu0 %v3528
  %5553 = vmatprep.mubr.bf16.mxu0 %v1122
  %5554 = vmatmul.mubr.bf16.gmra.mrb[0].mxu0 %v1121
  %v5555 = vpop.f32.mrb[0].mxu0
  %v5556 = vadd.f32 %v5507, %v5555
  %v5557 = vpop.f32.mrb[0].mxu0
  %v5558 = vpop.f32.mrb[0].mxu0
  %v5559 = vadd.f32 %v5510, %v5558
  %v5560 = vpop.f32.mrb[0].mxu0
  %5561 = vmatprep.mubr.bf16.mxu0 %v1149
  %5562 = vmatmul.mubr.bf16.gmra.mrb[0].mxu0 %v1148
  %v5563 = vpop.f32.mrb[0].mxu0
  %v5564 = vadd.f32 %v5515, %v5563
  %v5565 = vpop.f32.mrb[0].mxu0
  %v5566 = vpop.f32.mrb[0].mxu0
  %v5567 = vadd.f32 %v5518, %v5566
  %v5568 = vpop.f32.mrb[0].mxu0
  %5569 = vdwg.mxu0
  %5570 = vmatprep.subr.bf16.mxu0 0
  %5571 = vmatpush1.bf16.msra.mxu0 %v3531
  %5572 = vmatprep.subr.bf16.mxu0 0
  %5573 = vmatpush1.bf16.msra.mxu0 %v3534
  %5574 = vmatprep.subr.bf16.mxu0 0
  %5575 = vmatpush1.bf16.msra.mxu0 %v3537
  %5576 = vmatprep.subr.bf16.mxu0 0
  %5577 = vmatpush1.bf16.msra.mxu0 %v3540
  %5578 = vmatprep.subr.bf16.mxu0 0
  %5579 = vmatpush1.bf16.msra.mxu0 %v3543
  %5580 = vmatprep.subr.bf16.mxu0 0
  %5581 = vmatpush1.bf16.msra.mxu0 %v3546
  %5582 = vmatprep.subr.bf16.mxu0 0
  %5583 = vmatpush1.bf16.msra.mxu0 %v3549
  %5584 = vmatprep.subr.bf16.mxu0 0
  %5585 = vmatpush1.bf16.msra.mxu0 %v3552
  %5586 = vmatprep.subr.bf16.mxu0 0
  %5587 = vmatpush1.bf16.msra.mxu0 %v3555
  %5588 = vmatprep.subr.bf16.mxu0 0
  %5589 = vmatpush1.bf16.msra.mxu0 %v3558
  %5590 = vmatprep.subr.bf16.mxu0 0
  %5591 = vmatpush1.bf16.msra.mxu0 %v3561
  %5592 = vmatprep.subr.bf16.mxu0 0
  %5593 = vmatpush1.bf16.msra.mxu0 %v3564
  %5594 = vmatprep.subr.bf16.mxu0 0
  %5595 = vmatpush1.bf16.msra.mxu0 %v3567
  %5596 = vmatprep.subr.bf16.mxu0 0
  %5597 = vmatpush1.bf16.msra.mxu0 %v3570
  %5598 = vmatprep.subr.bf16.mxu0 0
  %5599 = vmatpush1.bf16.msra.mxu0 %v3573
  %5600 = vmatprep.subr.bf16.mxu0 0
  %5601 = vmatpush1.bf16.msra.mxu0 %v3576
  %5602 = vmatprep.mubr.bf16.mxu0 %v1124
  %5603 = vmatmul.mubr.bf16.gmra.mrb[0].mxu0 %v1123
  %v5604 = vpop.f32.mrb[0].mxu0
  %v5605 = vadd.f32 %v5556, %v5604
  %v5606 = vpop.f32.mrb[0].mxu0
  %v5607 = vpop.f32.mrb[0].mxu0
  %v5608 = vadd.f32 %v5559, %v5607
  %v5609 = vpop.f32.mrb[0].mxu0
  %5610 = vmatprep.mubr.bf16.mxu0 %v1151
  %5611 = vmatmul.mubr.bf16.gmra.mrb[0].mxu0 %v1150
  %v5612 = vpop.f32.mrb[0].mxu0
  %v5613 = vadd.f32 %v5564, %v5612
  %v5614 = vpop.f32.mrb[0].mxu0
  %v5615 = vpop.f32.mrb[0].mxu0
  %v5616 = vadd.f32 %v5567, %v5615
  %v5617 = vpop.f32.mrb[0].mxu0
  %5618 = vdwg.mxu0
  %5619 = vmatprep.subr.bf16.mxu0 0
  %5620 = vmatpush1.bf16.msra.mxu0 %v3579
  %5621 = vmatprep.subr.bf16.mxu0 0
  %5622 = vmatpush1.bf16.msra.mxu0 %v3582
  %5623 = vmatprep.subr.bf16.mxu0 0
  %5624 = vmatpush1.bf16.msra.mxu0 %v3585
  %5625 = vmatprep.subr.bf16.mxu0 0
  %5626 = vmatpush1.bf16.msra.mxu0 %v3588
  %5627 = vmatprep.subr.bf16.mxu0 0
  %5628 = vmatpush1.bf16.msra.mxu0 %v3591
  %5629 = vmatprep.subr.bf16.mxu0 0
  %5630 = vmatpush1.bf16.msra.mxu0 %v3594
  %5631 = vmatprep.subr.bf16.mxu0 0
  %5632 = vmatpush1.bf16.msra.mxu0 %v3597
  %5633 = vmatprep.subr.bf16.mxu0 0
  %5634 = vmatpush1.bf16.msra.mxu0 %v3600
  %5635 = vmatprep.subr.bf16.mxu0 0
  %5636 = vmatpush1.bf16.msra.mxu0 %v3603
  %5637 = vmatprep.subr.bf16.mxu0 0
  %5638 = vmatpush1.bf16.msra.mxu0 %v3606
  %5639 = vmatprep.subr.bf16.mxu0 0
  %5640 = vmatpush1.bf16.msra.mxu0 %v3609
  %5641 = vmatprep.subr.bf16.mxu0 0
  %5642 = vmatpush1.bf16.msra.mxu0 %v3612
  %5643 = vmatprep.subr.bf16.mxu0 0
  %5644 = vmatpush1.bf16.msra.mxu0 %v3615
  %5645 = vmatprep.subr.bf16.mxu0 0
  %5646 = vmatpush1.bf16.msra.mxu0 %v3618
  %5647 = vmatprep.subr.bf16.mxu0 0
  %5648 = vmatpush1.bf16.msra.mxu0 %v3621
  %5649 = vmatprep.subr.bf16.mxu0 0
  %5650 = vmatpush1.bf16.msra.mxu0 %v3624
  %5651 = vmatprep.mubr.bf16.mxu0 %v1126
  %5652 = vmatmul.mubr.bf16.gmra.mrb[0].mxu0 %v1125
  %v5653 = vpop.f32.mrb[0].mxu0
  %v5654 = vadd.f32 %v5605, %v5653
  %v5655 = vpop.f32.mrb[0].mxu0
  %v5656 = vpop.f32.mrb[0].mxu0
  %v5657 = vadd.f32 %v5608, %v5656
  %v5658 = vpop.f32.mrb[0].mxu0
  %5659 = vmatprep.mubr.bf16.mxu0 %v1153
  %5660 = vmatmul.mubr.bf16.gmra.mrb[0].mxu0 %v1152
  %v5661 = vpop.f32.mrb[0].mxu0
  %v5662 = vadd.f32 %v5613, %v5661
  %v5663 = vpop.f32.mrb[0].mxu0
  %v5664 = vpop.f32.mrb[0].mxu0
  %v5665 = vadd.f32 %v5616, %v5664
  %v5666 = vpop.f32.mrb[0].mxu0
  %5667 = vdwg.mxu0
  %5668 = vmatprep.subr.bf16.mxu0 0
  %5669 = vmatpush1.bf16.msra.mxu0 %v3627
  %5670 = vmatprep.subr.bf16.mxu0 0
  %5671 = vmatpush1.bf16.msra.mxu0 %v3630
  %5672 = vmatprep.subr.bf16.mxu0 0
  %5673 = vmatpush1.bf16.msra.mxu0 %v3633
  %5674 = vmatprep.subr.bf16.mxu0 0
  %5675 = vmatpush1.bf16.msra.mxu0 %v3636
  %5676 = vmatprep.subr.bf16.mxu0 0
  %5677 = vmatpush1.bf16.msra.mxu0 %v3639
  %5678 = vmatprep.subr.bf16.mxu0 0
  %5679 = vmatpush1.bf16.msra.mxu0 %v3642
  %5680 = vmatprep.subr.bf16.mxu0 0
  %5681 = vmatpush1.bf16.msra.mxu0 %v3645
  %5682 = vmatprep.subr.bf16.mxu0 0
  %5683 = vmatpush1.bf16.msra.mxu0 %v3648
  %5684 = vmatprep.subr.bf16.mxu0 0
  %5685 = vmatpush1.bf16.msra.mxu0 %v3651
  %5686 = vmatprep.subr.bf16.mxu0 0
  %5687 = vmatpush1.bf16.msra.mxu0 %v3654
  %5688 = vmatprep.subr.bf16.mxu0 0
  %5689 = vmatpush1.bf16.msra.mxu0 %v3657
  %5690 = vmatprep.subr.bf16.mxu0 0
  %5691 = vmatpush1.bf16.msra.mxu0 %v3660
  %5692 = vmatprep.subr.bf16.mxu0 0
  %5693 = vmatpush1.bf16.msra.mxu0 %v3663
  %5694 = vmatprep.subr.bf16.mxu0 0
  %5695 = vmatpush1.bf16.msra.mxu0 %v3666
  %5696 = vmatprep.subr.bf16.mxu0 0
  %5697 = vmatpush1.bf16.msra.mxu0 %v3669
  %5698 = vmatprep.subr.bf16.mxu0 0
  %5699 = vmatpush1.bf16.msra.mxu0 %v3672
  %5700 = vmatprep.mubr.bf16.mxu0 %v1128
  %5701 = vmatmul.mubr.bf16.gmra.mrb[0].mxu0 %v1127
  %v5702 = vpop.f32.mrb[0].mxu0
  %v5703 = vadd.f32 %v5654, %v5702
  %v5704 = vpop.f32.mrb[0].mxu0
  %v5705 = vpop.f32.mrb[0].mxu0
  %v5706 = vadd.f32 %v5657, %v5705
  %v5707 = vpop.f32.mrb[0].mxu0
  %5708 = vmatprep.mubr.bf16.mxu0 %v1155
  %5709 = vmatmul.mubr.bf16.gmra.mrb[0].mxu0 %v1154
  %v5710 = vpop.f32.mrb[0].mxu0
  %v5711 = vadd.f32 %v5662, %v5710
  %v5712 = vpop.f32.mrb[0].mxu0
  %v5713 = vpop.f32.mrb[0].mxu0
  %v5714 = vadd.f32 %v5665, %v5713
  %v5715 = vpop.f32.mrb[0].mxu0
  %5716 = vdwg.mxu0
  %5717 = vmatprep.subr.bf16.mxu0 0
  %5718 = vmatpush1.bf16.msra.mxu0 %v3675
  %5719 = vmatprep.subr.bf16.mxu0 0
  %5720 = vmatpush1.bf16.msra.mxu0 %v3678
  %5721 = vmatprep.subr.bf16.mxu0 0
  %5722 = vmatpush1.bf16.msra.mxu0 %v3681
  %5723 = vmatprep.subr.bf16.mxu0 0
  %5724 = vmatpush1.bf16.msra.mxu0 %v3684
  %5725 = vmatprep.subr.bf16.mxu0 0
  %5726 = vmatpush1.bf16.msra.mxu0 %v3687
  %5727 = vmatprep.subr.bf16.mxu0 0
  %5728 = vmatpush1.bf16.msra.mxu0 %v3690
  %5729 = vmatprep.subr.bf16.mxu0 0
  %5730 = vmatpush1.bf16.msra.mxu0 %v3693
  %5731 = vmatprep.subr.bf16.mxu0 0
  %5732 = vmatpush1.bf16.msra.mxu0 %v3696
  %5733 = vmatprep.subr.bf16.mxu0 0
  %5734 = vmatpush1.bf16.msra.mxu0 %v3699
  %5735 = vmatprep.subr.bf16.mxu0 0
  %5736 = vmatpush1.bf16.msra.mxu0 %v3702
  %5737 = vmatprep.subr.bf16.mxu0 0
  %5738 = vmatpush1.bf16.msra.mxu0 %v3705
  %5739 = vmatprep.subr.bf16.mxu0 0
  %5740 = vmatpush1.bf16.msra.mxu0 %v3708
  %5741 = vmatprep.subr.bf16.mxu0 0
  %5742 = vmatpush1.bf16.msra.mxu0 %v3711
  %5743 = vmatprep.subr.bf16.mxu0 0
  %5744 = vmatpush1.bf16.msra.mxu0 %v3714
  %5745 = vmatprep.subr.bf16.mxu0 0
  %5746 = vmatpush1.bf16.msra.mxu0 %v3717
  %5747 = vmatprep.subr.bf16.mxu0 0
  %5748 = vmatpush1.bf16.msra.mxu0 %v3720
  %5749 = vmatprep.mubr.bf16.mxu0 %v1130
  %5750 = vmatmul.mubr.bf16.gmra.mrb[0].mxu0 %v1129
  %v5751 = vpop.f32.mrb[0].mxu0
  %v5752 = vadd.f32 %v5703, %v5751
  %v5753 = vpop.f32.mrb[0].mxu0
  %v5754 = vpop.f32.mrb[0].mxu0
  %v5755 = vadd.f32 %v5706, %v5754
  %v5756 = vpop.f32.mrb[0].mxu0
  %5757 = vmatprep.mubr.bf16.mxu0 %v1157
  %5758 = vmatmul.mubr.bf16.gmra.mrb[0].mxu0 %v1156
  %v5759 = vpop.f32.mrb[0].mxu0
  %v5760 = vadd.f32 %v5711, %v5759
  %v5761 = vpop.f32.mrb[0].mxu0
  %v5762 = vpop.f32.mrb[0].mxu0
  %v5763 = vadd.f32 %v5714, %v5762
  %v5764 = vpop.f32.mrb[0].mxu0
  %5765 = vdwg.mxu0
  %5766 = vmatprep.subr.bf16.mxu0 0
  %5767 = vmatpush1.bf16.msra.mxu0 %v3723
  %5768 = vmatprep.subr.bf16.mxu0 0
  %5769 = vmatpush1.bf16.msra.mxu0 %v3726
  %5770 = vmatprep.subr.bf16.mxu0 0
  %5771 = vmatpush1.bf16.msra.mxu0 %v3729
  %5772 = vmatprep.subr.bf16.mxu0 0
  %5773 = vmatpush1.bf16.msra.mxu0 %v3732
  %5774 = vmatprep.subr.bf16.mxu0 0
  %5775 = vmatpush1.bf16.msra.mxu0 %v3735
  %5776 = vmatprep.subr.bf16.mxu0 0
  %5777 = vmatpush1.bf16.msra.mxu0 %v3738
  %5778 = vmatprep.subr.bf16.mxu0 0
  %5779 = vmatpush1.bf16.msra.mxu0 %v3741
  %5780 = vmatprep.subr.bf16.mxu0 0
  %5781 = vmatpush1.bf16.msra.mxu0 %v3744
  %5782 = vmatprep.subr.bf16.mxu0 0
  %5783 = vmatpush1.bf16.msra.mxu0 %v3747
  %5784 = vmatprep.subr.bf16.mxu0 0
  %5785 = vmatpush1.bf16.msra.mxu0 %v3750
  %5786 = vmatprep.subr.bf16.mxu0 0
  %5787 = vmatpush1.bf16.msra.mxu0 %v3753
  %5788 = vmatprep.subr.bf16.mxu0 0
  %5789 = vmatpush1.bf16.msra.mxu0 %v3756
  %5790 = vmatprep.subr.bf16.mxu0 0
  %5791 = vmatpush1.bf16.msra.mxu0 %v3759
  %5792 = vmatprep.subr.bf16.mxu0 0
  %5793 = vmatpush1.bf16.msra.mxu0 %v3762
  %5794 = vmatprep.subr.bf16.mxu0 0
  %5795 = vmatpush1.bf16.msra.mxu0 %v3765
  %5796 = vmatprep.subr.bf16.mxu0 0
  %5797 = vmatpush1.bf16.msra.mxu0 %v3768
  %5798 = vmatprep.mubr.bf16.mxu0 %v1132
  %5799 = vmatmul.mubr.bf16.gmra.mrb[0].mxu0 %v1131
  %v5800 = vpop.f32.mrb[0].mxu0
  %v5801 = vadd.f32 %v5752, %v5800
  %v5802 = vpop.f32.mrb[0].mxu0
  %v5803 = vpop.f32.mrb[0].mxu0
  %v5804 = vadd.f32 %v5755, %v5803
  %v5805 = vpop.f32.mrb[0].mxu0
  %5806 = vmatprep.mubr.bf16.mxu0 %v1159
  %5807 = vmatmul.mubr.bf16.gmra.mrb[0].mxu0 %v1158
  %v5808 = vpop.f32.mrb[0].mxu0
  %v5809 = vadd.f32 %v5760, %v5808
  %v5810 = vpop.f32.mrb[0].mxu0
  %v5811 = vpop.f32.mrb[0].mxu0
  %v5812 = vadd.f32 %v5763, %v5811
  %v5813 = vpop.f32.mrb[0].mxu0
  %5814 = vdwg.mxu0
  %5815 = vmatprep.subr.bf16.mxu0 0
  %5816 = vmatpush1.bf16.msra.mxu0 %v3771
  %5817 = vmatprep.subr.bf16.mxu0 0
  %5818 = vmatpush1.bf16.msra.mxu0 %v3774
  %5819 = vmatprep.subr.bf16.mxu0 0
  %5820 = vmatpush1.bf16.msra.mxu0 %v3777
  %5821 = vmatprep.subr.bf16.mxu0 0
  %5822 = vmatpush1.bf16.msra.mxu0 %v3780
  %5823 = vmatprep.subr.bf16.mxu0 0
  %5824 = vmatpush1.bf16.msra.mxu0 %v3783
  %5825 = vmatprep.subr.bf16.mxu0 0
  %5826 = vmatpush1.bf16.msra.mxu0 %v3786
  %5827 = vmatprep.subr.bf16.mxu0 0
  %5828 = vmatpush1.bf16.msra.mxu0 %v3789
  %5829 = vmatprep.subr.bf16.mxu0 0
  %5830 = vmatpush1.bf16.msra.mxu0 %v3792
  %5831 = vmatprep.subr.bf16.mxu0 0
  %5832 = vmatpush1.bf16.msra.mxu0 %v3795
  %5833 = vmatprep.subr.bf16.mxu0 0
  %5834 = vmatpush1.bf16.msra.mxu0 %v3798
  %5835 = vmatprep.subr.bf16.mxu0 0
  %5836 = vmatpush1.bf16.msra.mxu0 %v3801
  %5837 = vmatprep.subr.bf16.mxu0 0
  %5838 = vmatpush1.bf16.msra.mxu0 %v3804
  %5839 = vmatprep.subr.bf16.mxu0 0
  %5840 = vmatpush1.bf16.msra.mxu0 %v3807
  %5841 = vmatprep.subr.bf16.mxu0 0
  %5842 = vmatpush1.bf16.msra.mxu0 %v3810
  %5843 = vmatprep.subr.bf16.mxu0 0
  %5844 = vmatpush1.bf16.msra.mxu0 %v3813
  %5845 = vmatprep.subr.bf16.mxu0 0
  %5846 = vmatpush1.bf16.msra.mxu0 %v3816
  %5847 = vmatprep.mubr.bf16.mxu0 %v1134
  %5848 = vmatmul.mubr.bf16.gmra.mrb[0].mxu0 %v1133
  %v5849 = vpop.f32.mrb[0].mxu0
  %v5850 = vadd.f32 %v5801, %v5849
  %v5851 = vpop.f32.mrb[0].mxu0
  %v5852 = vpop.f32.mrb[0].mxu0
  %v5853 = vadd.f32 %v5804, %v5852
  %v5854 = vpop.f32.mrb[0].mxu0
  %5855 = vmatprep.mubr.bf16.mxu0 %v1161
  %5856 = vmatmul.mubr.bf16.gmra.mrb[0].mxu0 %v1160
  %v5857 = vpop.f32.mrb[0].mxu0
  %v5858 = vadd.f32 %v5809, %v5857
  %v5859 = vpop.f32.mrb[0].mxu0
  %v5860 = vpop.f32.mrb[0].mxu0
  %v5861 = vadd.f32 %v5812, %v5860
  %v5862 = vpop.f32.mrb[0].mxu0
  %5863 = vdwg.mxu0
  %5864 = vmatprep.subr.bf16.mxu0 0
  %5865 = vmatpush1.bf16.msra.mxu0 %v3819
  %5866 = vmatprep.subr.bf16.mxu0 0
  %5867 = vmatpush1.bf16.msra.mxu0 %v3822
  %5868 = vmatprep.subr.bf16.mxu0 0
  %5869 = vmatpush1.bf16.msra.mxu0 %v3825
  %5870 = vmatprep.subr.bf16.mxu0 0
  %5871 = vmatpush1.bf16.msra.mxu0 %v3828
  %5872 = vmatprep.subr.bf16.mxu0 0
  %5873 = vmatpush1.bf16.msra.mxu0 %v3831
  %5874 = vmatprep.subr.bf16.mxu0 0
  %5875 = vmatpush1.bf16.msra.mxu0 %v3834
  %5876 = vmatprep.subr.bf16.mxu0 0
  %5877 = vmatpush1.bf16.msra.mxu0 %v3837
  %5878 = vmatprep.subr.bf16.mxu0 0
  %5879 = vmatpush1.bf16.msra.mxu0 %v3840
  %5880 = vmatprep.subr.bf16.mxu0 0
  %5881 = vmatpush1.bf16.msra.mxu0 %v3843
  %5882 = vmatprep.subr.bf16.mxu0 0
  %5883 = vmatpush1.bf16.msra.mxu0 %v3846
  %5884 = vmatprep.subr.bf16.mxu0 0
  %5885 = vmatpush1.bf16.msra.mxu0 %v3849
  %5886 = vmatprep.subr.bf16.mxu0 0
  %5887 = vmatpush1.bf16.msra.mxu0 %v3852
  %5888 = vmatprep.subr.bf16.mxu0 0
  %5889 = vmatpush1.bf16.msra.mxu0 %v3855
  %5890 = vmatprep.subr.bf16.mxu0 0
  %5891 = vmatpush1.bf16.msra.mxu0 %v3858
  %5892 = vmatprep.subr.bf16.mxu0 0
  %5893 = vmatpush1.bf16.msra.mxu0 %v3861
  %5894 = vmatprep.subr.bf16.mxu0 0
  %5895 = vmatpush1.bf16.msra.mxu0 %v3864
  %5896 = vmatprep.mubr.bf16.mxu0 %v1136
  %5897 = vmatmul.mubr.bf16.gmra.mrb[0].mxu0 %v1135
  %v5898 = vpop.f32.mrb[0].mxu0
  %v5899 = vadd.f32 %v5850, %v5898
  %v5900 = vpop.f32.mrb[0].mxu0
  %v5901 = vpop.f32.mrb[0].mxu0
  %v5902 = vadd.f32 %v5853, %v5901
  %v5903 = vpop.f32.mrb[0].mxu0
  %5904 = vmatprep.mubr.bf16.mxu0 %v1163
  %5905 = vmatmul.mubr.bf16.gmra.mrb[0].mxu0 %v1162
  %v5906 = vpop.f32.mrb[0].mxu0
  %v5907 = vadd.f32 %v5858, %v5906
  %v5908 = vpop.f32.mrb[0].mxu0
  %v5909 = vpop.f32.mrb[0].mxu0
  %v5910 = vadd.f32 %v5861, %v5909
  %v5911 = vpop.f32.mrb[0].mxu0
  %5912 = vdwg.mxu0
  %5913 = vmatprep.subr.bf16.mxu0 0
  %5914 = vmatpush1.bf16.msra.mxu0 %v3867
  %5915 = vmatprep.subr.bf16.mxu0 0
  %5916 = vmatpush1.bf16.msra.mxu0 %v3870
  %5917 = vmatprep.subr.bf16.mxu0 0
  %5918 = vmatpush1.bf16.msra.mxu0 %v3873
  %5919 = vmatprep.subr.bf16.mxu0 0
  %5920 = vmatpush1.bf16.msra.mxu0 %v3876
  %5921 = vmatprep.subr.bf16.mxu0 0
  %5922 = vmatpush1.bf16.msra.mxu0 %v3879
  %5923 = vmatprep.subr.bf16.mxu0 0
  %5924 = vmatpush1.bf16.msra.mxu0 %v3882
  %5925 = vmatprep.subr.bf16.mxu0 0
  %5926 = vmatpush1.bf16.msra.mxu0 %v3885
  %5927 = vmatprep.subr.bf16.mxu0 0
  %5928 = vmatpush1.bf16.msra.mxu0 %v3888
  %5929 = vmatprep.subr.bf16.mxu0 0
  %5930 = vmatpush1.bf16.msra.mxu0 %v3891
  %5931 = vmatprep.subr.bf16.mxu0 0
  %5932 = vmatpush1.bf16.msra.mxu0 %v3894
  %5933 = vmatprep.subr.bf16.mxu0 0
  %5934 = vmatpush1.bf16.msra.mxu0 %v3897
  %5935 = vmatprep.subr.bf16.mxu0 0
  %5936 = vmatpush1.bf16.msra.mxu0 %v3900
  %5937 = vmatprep.subr.bf16.mxu0 0
  %5938 = vmatpush1.bf16.msra.mxu0 %v3903
  %5939 = vmatprep.subr.bf16.mxu0 0
  %5940 = vmatpush1.bf16.msra.mxu0 %v3906
  %5941 = vmatprep.subr.bf16.mxu0 0
  %5942 = vmatpush1.bf16.msra.mxu0 %v3909
  %5943 = vmatprep.subr.bf16.mxu0 0
  %5944 = vmatpush1.bf16.msra.mxu0 %v3912
  %5945 = vmatprep.mubr.bf16.mxu0 %v1138
  %5946 = vmatmul.mubr.bf16.gmra.mrb[0].mxu0 %v1137
  %v5947 = vpop.f32.mrb[0].mxu0
  %v5948 = vadd.f32 %v5899, %v5947
  %v5949 = vpop.f32.mrb[0].mxu0
  %v5950 = vpop.f32.mrb[0].mxu0
  %v5951 = vadd.f32 %v5902, %v5950
  %v5952 = vpop.f32.mrb[0].mxu0
  %5953 = vmatprep.mubr.bf16.mxu0 %v1165
  %5954 = vmatmul.mubr.bf16.gmra.mrb[0].mxu0 %v1164
  %v5955 = vpop.f32.mrb[0].mxu0
  %v5956 = vadd.f32 %v5907, %v5955
  %v5957 = vpop.f32.mrb[0].mxu0
  %v5958 = vpop.f32.mrb[0].mxu0
  %v5959 = vadd.f32 %v5910, %v5958
  %v5960 = vpop.f32.mrb[0].mxu0
  %5961 = vdwg.mxu0
  %5962 = vmatprep.subr.bf16.mxu0 0
  %5963 = vmatpush1.bf16.msra.mxu0 %v3915
  %5964 = vmatprep.subr.bf16.mxu0 0
  %5965 = vmatpush1.bf16.msra.mxu0 %v3918
  %5966 = vmatprep.subr.bf16.mxu0 0
  %5967 = vmatpush1.bf16.msra.mxu0 %v3921
  %5968 = vmatprep.subr.bf16.mxu0 0
  %5969 = vmatpush1.bf16.msra.mxu0 %v3924
  %5970 = vmatprep.subr.bf16.mxu0 0
  %5971 = vmatpush1.bf16.msra.mxu0 %v3927
  %5972 = vmatprep.subr.bf16.mxu0 0
  %5973 = vmatpush1.bf16.msra.mxu0 %v3930
  %5974 = vmatprep.subr.bf16.mxu0 0
  %5975 = vmatpush1.bf16.msra.mxu0 %v3933
  %5976 = vmatprep.subr.bf16.mxu0 0
  %5977 = vmatpush1.bf16.msra.mxu0 %v3936
  %5978 = vmatprep.subr.bf16.mxu0 0
  %5979 = vmatpush1.bf16.msra.mxu0 %v3939
  %5980 = vmatprep.subr.bf16.mxu0 0
  %5981 = vmatpush1.bf16.msra.mxu0 %v3942
  %5982 = vmatprep.subr.bf16.mxu0 0
  %5983 = vmatpush1.bf16.msra.mxu0 %v3945
  %5984 = vmatprep.subr.bf16.mxu0 0
  %5985 = vmatpush1.bf16.msra.mxu0 %v3948
  %5986 = vmatprep.subr.bf16.mxu0 0
  %5987 = vmatpush1.bf16.msra.mxu0 %v3951
  %5988 = vmatprep.subr.bf16.mxu0 0
  %5989 = vmatpush1.bf16.msra.mxu0 %v3954
  %5990 = vmatprep.subr.bf16.mxu0 0
  %5991 = vmatpush1.bf16.msra.mxu0 %v3957
  %5992 = vmatprep.subr.bf16.mxu0 0
  %5993 = vmatpush1.bf16.msra.mxu0 %v3960
  %5994 = vmatprep.mubr.bf16.mxu0 %v1140
  %5995 = vmatmul.mubr.bf16.gmra.mrb[0].mxu0 %v1139
  %v5996 = vpop.f32.mrb[0].mxu0
  %v5997 = vadd.f32 %v5948, %v5996
  %v5998 = vpop.f32.mrb[0].mxu0
  %v5999 = vpop.f32.mrb[0].mxu0
  %v6000 = vadd.f32 %v5951, %v5999
  %v6001 = vpop.f32.mrb[0].mxu0
  %6002 = vmatprep.mubr.bf16.mxu0 %v1167
  %6003 = vmatmul.mubr.bf16.gmra.mrb[0].mxu0 %v1166
  %v6004 = vpop.f32.mrb[0].mxu0
  %v6005 = vadd.f32 %v5956, %v6004
  %v6006 = vpop.f32.mrb[0].mxu0
  %v6007 = vpop.f32.mrb[0].mxu0
  %v6008 = vadd.f32 %v5959, %v6007
  %v6009 = vpop.f32.mrb[0].mxu0
  %6010 = vdwg.mxu0
  %6011 = vmatprep.subr.bf16.mxu0 0
  %6012 = vmatpush1.bf16.msra.mxu0 %v3963
  %6013 = vmatprep.subr.bf16.mxu0 0
  %6014 = vmatpush1.bf16.msra.mxu0 %v3966
  %6015 = vmatprep.subr.bf16.mxu0 0
  %6016 = vmatpush1.bf16.msra.mxu0 %v3969
  %6017 = vmatprep.subr.bf16.mxu0 0
  %6018 = vmatpush1.bf16.msra.mxu0 %v3972
  %6019 = vmatprep.subr.bf16.mxu0 0
  %6020 = vmatpush1.bf16.msra.mxu0 %v3975
  %6021 = vmatprep.subr.bf16.mxu0 0
  %6022 = vmatpush1.bf16.msra.mxu0 %v3978
  %6023 = vmatprep.subr.bf16.mxu0 0
  %6024 = vmatpush1.bf16.msra.mxu0 %v3981
  %6025 = vmatprep.subr.bf16.mxu0 0
  %6026 = vmatpush1.bf16.msra.mxu0 %v3984
  %6027 = vmatprep.subr.bf16.mxu0 0
  %6028 = vmatpush1.bf16.msra.mxu0 %v3987
  %6029 = vmatprep.subr.bf16.mxu0 0
  %6030 = vmatpush1.bf16.msra.mxu0 %v3990
  %6031 = vmatprep.subr.bf16.mxu0 0
  %6032 = vmatpush1.bf16.msra.mxu0 %v3993
  %6033 = vmatprep.subr.bf16.mxu0 0
  %6034 = vmatpush1.bf16.msra.mxu0 %v3996
  %6035 = vmatprep.subr.bf16.mxu0 0
  %6036 = vmatpush1.bf16.msra.mxu0 %v3999
  %6037 = vmatprep.subr.bf16.mxu0 0
  %6038 = vmatpush1.bf16.msra.mxu0 %v4002
  %6039 = vmatprep.subr.bf16.mxu0 0
  %6040 = vmatpush1.bf16.msra.mxu0 %v4005
  %6041 = vmatprep.subr.bf16.mxu0 0
  %6042 = vmatpush1.bf16.msra.mxu0 %v4008
  %6043 = vmatprep.mubr.bf16.mxu0 %v1142
  %6044 = vmatmul.mubr.bf16.gmra.mrb[0].mxu0 %v1141
  %v6045 = vpop.f32.mrb[0].mxu0
  %v6046 = vadd.f32 %v5997, %v6045
  %v6047 = vpop.f32.mrb[0].mxu0
  %v6048 = vpop.f32.mrb[0].mxu0
  %v6049 = vadd.f32 %v6000, %v6048
  %v6050 = vpop.f32.mrb[0].mxu0
  %6051 = vmatprep.mubr.bf16.mxu0 %v1169
  %6052 = vmatmul.mubr.bf16.gmra.mrb[0].mxu0 %v1168
  %v6053 = vpop.f32.mrb[0].mxu0
  %v6054 = vadd.f32 %v6005, %v6053
  %v6055 = vpop.f32.mrb[0].mxu0
  %v6056 = vpop.f32.mrb[0].mxu0
  %v6057 = vadd.f32 %v6008, %v6056
  %v6058 = vpop.f32.mrb[0].mxu0
  %6059 = vdwg.mxu0
  %6060 = vmatprep.subr.bf16.mxu0 0
  %6061 = vmatpush1.bf16.msra.mxu0 %v4011
  %6062 = vmatprep.subr.bf16.mxu0 0
  %6063 = vmatpush1.bf16.msra.mxu0 %v4014
  %6064 = vmatprep.subr.bf16.mxu0 0
  %6065 = vmatpush1.bf16.msra.mxu0 %v4017
  %6066 = vmatprep.subr.bf16.mxu0 0
  %6067 = vmatpush1.bf16.msra.mxu0 %v4020
  %6068 = vmatprep.subr.bf16.mxu0 0
  %6069 = vmatpush1.bf16.msra.mxu0 %v4023
  %6070 = vmatprep.subr.bf16.mxu0 0
  %6071 = vmatpush1.bf16.msra.mxu0 %v4026
  %6072 = vmatprep.subr.bf16.mxu0 0
  %6073 = vmatpush1.bf16.msra.mxu0 %v4029
  %6074 = vmatprep.subr.bf16.mxu0 0
  %6075 = vmatpush1.bf16.msra.mxu0 %v4032
  %6076 = vmatprep.subr.bf16.mxu0 0
  %6077 = vmatpush1.bf16.msra.mxu0 0
  %6078 = vmatprep.subr.bf16.mxu0 0
  %6079 = vmatpush1.bf16.msra.mxu0 0
  %6080 = vmatprep.subr.bf16.mxu0 0
  %6081 = vmatpush1.bf16.msra.mxu0 0
  %6082 = vmatprep.subr.bf16.mxu0 0
  %6083 = vmatpush1.bf16.msra.mxu0 0
  %6084 = vmatprep.subr.bf16.mxu0 0
  %6085 = vmatpush1.bf16.msra.mxu0 0
  %6086 = vmatprep.subr.bf16.mxu0 0
  %6087 = vmatpush1.bf16.msra.mxu0 0
  %6088 = vmatprep.subr.bf16.mxu0 0
  %6089 = vmatpush1.bf16.msra.mxu0 0
  %6090 = vmatprep.subr.bf16.mxu0 0
  %6091 = vmatpush1.bf16.msra.mxu0 0
  %6092 = vmatprep.mubr.bf16.mxu0 0
  %6093 = vmatmul.mubr.bf16.gmra.mrb[0].mxu0 %v1143
  %v6094 = vpop.f32.mrb[0].mxu0
  %v6095 = vadd.f32 %v6046, %v6094
  %v6096 = vpop.f32.mrb[0].mxu0
  %v6097 = vpop.f32.mrb[0].mxu0
  %v6098 = vadd.f32 %v6049, %v6097
  %v6099 = vpop.f32.mrb[0].mxu0
  %6100 = vmatprep.mubr.bf16.mxu0 0
  %6101 = vmatmul.mubr.bf16.gmra.mrb[0].mxu0 %v1170
  %v6102 = vpop.f32.mrb[0].mxu0
  %v6103 = vadd.f32 %v6054, %v6102
  %v6104 = vpop.f32.mrb[0].mxu0
  %v6105 = vpop.f32.mrb[0].mxu0
  %v6106 = vadd.f32 %v6057, %v6105
  %v6107 = vpop.f32.mrb[0].mxu0
  %6108 = vdwg.mxu0
  %v6109 = vld [vmem:[%s2] sm:$0x7]
  %v6111 = vlaneseq
  %v6112 = vshrl.u32 %v6111, 7
  %v6113 = vsub.s32 0, %v6112
  %v6114 = vrot.slane %v6109, %v6113
  %v6115 = vlaneseq
  %v6116 = vshrl.u32 %v6115, 7
  %v6117 = vsub.s32 1, %v6116
  %v6118 = vrot.slane %v6109, %v6117
  %v6119 = vlaneseq
  %v6120 = vshrl.u32 %v6119, 7
  %v6121 = vsub.s32 2, %v6120
  %v6122 = vrot.slane %v6109, %v6121
  %v6126 = vmul.f32 %v5405, %v6114
  %v6127 = vmul.f32 %v5407, %v6118
  %v6128 = vmul.f32 %v6095, %v6122
  %v6129 = vmul.f32 %v5409, %v6114
  %v6130 = vmul.f32 %v5411, %v6118
  %v6131 = vmul.f32 %v6098, %v6122
  %v6132 = vmul.f32 %v5415, %v6114
  %v6133 = vmul.f32 %v5417, %v6118
  %v6134 = vmul.f32 %v6103, %v6122
  %v6135 = vmul.f32 %v5419, %v6114
  %v6136 = vmul.f32 %v5421, %v6118
  %v6137 = vmul.f32 %v6106, %v6122
  %v6138 = vld [vmem:[%s3] sm:$0x7]
  %v6140 = vlaneseq
  %v6141 = vshrl.u32 %v6140, 7
  %v6142 = vsub.s32 0, %v6141
  %v6143 = vrot.slane %v6138, %v6142
  %v6144 = vlaneseq
  %v6145 = vshrl.u32 %v6144, 7
  %v6146 = vsub.s32 1, %v6145
  %v6147 = vrot.slane %v6138, %v6146
  %v6148 = vlaneseq
  %v6149 = vshrl.u32 %v6148, 7
  %v6150 = vsub.s32 2, %v6149
  %v6151 = vrot.slane %v6138, %v6150
  %v6155 = vadd.f32 %v6126, %v6143
  %v6156 = vadd.f32 %v6127, %v6147
  %v6157 = vadd.f32 %v6128, %v6151
  %v6158 = vadd.f32 %v6129, %v6143
  %v6159 = vadd.f32 %v6130, %v6147
  %v6160 = vadd.f32 %v6131, %v6151
  %v6161 = vadd.f32 %v6132, %v6143
  %v6162 = vadd.f32 %v6133, %v6147
  %v6163 = vadd.f32 %v6134, %v6151
  %v6164 = vadd.f32 %v6135, %v6143
  %v6165 = vadd.f32 %v6136, %v6147
  %v6166 = vadd.f32 %v6137, %v6151
  %v6167 = vmax.f32 %v6155, 0.0
  %v6168 = vmax.f32 %v6156, 0.0
  %v6169 = vmax.f32 %v6157, 0.0
  %v6170 = vmax.f32 %v6158, 0.0
  %v6171 = vmax.f32 %v6159, 0.0
  %v6172 = vmax.f32 %v6160, 0.0
  %v6173 = vmax.f32 %v6161, 0.0
  %v6174 = vmax.f32 %v6162, 0.0
  %v6175 = vmax.f32 %v6163, 0.0
  %v6176 = vmax.f32 %v6164, 0.0
  %v6177 = vmax.f32 %v6165, 0.0
  %v6178 = vmax.f32 %v6166, 0.0
  %6179 = vst [vmem:[%s9] sm:$0xff] %v6167
  %6180 = vst [vmem:[%s9 + $0x8] sm:$0xff] %v6168
  %6181 = vst [vmem:[%s9 + $0x10] sm:$0xff] %v6169
  %6182 = vst [vmem:[%s9 + $0x40] sm:$0xff] %v6170
  %6183 = vst [vmem:[%s9 + $0x48] sm:$0xff] %v6171
  %6184 = vst [vmem:[%s9 + $0x50] sm:$0xff] %v6172
  %6185 = vst [vmem:[%s9 + $0x80] sm:$0xff] %v6173
  %6186 = vst [vmem:[%s9 + $0x88] sm:$0xff] %v6174
  %6187 = vst [vmem:[%s9 + $0x90] sm:$0xff] %v6175
  %6188 = vst [vmem:[%s9 + $0xc0] sm:$0xff] %v6176
  %6189 = vst [vmem:[%s9 + $0xc8] sm:$0xff] %v6177
  %6190 = vst [vmem:[%s9 + $0xd0] sm:$0xff] %v6178
  %v6191 = vld [vmem:[%s4] sm:$0xff]
  %v6192 = vld [vmem:[%s4 + $0x8] sm:$0xff]
  %v6193 = vld [vmem:[%s4 + $0x10] sm:$0xff]
  %v6194 = vld [vmem:[%s4 + $0x18] sm:$0xff]
  %v6195 = vld [vmem:[%s4 + $0x20] sm:$0xff]
  %v6196 = vld [vmem:[%s4 + $0x28] sm:$0xff]
  %v6197 = vld [vmem:[%s4 + $0x30] sm:$0xff]
  %v6198 = vld [vmem:[%s4 + $0x38] sm:$0xff]
  %v6199 = vld [vmem:[%s4 + $0x40] sm:$0xff]
  %v6200 = vld [vmem:[%s4 + $0x48] sm:$0xff]
  %v6201 = vld [vmem:[%s4 + $0x50] sm:$0xff]
  %v6202 = vld [vmem:[%s4 + $0x58] sm:$0xff]
  %v6203 = vld [vmem:[%s4 + $0x60] sm:$0xff]
  %v6204 = vld [vmem:[%s4 + $0x68] sm:$0xff]
  %v6205 = vld [vmem:[%s4 + $0x70] sm:$0xff]
  %v6206 = vld [vmem:[%s4 + $0x78] sm:$0xff]
  %v6207 = vld [vmem:[%s4 + $0x80] sm:$0xff]
  %v6208 = vld [vmem:[%s4 + $0x88] sm:$0xff]
  %v6209 = vld [vmem:[%s4 + $0x90] sm:$0xff]
  %v6210 = vld [vmem:[%s4 + $0x98] sm:$0xff]
  %v6211 = vld [vmem:[%s4 + $0xa0] sm:$0xff]
  %v6212 = vld [vmem:[%s4 + $0xa8] sm:$0xff]
  %v6213 = vld [vmem:[%s4 + $0xb0] sm:$0xff]
  %v6214 = vld [vmem:[%s4 + $0xb8] sm:$0xff]
  %v6215 = vld [vmem:[%s4 + $0xc0] sm:$0xff]
  %v6216 = vld [vmem:[%s4 + $0xc8] sm:$0xff]
  %v6217 = vld [vmem:[%s4 + $0xd0] sm:$0xff]
  %v6218 = vld [vmem:[%s4 + $0xd8] sm:$0xff]
  %v6219 = vld [vmem:[%s4 + $0xe0] sm:$0xff]
  %v6220 = vld [vmem:[%s4 + $0xe8] sm:$0xff]
  %v6221 = vld [vmem:[%s4 + $0xf0] sm:$0xff]
  %v6222 = vld [vmem:[%s4 + $0xf8] sm:$0xff]
  %v6223 = vld [vmem:[%s5] sm:$0xff]
  %v6224 = vld [vmem:[%s5 + $0x8] sm:$0xff]
  %v6225 = vld [vmem:[%s5 + $0x10] sm:$0xff]
  %v6226 = vld [vmem:[%s5 + $0x18] sm:$0xff]
  %v6227 = vld [vmem:[%s5 + $0x20] sm:$0xff]
  %v6228 = vld [vmem:[%s5 + $0x28] sm:$0xff]
  %v6229 = vld [vmem:[%s5 + $0x30] sm:$0xff]
  %v6230 = vld [vmem:[%s5 + $0x38] sm:$0xff]
  %v6231 = vld [vmem:[%s5 + $0x40] sm:$0xff]
  %v6232 = vld [vmem:[%s5 + $0x48] sm:$0xff]
  %v6233 = vld [vmem:[%s5 + $0x50] sm:$0xff]
  %v6234 = vld [vmem:[%s5 + $0x58] sm:$0xff]
  %v6235 = vld [vmem:[%s5 + $0x60] sm:$0xff]
  %v6236 = vld [vmem:[%s5 + $0x68] sm:$0xff]
  %v6237 = vld [vmem:[%s5 + $0x70] sm:$0xff]
  %v6238 = vld [vmem:[%s5 + $0x78] sm:$0xff]
  %v6239 = vld [vmem:[%s5 + $0x80] sm:$0xff]
  %v6240 = vld [vmem:[%s5 + $0x88] sm:$0xff]
  %v6241 = vld [vmem:[%s5 + $0x90] sm:$0xff]
  %v6242 = vld [vmem:[%s5 + $0x98] sm:$0xff]
  %v6243 = vld [vmem:[%s5 + $0xa0] sm:$0xff]
  %v6244 = vld [vmem:[%s5 + $0xa8] sm:$0xff]
  %v6245 = vld [vmem:[%s5 + $0xb0] sm:$0xff]
  %v6246 = vld [vmem:[%s5 + $0xb8] sm:$0xff]
  %v6247 = vld [vmem:[%s5 + $0xc0] sm:$0xff]
  %v6248 = vld [vmem:[%s5 + $0xc8] sm:$0xff]
  %v6249 = vld [vmem:[%s5 + $0xd0] sm:$0xff]
  %v6250 = vld [vmem:[%s5 + $0xd8] sm:$0xff]
  %v6251 = vld [vmem:[%s5 + $0xe0] sm:$0xff]
  %v6252 = vld [vmem:[%s5 + $0xe8] sm:$0xff]
  %v6253 = vld [vmem:[%s5 + $0xf0] sm:$0xff]
  %v6254 = vld [vmem:[%s5 + $0xf8] sm:$0xff]
  %v6255 = vld [vmem:[%s5 + $0x100] sm:$0xff]
  %v6256 = vld [vmem:[%s5 + $0x108] sm:$0xff]
  %v6257 = vld [vmem:[%s5 + $0x110] sm:$0xff]
  %v6258 = vld [vmem:[%s5 + $0x118] sm:$0xff]
  %v6259 = vld [vmem:[%s5 + $0x120] sm:$0xff]
  %v6260 = vld [vmem:[%s5 + $0x128] sm:$0xff]
  %v6261 = vld [vmem:[%s5 + $0x130] sm:$0xff]
  %v6262 = vld [vmem:[%s5 + $0x138] sm:$0xff]
  %v6263 = vld [vmem:[%s5 + $0x140] sm:$0xff]
  %v6264 = vld [vmem:[%s5 + $0x148] sm:$0xff]
  %v6265 = vld [vmem:[%s5 + $0x150] sm:$0xff]
  %v6266 = vld [vmem:[%s5 + $0x158] sm:$0xff]
  %v6267 = vld [vmem:[%s5 + $0x160] sm:$0xff]
  %v6268 = vld [vmem:[%s5 + $0x168] sm:$0xff]
  %v6269 = vld [vmem:[%s5 + $0x170] sm:$0xff]
  %v6270 = vld [vmem:[%s5 + $0x178] sm:$0xff]
  %v6271 = vld [vmem:[%s5 + $0x180] sm:$0xff]
  %v6272 = vld [vmem:[%s5 + $0x188] sm:$0xff]
  %v6273 = vld [vmem:[%s5 + $0x190] sm:$0xff]
  %v6274 = vld [vmem:[%s5 + $0x198] sm:$0xff]
  %v6275 = vld [vmem:[%s5 + $0x1a0] sm:$0xff]
  %v6276 = vld [vmem:[%s5 + $0x1a8] sm:$0xff]
  %v6277 = vld [vmem:[%s5 + $0x1b0] sm:$0xff]
  %v6278 = vld [vmem:[%s5 + $0x1b8] sm:$0xff]
  %v6279 = vld [vmem:[%s5 + $0x1c0] sm:$0xff]
  %v6280 = vld [vmem:[%s5 + $0x1c8] sm:$0xff]
  %v6281 = vld [vmem:[%s5 + $0x1d0] sm:$0xff]
  %v6282 = vld [vmem:[%s5 + $0x1d8] sm:$0xff]
  %v6283 = vld [vmem:[%s5 + $0x1e0] sm:$0xff]
  %v6284 = vld [vmem:[%s5 + $0x1e8] sm:$0xff]
  %v6285 = vld [vmem:[%s5 + $0x1f0] sm:$0xff]
  %v6286 = vld [vmem:[%s5 + $0x1f8] sm:$0xff]
  %v6287 = vld [vmem:[%s5 + $0x200] sm:$0xff]
  %v6288 = vld [vmem:[%s5 + $0x208] sm:$0xff]
  %v6289 = vld [vmem:[%s5 + $0x210] sm:$0xff]
  %v6290 = vld [vmem:[%s5 + $0x218] sm:$0xff]
  %v6291 = vld [vmem:[%s5 + $0x220] sm:$0xff]
  %v6292 = vld [vmem:[%s5 + $0x228] sm:$0xff]
  %v6293 = vld [vmem:[%s5 + $0x230] sm:$0xff]
  %v6294 = vld [vmem:[%s5 + $0x238] sm:$0xff]
  %v6295 = vld [vmem:[%s5 + $0x240] sm:$0xff]
  %v6296 = vld [vmem:[%s5 + $0x248] sm:$0xff]
  %v6297 = vld [vmem:[%s5 + $0x250] sm:$0xff]
  %v6298 = vld [vmem:[%s5 + $0x258] sm:$0xff]
  %v6299 = vld [vmem:[%s5 + $0x260] sm:$0xff]
  %v6300 = vld [vmem:[%s5 + $0x268] sm:$0xff]
  %v6301 = vld [vmem:[%s5 + $0x270] sm:$0xff]
  %v6302 = vld [vmem:[%s5 + $0x278] sm:$0xff]
  %v6303 = vld [vmem:[%s5 + $0x280] sm:$0xff]
  %v6304 = vld [vmem:[%s5 + $0x288] sm:$0xff]
  %v6305 = vld [vmem:[%s5 + $0x290] sm:$0xff]
  %v6306 = vld [vmem:[%s5 + $0x298] sm:$0xff]
  %v6307 = vld [vmem:[%s5 + $0x2a0] sm:$0xff]
  %v6308 = vld [vmem:[%s5 + $0x2a8] sm:$0xff]
  %v6309 = vld [vmem:[%s5 + $0x2b0] sm:$0xff]
  %v6310 = vld [vmem:[%s5 + $0x2b8] sm:$0xff]
  %v6311 = vld [vmem:[%s5 + $0x2c0] sm:$0xff]
  %v6312 = vld [vmem:[%s5 + $0x2c8] sm:$0xff]
  %v6313 = vld [vmem:[%s5 + $0x2d0] sm:$0xff]
  %v6314 = vld [vmem:[%s5 + $0x2d8] sm:$0xff]
  %v6315 = vld [vmem:[%s5 + $0x2e0] sm:$0xff]
  %v6316 = vld [vmem:[%s5 + $0x2e8] sm:$0xff]
  %v6317 = vld [vmem:[%s5 + $0x2f0] sm:$0xff]
  %v6318 = vld [vmem:[%s5 + $0x2f8] sm:$0xff]
  %v6319 = vld [vmem:[%s5 + $0x300] sm:$0xff]
  %v6320 = vld [vmem:[%s5 + $0x308] sm:$0xff]
  %v6321 = vld [vmem:[%s5 + $0x310] sm:$0xff]
  %v6322 = vld [vmem:[%s5 + $0x318] sm:$0xff]
  %v6323 = vld [vmem:[%s5 + $0x320] sm:$0xff]
  %v6324 = vld [vmem:[%s5 + $0x328] sm:$0xff]
  %v6325 = vld [vmem:[%s5 + $0x330] sm:$0xff]
  %v6326 = vld [vmem:[%s5 + $0x338] sm:$0xff]
  %v6327 = vld [vmem:[%s5 + $0x340] sm:$0xff]
  %v6328 = vld [vmem:[%s5 + $0x348] sm:$0xff]
  %v6329 = vld [vmem:[%s5 + $0x350] sm:$0xff]
  %v6330 = vld [vmem:[%s5 + $0x358] sm:$0xff]
  %v6331 = vld [vmem:[%s5 + $0x360] sm:$0xff]
  %v6332 = vld [vmem:[%s5 + $0x368] sm:$0xff]
  %v6333 = vld [vmem:[%s5 + $0x370] sm:$0xff]
  %v6334 = vld [vmem:[%s5 + $0x378] sm:$0xff]
  %v6335 = vld [vmem:[%s5 + $0x380] sm:$0xff]
  %v6336 = vld [vmem:[%s5 + $0x388] sm:$0xff]
  %v6337 = vld [vmem:[%s5 + $0x390] sm:$0xff]
  %v6338 = vld [vmem:[%s5 + $0x398] sm:$0xff]
  %v6339 = vld [vmem:[%s5 + $0x3a0] sm:$0xff]
  %v6340 = vld [vmem:[%s5 + $0x3a8] sm:$0xff]
  %v6341 = vld [vmem:[%s5 + $0x3b0] sm:$0xff]
  %v6342 = vld [vmem:[%s5 + $0x3b8] sm:$0xff]
  %v6343 = vld [vmem:[%s5 + $0x3c0] sm:$0xff]
  %v6344 = vld [vmem:[%s5 + $0x3c8] sm:$0xff]
  %v6345 = vld [vmem:[%s5 + $0x3d0] sm:$0xff]
  %v6346 = vld [vmem:[%s5 + $0x3d8] sm:$0xff]
  %v6347 = vld [vmem:[%s5 + $0x3e0] sm:$0xff]
  %v6348 = vld [vmem:[%s5 + $0x3e8] sm:$0xff]
  %v6349 = vld [vmem:[%s5 + $0x3f0] sm:$0xff]
  %v6350 = vld [vmem:[%s5 + $0x3f8] sm:$0xff]
  %v6351 = vld [vmem:[%s5 + $0x400] sm:$0xff]
  %v6352 = vld [vmem:[%s5 + $0x408] sm:$0xff]
  %v6353 = vld [vmem:[%s5 + $0x410] sm:$0xff]
  %v6354 = vld [vmem:[%s5 + $0x418] sm:$0xff]
  %v6355 = vld [vmem:[%s5 + $0x420] sm:$0xff]
  %v6356 = vld [vmem:[%s5 + $0x428] sm:$0xff]
  %v6357 = vld [vmem:[%s5 + $0x430] sm:$0xff]
  %v6358 = vld [vmem:[%s5 + $0x438] sm:$0xff]
  %v6359 = vld [vmem:[%s5 + $0x440] sm:$0xff]
  %v6360 = vld [vmem:[%s5 + $0x448] sm:$0xff]
  %v6361 = vld [vmem:[%s5 + $0x450] sm:$0xff]
  %v6362 = vld [vmem:[%s5 + $0x458] sm:$0xff]
  %v6363 = vld [vmem:[%s5 + $0x460] sm:$0xff]
  %v6364 = vld [vmem:[%s5 + $0x468] sm:$0xff]
  %v6365 = vld [vmem:[%s5 + $0x470] sm:$0xff]
  %v6366 = vld [vmem:[%s5 + $0x478] sm:$0xff]
  %v6367 = vld [vmem:[%s5 + $0x480] sm:$0xff]
  %v6368 = vld [vmem:[%s5 + $0x488] sm:$0xff]
  %v6369 = vld [vmem:[%s5 + $0x490] sm:$0xff]
  %v6370 = vld [vmem:[%s5 + $0x498] sm:$0xff]
  %v6371 = vld [vmem:[%s5 + $0x4a0] sm:$0xff]
  %v6372 = vld [vmem:[%s5 + $0x4a8] sm:$0xff]
  %v6373 = vld [vmem:[%s5 + $0x4b0] sm:$0xff]
  %v6374 = vld [vmem:[%s5 + $0x4b8] sm:$0xff]
  %v6375 = vld [vmem:[%s5 + $0x4c0] sm:$0xff]
  %v6376 = vld [vmem:[%s5 + $0x4c8] sm:$0xff]
  %v6377 = vld [vmem:[%s5 + $0x4d0] sm:$0xff]
  %v6378 = vld [vmem:[%s5 + $0x4d8] sm:$0xff]
  %v6379 = vld [vmem:[%s5 + $0x4e0] sm:$0xff]
  %v6380 = vld [vmem:[%s5 + $0x4e8] sm:$0xff]
  %v6381 = vld [vmem:[%s5 + $0x4f0] sm:$0xff]
  %v6382 = vld [vmem:[%s5 + $0x4f8] sm:$0xff]
  %v6383 = vld [vmem:[%s5 + $0x500] sm:$0xff]
  %v6384 = vld [vmem:[%s5 + $0x508] sm:$0xff]
  %v6385 = vld [vmem:[%s5 + $0x510] sm:$0xff]
  %v6386 = vld [vmem:[%s5 + $0x518] sm:$0xff]
  %v6387 = vld [vmem:[%s5 + $0x520] sm:$0xff]
  %v6388 = vld [vmem:[%s5 + $0x528] sm:$0xff]
  %v6389 = vld [vmem:[%s5 + $0x530] sm:$0xff]
  %v6390 = vld [vmem:[%s5 + $0x538] sm:$0xff]
  %v6391 = vld [vmem:[%s5 + $0x540] sm:$0xff]
  %v6392 = vld [vmem:[%s5 + $0x548] sm:$0xff]
  %v6393 = vld [vmem:[%s5 + $0x550] sm:$0xff]
  %v6394 = vld [vmem:[%s5 + $0x558] sm:$0xff]
  %v6395 = vld [vmem:[%s5 + $0x560] sm:$0xff]
  %v6396 = vld [vmem:[%s5 + $0x568] sm:$0xff]
  %v6397 = vld [vmem:[%s5 + $0x570] sm:$0xff]
  %v6398 = vld [vmem:[%s5 + $0x578] sm:$0xff]
  %v6399 = vld [vmem:[%s5 + $0x580] sm:$0xff]
  %v6400 = vld [vmem:[%s5 + $0x588] sm:$0xff]
  %v6401 = vld [vmem:[%s5 + $0x590] sm:$0xff]
  %v6402 = vld [vmem:[%s5 + $0x598] sm:$0xff]
  %v6403 = vld [vmem:[%s5 + $0x5a0] sm:$0xff]
  %v6404 = vld [vmem:[%s5 + $0x5a8] sm:$0xff]
  %v6405 = vld [vmem:[%s5 + $0x5b0] sm:$0xff]
  %v6406 = vld [vmem:[%s5 + $0x5b8] sm:$0xff]
  %v6407 = vld [vmem:[%s5 + $0x5c0] sm:$0xff]
  %v6408 = vld [vmem:[%s5 + $0x5c8] sm:$0xff]
  %v6409 = vld [vmem:[%s5 + $0x5d0] sm:$0xff]
  %v6410 = vld [vmem:[%s5 + $0x5d8] sm:$0xff]
  %v6411 = vld [vmem:[%s5 + $0x5e0] sm:$0xff]
  %v6412 = vld [vmem:[%s5 + $0x5e8] sm:$0xff]
  %v6413 = vld [vmem:[%s5 + $0x5f0] sm:$0xff]
  %v6414 = vld [vmem:[%s5 + $0x5f8] sm:$0xff]
  %v6415 = vld [vmem:[%s5 + $0x600] sm:$0xff]
  %v6416 = vld [vmem:[%s5 + $0x608] sm:$0xff]
  %v6417 = vld [vmem:[%s5 + $0x610] sm:$0xff]
  %v6418 = vld [vmem:[%s5 + $0x618] sm:$0xff]
  %v6419 = vld [vmem:[%s5 + $0x620] sm:$0xff]
  %v6420 = vld [vmem:[%s5 + $0x628] sm:$0xff]
  %v6421 = vld [vmem:[%s5 + $0x630] sm:$0xff]
  %v6422 = vld [vmem:[%s5 + $0x638] sm:$0xff]
  %v6423 = vld [vmem:[%s5 + $0x640] sm:$0xff]
  %v6424 = vld [vmem:[%s5 + $0x648] sm:$0xff]
  %v6425 = vld [vmem:[%s5 + $0x650] sm:$0xff]
  %v6426 = vld [vmem:[%s5 + $0x658] sm:$0xff]
  %v6427 = vld [vmem:[%s5 + $0x660] sm:$0xff]
  %v6428 = vld [vmem:[%s5 + $0x668] sm:$0xff]
  %v6429 = vld [vmem:[%s5 + $0x670] sm:$0xff]
  %v6430 = vld [vmem:[%s5 + $0x678] sm:$0xff]
  %v6431 = vld [vmem:[%s5 + $0x680] sm:$0xff]
  %v6432 = vld [vmem:[%s5 + $0x688] sm:$0xff]
  %v6433 = vld [vmem:[%s5 + $0x690] sm:$0xff]
  %v6434 = vld [vmem:[%s5 + $0x698] sm:$0xff]
  %v6435 = vld [vmem:[%s5 + $0x6a0] sm:$0xff]
  %v6436 = vld [vmem:[%s5 + $0x6a8] sm:$0xff]
  %v6437 = vld [vmem:[%s5 + $0x6b0] sm:$0xff]
  %v6438 = vld [vmem:[%s5 + $0x6b8] sm:$0xff]
  %v6439 = vld [vmem:[%s5 + $0x6c0] sm:$0xff]
  %v6440 = vld [vmem:[%s5 + $0x6c8] sm:$0xff]
  %v6441 = vld [vmem:[%s5 + $0x6d0] sm:$0xff]
  %v6442 = vld [vmem:[%s5 + $0x6d8] sm:$0xff]
  %v6443 = vld [vmem:[%s5 + $0x6e0] sm:$0xff]
  %v6444 = vld [vmem:[%s5 + $0x6e8] sm:$0xff]
  %v6445 = vld [vmem:[%s5 + $0x6f0] sm:$0xff]
  %v6446 = vld [vmem:[%s5 + $0x6f8] sm:$0xff]
  %v6447 = vld [vmem:[%s5 + $0x700] sm:$0xff]
  %v6448 = vld [vmem:[%s5 + $0x708] sm:$0xff]
  %v6449 = vld [vmem:[%s5 + $0x710] sm:$0xff]
  %v6450 = vld [vmem:[%s5 + $0x718] sm:$0xff]
  %v6451 = vld [vmem:[%s5 + $0x720] sm:$0xff]
  %v6452 = vld [vmem:[%s5 + $0x728] sm:$0xff]
  %v6453 = vld [vmem:[%s5 + $0x730] sm:$0xff]
  %v6454 = vld [vmem:[%s5 + $0x738] sm:$0xff]
  %v6455 = vld [vmem:[%s5 + $0x740] sm:$0xff]
  %v6456 = vld [vmem:[%s5 + $0x748] sm:$0xff]
  %v6457 = vld [vmem:[%s5 + $0x750] sm:$0xff]
  %v6458 = vld [vmem:[%s5 + $0x758] sm:$0xff]
  %v6459 = vld [vmem:[%s5 + $0x760] sm:$0xff]
  %v6460 = vld [vmem:[%s5 + $0x768] sm:$0xff]
  %v6461 = vld [vmem:[%s5 + $0x770] sm:$0xff]
  %v6462 = vld [vmem:[%s5 + $0x778] sm:$0xff]
  %v6463 = vld [vmem:[%s5 + $0x780] sm:$0xff]
  %v6464 = vld [vmem:[%s5 + $0x788] sm:$0xff]
  %v6465 = vld [vmem:[%s5 + $0x790] sm:$0xff]
  %v6466 = vld [vmem:[%s5 + $0x798] sm:$0xff]
  %v6467 = vld [vmem:[%s5 + $0x7a0] sm:$0xff]
  %v6468 = vld [vmem:[%s5 + $0x7a8] sm:$0xff]
  %v6469 = vld [vmem:[%s5 + $0x7b0] sm:$0xff]
  %v6470 = vld [vmem:[%s5 + $0x7b8] sm:$0xff]
  %v6471 = vld [vmem:[%s5 + $0x7c0] sm:$0xff]
  %v6472 = vld [vmem:[%s5 + $0x7c8] sm:$0xff]
  %v6473 = vld [vmem:[%s5 + $0x7d0] sm:$0xff]
  %v6474 = vld [vmem:[%s5 + $0x7d8] sm:$0xff]
  %v6507 = vunpack.c.l.b16 %v6191
  %v6508 = vunpack.c.h.b16 %v6191
  %v6509 = vunpack.c.l.b16 %v6192
  %v6510 = vunpack.c.h.b16 %v6192
  %v6511 = vunpack.c.l.b16 %v6193
  %v6512 = vunpack.c.h.b16 %v6193
  %v6513 = vunpack.c.l.b16 %v6194
  %v6514 = vunpack.c.h.b16 %v6194
  %v6515 = vunpack.c.l.b16 %v6195
  %v6516 = vunpack.c.h.b16 %v6195
  %v6517 = vunpack.c.l.b16 %v6196
  %v6518 = vunpack.c.h.b16 %v6196
  %v6519 = vunpack.c.l.b16 %v6197
  %v6520 = vunpack.c.h.b16 %v6197
  %v6521 = vunpack.c.l.b16 %v6198
  %v6522 = vunpack.c.h.b16 %v6198
  %v6523 = vunpack.c.l.b16 %v6199
  %v6524 = vunpack.c.h.b16 %v6199
  %v6525 = vunpack.c.l.b16 %v6200
  %v6526 = vunpack.c.h.b16 %v6200
  %v6527 = vunpack.c.l.b16 %v6201
  %v6528 = vunpack.c.h.b16 %v6201
  %v6529 = vunpack.c.l.b16 %v6202
  %v6530 = vunpack.c.h.b16 %v6202
  %v6531 = vunpack.c.l.b16 %v6203
  %v6532 = vunpack.c.h.b16 %v6203
  %v6533 = vunpack.c.l.b16 %v6204
  %v6534 = vunpack.c.h.b16 %v6204
  %v6535 = vunpack.c.l.b16 %v6205
  %v6536 = vunpack.c.h.b16 %v6205
  %v6537 = vunpack.c.l.b16 %v6206
  %v6538 = vunpack.c.h.b16 %v6206
  %v6539 = vunpack.c.l.b16 %v6207
  %v6540 = vunpack.c.h.b16 %v6207
  %v6541 = vunpack.c.l.b16 %v6208
  %v6542 = vunpack.c.h.b16 %v6208
  %v6543 = vunpack.c.l.b16 %v6209
  %v6544 = vunpack.c.h.b16 %v6209
  %v6545 = vunpack.c.l.b16 %v6210
  %v6546 = vunpack.c.h.b16 %v6210
  %v6547 = vunpack.c.l.b16 %v6211
  %v6548 = vunpack.c.h.b16 %v6211
  %v6549 = vunpack.c.l.b16 %v6212
  %v6550 = vunpack.c.h.b16 %v6212
  %v6551 = vunpack.c.l.b16 %v6213
  %v6552 = vunpack.c.h.b16 %v6213
  %v6553 = vunpack.c.l.b16 %v6214
  %v6554 = vunpack.c.h.b16 %v6214
  %v6555 = vunpack.c.l.b16 %v6215
  %v6556 = vunpack.c.h.b16 %v6215
  %v6557 = vunpack.c.l.b16 %v6216
  %v6558 = vunpack.c.h.b16 %v6216
  %v6559 = vunpack.c.l.b16 %v6217
  %v6560 = vunpack.c.h.b16 %v6217
  %v6561 = vunpack.c.l.b16 %v6218
  %v6562 = vunpack.c.h.b16 %v6218
  %v6563 = vunpack.c.l.b16 %v6219
  %v6564 = vunpack.c.h.b16 %v6219
  %v6565 = vunpack.c.l.b16 %v6220
  %v6566 = vunpack.c.h.b16 %v6220
  %v6567 = vunpack.c.l.b16 %v6221
  %v6568 = vunpack.c.h.b16 %v6221
  %v6569 = vunpack.c.l.b16 %v6222
  %v6570 = vunpack.c.h.b16 %v6222
  %v6571 = vpack.c.b16 %v6523, %v6507
  %v6572 = vpack.c.b16 %v6524, %v6508
  %v6573 = vpack.c.b16 %v6525, %v6509
  %v6574 = vpack.c.b16 %v6526, %v6510
  %v6575 = vpack.c.b16 %v6527, %v6511
  %v6576 = vpack.c.b16 %v6528, %v6512
  %v6577 = vpack.c.b16 %v6529, %v6513
  %v6578 = vpack.c.b16 %v6530, %v6514
  %v6579 = vpack.c.b16 %v6531, %v6515
  %v6580 = vpack.c.b16 %v6532, %v6516
  %v6581 = vpack.c.b16 %v6533, %v6517
  %v6582 = vpack.c.b16 %v6534, %v6518
  %v6583 = vpack.c.b16 %v6535, %v6519
  %v6584 = vpack.c.b16 %v6536, %v6520
  %v6585 = vpack.c.b16 %v6537, %v6521
  %v6586 = vpack.c.b16 %v6538, %v6522
  %v6587 = vpack.c.b16 %v6555, %v6539
  %v6588 = vpack.c.b16 %v6556, %v6540
  %v6589 = vpack.c.b16 %v6557, %v6541
  %v6590 = vpack.c.b16 %v6558, %v6542
  %v6591 = vpack.c.b16 %v6559, %v6543
  %v6592 = vpack.c.b16 %v6560, %v6544
  %v6593 = vpack.c.b16 %v6561, %v6545
  %v6594 = vpack.c.b16 %v6562, %v6546
  %v6595 = vpack.c.b16 %v6563, %v6547
  %v6596 = vpack.c.b16 %v6564, %v6548
  %v6597 = vpack.c.b16 %v6565, %v6549
  %v6598 = vpack.c.b16 %v6566, %v6550
  %v6599 = vpack.c.b16 %v6567, %v6551
  %v6600 = vpack.c.b16 %v6568, %v6552
  %v6601 = vpack.c.b16 %v6569, %v6553
  %v6602 = vpack.c.b16 %v6570, %v6554
  %v6885 = vunpack.c.l.b16 %v6223
  %v6886 = vunpack.c.h.b16 %v6223
  %v6887 = vunpack.c.l.b16 %v6224
  %v6888 = vunpack.c.h.b16 %v6224
  %v6889 = vunpack.c.l.b16 %v6225
  %v6890 = vunpack.c.h.b16 %v6225
  %v6891 = vunpack.c.l.b16 %v6226
  %v6892 = vunpack.c.h.b16 %v6226
  %v6893 = vunpack.c.l.b16 %v6227
  %v6894 = vunpack.c.h.b16 %v6227
  %v6895 = vunpack.c.l.b16 %v6228
  %v6896 = vunpack.c.h.b16 %v6228
  %v6897 = vunpack.c.l.b16 %v6229
  %v6898 = vunpack.c.h.b16 %v6229
  %v6899 = vunpack.c.l.b16 %v6230
  %v6900 = vunpack.c.h.b16 %v6230
  %v6901 = vunpack.c.l.b16 %v6231
  %v6902 = vunpack.c.h.b16 %v6231
  %v6903 = vunpack.c.l.b16 %v6232
  %v6904 = vunpack.c.h.b16 %v6232
  %v6905 = vunpack.c.l.b16 %v6233
  %v6906 = vunpack.c.h.b16 %v6233
  %v6907 = vunpack.c.l.b16 %v6234
  %v6908 = vunpack.c.h.b16 %v6234
  %v6909 = vunpack.c.l.b16 %v6235
  %v6910 = vunpack.c.h.b16 %v6235
  %v6911 = vunpack.c.l.b16 %v6236
  %v6912 = vunpack.c.h.b16 %v6236
  %v6913 = vunpack.c.l.b16 %v6237
  %v6914 = vunpack.c.h.b16 %v6237
  %v6915 = vunpack.c.l.b16 %v6238
  %v6916 = vunpack.c.h.b16 %v6238
  %v6917 = vunpack.c.l.b16 %v6239
  %v6918 = vunpack.c.h.b16 %v6239
  %v6919 = vunpack.c.l.b16 %v6240
  %v6920 = vunpack.c.h.b16 %v6240
  %v6921 = vunpack.c.l.b16 %v6241
  %v6922 = vunpack.c.h.b16 %v6241
  %v6923 = vunpack.c.l.b16 %v6242
  %v6924 = vunpack.c.h.b16 %v6242
  %v6925 = vunpack.c.l.b16 %v6243
  %v6926 = vunpack.c.h.b16 %v6243
  %v6927 = vunpack.c.l.b16 %v6244
  %v6928 = vunpack.c.h.b16 %v6244
  %v6929 = vunpack.c.l.b16 %v6245
  %v6930 = vunpack.c.h.b16 %v6245
  %v6931 = vunpack.c.l.b16 %v6246
  %v6932 = vunpack.c.h.b16 %v6246
  %v6933 = vunpack.c.l.b16 %v6247
  %v6934 = vunpack.c.h.b16 %v6247
  %v6935 = vunpack.c.l.b16 %v6248
  %v6936 = vunpack.c.h.b16 %v6248
  %v6937 = vunpack.c.l.b16 %v6249
  %v6938 = vunpack.c.h.b16 %v6249
  %v6939 = vunpack.c.l.b16 %v6250
  %v6940 = vunpack.c.h.b16 %v6250
  %v6941 = vunpack.c.l.b16 %v6251
  %v6942 = vunpack.c.h.b16 %v6251
  %v6943 = vunpack.c.l.b16 %v6252
  %v6944 = vunpack.c.h.b16 %v6252
  %v6945 = vunpack.c.l.b16 %v6253
  %v6946 = vunpack.c.h.b16 %v6253
  %v6947 = vunpack.c.l.b16 %v6254
  %v6948 = vunpack.c.h.b16 %v6254
  %v6949 = vunpack.c.l.b16 %v6255
  %v6950 = vunpack.c.h.b16 %v6255
  %v6951 = vunpack.c.l.b16 %v6256
  %v6952 = vunpack.c.h.b16 %v6256
  %v6953 = vunpack.c.l.b16 %v6257
  %v6954 = vunpack.c.h.b16 %v6257
  %v6955 = vunpack.c.l.b16 %v6258
  %v6956 = vunpack.c.h.b16 %v6258
  %v6957 = vunpack.c.l.b16 %v6259
  %v6958 = vunpack.c.h.b16 %v6259
  %v6959 = vunpack.c.l.b16 %v6260
  %v6960 = vunpack.c.h.b16 %v6260
  %v6961 = vunpack.c.l.b16 %v6261
  %v6962 = vunpack.c.h.b16 %v6261
  %v6963 = vunpack.c.l.b16 %v6262
  %v6964 = vunpack.c.h.b16 %v6262
  %v6965 = vunpack.c.l.b16 %v6263
  %v6966 = vunpack.c.h.b16 %v6263
  %v6967 = vunpack.c.l.b16 %v6264
  %v6968 = vunpack.c.h.b16 %v6264
  %v6969 = vunpack.c.l.b16 %v6265
  %v6970 = vunpack.c.h.b16 %v6265
  %v6971 = vunpack.c.l.b16 %v6266
  %v6972 = vunpack.c.h.b16 %v6266
  %v6973 = vunpack.c.l.b16 %v6267
  %v6974 = vunpack.c.h.b16 %v6267
  %v6975 = vunpack.c.l.b16 %v6268
  %v6976 = vunpack.c.h.b16 %v6268
  %v6977 = vunpack.c.l.b16 %v6269
  %v6978 = vunpack.c.h.b16 %v6269
  %v6979 = vunpack.c.l.b16 %v6270
  %v6980 = vunpack.c.h.b16 %v6270
  %v6981 = vunpack.c.l.b16 %v6271
  %v6982 = vunpack.c.h.b16 %v6271
  %v6983 = vunpack.c.l.b16 %v6272
  %v6984 = vunpack.c.h.b16 %v6272
  %v6985 = vunpack.c.l.b16 %v6273
  %v6986 = vunpack.c.h.b16 %v6273
  %v6987 = vunpack.c.l.b16 %v6274
  %v6988 = vunpack.c.h.b16 %v6274
  %v6989 = vunpack.c.l.b16 %v6275
  %v6990 = vunpack.c.h.b16 %v6275
  %v6991 = vunpack.c.l.b16 %v6276
  %v6992 = vunpack.c.h.b16 %v6276
  %v6993 = vunpack.c.l.b16 %v6277
  %v6994 = vunpack.c.h.b16 %v6277
  %v6995 = vunpack.c.l.b16 %v6278
  %v6996 = vunpack.c.h.b16 %v6278
  %v6997 = vunpack.c.l.b16 %v6279
  %v6998 = vunpack.c.h.b16 %v6279
  %v6999 = vunpack.c.l.b16 %v6280
  %v7000 = vunpack.c.h.b16 %v6280
  %v7001 = vunpack.c.l.b16 %v6281
  %v7002 = vunpack.c.h.b16 %v6281
  %v7003 = vunpack.c.l.b16 %v6282
  %v7004 = vunpack.c.h.b16 %v6282
  %v7005 = vunpack.c.l.b16 %v6283
  %v7006 = vunpack.c.h.b16 %v6283
  %v7007 = vunpack.c.l.b16 %v6284
  %v7008 = vunpack.c.h.b16 %v6284
  %v7009 = vunpack.c.l.b16 %v6285
  %v7010 = vunpack.c.h.b16 %v6285
  %v7011 = vunpack.c.l.b16 %v6286
  %v7012 = vunpack.c.h.b16 %v6286
  %v7013 = vunpack.c.l.b16 %v6287
  %v7014 = vunpack.c.h.b16 %v6287
  %v7015 = vunpack.c.l.b16 %v6288
  %v7016 = vunpack.c.h.b16 %v6288
  %v7017 = vunpack.c.l.b16 %v6289
  %v7018 = vunpack.c.h.b16 %v6289
  %v7019 = vunpack.c.l.b16 %v6290
  %v7020 = vunpack.c.h.b16 %v6290
  %v7021 = vunpack.c.l.b16 %v6291
  %v7022 = vunpack.c.h.b16 %v6291
  %v7023 = vunpack.c.l.b16 %v6292
  %v7024 = vunpack.c.h.b16 %v6292
  %v7025 = vunpack.c.l.b16 %v6293
  %v7026 = vunpack.c.h.b16 %v6293
  %v7027 = vunpack.c.l.b16 %v6294
  %v7028 = vunpack.c.h.b16 %v6294
  %v7029 = vunpack.c.l.b16 %v6295
  %v7030 = vunpack.c.h.b16 %v6295
  %v7031 = vunpack.c.l.b16 %v6296
  %v7032 = vunpack.c.h.b16 %v6296
  %v7033 = vunpack.c.l.b16 %v6297
  %v7034 = vunpack.c.h.b16 %v6297
  %v7035 = vunpack.c.l.b16 %v6298
  %v7036 = vunpack.c.h.b16 %v6298
  %v7037 = vunpack.c.l.b16 %v6299
  %v7038 = vunpack.c.h.b16 %v6299
  %v7039 = vunpack.c.l.b16 %v6300
  %v7040 = vunpack.c.h.b16 %v6300
  %v7041 = vunpack.c.l.b16 %v6301
  %v7042 = vunpack.c.h.b16 %v6301
  %v7043 = vunpack.c.l.b16 %v6302
  %v7044 = vunpack.c.h.b16 %v6302
  %v7045 = vunpack.c.l.b16 %v6303
  %v7046 = vunpack.c.h.b16 %v6303
  %v7047 = vunpack.c.l.b16 %v6304
  %v7048 = vunpack.c.h.b16 %v6304
  %v7049 = vunpack.c.l.b16 %v6305
  %v7050 = vunpack.c.h.b16 %v6305
  %v7051 = vunpack.c.l.b16 %v6306
  %v7052 = vunpack.c.h.b16 %v6306
  %v7053 = vunpack.c.l.b16 %v6307
  %v7054 = vunpack.c.h.b16 %v6307
  %v7055 = vunpack.c.l.b16 %v6308
  %v7056 = vunpack.c.h.b16 %v6308
  %v7057 = vunpack.c.l.b16 %v6309
  %v7058 = vunpack.c.h.b16 %v6309
  %v7059 = vunpack.c.l.b16 %v6310
  %v7060 = vunpack.c.h.b16 %v6310
  %v7061 = vunpack.c.l.b16 %v6311
  %v7062 = vunpack.c.h.b16 %v6311
  %v7063 = vunpack.c.l.b16 %v6312
  %v7064 = vunpack.c.h.b16 %v6312
  %v7065 = vunpack.c.l.b16 %v6313
  %v7066 = vunpack.c.h.b16 %v6313
  %v7067 = vunpack.c.l.b16 %v6314
  %v7068 = vunpack.c.h.b16 %v6314
  %v7069 = vunpack.c.l.b16 %v6315
  %v7070 = vunpack.c.h.b16 %v6315
  %v7071 = vunpack.c.l.b16 %v6316
  %v7072 = vunpack.c.h.b16 %v6316
  %v7073 = vunpack.c.l.b16 %v6317
  %v7074 = vunpack.c.h.b16 %v6317
  %v7075 = vunpack.c.l.b16 %v6318
  %v7076 = vunpack.c.h.b16 %v6318
  %v7077 = vunpack.c.l.b16 %v6319
  %v7078 = vunpack.c.h.b16 %v6319
  %v7079 = vunpack.c.l.b16 %v6320
  %v7080 = vunpack.c.h.b16 %v6320
  %v7081 = vunpack.c.l.b16 %v6321
  %v7082 = vunpack.c.h.b16 %v6321
  %v7083 = vunpack.c.l.b16 %v6322
  %v7084 = vunpack.c.h.b16 %v6322
  %v7085 = vunpack.c.l.b16 %v6323
  %v7086 = vunpack.c.h.b16 %v6323
  %v7087 = vunpack.c.l.b16 %v6324
  %v7088 = vunpack.c.h.b16 %v6324
  %v7089 = vunpack.c.l.b16 %v6325
  %v7090 = vunpack.c.h.b16 %v6325
  %v7091 = vunpack.c.l.b16 %v6326
  %v7092 = vunpack.c.h.b16 %v6326
  %v7093 = vunpack.c.l.b16 %v6327
  %v7094 = vunpack.c.h.b16 %v6327
  %v7095 = vunpack.c.l.b16 %v6328
  %v7096 = vunpack.c.h.b16 %v6328
  %v7097 = vunpack.c.l.b16 %v6329
  %v7098 = vunpack.c.h.b16 %v6329
  %v7099 = vunpack.c.l.b16 %v6330
  %v7100 = vunpack.c.h.b16 %v6330
  %v7101 = vunpack.c.l.b16 %v6331
  %v7102 = vunpack.c.h.b16 %v6331
  %v7103 = vunpack.c.l.b16 %v6332
  %v7104 = vunpack.c.h.b16 %v6332
  %v7105 = vunpack.c.l.b16 %v6333
  %v7106 = vunpack.c.h.b16 %v6333
  %v7107 = vunpack.c.l.b16 %v6334
  %v7108 = vunpack.c.h.b16 %v6334
  %v7109 = vunpack.c.l.b16 %v6335
  %v7110 = vunpack.c.h.b16 %v6335
  %v7111 = vunpack.c.l.b16 %v6336
  %v7112 = vunpack.c.h.b16 %v6336
  %v7113 = vunpack.c.l.b16 %v6337
  %v7114 = vunpack.c.h.b16 %v6337
  %v7115 = vunpack.c.l.b16 %v6338
  %v7116 = vunpack.c.h.b16 %v6338
  %v7117 = vunpack.c.l.b16 %v6339
  %v7118 = vunpack.c.h.b16 %v6339
  %v7119 = vunpack.c.l.b16 %v6340
  %v7120 = vunpack.c.h.b16 %v6340
  %v7121 = vunpack.c.l.b16 %v6341
  %v7122 = vunpack.c.h.b16 %v6341
  %v7123 = vunpack.c.l.b16 %v6342
  %v7124 = vunpack.c.h.b16 %v6342
  %v7125 = vunpack.c.l.b16 %v6343
  %v7126 = vunpack.c.h.b16 %v6343
  %v7127 = vunpack.c.l.b16 %v6344
  %v7128 = vunpack.c.h.b16 %v6344
  %v7129 = vunpack.c.l.b16 %v6345
  %v7130 = vunpack.c.h.b16 %v6345
  %v7131 = vunpack.c.l.b16 %v6346
  %v7132 = vunpack.c.h.b16 %v6346
  %v7133 = vunpack.c.l.b16 %v6347
  %v7134 = vunpack.c.h.b16 %v6347
  %v7135 = vunpack.c.l.b16 %v6348
  %v7136 = vunpack.c.h.b16 %v6348
  %v7137 = vunpack.c.l.b16 %v6349
  %v7138 = vunpack.c.h.b16 %v6349
  %v7139 = vunpack.c.l.b16 %v6350
  %v7140 = vunpack.c.h.b16 %v6350
  %v7141 = vunpack.c.l.b16 %v6351
  %v7142 = vunpack.c.h.b16 %v6351
  %v7143 = vunpack.c.l.b16 %v6352
  %v7144 = vunpack.c.h.b16 %v6352
  %v7145 = vunpack.c.l.b16 %v6353
  %v7146 = vunpack.c.h.b16 %v6353
  %v7147 = vunpack.c.l.b16 %v6354
  %v7148 = vunpack.c.h.b16 %v6354
  %v7149 = vunpack.c.l.b16 %v6355
  %v7150 = vunpack.c.h.b16 %v6355
  %v7151 = vunpack.c.l.b16 %v6356
  %v7152 = vunpack.c.h.b16 %v6356
  %v7153 = vunpack.c.l.b16 %v6357
  %v7154 = vunpack.c.h.b16 %v6357
  %v7155 = vunpack.c.l.b16 %v6358
  %v7156 = vunpack.c.h.b16 %v6358
  %v7157 = vunpack.c.l.b16 %v6359
  %v7158 = vunpack.c.h.b16 %v6359
  %v7159 = vunpack.c.l.b16 %v6360
  %v7160 = vunpack.c.h.b16 %v6360
  %v7161 = vunpack.c.l.b16 %v6361
  %v7162 = vunpack.c.h.b16 %v6361
  %v7163 = vunpack.c.l.b16 %v6362
  %v7164 = vunpack.c.h.b16 %v6362
  %v7165 = vunpack.c.l.b16 %v6363
  %v7166 = vunpack.c.h.b16 %v6363
  %v7167 = vunpack.c.l.b16 %v6364
  %v7168 = vunpack.c.h.b16 %v6364
  %v7169 = vunpack.c.l.b16 %v6365
  %v7170 = vunpack.c.h.b16 %v6365
  %v7171 = vunpack.c.l.b16 %v6366
  %v7172 = vunpack.c.h.b16 %v6366
  %v7173 = vunpack.c.l.b16 %v6367
  %v7174 = vunpack.c.h.b16 %v6367
  %v7175 = vunpack.c.l.b16 %v6368
  %v7176 = vunpack.c.h.b16 %v6368
  %v7177 = vunpack.c.l.b16 %v6369
  %v7178 = vunpack.c.h.b16 %v6369
  %v7179 = vunpack.c.l.b16 %v6370
  %v7180 = vunpack.c.h.b16 %v6370
  %v7181 = vunpack.c.l.b16 %v6371
  %v7182 = vunpack.c.h.b16 %v6371
  %v7183 = vunpack.c.l.b16 %v6372
  %v7184 = vunpack.c.h.b16 %v6372
  %v7185 = vunpack.c.l.b16 %v6373
  %v7186 = vunpack.c.h.b16 %v6373
  %v7187 = vunpack.c.l.b16 %v6374
  %v7188 = vunpack.c.h.b16 %v6374
  %v7189 = vunpack.c.l.b16 %v6375
  %v7190 = vunpack.c.h.b16 %v6375
  %v7191 = vunpack.c.l.b16 %v6376
  %v7192 = vunpack.c.h.b16 %v6376
  %v7193 = vunpack.c.l.b16 %v6377
  %v7194 = vunpack.c.h.b16 %v6377
  %v7195 = vunpack.c.l.b16 %v6378
  %v7196 = vunpack.c.h.b16 %v6378
  %v7197 = vunpack.c.l.b16 %v6379
  %v7198 = vunpack.c.h.b16 %v6379
  %v7199 = vunpack.c.l.b16 %v6380
  %v7200 = vunpack.c.h.b16 %v6380
  %v7201 = vunpack.c.l.b16 %v6381
  %v7202 = vunpack.c.h.b16 %v6381
  %v7203 = vunpack.c.l.b16 %v6382
  %v7204 = vunpack.c.h.b16 %v6382
  %v7205 = vunpack.c.l.b16 %v6383
  %v7206 = vunpack.c.h.b16 %v6383
  %v7207 = vunpack.c.l.b16 %v6384
  %v7208 = vunpack.c.h.b16 %v6384
  %v7209 = vunpack.c.l.b16 %v6385
  %v7210 = vunpack.c.h.b16 %v6385
  %v7211 = vunpack.c.l.b16 %v6386
  %v7212 = vunpack.c.h.b16 %v6386
  %v7213 = vunpack.c.l.b16 %v6387
  %v7214 = vunpack.c.h.b16 %v6387
  %v7215 = vunpack.c.l.b16 %v6388
  %v7216 = vunpack.c.h.b16 %v6388
  %v7217 = vunpack.c.l.b16 %v6389
  %v7218 = vunpack.c.h.b16 %v6389
  %v7219 = vunpack.c.l.b16 %v6390
  %v7220 = vunpack.c.h.b16 %v6390
  %v7221 = vunpack.c.l.b16 %v6391
  %v7222 = vunpack.c.h.b16 %v6391
  %v7223 = vunpack.c.l.b16 %v6392
  %v7224 = vunpack.c.h.b16 %v6392
  %v7225 = vunpack.c.l.b16 %v6393
  %v7226 = vunpack.c.h.b16 %v6393
  %v7227 = vunpack.c.l.b16 %v6394
  %v7228 = vunpack.c.h.b16 %v6394
  %v7229 = vunpack.c.l.b16 %v6395
  %v7230 = vunpack.c.h.b16 %v6395
  %v7231 = vunpack.c.l.b16 %v6396
  %v7232 = vunpack.c.h.b16 %v6396
  %v7233 = vunpack.c.l.b16 %v6397
  %v7234 = vunpack.c.h.b16 %v6397
  %v7235 = vunpack.c.l.b16 %v6398
  %v7236 = vunpack.c.h.b16 %v6398
  %v7237 = vunpack.c.l.b16 %v6399
  %v7238 = vunpack.c.h.b16 %v6399
  %v7239 = vunpack.c.l.b16 %v6400
  %v7240 = vunpack.c.h.b16 %v6400
  %v7241 = vunpack.c.l.b16 %v6401
  %v7242 = vunpack.c.h.b16 %v6401
  %v7243 = vunpack.c.l.b16 %v6402
  %v7244 = vunpack.c.h.b16 %v6402
  %v7245 = vunpack.c.l.b16 %v6403
  %v7246 = vunpack.c.h.b16 %v6403
  %v7247 = vunpack.c.l.b16 %v6404
  %v7248 = vunpack.c.h.b16 %v6404
  %v7249 = vunpack.c.l.b16 %v6405
  %v7250 = vunpack.c.h.b16 %v6405
  %v7251 = vunpack.c.l.b16 %v6406
  %v7252 = vunpack.c.h.b16 %v6406
  %v7253 = vunpack.c.l.b16 %v6407
  %v7254 = vunpack.c.h.b16 %v6407
  %v7255 = vunpack.c.l.b16 %v6408
  %v7256 = vunpack.c.h.b16 %v6408
  %v7257 = vunpack.c.l.b16 %v6409
  %v7258 = vunpack.c.h.b16 %v6409
  %v7259 = vunpack.c.l.b16 %v6410
  %v7260 = vunpack.c.h.b16 %v6410
  %v7261 = vunpack.c.l.b16 %v6411
  %v7262 = vunpack.c.h.b16 %v6411
  %v7263 = vunpack.c.l.b16 %v6412
  %v7264 = vunpack.c.h.b16 %v6412
  %v7265 = vunpack.c.l.b16 %v6413
  %v7266 = vunpack.c.h.b16 %v6413
  %v7267 = vunpack.c.l.b16 %v6414
  %v7268 = vunpack.c.h.b16 %v6414
  %v7269 = vunpack.c.l.b16 %v6415
  %v7270 = vunpack.c.h.b16 %v6415
  %v7271 = vunpack.c.l.b16 %v6416
  %v7272 = vunpack.c.h.b16 %v6416
  %v7273 = vunpack.c.l.b16 %v6417
  %v7274 = vunpack.c.h.b16 %v6417
  %v7275 = vunpack.c.l.b16 %v6418
  %v7276 = vunpack.c.h.b16 %v6418
  %v7277 = vunpack.c.l.b16 %v6419
  %v7278 = vunpack.c.h.b16 %v6419
  %v7279 = vunpack.c.l.b16 %v6420
  %v7280 = vunpack.c.h.b16 %v6420
  %v7281 = vunpack.c.l.b16 %v6421
  %v7282 = vunpack.c.h.b16 %v6421
  %v7283 = vunpack.c.l.b16 %v6422
  %v7284 = vunpack.c.h.b16 %v6422
  %v7285 = vunpack.c.l.b16 %v6423
  %v7286 = vunpack.c.h.b16 %v6423
  %v7287 = vunpack.c.l.b16 %v6424
  %v7288 = vunpack.c.h.b16 %v6424
  %v7289 = vunpack.c.l.b16 %v6425
  %v7290 = vunpack.c.h.b16 %v6425
  %v7291 = vunpack.c.l.b16 %v6426
  %v7292 = vunpack.c.h.b16 %v6426
  %v7293 = vunpack.c.l.b16 %v6427
  %v7294 = vunpack.c.h.b16 %v6427
  %v7295 = vunpack.c.l.b16 %v6428
  %v7296 = vunpack.c.h.b16 %v6428
  %v7297 = vunpack.c.l.b16 %v6429
  %v7298 = vunpack.c.h.b16 %v6429
  %v7299 = vunpack.c.l.b16 %v6430
  %v7300 = vunpack.c.h.b16 %v6430
  %v7301 = vunpack.c.l.b16 %v6431
  %v7302 = vunpack.c.h.b16 %v6431
  %v7303 = vunpack.c.l.b16 %v6432
  %v7304 = vunpack.c.h.b16 %v6432
  %v7305 = vunpack.c.l.b16 %v6433
  %v7306 = vunpack.c.h.b16 %v6433
  %v7307 = vunpack.c.l.b16 %v6434
  %v7308 = vunpack.c.h.b16 %v6434
  %v7309 = vunpack.c.l.b16 %v6435
  %v7310 = vunpack.c.h.b16 %v6435
  %v7311 = vunpack.c.l.b16 %v6436
  %v7312 = vunpack.c.h.b16 %v6436
  %v7313 = vunpack.c.l.b16 %v6437
  %v7314 = vunpack.c.h.b16 %v6437
  %v7315 = vunpack.c.l.b16 %v6438
  %v7316 = vunpack.c.h.b16 %v6438
  %v7317 = vunpack.c.l.b16 %v6439
  %v7318 = vunpack.c.h.b16 %v6439
  %v7319 = vunpack.c.l.b16 %v6440
  %v7320 = vunpack.c.h.b16 %v6440
  %v7321 = vunpack.c.l.b16 %v6441
  %v7322 = vunpack.c.h.b16 %v6441
  %v7323 = vunpack.c.l.b16 %v6442
  %v7324 = vunpack.c.h.b16 %v6442
  %v7325 = vunpack.c.l.b16 %v6443
  %v7326 = vunpack.c.h.b16 %v6443
  %v7327 = vunpack.c.l.b16 %v6444
  %v7328 = vunpack.c.h.b16 %v6444
  %v7329 = vunpack.c.l.b16 %v6445
  %v7330 = vunpack.c.h.b16 %v6445
  %v7331 = vunpack.c.l.b16 %v6446
  %v7332 = vunpack.c.h.b16 %v6446
  %v7333 = vunpack.c.l.b16 %v6447
  %v7334 = vunpack.c.h.b16 %v6447
  %v7335 = vunpack.c.l.b16 %v6448
  %v7336 = vunpack.c.h.b16 %v6448
  %v7337 = vunpack.c.l.b16 %v6449
  %v7338 = vunpack.c.h.b16 %v6449
  %v7339 = vunpack.c.l.b16 %v6450
  %v7340 = vunpack.c.h.b16 %v6450
  %v7341 = vunpack.c.l.b16 %v6451
  %v7342 = vunpack.c.h.b16 %v6451
  %v7343 = vunpack.c.l.b16 %v6452
  %v7344 = vunpack.c.h.b16 %v6452
  %v7345 = vunpack.c.l.b16 %v6453
  %v7346 = vunpack.c.h.b16 %v6453
  %v7347 = vunpack.c.l.b16 %v6454
  %v7348 = vunpack.c.h.b16 %v6454
  %v7349 = vunpack.c.l.b16 %v6455
  %v7350 = vunpack.c.h.b16 %v6455
  %v7351 = vunpack.c.l.b16 %v6456
  %v7352 = vunpack.c.h.b16 %v6456
  %v7353 = vunpack.c.l.b16 %v6457
  %v7354 = vunpack.c.h.b16 %v6457
  %v7355 = vunpack.c.l.b16 %v6458
  %v7356 = vunpack.c.h.b16 %v6458
  %v7357 = vunpack.c.l.b16 %v6459
  %v7358 = vunpack.c.h.b16 %v6459
  %v7359 = vunpack.c.l.b16 %v6460
  %v7360 = vunpack.c.h.b16 %v6460
  %v7361 = vunpack.c.l.b16 %v6461
  %v7362 = vunpack.c.h.b16 %v6461
  %v7363 = vunpack.c.l.b16 %v6462
  %v7364 = vunpack.c.h.b16 %v6462
  %v7365 = vunpack.c.l.b16 %v6463
  %v7366 = vunpack.c.h.b16 %v6463
  %v7367 = vunpack.c.l.b16 %v6464
  %v7368 = vunpack.c.h.b16 %v6464
  %v7369 = vunpack.c.l.b16 %v6465
  %v7370 = vunpack.c.h.b16 %v6465
  %v7371 = vunpack.c.l.b16 %v6466
  %v7372 = vunpack.c.h.b16 %v6466
  %v7373 = vunpack.c.l.b16 %v6467
  %v7374 = vunpack.c.h.b16 %v6467
  %v7375 = vunpack.c.l.b16 %v6468
  %v7376 = vunpack.c.h.b16 %v6468
  %v7377 = vunpack.c.l.b16 %v6469
  %v7378 = vunpack.c.h.b16 %v6469
  %v7379 = vunpack.c.l.b16 %v6470
  %v7380 = vunpack.c.h.b16 %v6470
  %v7381 = vunpack.c.l.b16 %v6471
  %v7382 = vunpack.c.h.b16 %v6471
  %v7383 = vunpack.c.l.b16 %v6472
  %v7384 = vunpack.c.h.b16 %v6472
  %v7385 = vunpack.c.l.b16 %v6473
  %v7386 = vunpack.c.h.b16 %v6473
  %v7387 = vunpack.c.l.b16 %v6474
  %v7388 = vunpack.c.h.b16 %v6474
  %v7389 = vpack.c.b16 %v6887, %v6885
  %v7390 = vpack.c.b16 %v6888, %v6886
  %v7391 = vpack.c.b16 %v6891, %v6889
  %v7392 = vpack.c.b16 %v6892, %v6890
  %v7393 = vpack.c.b16 %v6895, %v6893
  %v7394 = vpack.c.b16 %v6896, %v6894
  %v7395 = vpack.c.b16 %v6899, %v6897
  %v7396 = vpack.c.b16 %v6900, %v6898
  %v7397 = vpack.c.b16 %v6903, %v6901
  %v7398 = vpack.c.b16 %v6904, %v6902
  %v7399 = vpack.c.b16 %v6907, %v6905
  %v7400 = vpack.c.b16 %v6908, %v6906
  %v7401 = vpack.c.b16 %v6911, %v6909
  %v7402 = vpack.c.b16 %v6912, %v6910
  %v7403 = vpack.c.b16 %v6915, %v6913
  %v7404 = vpack.c.b16 %v6916, %v6914
  %v7405 = vpack.c.b16 %v6919, %v6917
  %v7406 = vpack.c.b16 %v6920, %v6918
  %v7407 = vpack.c.b16 %v6923, %v6921
  %v7408 = vpack.c.b16 %v6924, %v6922
  %v7409 = vpack.c.b16 %v6927, %v6925
  %v7410 = vpack.c.b16 %v6928, %v6926
  %v7411 = vpack.c.b16 %v6931, %v6929
  %v7412 = vpack.c.b16 %v6932, %v6930
  %v7413 = vpack.c.b16 %v6935, %v6933
  %v7414 = vpack.c.b16 %v6936, %v6934
  %v7415 = vpack.c.b16 %v6939, %v6937
  %v7416 = vpack.c.b16 %v6940, %v6938
  %v7417 = vpack.c.b16 %v6943, %v6941
  %v7418 = vpack.c.b16 %v6944, %v6942
  %v7419 = vpack.c.b16 %v6947, %v6945
  %v7420 = vpack.c.b16 %v6948, %v6946
  %v7421 = vpack.c.b16 %v6951, %v6949
  %v7422 = vpack.c.b16 %v6952, %v6950
  %v7423 = vpack.c.b16 %v6955, %v6953
  %v7424 = vpack.c.b16 %v6956, %v6954
  %v7425 = vpack.c.b16 %v6959, %v6957
  %v7426 = vpack.c.b16 %v6960, %v6958
  %v7427 = vpack.c.b16 %v6963, %v6961
  %v7428 = vpack.c.b16 %v6964, %v6962
  %v7429 = vpack.c.b16 %v6967, %v6965
  %v7430 = vpack.c.b16 %v6968, %v6966
  %v7431 = vpack.c.b16 %v6971, %v6969
  %v7432 = vpack.c.b16 %v6972, %v6970
  %v7433 = vpack.c.b16 %v6975, %v6973
  %v7434 = vpack.c.b16 %v6976, %v6974
  %v7435 = vpack.c.b16 %v6979, %v6977
  %v7436 = vpack.c.b16 %v6980, %v6978
  %v7437 = vpack.c.b16 %v6983, %v6981
  %v7438 = vpack.c.b16 %v6984, %v6982
  %v7439 = vpack.c.b16 %v6987, %v6985
  %v7440 = vpack.c.b16 %v6988, %v6986
  %v7441 = vpack.c.b16 %v6991, %v6989
  %v7442 = vpack.c.b16 %v6992, %v6990
  %v7443 = vpack.c.b16 %v6995, %v6993
  %v7444 = vpack.c.b16 %v6996, %v6994
  %v7445 = vpack.c.b16 %v6999, %v6997
  %v7446 = vpack.c.b16 %v7000, %v6998
  %v7447 = vpack.c.b16 %v7003, %v7001
  %v7448 = vpack.c.b16 %v7004, %v7002
  %v7449 = vpack.c.b16 %v7007, %v7005
  %v7450 = vpack.c.b16 %v7008, %v7006
  %v7451 = vpack.c.b16 %v7011, %v7009
  %v7452 = vpack.c.b16 %v7012, %v7010
  %v7453 = vpack.c.b16 %v7015, %v7013
  %v7454 = vpack.c.b16 %v7016, %v7014
  %v7455 = vpack.c.b16 %v7019, %v7017
  %v7456 = vpack.c.b16 %v7020, %v7018
  %v7457 = vpack.c.b16 %v7023, %v7021
  %v7458 = vpack.c.b16 %v7024, %v7022
  %v7459 = vpack.c.b16 %v7027, %v7025
  %v7460 = vpack.c.b16 %v7028, %v7026
  %v7461 = vpack.c.b16 %v7031, %v7029
  %v7462 = vpack.c.b16 %v7032, %v7030
  %v7463 = vpack.c.b16 %v7035, %v7033
  %v7464 = vpack.c.b16 %v7036, %v7034
  %v7465 = vpack.c.b16 %v7039, %v7037
  %v7466 = vpack.c.b16 %v7040, %v7038
  %v7467 = vpack.c.b16 %v7043, %v7041
  %v7468 = vpack.c.b16 %v7044, %v7042
  %v7469 = vpack.c.b16 %v7047, %v7045
  %v7470 = vpack.c.b16 %v7048, %v7046
  %v7471 = vpack.c.b16 %v7051, %v7049
  %v7472 = vpack.c.b16 %v7052, %v7050
  %v7473 = vpack.c.b16 %v7055, %v7053
  %v7474 = vpack.c.b16 %v7056, %v7054
  %v7475 = vpack.c.b16 %v7059, %v7057
  %v7476 = vpack.c.b16 %v7060, %v7058
  %v7477 = vpack.c.b16 %v7063, %v7061
  %v7478 = vpack.c.b16 %v7064, %v7062
  %v7479 = vpack.c.b16 %v7067, %v7065
  %v7480 = vpack.c.b16 %v7068, %v7066
  %v7481 = vpack.c.b16 %v7071, %v7069
  %v7482 = vpack.c.b16 %v7072, %v7070
  %v7483 = vpack.c.b16 %v7075, %v7073
  %v7484 = vpack.c.b16 %v7076, %v7074
  %v7485 = vpack.c.b16 %v7079, %v7077
  %v7486 = vpack.c.b16 %v7080, %v7078
  %v7487 = vpack.c.b16 %v7083, %v7081
  %v7488 = vpack.c.b16 %v7084, %v7082
  %v7489 = vpack.c.b16 %v7087, %v7085
  %v7490 = vpack.c.b16 %v7088, %v7086
  %v7491 = vpack.c.b16 %v7091, %v7089
  %v7492 = vpack.c.b16 %v7092, %v7090
  %v7493 = vpack.c.b16 %v7095, %v7093
  %v7494 = vpack.c.b16 %v7096, %v7094
  %v7495 = vpack.c.b16 %v7099, %v7097
  %v7496 = vpack.c.b16 %v7100, %v7098
  %v7497 = vpack.c.b16 %v7103, %v7101
  %v7498 = vpack.c.b16 %v7104, %v7102
  %v7499 = vpack.c.b16 %v7107, %v7105
  %v7500 = vpack.c.b16 %v7108, %v7106
  %v7501 = vpack.c.b16 %v7111, %v7109
  %v7502 = vpack.c.b16 %v7112, %v7110
  %v7503 = vpack.c.b16 %v7115, %v7113
  %v7504 = vpack.c.b16 %v7116, %v7114
  %v7505 = vpack.c.b16 %v7119, %v7117
  %v7506 = vpack.c.b16 %v7120, %v7118
  %v7507 = vpack.c.b16 %v7123, %v7121
  %v7508 = vpack.c.b16 %v7124, %v7122
  %v7509 = vpack.c.b16 %v7127, %v7125
  %v7510 = vpack.c.b16 %v7128, %v7126
  %v7511 = vpack.c.b16 %v7131, %v7129
  %v7512 = vpack.c.b16 %v7132, %v7130
  %v7513 = vpack.c.b16 %v7135, %v7133
  %v7514 = vpack.c.b16 %v7136, %v7134
  %v7515 = vpack.c.b16 %v7139, %v7137
  %v7516 = vpack.c.b16 %v7140, %v7138
  %v7517 = vpack.c.b16 %v7143, %v7141
  %v7518 = vpack.c.b16 %v7144, %v7142
  %v7519 = vpack.c.b16 %v7147, %v7145
  %v7520 = vpack.c.b16 %v7148, %v7146
  %v7521 = vpack.c.b16 %v7151, %v7149
  %v7522 = vpack.c.b16 %v7152, %v7150
  %v7523 = vpack.c.b16 %v7155, %v7153
  %v7524 = vpack.c.b16 %v7156, %v7154
  %v7525 = vpack.c.b16 %v7159, %v7157
  %v7526 = vpack.c.b16 %v7160, %v7158
  %v7527 = vpack.c.b16 %v7163, %v7161
  %v7528 = vpack.c.b16 %v7164, %v7162
  %v7529 = vpack.c.b16 %v7167, %v7165
  %v7530 = vpack.c.b16 %v7168, %v7166
  %v7531 = vpack.c.b16 %v7171, %v7169
  %v7532 = vpack.c.b16 %v7172, %v7170
  %v7533 = vpack.c.b16 %v7175, %v7173
  %v7534 = vpack.c.b16 %v7176, %v7174
  %v7535 = vpack.c.b16 %v7179, %v7177
  %v7536 = vpack.c.b16 %v7180, %v7178
  %v7537 = vpack.c.b16 %v7183, %v7181
  %v7538 = vpack.c.b16 %v7184, %v7182
  %v7539 = vpack.c.b16 %v7187, %v7185
  %v7540 = vpack.c.b16 %v7188, %v7186
  %v7541 = vpack.c.b16 %v7191, %v7189
  %v7542 = vpack.c.b16 %v7192, %v7190
  %v7543 = vpack.c.b16 %v7195, %v7193
  %v7544 = vpack.c.b16 %v7196, %v7194
  %v7545 = vpack.c.b16 %v7199, %v7197
  %v7546 = vpack.c.b16 %v7200, %v7198
  %v7547 = vpack.c.b16 %v7203, %v7201
  %v7548 = vpack.c.b16 %v7204, %v7202
  %v7549 = vpack.c.b16 %v7207, %v7205
  %v7550 = vpack.c.b16 %v7208, %v7206
  %v7551 = vpack.c.b16 %v7211, %v7209
  %v7552 = vpack.c.b16 %v7212, %v7210
  %v7553 = vpack.c.b16 %v7215, %v7213
  %v7554 = vpack.c.b16 %v7216, %v7214
  %v7555 = vpack.c.b16 %v7219, %v7217
  %v7556 = vpack.c.b16 %v7220, %v7218
  %v7557 = vpack.c.b16 %v7223, %v7221
  %v7558 = vpack.c.b16 %v7224, %v7222
  %v7559 = vpack.c.b16 %v7227, %v7225
  %v7560 = vpack.c.b16 %v7228, %v7226
  %v7561 = vpack.c.b16 %v7231, %v7229
  %v7562 = vpack.c.b16 %v7232, %v7230
  %v7563 = vpack.c.b16 %v7235, %v7233
  %v7564 = vpack.c.b16 %v7236, %v7234
  %v7565 = vpack.c.b16 %v7239, %v7237
  %v7566 = vpack.c.b16 %v7240, %v7238
  %v7567 = vpack.c.b16 %v7243, %v7241
  %v7568 = vpack.c.b16 %v7244, %v7242
  %v7569 = vpack.c.b16 %v7247, %v7245
  %v7570 = vpack.c.b16 %v7248, %v7246
  %v7571 = vpack.c.b16 %v7251, %v7249
  %v7572 = vpack.c.b16 %v7252, %v7250
  %v7573 = vpack.c.b16 %v7255, %v7253
  %v7574 = vpack.c.b16 %v7256, %v7254
  %v7575 = vpack.c.b16 %v7259, %v7257
  %v7576 = vpack.c.b16 %v7260, %v7258
  %v7577 = vpack.c.b16 %v7263, %v7261
  %v7578 = vpack.c.b16 %v7264, %v7262
  %v7579 = vpack.c.b16 %v7267, %v7265
  %v7580 = vpack.c.b16 %v7268, %v7266
  %v7581 = vpack.c.b16 %v7271, %v7269
  %v7582 = vpack.c.b16 %v7272, %v7270
  %v7583 = vpack.c.b16 %v7275, %v7273
  %v7584 = vpack.c.b16 %v7276, %v7274
  %v7585 = vpack.c.b16 %v7279, %v7277
  %v7586 = vpack.c.b16 %v7280, %v7278
  %v7587 = vpack.c.b16 %v7283, %v7281
  %v7588 = vpack.c.b16 %v7284, %v7282
  %v7589 = vpack.c.b16 %v7287, %v7285
  %v7590 = vpack.c.b16 %v7288, %v7286
  %v7591 = vpack.c.b16 %v7291, %v7289
  %v7592 = vpack.c.b16 %v7292, %v7290
  %v7593 = vpack.c.b16 %v7295, %v7293
  %v7594 = vpack.c.b16 %v7296, %v7294
  %v7595 = vpack.c.b16 %v7299, %v7297
  %v7596 = vpack.c.b16 %v7300, %v7298
  %v7597 = vpack.c.b16 %v7303, %v7301
  %v7598 = vpack.c.b16 %v7304, %v7302
  %v7599 = vpack.c.b16 %v7307, %v7305
  %v7600 = vpack.c.b16 %v7308, %v7306
  %v7601 = vpack.c.b16 %v7311, %v7309
  %v7602 = vpack.c.b16 %v7312, %v7310
  %v7603 = vpack.c.b16 %v7315, %v7313
  %v7604 = vpack.c.b16 %v7316, %v7314
  %v7605 = vpack.c.b16 %v7319, %v7317
  %v7606 = vpack.c.b16 %v7320, %v7318
  %v7607 = vpack.c.b16 %v7323, %v7321
  %v7608 = vpack.c.b16 %v7324, %v7322
  %v7609 = vpack.c.b16 %v7327, %v7325
  %v7610 = vpack.c.b16 %v7328, %v7326
  %v7611 = vpack.c.b16 %v7331, %v7329
  %v7612 = vpack.c.b16 %v7332, %v7330
  %v7613 = vpack.c.b16 %v7335, %v7333
  %v7614 = vpack.c.b16 %v7336, %v7334
  %v7615 = vpack.c.b16 %v7339, %v7337
  %v7616 = vpack.c.b16 %v7340, %v7338
  %v7617 = vpack.c.b16 %v7343, %v7341
  %v7618 = vpack.c.b16 %v7344, %v7342
  %v7619 = vpack.c.b16 %v7347, %v7345
  %v7620 = vpack.c.b16 %v7348, %v7346
  %v7621 = vpack.c.b16 %v7351, %v7349
  %v7622 = vpack.c.b16 %v7352, %v7350
  %v7623 = vpack.c.b16 %v7355, %v7353
  %v7624 = vpack.c.b16 %v7356, %v7354
  %v7625 = vpack.c.b16 %v7359, %v7357
  %v7626 = vpack.c.b16 %v7360, %v7358
  %v7627 = vpack.c.b16 %v7363, %v7361
  %v7628 = vpack.c.b16 %v7364, %v7362
  %v7629 = vpack.c.b16 %v7367, %v7365
  %v7630 = vpack.c.b16 %v7368, %v7366
  %v7631 = vpack.c.b16 %v7371, %v7369
  %v7632 = vpack.c.b16 %v7372, %v7370
  %v7633 = vpack.c.b16 %v7375, %v7373
  %v7634 = vpack.c.b16 %v7376, %v7374
  %v7635 = vpack.c.b16 %v7379, %v7377
  %v7636 = vpack.c.b16 %v7380, %v7378
  %v7637 = vpack.c.b16 %v7383, %v7381
  %v7638 = vpack.c.b16 %v7384, %v7382
  %v7639 = vpack.c.b16 %v7387, %v7385
  %v7640 = vpack.c.b16 %v7388, %v7386
  %vm7893 = vcmask 785408
  %v7895 = vsel %vm7893, %v6586, 0
  %v7898 = vsel %vm7893, %v6602, 0
  %7900 = vmatprep.subr.bf16.mxu0 %v7390
  %7901 = vmatpush1.bf16.msra.mxu0 %v7389
  %7902 = vmatprep.subr.bf16.mxu0 %v7392
  %7903 = vmatpush1.bf16.msra.mxu0 %v7391
  %7904 = vmatprep.subr.bf16.mxu0 %v7394
  %7905 = vmatpush1.bf16.msra.mxu0 %v7393
  %7906 = vmatprep.subr.bf16.mxu0 %v7396
  %7907 = vmatpush1.bf16.msra.mxu0 %v7395
  %7908 = vmatprep.subr.bf16.mxu0 %v7398
  %7909 = vmatpush1.bf16.msra.mxu0 %v7397
  %7910 = vmatprep.subr.bf16.mxu0 %v7400
  %7911 = vmatpush1.bf16.msra.mxu0 %v7399
  %7912 = vmatprep.subr.bf16.mxu0 %v7402
  %7913 = vmatpush1.bf16.msra.mxu0 %v7401
  %7914 = vmatprep.subr.bf16.mxu0 %v7404
  %7915 = vmatpush1.bf16.msra.mxu0 %v7403
  %7916 = vmatprep.subr.bf16.mxu0 %v7406
  %7917 = vmatpush1.bf16.msra.mxu0 %v7405
  %7918 = vmatprep.subr.bf16.mxu0 %v7408
  %7919 = vmatpush1.bf16.msra.mxu0 %v7407
  %7920 = vmatprep.subr.bf16.mxu0 %v7410
  %7921 = vmatpush1.bf16.msra.mxu0 %v7409
  %7922 = vmatprep.subr.bf16.mxu0 %v7412
  %7923 = vmatpush1.bf16.msra.mxu0 %v7411
  %7924 = vmatprep.subr.bf16.mxu0 %v7414
  %7925 = vmatpush1.bf16.msra.mxu0 %v7413
  %7926 = vmatprep.subr.bf16.mxu0 %v7416
  %7927 = vmatpush1.bf16.msra.mxu0 %v7415
  %7928 = vmatprep.subr.bf16.mxu0 %v7418
  %7929 = vmatpush1.bf16.msra.mxu0 %v7417
  %7930 = vmatprep.subr.bf16.mxu0 %v7420
  %7931 = vmatpush1.bf16.msra.mxu0 %v7419
  %7932 = vmatprep.mubr.bf16.mxu0 %v6572
  %7933 = vmatmul.mubr.bf16.gmra.mrb[0].mxu0 %v6571
  %v7934 = vpop.f32.mrb[0].mxu0
  %v7935 = vadd.f32 0.0, %v7934
  %v7936 = vpop.f32.mrb[0].mxu0
  %v7937 = vadd.f32 0.0, %v7936
  %v7938 = vpop.f32.mrb[0].mxu0
  %v7939 = vadd.f32 0.0, %v7938
  %v7940 = vpop.f32.mrb[0].mxu0
  %v7941 = vadd.f32 0.0, %v7940
  %7942 = vmatprep.mubr.bf16.mxu0 %v6588
  %7943 = vmatmul.mubr.bf16.gmra.mrb[0].mxu0 %v6587
  %v7944 = vpop.f32.mrb[0].mxu0
  %v7945 = vadd.f32 0.0, %v7944
  %v7946 = vpop.f32.mrb[0].mxu0
  %v7947 = vadd.f32 0.0, %v7946
  %v7948 = vpop.f32.mrb[0].mxu0
  %v7949 = vadd.f32 0.0, %v7948
  %v7950 = vpop.f32.mrb[0].mxu0
  %v7951 = vadd.f32 0.0, %v7950
  %7952 = vdwg.mxu0
  %7953 = vmatprep.subr.bf16.mxu0 %v7422
  %7954 = vmatpush1.bf16.msra.mxu0 %v7421
  %7955 = vmatprep.subr.bf16.mxu0 %v7424
  %7956 = vmatpush1.bf16.msra.mxu0 %v7423
  %7957 = vmatprep.subr.bf16.mxu0 %v7426
  %7958 = vmatpush1.bf16.msra.mxu0 %v7425
  %7959 = vmatprep.subr.bf16.mxu0 %v7428
  %7960 = vmatpush1.bf16.msra.mxu0 %v7427
  %7961 = vmatprep.subr.bf16.mxu0 %v7430
  %7962 = vmatpush1.bf16.msra.mxu0 %v7429
  %7963 = vmatprep.subr.bf16.mxu0 %v7432
  %7964 = vmatpush1.bf16.msra.mxu0 %v7431
  %7965 = vmatprep.subr.bf16.mxu0 %v7434
  %7966 = vmatpush1.bf16.msra.mxu0 %v7433
  %7967 = vmatprep.subr.bf16.mxu0 %v7436
  %7968 = vmatpush1.bf16.msra.mxu0 %v7435
  %7969 = vmatprep.subr.bf16.mxu0 %v7438
  %7970 = vmatpush1.bf16.msra.mxu0 %v7437
  %7971 = vmatprep.subr.bf16.mxu0 %v7440
  %7972 = vmatpush1.bf16.msra.mxu0 %v7439
  %7973 = vmatprep.subr.bf16.mxu0 %v7442
  %7974 = vmatpush1.bf16.msra.mxu0 %v7441
  %7975 = vmatprep.subr.bf16.mxu0 %v7444
  %7976 = vmatpush1.bf16.msra.mxu0 %v7443
  %7977 = vmatprep.subr.bf16.mxu0 %v7446
  %7978 = vmatpush1.bf16.msra.mxu0 %v7445
  %7979 = vmatprep.subr.bf16.mxu0 %v7448
  %7980 = vmatpush1.bf16.msra.mxu0 %v7447
  %7981 = vmatprep.subr.bf16.mxu0 %v7450
  %7982 = vmatpush1.bf16.msra.mxu0 %v7449
  %7983 = vmatprep.subr.bf16.mxu0 %v7452
  %7984 = vmatpush1.bf16.msra.mxu0 %v7451
  %7985 = vmatprep.mubr.bf16.mxu0 %v6574
  %7986 = vmatmul.mubr.bf16.gmra.mrb[0].mxu0 %v6573
  %v7987 = vpop.f32.mrb[0].mxu0
  %v7988 = vadd.f32 %v7935, %v7987
  %v7989 = vpop.f32.mrb[0].mxu0
  %v7990 = vadd.f32 %v7937, %v7989
  %v7991 = vpop.f32.mrb[0].mxu0
  %v7992 = vadd.f32 %v7939, %v7991
  %v7993 = vpop.f32.mrb[0].mxu0
  %v7994 = vadd.f32 %v7941, %v7993
  %7995 = vmatprep.mubr.bf16.mxu0 %v6590
  %7996 = vmatmul.mubr.bf16.gmra.mrb[0].mxu0 %v6589
  %v7997 = vpop.f32.mrb[0].mxu0
  %v7998 = vadd.f32 %v7945, %v7997
  %v7999 = vpop.f32.mrb[0].mxu0
  %v8000 = vadd.f32 %v7947, %v7999
  %v8001 = vpop.f32.mrb[0].mxu0
  %v8002 = vadd.f32 %v7949, %v8001
  %v8003 = vpop.f32.mrb[0].mxu0
  %v8004 = vadd.f32 %v7951, %v8003
  %8005 = vdwg.mxu0
  %8006 = vmatprep.subr.bf16.mxu0 %v7454
  %8007 = vmatpush1.bf16.msra.mxu0 %v7453
  %8008 = vmatprep.subr.bf16.mxu0 %v7456
  %8009 = vmatpush1.bf16.msra.mxu0 %v7455
  %8010 = vmatprep.subr.bf16.mxu0 %v7458
  %8011 = vmatpush1.bf16.msra.mxu0 %v7457
  %8012 = vmatprep.subr.bf16.mxu0 %v7460
  %8013 = vmatpush1.bf16.msra.mxu0 %v7459
  %8014 = vmatprep.subr.bf16.mxu0 %v7462
  %8015 = vmatpush1.bf16.msra.mxu0 %v7461
  %8016 = vmatprep.subr.bf16.mxu0 %v7464
  %8017 = vmatpush1.bf16.msra.mxu0 %v7463
  %8018 = vmatprep.subr.bf16.mxu0 %v7466
  %8019 = vmatpush1.bf16.msra.mxu0 %v7465
  %8020 = vmatprep.subr.bf16.mxu0 %v7468
  %8021 = vmatpush1.bf16.msra.mxu0 %v7467
  %8022 = vmatprep.subr.bf16.mxu0 %v7470
  %8023 = vmatpush1.bf16.msra.mxu0 %v7469
  %8024 = vmatprep.subr.bf16.mxu0 %v7472
  %8025 = vmatpush1.bf16.msra.mxu0 %v7471
  %8026 = vmatprep.subr.bf16.mxu0 %v7474
  %8027 = vmatpush1.bf16.msra.mxu0 %v7473
  %8028 = vmatprep.subr.bf16.mxu0 %v7476
  %8029 = vmatpush1.bf16.msra.mxu0 %v7475
  %8030 = vmatprep.subr.bf16.mxu0 %v7478
  %8031 = vmatpush1.bf16.msra.mxu0 %v7477
  %8032 = vmatprep.subr.bf16.mxu0 %v7480
  %8033 = vmatpush1.bf16.msra.mxu0 %v7479
  %8034 = vmatprep.subr.bf16.mxu0 %v7482
  %8035 = vmatpush1.bf16.msra.mxu0 %v7481
  %8036 = vmatprep.subr.bf16.mxu0 %v7484
  %8037 = vmatpush1.bf16.msra.mxu0 %v7483
  %8038 = vmatprep.mubr.bf16.mxu0 %v6576
  %8039 = vmatmul.mubr.bf16.gmra.mrb[0].mxu0 %v6575
  %v8040 = vpop.f32.mrb[0].mxu0
  %v8041 = vadd.f32 %v7988, %v8040
  %v8042 = vpop.f32.mrb[0].mxu0
  %v8043 = vadd.f32 %v7990, %v8042
  %v8044 = vpop.f32.mrb[0].mxu0
  %v8045 = vadd.f32 %v7992, %v8044
  %v8046 = vpop.f32.mrb[0].mxu0
  %v8047 = vadd.f32 %v7994, %v8046
  %8048 = vmatprep.mubr.bf16.mxu0 %v6592
  %8049 = vmatmul.mubr.bf16.gmra.mrb[0].mxu0 %v6591
  %v8050 = vpop.f32.mrb[0].mxu0
  %v8051 = vadd.f32 %v7998, %v8050
  %v8052 = vpop.f32.mrb[0].mxu0
  %v8053 = vadd.f32 %v8000, %v8052
  %v8054 = vpop.f32.mrb[0].mxu0
  %v8055 = vadd.f32 %v8002, %v8054
  %v8056 = vpop.f32.mrb[0].mxu0
  %v8057 = vadd.f32 %v8004, %v8056
  %8058 = vdwg.mxu0
  %8059 = vmatprep.subr.bf16.mxu0 %v7486
  %8060 = vmatpush1.bf16.msra.mxu0 %v7485
  %8061 = vmatprep.subr.bf16.mxu0 %v7488
  %8062 = vmatpush1.bf16.msra.mxu0 %v7487
  %8063 = vmatprep.subr.bf16.mxu0 %v7490
  %8064 = vmatpush1.bf16.msra.mxu0 %v7489
  %8065 = vmatprep.subr.bf16.mxu0 %v7492
  %8066 = vmatpush1.bf16.msra.mxu0 %v7491
  %8067 = vmatprep.subr.bf16.mxu0 %v7494
  %8068 = vmatpush1.bf16.msra.mxu0 %v7493
  %8069 = vmatprep.subr.bf16.mxu0 %v7496
  %8070 = vmatpush1.bf16.msra.mxu0 %v7495
  %8071 = vmatprep.subr.bf16.mxu0 %v7498
  %8072 = vmatpush1.bf16.msra.mxu0 %v7497
  %8073 = vmatprep.subr.bf16.mxu0 %v7500
  %8074 = vmatpush1.bf16.msra.mxu0 %v7499
  %8075 = vmatprep.subr.bf16.mxu0 %v7502
  %8076 = vmatpush1.bf16.msra.mxu0 %v7501
  %8077 = vmatprep.subr.bf16.mxu0 %v7504
  %8078 = vmatpush1.bf16.msra.mxu0 %v7503
  %8079 = vmatprep.subr.bf16.mxu0 %v7506
  %8080 = vmatpush1.bf16.msra.mxu0 %v7505
  %8081 = vmatprep.subr.bf16.mxu0 %v7508
  %8082 = vmatpush1.bf16.msra.mxu0 %v7507
  %8083 = vmatprep.subr.bf16.mxu0 %v7510
  %8084 = vmatpush1.bf16.msra.mxu0 %v7509
  %8085 = vmatprep.subr.bf16.mxu0 %v7512
  %8086 = vmatpush1.bf16.msra.mxu0 %v7511
  %8087 = vmatprep.subr.bf16.mxu0 %v7514
  %8088 = vmatpush1.bf16.msra.mxu0 %v7513
  %8089 = vmatprep.subr.bf16.mxu0 %v7516
  %8090 = vmatpush1.bf16.msra.mxu0 %v7515
  %8091 = vmatprep.mubr.bf16.mxu0 %v6578
  %8092 = vmatmul.mubr.bf16.gmra.mrb[0].mxu0 %v6577
  %v8093 = vpop.f32.mrb[0].mxu0
  %v8094 = vadd.f32 %v8041, %v8093
  %v8095 = vpop.f32.mrb[0].mxu0
  %v8096 = vadd.f32 %v8043, %v8095
  %v8097 = vpop.f32.mrb[0].mxu0
  %v8098 = vadd.f32 %v8045, %v8097
  %v8099 = vpop.f32.mrb[0].mxu0
  %v8100 = vadd.f32 %v8047, %v8099
  %8101 = vmatprep.mubr.bf16.mxu0 %v6594
  %8102 = vmatmul.mubr.bf16.gmra.mrb[0].mxu0 %v6593
  %v8103 = vpop.f32.mrb[0].mxu0
  %v8104 = vadd.f32 %v8051, %v8103
  %v8105 = vpop.f32.mrb[0].mxu0
  %v8106 = vadd.f32 %v8053, %v8105
  %v8107 = vpop.f32.mrb[0].mxu0
  %v8108 = vadd.f32 %v8055, %v8107
  %v8109 = vpop.f32.mrb[0].mxu0
  %v8110 = vadd.f32 %v8057, %v8109
  %8111 = vdwg.mxu0
  %8112 = vmatprep.subr.bf16.mxu0 %v7518
  %8113 = vmatpush1.bf16.msra.mxu0 %v7517
  %8114 = vmatprep.subr.bf16.mxu0 %v7520
  %8115 = vmatpush1.bf16.msra.mxu0 %v7519
  %8116 = vmatprep.subr.bf16.mxu0 %v7522
  %8117 = vmatpush1.bf16.msra.mxu0 %v7521
  %8118 = vmatprep.subr.bf16.mxu0 %v7524
  %8119 = vmatpush1.bf16.msra.mxu0 %v7523
  %8120 = vmatprep.subr.bf16.mxu0 %v7526
  %8121 = vmatpush1.bf16.msra.mxu0 %v7525
  %8122 = vmatprep.subr.bf16.mxu0 %v7528
  %8123 = vmatpush1.bf16.msra.mxu0 %v7527
  %8124 = vmatprep.subr.bf16.mxu0 %v7530
  %8125 = vmatpush1.bf16.msra.mxu0 %v7529
  %8126 = vmatprep.subr.bf16.mxu0 %v7532
  %8127 = vmatpush1.bf16.msra.mxu0 %v7531
  %8128 = vmatprep.subr.bf16.mxu0 %v7534
  %8129 = vmatpush1.bf16.msra.mxu0 %v7533
  %8130 = vmatprep.subr.bf16.mxu0 %v7536
  %8131 = vmatpush1.bf16.msra.mxu0 %v7535
  %8132 = vmatprep.subr.bf16.mxu0 %v7538
  %8133 = vmatpush1.bf16.msra.mxu0 %v7537
  %8134 = vmatprep.subr.bf16.mxu0 %v7540
  %8135 = vmatpush1.bf16.msra.mxu0 %v7539
  %8136 = vmatprep.subr.bf16.mxu0 %v7542
  %8137 = vmatpush1.bf16.msra.mxu0 %v7541
  %8138 = vmatprep.subr.bf16.mxu0 %v7544
  %8139 = vmatpush1.bf16.msra.mxu0 %v7543
  %8140 = vmatprep.subr.bf16.mxu0 %v7546
  %8141 = vmatpush1.bf16.msra.mxu0 %v7545
  %8142 = vmatprep.subr.bf16.mxu0 %v7548
  %8143 = vmatpush1.bf16.msra.mxu0 %v7547
  %8144 = vmatprep.mubr.bf16.mxu0 %v6580
  %8145 = vmatmul.mubr.bf16.gmra.mrb[0].mxu0 %v6579
  %v8146 = vpop.f32.mrb[0].mxu0
  %v8147 = vadd.f32 %v8094, %v8146
  %v8148 = vpop.f32.mrb[0].mxu0
  %v8149 = vadd.f32 %v8096, %v8148
  %v8150 = vpop.f32.mrb[0].mxu0
  %v8151 = vadd.f32 %v8098, %v8150
  %v8152 = vpop.f32.mrb[0].mxu0
  %v8153 = vadd.f32 %v8100, %v8152
  %8154 = vmatprep.mubr.bf16.mxu0 %v6596
  %8155 = vmatmul.mubr.bf16.gmra.mrb[0].mxu0 %v6595
  %v8156 = vpop.f32.mrb[0].mxu0
  %v8157 = vadd.f32 %v8104, %v8156
  %v8158 = vpop.f32.mrb[0].mxu0
  %v8159 = vadd.f32 %v8106, %v8158
  %v8160 = vpop.f32.mrb[0].mxu0
  %v8161 = vadd.f32 %v8108, %v8160
  %v8162 = vpop.f32.mrb[0].mxu0
  %v8163 = vadd.f32 %v8110, %v8162
  %8164 = vdwg.mxu0
  %8165 = vmatprep.subr.bf16.mxu0 %v7550
  %8166 = vmatpush1.bf16.msra.mxu0 %v7549
  %8167 = vmatprep.subr.bf16.mxu0 %v7552
  %8168 = vmatpush1.bf16.msra.mxu0 %v7551
  %8169 = vmatprep.subr.bf16.mxu0 %v7554
  %8170 = vmatpush1.bf16.msra.mxu0 %v7553
  %8171 = vmatprep.subr.bf16.mxu0 %v7556
  %8172 = vmatpush1.bf16.msra.mxu0 %v7555
  %8173 = vmatprep.subr.bf16.mxu0 %v7558
  %8174 = vmatpush1.bf16.msra.mxu0 %v7557
  %8175 = vmatprep.subr.bf16.mxu0 %v7560
  %8176 = vmatpush1.bf16.msra.mxu0 %v7559
  %8177 = vmatprep.subr.bf16.mxu0 %v7562
  %8178 = vmatpush1.bf16.msra.mxu0 %v7561
  %8179 = vmatprep.subr.bf16.mxu0 %v7564
  %8180 = vmatpush1.bf16.msra.mxu0 %v7563
  %8181 = vmatprep.subr.bf16.mxu0 %v7566
  %8182 = vmatpush1.bf16.msra.mxu0 %v7565
  %8183 = vmatprep.subr.bf16.mxu0 %v7568
  %8184 = vmatpush1.bf16.msra.mxu0 %v7567
  %8185 = vmatprep.subr.bf16.mxu0 %v7570
  %8186 = vmatpush1.bf16.msra.mxu0 %v7569
  %8187 = vmatprep.subr.bf16.mxu0 %v7572
  %8188 = vmatpush1.bf16.msra.mxu0 %v7571
  %8189 = vmatprep.subr.bf16.mxu0 %v7574
  %8190 = vmatpush1.bf16.msra.mxu0 %v7573
  %8191 = vmatprep.subr.bf16.mxu0 %v7576
  %8192 = vmatpush1.bf16.msra.mxu0 %v7575
  %8193 = vmatprep.subr.bf16.mxu0 %v7578
  %8194 = vmatpush1.bf16.msra.mxu0 %v7577
  %8195 = vmatprep.subr.bf16.mxu0 %v7580
  %8196 = vmatpush1.bf16.msra.mxu0 %v7579
  %8197 = vmatprep.mubr.bf16.mxu0 %v6582
  %8198 = vmatmul.mubr.bf16.gmra.mrb[0].mxu0 %v6581
  %v8199 = vpop.f32.mrb[0].mxu0
  %v8200 = vadd.f32 %v8147, %v8199
  %v8201 = vpop.f32.mrb[0].mxu0
  %v8202 = vadd.f32 %v8149, %v8201
  %v8203 = vpop.f32.mrb[0].mxu0
  %v8204 = vadd.f32 %v8151, %v8203
  %v8205 = vpop.f32.mrb[0].mxu0
  %v8206 = vadd.f32 %v8153, %v8205
  %8207 = vmatprep.mubr.bf16.mxu0 %v6598
  %8208 = vmatmul.mubr.bf16.gmra.mrb[0].mxu0 %v6597
  %v8209 = vpop.f32.mrb[0].mxu0
  %v8210 = vadd.f32 %v8157, %v8209
  %v8211 = vpop.f32.mrb[0].mxu0
  %v8212 = vadd.f32 %v8159, %v8211
  %v8213 = vpop.f32.mrb[0].mxu0
  %v8214 = vadd.f32 %v8161, %v8213
  %v8215 = vpop.f32.mrb[0].mxu0
  %v8216 = vadd.f32 %v8163, %v8215
  %8217 = vdwg.mxu0
  %8218 = vmatprep.subr.bf16.mxu0 %v7582
  %8219 = vmatpush1.bf16.msra.mxu0 %v7581
  %8220 = vmatprep.subr.bf16.mxu0 %v7584
  %8221 = vmatpush1.bf16.msra.mxu0 %v7583
  %8222 = vmatprep.subr.bf16.mxu0 %v7586
  %8223 = vmatpush1.bf16.msra.mxu0 %v7585
  %8224 = vmatprep.subr.bf16.mxu0 %v7588
  %8225 = vmatpush1.bf16.msra.mxu0 %v7587
  %8226 = vmatprep.subr.bf16.mxu0 %v7590
  %8227 = vmatpush1.bf16.msra.mxu0 %v7589
  %8228 = vmatprep.subr.bf16.mxu0 %v7592
  %8229 = vmatpush1.bf16.msra.mxu0 %v7591
  %8230 = vmatprep.subr.bf16.mxu0 %v7594
  %8231 = vmatpush1.bf16.msra.mxu0 %v7593
  %8232 = vmatprep.subr.bf16.mxu0 %v7596
  %8233 = vmatpush1.bf16.msra.mxu0 %v7595
  %8234 = vmatprep.subr.bf16.mxu0 %v7598
  %8235 = vmatpush1.bf16.msra.mxu0 %v7597
  %8236 = vmatprep.subr.bf16.mxu0 %v7600
  %8237 = vmatpush1.bf16.msra.mxu0 %v7599
  %8238 = vmatprep.subr.bf16.mxu0 %v7602
  %8239 = vmatpush1.bf16.msra.mxu0 %v7601
  %8240 = vmatprep.subr.bf16.mxu0 %v7604
  %8241 = vmatpush1.bf16.msra.mxu0 %v7603
  %8242 = vmatprep.subr.bf16.mxu0 %v7606
  %8243 = vmatpush1.bf16.msra.mxu0 %v7605
  %8244 = vmatprep.subr.bf16.mxu0 %v7608
  %8245 = vmatpush1.bf16.msra.mxu0 %v7607
  %8246 = vmatprep.subr.bf16.mxu0 %v7610
  %8247 = vmatpush1.bf16.msra.mxu0 %v7609
  %8248 = vmatprep.subr.bf16.mxu0 %v7612
  %8249 = vmatpush1.bf16.msra.mxu0 %v7611
  %8250 = vmatprep.mubr.bf16.mxu0 %v6584
  %8251 = vmatmul.mubr.bf16.gmra.mrb[0].mxu0 %v6583
  %v8252 = vpop.f32.mrb[0].mxu0
  %v8253 = vadd.f32 %v8200, %v8252
  %v8254 = vpop.f32.mrb[0].mxu0
  %v8255 = vadd.f32 %v8202, %v8254
  %v8256 = vpop.f32.mrb[0].mxu0
  %v8257 = vadd.f32 %v8204, %v8256
  %v8258 = vpop.f32.mrb[0].mxu0
  %v8259 = vadd.f32 %v8206, %v8258
  %8260 = vmatprep.mubr.bf16.mxu0 %v6600
  %8261 = vmatmul.mubr.bf16.gmra.mrb[0].mxu0 %v6599
  %v8262 = vpop.f32.mrb[0].mxu0
  %v8263 = vadd.f32 %v8210, %v8262
  %v8264 = vpop.f32.mrb[0].mxu0
  %v8265 = vadd.f32 %v8212, %v8264
  %v8266 = vpop.f32.mrb[0].mxu0
  %v8267 = vadd.f32 %v8214, %v8266
  %v8268 = vpop.f32.mrb[0].mxu0
  %v8269 = vadd.f32 %v8216, %v8268
  %8270 = vdwg.mxu0
  %8271 = vmatprep.subr.bf16.mxu0 %v7614
  %8272 = vmatpush1.bf16.msra.mxu0 %v7613
  %8273 = vmatprep.subr.bf16.mxu0 %v7616
  %8274 = vmatpush1.bf16.msra.mxu0 %v7615
  %8275 = vmatprep.subr.bf16.mxu0 %v7618
  %8276 = vmatpush1.bf16.msra.mxu0 %v7617
  %8277 = vmatprep.subr.bf16.mxu0 %v7620
  %8278 = vmatpush1.bf16.msra.mxu0 %v7619
  %8279 = vmatprep.subr.bf16.mxu0 %v7622
  %8280 = vmatpush1.bf16.msra.mxu0 %v7621
  %8281 = vmatprep.subr.bf16.mxu0 %v7624
  %8282 = vmatpush1.bf16.msra.mxu0 %v7623
  %8283 = vmatprep.subr.bf16.mxu0 %v7626
  %8284 = vmatpush1.bf16.msra.mxu0 %v7625
  %8285 = vmatprep.subr.bf16.mxu0 %v7628
  %8286 = vmatpush1.bf16.msra.mxu0 %v7627
  %8287 = vmatprep.subr.bf16.mxu0 %v7630
  %8288 = vmatpush1.bf16.msra.mxu0 %v7629
  %8289 = vmatprep.subr.bf16.mxu0 %v7632
  %8290 = vmatpush1.bf16.msra.mxu0 %v7631
  %8291 = vmatprep.subr.bf16.mxu0 %v7634
  %8292 = vmatpush1.bf16.msra.mxu0 %v7633
  %8293 = vmatprep.subr.bf16.mxu0 %v7636
  %8294 = vmatpush1.bf16.msra.mxu0 %v7635
  %8295 = vmatprep.subr.bf16.mxu0 %v7638
  %8296 = vmatpush1.bf16.msra.mxu0 %v7637
  %8297 = vmatprep.subr.bf16.mxu0 %v7640
  %8298 = vmatpush1.bf16.msra.mxu0 %v7639
  %8299 = vmatprep.subr.bf16.mxu0 0
  %8300 = vmatpush1.bf16.msra.mxu0 0
  %8301 = vmatprep.subr.bf16.mxu0 0
  %8302 = vmatpush1.bf16.msra.mxu0 0
  %8303 = vmatprep.mubr.bf16.mxu0 %v7895
  %8304 = vmatmul.mubr.bf16.gmra.mrb[0].mxu0 %v6585
  %v8305 = vpop.f32.mrb[0].mxu0
  %v8306 = vadd.f32 %v8253, %v8305
  %v8307 = vpop.f32.mrb[0].mxu0
  %v8308 = vadd.f32 %v8255, %v8307
  %v8309 = vpop.f32.mrb[0].mxu0
  %v8310 = vadd.f32 %v8257, %v8309
  %v8311 = vpop.f32.mrb[0].mxu0
  %v8312 = vadd.f32 %v8259, %v8311
  %8313 = vmatprep.mubr.bf16.mxu0 %v7898
  %8314 = vmatmul.mubr.bf16.gmra.mrb[0].mxu0 %v6601
  %v8315 = vpop.f32.mrb[0].mxu0
  %v8316 = vadd.f32 %v8263, %v8315
  %v8317 = vpop.f32.mrb[0].mxu0
  %v8318 = vadd.f32 %v8265, %v8317
  %v8319 = vpop.f32.mrb[0].mxu0
  %v8320 = vadd.f32 %v8267, %v8319
  %v8321 = vpop.f32.mrb[0].mxu0
  %v8322 = vadd.f32 %v8269, %v8321
  %8323 = vdwg.mxu0
  %v8324 = vld [vmem:[%s6] sm:$0x3]
  %v8326 = vlaneseq
  %v8327 = vshrl.u32 %v8326, 7
  %v8328 = vsub.s32 0, %v8327
  %v8329 = vrot.slane %v8324, %v8328
  %v8330 = vlaneseq
  %v8331 = vshrl.u32 %v8330, 7
  %v8332 = vsub.s32 1, %v8331
  %v8333 = vrot.slane %v8324, %v8332
  %v8336 = vmul.f32 %v8306, %v8329
  %v8337 = vmul.f32 %v8308, %v8333
  %v8338 = vmul.f32 %v8310, %v8329
  %v8339 = vmul.f32 %v8312, %v8333
  %v8340 = vmul.f32 %v8316, %v8329
  %v8341 = vmul.f32 %v8318, %v8333
  %v8342 = vmul.f32 %v8320, %v8329
  %v8343 = vmul.f32 %v8322, %v8333
  %v8344 = vld [vmem:[%s7] sm:$0x3]
  %v8346 = vlaneseq
  %v8347 = vshrl.u32 %v8346, 7
  %v8348 = vsub.s32 0, %v8347
  %v8349 = vrot.slane %v8344, %v8348
  %v8350 = vlaneseq
  %v8351 = vshrl.u32 %v8350, 7
  %v8352 = vsub.s32 1, %v8351
  %v8353 = vrot.slane %v8344, %v8352
  %v8356 = vadd.f32 %v8336, %v8349
  %v8357 = vadd.f32 %v8337, %v8353
  %v8358 = vadd.f32 %v8338, %v8349
  %v8359 = vadd.f32 %v8339, %v8353
  %v8360 = vadd.f32 %v8340, %v8349
  %v8361 = vadd.f32 %v8341, %v8353
  %v8362 = vadd.f32 %v8342, %v8349
  %v8363 = vadd.f32 %v8343, %v8353
  %v8364 = vmax.f32 %v8356, 0.0
  %v8365 = vmax.f32 %v8357, 0.0
  %v8366 = vmax.f32 %v8358, 0.0
  %v8367 = vmax.f32 %v8359, 0.0
  %v8368 = vmax.f32 %v8360, 0.0
  %v8369 = vmax.f32 %v8361, 0.0
  %v8370 = vmax.f32 %v8362, 0.0
  %v8371 = vmax.f32 %v8363, 0.0
  %8372 = vst [vmem:[%s9 + $0x18] sm:$0xff] %v8364
  %8373 = vst [vmem:[%s9 + $0x20] sm:$0xff] %v8365
  %8374 = vst [vmem:[%s9 + $0x58] sm:$0xff] %v8366
  %8375 = vst [vmem:[%s9 + $0x60] sm:$0xff] %v8367
  %8376 = vst [vmem:[%s9 + $0x98] sm:$0xff] %v8368
  %8377 = vst [vmem:[%s9 + $0xa0] sm:$0xff] %v8369
  %8378 = vst [vmem:[%s9 + $0xd8] sm:$0xff] %v8370
  %8379 = vst [vmem:[%s9 + $0xe0] sm:$0xff] %v8371
  %v8380 = vld [vmem:[%s8] sm:$0xff]
  %v8381 = vld [vmem:[%s8 + $0x8] sm:$0xff]
  %v8382 = vld [vmem:[%s8 + $0x10] sm:$0xff]
  %v8383 = vld [vmem:[%s8 + $0x18] sm:$0xff]
  %v8384 = vld [vmem:[%s8 + $0x20] sm:$0xff]
  %v8385 = vld [vmem:[%s8 + $0x28] sm:$0xff]
  %v8386 = vld [vmem:[%s8 + $0x30] sm:$0xff]
  %v8387 = vld [vmem:[%s8 + $0x38] sm:$0xff]
  %v8388 = vld [vmem:[%s8 + $0x40] sm:$0xff]
  %v8389 = vld [vmem:[%s8 + $0x48] sm:$0xff]
  %v8390 = vld [vmem:[%s8 + $0x50] sm:$0xff]
  %v8391 = vld [vmem:[%s8 + $0x58] sm:$0xff]
  %s8392 = scalar_lea.vmem %s8, 96
  %v8393 = vld [vmem:[%s8392] sm:$0xff]
  %v8394 = vld [vmem:[%s8392 + $0x8] sm:$0xff]
  %v8395 = vld [vmem:[%s8392 + $0x10] sm:$0xff]
  %v8396 = vld [vmem:[%s8392 + $0x18] sm:$0xff]
  %v8397 = vld [vmem:[%s8392 + $0x20] sm:$0xff]
  %v8398 = vld [vmem:[%s8392 + $0x28] sm:$0xff]
  %v8399 = vld [vmem:[%s8392 + $0x30] sm:$0xff]
  %v8400 = vld [vmem:[%s8392 + $0x38] sm:$0xff]
  %v8401 = vld [vmem:[%s8392 + $0x40] sm:$0xff]
  %v8402 = vld [vmem:[%s8392 + $0x48] sm:$0xff]
  %v8403 = vld [vmem:[%s8392 + $0x50] sm:$0xff]
  %v8404 = vld [vmem:[%s8392 + $0x58] sm:$0xff]
  %v8405 = vmax.f32 %v8380, %v8393
  %v8406 = vmax.f32 %v8381, %v8394
  %v8407 = vmax.f32 %v8382, %v8395
  %v8408 = vmax.f32 %v8383, %v8396
  %v8409 = vmax.f32 %v8384, %v8397
  %v8410 = vmax.f32 %v8385, %v8398
  %v8411 = vmax.f32 %v8386, %v8399
  %v8412 = vmax.f32 %v8387, %v8400
  %v8413 = vmax.f32 %v8388, %v8401
  %v8414 = vmax.f32 %v8389, %v8402
  %v8415 = vmax.f32 %v8390, %v8403
  %v8416 = vmax.f32 %v8391, %v8404
  %s8417 = scalar_lea.vmem %s8, 192
  %v8418 = vld [vmem:[%s8417] sm:$0xff]
  %v8419 = vld [vmem:[%s8417 + $0x8] sm:$0xff]
  %v8420 = vld [vmem:[%s8417 + $0x10] sm:$0xff]
  %v8421 = vld [vmem:[%s8417 + $0x18] sm:$0xff]
  %v8422 = vld [vmem:[%s8417 + $0x20] sm:$0xff]
  %v8423 = vld [vmem:[%s8417 + $0x28] sm:$0xff]
  %v8424 = vld [vmem:[%s8417 + $0x30] sm:$0xff]
  %v8425 = vld [vmem:[%s8417 + $0x38] sm:$0xff]
  %v8426 = vld [vmem:[%s8417 + $0x40] sm:$0xff]
  %v8427 = vld [vmem:[%s8417 + $0x48] sm:$0xff]
  %v8428 = vld [vmem:[%s8417 + $0x50] sm:$0xff]
  %v8429 = vld [vmem:[%s8417 + $0x58] sm:$0xff]
  %v8430 = vmax.f32 %v8405, %v8418
  %v8431 = vmax.f32 %v8406, %v8419
  %v8432 = vmax.f32 %v8407, %v8420
  %v8433 = vmax.f32 %v8408, %v8421
  %v8434 = vmax.f32 %v8409, %v8422
  %v8435 = vmax.f32 %v8410, %v8423
  %v8436 = vmax.f32 %v8411, %v8424
  %v8437 = vmax.f32 %v8412, %v8425
  %v8438 = vmax.f32 %v8413, %v8426
  %v8439 = vmax.f32 %v8414, %v8427
  %v8440 = vmax.f32 %v8415, %v8428
  %v8441 = vmax.f32 %v8416, %v8429
  %s8442 = scalar_lea.vmem %s8, 288
  %v8443 = vld [vmem:[%s8442] sm:$0xff]
  %v8444 = vld [vmem:[%s8442 + $0x8] sm:$0xff]
  %v8445 = vld [vmem:[%s8442 + $0x10] sm:$0xff]
  %v8446 = vld [vmem:[%s8442 + $0x18] sm:$0xff]
  %v8447 = vld [vmem:[%s8442 + $0x20] sm:$0xff]
  %v8448 = vld [vmem:[%s8442 + $0x28] sm:$0xff]
  %v8449 = vld [vmem:[%s8442 + $0x30] sm:$0xff]
  %v8450 = vld [vmem:[%s8442 + $0x38] sm:$0xff]
  %v8451 = vld [vmem:[%s8442 + $0x40] sm:$0xff]
  %v8452 = vld [vmem:[%s8442 + $0x48] sm:$0xff]
  %v8453 = vld [vmem:[%s8442 + $0x50] sm:$0xff]
  %v8454 = vld [vmem:[%s8442 + $0x58] sm:$0xff]
  %v8455 = vmax.f32 %v8430, %v8443
  %v8456 = vmax.f32 %v8431, %v8444
  %v8457 = vmax.f32 %v8432, %v8445
  %v8458 = vmax.f32 %v8433, %v8446
  %v8459 = vmax.f32 %v8434, %v8447
  %v8460 = vmax.f32 %v8435, %v8448
  %v8461 = vmax.f32 %v8436, %v8449
  %v8462 = vmax.f32 %v8437, %v8450
  %v8463 = vmax.f32 %v8438, %v8451
  %v8464 = vmax.f32 %v8439, %v8452
  %v8465 = vmax.f32 %v8440, %v8453
  %v8466 = vmax.f32 %v8441, %v8454
  %s8467 = scalar_lea.vmem %s8, 384
  %v8468 = vld [vmem:[%s8467] sm:$0xff]
  %v8469 = vld [vmem:[%s8467 + $0x8] sm:$0xff]
  %v8470 = vld [vmem:[%s8467 + $0x10] sm:$0xff]
  %v8471 = vld [vmem:[%s8467 + $0x18] sm:$0xff]
  %v8472 = vld [vmem:[%s8467 + $0x20] sm:$0xff]
  %v8473 = vld [vmem:[%s8467 + $0x28] sm:$0xff]
  %v8474 = vld [vmem:[%s8467 + $0x30] sm:$0xff]
  %v8475 = vld [vmem:[%s8467 + $0x38] sm:$0xff]
  %v8476 = vld [vmem:[%s8467 + $0x40] sm:$0xff]
  %v8477 = vld [vmem:[%s8467 + $0x48] sm:$0xff]
  %v8478 = vld [vmem:[%s8467 + $0x50] sm:$0xff]
  %v8479 = vld [vmem:[%s8467 + $0x58] sm:$0xff]
  %v8480 = vmax.f32 %v8455, %v8468
  %v8481 = vmax.f32 %v8456, %v8469
  %v8482 = vmax.f32 %v8457, %v8470
  %v8483 = vmax.f32 %v8458, %v8471
  %v8484 = vmax.f32 %v8459, %v8472
  %v8485 = vmax.f32 %v8460, %v8473
  %v8486 = vmax.f32 %v8461, %v8474
  %v8487 = vmax.f32 %v8462, %v8475
  %v8488 = vmax.f32 %v8463, %v8476
  %v8489 = vmax.f32 %v8464, %v8477
  %v8490 = vmax.f32 %v8465, %v8478
  %v8491 = vmax.f32 %v8466, %v8479
  %s8492 = scalar_lea.vmem %s8, 480
  %v8493 = vld [vmem:[%s8492] sm:$0xff]
  %v8494 = vld [vmem:[%s8492 + $0x8] sm:$0xff]
  %v8495 = vld [vmem:[%s8492 + $0x10] sm:$0xff]
  %v8496 = vld [vmem:[%s8492 + $0x18] sm:$0xff]
  %v8497 = vld [vmem:[%s8492 + $0x20] sm:$0xff]
  %v8498 = vld [vmem:[%s8492 + $0x28] sm:$0xff]
  %v8499 = vld [vmem:[%s8492 + $0x30] sm:$0xff]
  %v8500 = vld [vmem:[%s8492 + $0x38] sm:$0xff]
  %v8501 = vld [vmem:[%s8492 + $0x40] sm:$0xff]
  %v8502 = vld [vmem:[%s8492 + $0x48] sm:$0xff]
  %v8503 = vld [vmem:[%s8492 + $0x50] sm:$0xff]
  %v8504 = vld [vmem:[%s8492 + $0x58] sm:$0xff]
  %v8505 = vmax.f32 %v8480, %v8493
  %v8506 = vmax.f32 %v8481, %v8494
  %v8507 = vmax.f32 %v8482, %v8495
  %v8508 = vmax.f32 %v8483, %v8496
  %v8509 = vmax.f32 %v8484, %v8497
  %v8510 = vmax.f32 %v8485, %v8498
  %v8511 = vmax.f32 %v8486, %v8499
  %v8512 = vmax.f32 %v8487, %v8500
  %v8513 = vmax.f32 %v8488, %v8501
  %v8514 = vmax.f32 %v8489, %v8502
  %v8515 = vmax.f32 %v8490, %v8503
  %v8516 = vmax.f32 %v8491, %v8504
  %s8517 = scalar_lea.vmem %s8, 576
  %v8518 = vld [vmem:[%s8517] sm:$0xff]
  %v8519 = vld [vmem:[%s8517 + $0x8] sm:$0xff]
  %v8520 = vld [vmem:[%s8517 + $0x10] sm:$0xff]
  %v8521 = vld [vmem:[%s8517 + $0x18] sm:$0xff]
  %v8522 = vld [vmem:[%s8517 + $0x20] sm:$0xff]
  %v8523 = vld [vmem:[%s8517 + $0x28] sm:$0xff]
  %v8524 = vld [vmem:[%s8517 + $0x30] sm:$0xff]
  %v8525 = vld [vmem:[%s8517 + $0x38] sm:$0xff]
  %v8526 = vld [vmem:[%s8517 + $0x40] sm:$0xff]
  %v8527 = vld [vmem:[%s8517 + $0x48] sm:$0xff]
  %v8528 = vld [vmem:[%s8517 + $0x50] sm:$0xff]
  %v8529 = vld [vmem:[%s8517 + $0x58] sm:$0xff]
  %v8530 = vmax.f32 %v8505, %v8518
  %v8531 = vmax.f32 %v8506, %v8519
  %v8532 = vmax.f32 %v8507, %v8520
  %v8533 = vmax.f32 %v8508, %v8521
  %v8534 = vmax.f32 %v8509, %v8522
  %v8535 = vmax.f32 %v8510, %v8523
  %v8536 = vmax.f32 %v8511, %v8524
  %v8537 = vmax.f32 %v8512, %v8525
  %v8538 = vmax.f32 %v8513, %v8526
  %v8539 = vmax.f32 %v8514, %v8527
  %v8540 = vmax.f32 %v8515, %v8528
  %v8541 = vmax.f32 %v8516, %v8529
  %s8542 = scalar_lea.vmem %s8, 672
  %v8543 = vld [vmem:[%s8542] sm:$0xff]
  %v8544 = vld [vmem:[%s8542 + $0x8] sm:$0xff]
  %v8545 = vld [vmem:[%s8542 + $0x10] sm:$0xff]
  %v8546 = vld [vmem:[%s8542 + $0x18] sm:$0xff]
  %v8547 = vld [vmem:[%s8542 + $0x20] sm:$0xff]
  %v8548 = vld [vmem:[%s8542 + $0x28] sm:$0xff]
  %v8549 = vld [vmem:[%s8542 + $0x30] sm:$0xff]
  %v8550 = vld [vmem:[%s8542 + $0x38] sm:$0xff]
  %v8551 = vld [vmem:[%s8542 + $0x40] sm:$0xff]
  %v8552 = vld [vmem:[%s8542 + $0x48] sm:$0xff]
  %v8553 = vld [vmem:[%s8542 + $0x50] sm:$0xff]
  %v8554 = vld [vmem:[%s8542 + $0x58] sm:$0xff]
  %v8555 = vmax.f32 %v8530, %v8543
  %v8556 = vmax.f32 %v8531, %v8544
  %v8557 = vmax.f32 %v8532, %v8545
  %v8558 = vmax.f32 %v8533, %v8546
  %v8559 = vmax.f32 %v8534, %v8547
  %v8560 = vmax.f32 %v8535, %v8548
  %v8561 = vmax.f32 %v8536, %v8549
  %v8562 = vmax.f32 %v8537, %v8550
  %v8563 = vmax.f32 %v8538, %v8551
  %v8564 = vmax.f32 %v8539, %v8552
  %v8565 = vmax.f32 %v8540, %v8553
  %v8566 = vmax.f32 %v8541, %v8554
  %s8567 = scalar_lea.vmem %s8, 768
  %v8568 = vld [vmem:[%s8567] sm:$0xff]
  %v8569 = vld [vmem:[%s8567 + $0x8] sm:$0xff]
  %v8570 = vld [vmem:[%s8567 + $0x10] sm:$0xff]
  %v8571 = vld [vmem:[%s8567 + $0x18] sm:$0xff]
  %v8572 = vld [vmem:[%s8567 + $0x20] sm:$0xff]
  %v8573 = vld [vmem:[%s8567 + $0x28] sm:$0xff]
  %v8574 = vld [vmem:[%s8567 + $0x30] sm:$0xff]
  %v8575 = vld [vmem:[%s8567 + $0x38] sm:$0xff]
  %v8576 = vld [vmem:[%s8567 + $0x40] sm:$0xff]
  %v8577 = vld [vmem:[%s8567 + $0x48] sm:$0xff]
  %v8578 = vld [vmem:[%s8567 + $0x50] sm:$0xff]
  %v8579 = vld [vmem:[%s8567 + $0x58] sm:$0xff]
  %v8580 = vmax.f32 %v8555, %v8568
  %v8581 = vmax.f32 %v8556, %v8569
  %v8582 = vmax.f32 %v8557, %v8570
  %v8583 = vmax.f32 %v8558, %v8571
  %v8584 = vmax.f32 %v8559, %v8572
  %v8585 = vmax.f32 %v8560, %v8573
  %v8586 = vmax.f32 %v8561, %v8574
  %v8587 = vmax.f32 %v8562, %v8575
  %v8588 = vmax.f32 %v8563, %v8576
  %v8589 = vmax.f32 %v8564, %v8577
  %v8590 = vmax.f32 %v8565, %v8578
  %v8591 = vmax.f32 %v8566, %v8579
  %8592 = vst [vmem:[%s9 + $0x28] sm:$0xff] %v8580
  %8593 = vst [vmem:[%s9 + $0x30] sm:$0xff] %v8581
  %8594 = vst [vmem:[%s9 + $0x38] sm:$0xff] %v8582
  %8595 = vst [vmem:[%s9 + $0x68] sm:$0xff] %v8583
  %8596 = vst [vmem:[%s9 + $0x70] sm:$0xff] %v8584
  %8597 = vst [vmem:[%s9 + $0x78] sm:$0xff] %v8585
  %8598 = vst [vmem:[%s9 + $0xa8] sm:$0xff] %v8586
  %8599 = vst [vmem:[%s9 + $0xb0] sm:$0xff] %v8587
  %8600 = vst [vmem:[%s9 + $0xb8] sm:$0xff] %v8588
  %8601 = vst [vmem:[%s9 + $0xe8] sm:$0xff] %v8589
  %8602 = vst [vmem:[%s9 + $0xf0] sm:$0xff] %v8590
  %8603 = vst [vmem:[%s9 + $0xf8] sm:$0xff] %v8591
  // Predicated region
  $region38: #{reduction_a_forward.5} parent=0 // pred_check
    _
  $region39: #{reduction_a_forward.5} parent=0 // pred_check_branch
    %8605 = sbr.rel (0) target = $region41
  $region40: #{reduction_a_forward.5} parent=0 // pred_region
    _
  $region41: #{reduction_a_forward.5} parent=0 // pred_fallthru
    _
  // Predicated region
  $region42: #{reduction_a_forward.5} parent=0 // pred_check
    _
  $region43: #{reduction_a_forward.5} parent=0 // pred_check_branch
    %8607 = sbr.rel (0) target = $region45
  $region44: #{reduction_a_forward.5} parent=0 // pred_region
    _
  $region45: #{reduction_a_forward.5} parent=0 // pred_fallthru
    _

</llo_original>
